<compile_context>
chip_gen: v6e
topology: v6e:2x2x1
jax: 0.10.0
libtpu: 0.0.40
codegen_flags: <defaults>
</compile_context>

<pallas_src>
import math

import jax
import jax.numpy as jnp
from jax.experimental import pallas as pl
from jax.experimental.pallas import tpu as pltpu

# ---- small config consistent with the module's __init__ ---------------------
HIDDEN = 32
NUM_HEADS = 4
HEAD_DIM = HIDDEN // NUM_HEADS
MLP_DIM = 64
NUM_LAYERS = 2
PATCH = (4, 4, 2)          # config.patches['size']
IMG = 16                   # img_size
FRAMES = 4                 # num_frames
IN_CH = 3
BATCH = 2
LN_EPS = 1e-6
N_PATCHES = (IMG // PATCH[0]) * (IMG // PATCH[1]) * (FRAMES // PATCH[2])   # 32
SEQ = N_PATCHES + 1        # n_patches + 1 (cls token) = 33
PATCH_DIM = IN_CH * PATCH[0] * PATCH[1] * PATCH[2]                         # 96
TOK_DIM = PATCH_DIM + 1    # + cls-indicator column = 97
FLAT = BATCH * SEQ         # 66

_SQRT2 = math.sqrt(2.0)


# -----------------------------------------------------------------------------
# in-kernel math helpers (all f32 elementwise)
# -----------------------------------------------------------------------------
def _erf(x):
    # Abramowitz & Stegun 7.1.26 (|err| < 1.5e-7): exact-GELU at fp32 accuracy.
    p = 0.3275911
    a1, a2, a3, a4, a5 = (0.254829592, -0.284496736, 1.421413741,
                          -1.453152027, 1.061405429)
    s = jnp.where(x < 0.0, -1.0, 1.0)
    z = jnp.abs(x)
    # approx reciprocal -> EUP slot instead of a multi-op VALU divide
    t = pl.reciprocal(1.0 + p * z, approx=True)
    poly = ((((a5 * t + a4) * t + a3) * t + a2) * t + a1) * t
    return s * (1.0 - poly * jnp.exp(-z * z))


def _gelu(x):              # torch.nn.functional.gelu (exact / erf form)
    return 0.5 * x * (1.0 + _erf(x / _SQRT2))


def _layer_norm(x, g, b):
    # one-pass LN: var = E[x^2] - mu^2 (one fewer full-width subtract / sweep)
    mu = jnp.mean(x, axis=-1, keepdims=True)
    ms = jnp.mean(x * x, axis=-1, keepdims=True)
    var = ms - mu * mu
    return (x - mu) * jax.lax.rsqrt(var + LN_EPS) * g + b


# -----------------------------------------------------------------------------
# one fused Pallas kernel for the whole forward pass
# -----------------------------------------------------------------------------
def _fused_encoder_kernel(tok_ref, pw_ref, pb_ref, pos_ref, mask_ref,
                          ln1g_ref, ln1b_ref, wqkv_ref, bqkv_ref,
                          wo_ref, bo_ref, ln2g_ref, ln2b_ref,
                          w1_ref, b1_ref, w2_ref, b2_ref,
                          encg_ref, encb_ref, o_ref):
    f32 = jnp.float32
    bf16 = jnp.bfloat16

    # ---- tubelet embedding + cls + positional embedding: one (66,97)x(97,32)
    # matmul.  The wrapper appended a cls-indicator column to the tokens and a
    # (cls - patch_bias) row to the weight, so rows come out fully assembled --
    # no scratch buffer, masked stores or in-kernel concatenation.
    x = (jnp.dot(tok_ref[...], pw_ref[...], preferred_element_type=f32)
         + pb_ref[...] + pos_ref[...])                                  # (B*S, H)

    mask = mask_ref[...]                                                # (NH, H) 0/1

    # ---- encoder blocks: static layer loop, all weights VMEM-resident -------
    for l in range(NUM_LAYERS):
        # ---------------- attention sub-block (pre-LN) ----------------
        xn = _layer_norm(x, ln1g_ref[l], ln1b_ref[l])                   # (B*S, H)
        qkv = (jnp.dot(xn.astype(bf16), wqkv_ref[l],
                       preferred_element_type=f32) + bqkv_ref[l])       # (B*S, 3H)
        q = qkv[:, 0:HIDDEN]                       # 1/sqrt(D) pre-folded into wq/bq
        k = qkv[:, HIDDEN:2 * HIDDEN].astype(bf16)
        v = qkv[:, 2 * HIDDEN:3 * HIDDEN].astype(bf16)

        # Per-head scores without 8-lane slicing: zero the other heads' columns
        # of Q and contract over the full hidden dim (identical numerics; the
        # extra MACs land on the idle MXU instead of XLU relayouts).
        q_b = [q[b * SEQ:(b + 1) * SEQ, :] for b in range(BATCH)]
        k_b = [k[b * SEQ:(b + 1) * SEQ, :] for b in range(BATCH)]
        v_b = [v[b * SEQ:(b + 1) * SEQ, :] for b in range(BATCH)]
        qh = jnp.stack([q_b[b] * mask[n:n + 1, :]
                        for n in range(NUM_HEADS)
                        for b in range(BATCH)], axis=0).astype(bf16)    # (NH*B,S,H)
        kb = jnp.stack([k_b[b] for _ in range(NUM_HEADS)
                        for b in range(BATCH)], axis=0)                 # (NH*B,S,H)
        vb = jnp.stack([v_b[b] for _ in range(NUM_HEADS)
                        for b in range(BATCH)], axis=0)                 # (NH*B,S,H)

        s = jnp.einsum('nqh,nkh->nqk', qh, kb,
                       preferred_element_type=f32)                      # (NH*B,S,S)
        m = jnp.max(s, axis=-1, keepdims=True)
        p = jnp.exp(s - m)
        probs = p * pl.reciprocal(jnp.sum(p, axis=-1, keepdims=True),
                                  approx=True)
        ctx_all = jnp.einsum('nqk,nkh->nqh', probs.astype(bf16), vb,
                             preferred_element_type=f32)                # (NH*B,S,H)

        # merge heads: keep each head's own columns and sum (masked adds,
        # no lane concatenation)
        ctx_b = []
        for b in range(BATCH):
            acc = ctx_all[0 * BATCH + b] * mask[0:1, :]
            for n in range(1, NUM_HEADS):
                acc = acc + ctx_all[n * BATCH + b] * mask[n:n + 1, :]
            ctx_b.append(acc)
        ctx = jnp.concatenate(ctx_b, axis=0)                            # (B*S, H)

        attn = (jnp.dot(ctx.astype(bf16), wo_ref[l],
                        preferred_element_type=f32) + bo_ref[l])
        x = x + attn                              # residual 1

        # ---------------- MLP sub-block (pre-LN) ----------------
        xn2 = _layer_norm(x, ln2g_ref[l], ln2b_ref[l])
        y = (jnp.dot(xn2.astype(bf16), w1_ref[l],
                     preferred_element_type=f32) + b1_ref[l])           # (B*S, MLP)
        y = _gelu(y)
        y = (jnp.dot(y.astype(bf16), w2_ref[l],
                     preferred_element_type=f32) + b2_ref[l])           # (B*S, H)
        x = x + y                                 # residual 2

    # ---- final encoder LayerNorm + single store ------------------------------
    # TODO(synk): output last dim is 32 (<128 lanes) so this is a masked vst;
    # at 8 KB total output a lane-dense repack is not worth it.
    o_ref[...] = _layer_norm(x, encg_ref[...], encb_ref[...]).astype(o_ref.dtype)


# -----------------------------------------------------------------------------
# glue (patchify, parameter prep, pallas_call wrapper)
# -----------------------------------------------------------------------------
def patchify(x):
    # Conv3d(kernel=stride=PATCH) == non-overlapping tubelet extraction + matmul
    B, C, D, H, W = x.shape
    p0, p1, p2 = PATCH
    n0, n1, n2 = D // p0, H // p1, W // p2
    x = x.reshape(B, C, n0, p0, n1, p1, n2, p2)
    x = x.transpose(0, 2, 4, 6, 1, 3, 5, 7)        # token order = conv flatten(2)
    return x.reshape(B, n0 * n1 * n2, C * p0 * p1 * p2)


def prepare_kernel_params(params):
    """Fuse QKV, fold the attention scale and cls token, stack per-layer
    weights, build the head mask, cast matmul operands to bf16."""
    scale = 1.0 / math.sqrt(HEAD_DIM)

    def stack(name):
        return jnp.stack([blk[name] for blk in params["blocks"]], axis=0)

    wq, wk, wv = stack("wq"), stack("wk"), stack("wv")      # (L, H, H)
    bq, bk, bv = stack("bq"), stack("bk"), stack("bv")      # (L, 1, H)

    # cls token folded into an extra row of the patch weight: the indicator
    # column contributes (cls - patch_b), the bias add restores + patch_b.
    cls_row = params["cls"].reshape(1, HIDDEN) - params["patch_b"]      # (1, H)
    head_idx = jnp.arange(HIDDEN) // HEAD_DIM
    head_mask = (head_idx[None, :] ==
                 jnp.arange(NUM_HEADS)[:, None]).astype(jnp.float32)    # (NH, H)

    return {
        "patch_w": jnp.concatenate([params["patch_w"], cls_row],
                                   axis=0).astype(jnp.bfloat16),        # (97, H)
        "patch_b": params["patch_b"],
        "pos": jnp.tile(params["pos"][0], (BATCH, 1)),                  # (B*S, H)
        "mask": head_mask,
        "ln1_g": stack("ln1_g"), "ln1_b": stack("ln1_b"),
        "wqkv": jnp.concatenate([wq * scale, wk, wv], axis=-1).astype(jnp.bfloat16),
        "bqkv": jnp.concatenate([bq * scale, bk, bv], axis=-1),
        "wo": stack("wo").astype(jnp.bfloat16), "bo": stack("bo"),
        "ln2_g": stack("ln2_g"), "ln2_b": stack("ln2_b"),
        "w1": stack("w1").astype(jnp.bfloat16), "b1": stack("b1"),
        "w2": stack("w2").astype(jnp.bfloat16), "b2": stack("b2"),
        "enc_g": params["enc_ln_g"], "enc_b": params["enc_ln_b"],
    }


def transformer_forward(x, params):
    kp = prepare_kernel_params(params)

    # tokens + cls-indicator column, pre-cast to bf16 (halves the input DMA)
    tok = patchify(x)                                                   # (B, P, 96)
    cls_rows = jnp.concatenate(
        [jnp.zeros((BATCH, 1, PATCH_DIM), jnp.float32),
         jnp.ones((BATCH, 1, 1), jnp.float32)], axis=-1)                # (B, 1, 97)
    patch_rows = jnp.concatenate(
        [tok, jnp.zeros((BATCH, N_PATCHES, 1), jnp.float32)], axis=-1)  # (B, P, 97)
    tokens = jnp.concatenate([cls_rows, patch_rows], axis=1)
    tokens = tokens.reshape(FLAT, TOK_DIM).astype(jnp.bfloat16)         # (66, 97)

    inputs = (tokens, kp["patch_w"], kp["patch_b"], kp["pos"], kp["mask"],
              kp["ln1_g"], kp["ln1_b"], kp["wqkv"], kp["bqkv"],
              kp["wo"], kp["bo"], kp["ln2_g"], kp["ln2_b"],
              kp["w1"], kp["b1"], kp["w2"], kp["b2"],
              kp["enc_g"], kp["enc_b"])
    vmem = pl.BlockSpec(memory_space=pltpu.MemorySpace.VMEM)
    out = pl.pallas_call(
        _fused_encoder_kernel,
        out_shape=jax.ShapeDtypeStruct((FLAT, HIDDEN), jnp.float32),
        in_specs=[vmem] * len(inputs),
        out_specs=vmem,
    )(*inputs)
    return out.reshape(BATCH, SEQ, HIDDEN)


# -----------------------------------------------------------------------------
# parameter init (mirrors the torch module) and a plain-JAX f32 reference
# -----------------------------------------------------------------------------
def init_params(key):
    def normal(k, shape, std=0.02):
        return (std * jax.random.normal(k, shape)).astype(jnp.float32)

    keys = jax.random.split(key, 4 + NUM_LAYERS)
    params = {
        # Conv3d tubelet weight folded to (C*p0*p1*p2, HIDDEN)
        "patch_w": normal(keys[0], (PATCH_DIM, HIDDEN)),
        "patch_b": normal(keys[1], (1, HIDDEN)),
        # cls/pos are zeros in the torch __init__; deterministic small randoms
        # here so the adds are actually exercised.
        "cls": normal(keys[2], (1, 1, HIDDEN)),
        "pos": normal(keys[3], (1, SEQ, HIDDEN)),
        "enc_ln_g": jnp.ones((1, HIDDEN), jnp.float32),
        "enc_ln_b": jnp.zeros((1, HIDDEN), jnp.float32),
        "blocks": [],
    }
    for l in range(NUM_LAYERS):
        k = jax.random.split(keys[4 + l], 12)
        params["blocks"].append({
            "ln1_g": jnp.ones((1, HIDDEN), jnp.float32),
            "ln1_b": jnp.zeros((1, HIDDEN), jnp.float32),
            "wq": normal(k[0], (HIDDEN, HIDDEN)), "bq": normal(k[1], (1, HIDDEN), 0.01),
            "wk": normal(k[2], (HIDDEN, HIDDEN)), "bk": normal(k[3], (1, HIDDEN), 0.01),
            "wv": normal(k[4], (HIDDEN, HIDDEN)), "bv": normal(k[5], (1, HIDDEN), 0.01),
            "wo": normal(k[6], (HIDDEN, HIDDEN)), "bo": normal(k[7], (1, HIDDEN), 0.01),
            "ln2_g": jnp.ones((1, HIDDEN), jnp.float32),
            "ln2_b": jnp.zeros((1, HIDDEN), jnp.float32),
            "w1": normal(k[8], (HIDDEN, MLP_DIM)), "b1": normal(k[9], (1, MLP_DIM), 1e-6),
            "w2": normal(k[10], (MLP_DIM, HIDDEN)), "b2": normal(k[11], (1, HIDDEN), 1e-6),
        })
    return params


def reference_forward(x, params):
    def ln(t, g, b):
        mu = jnp.mean(t, axis=-1, keepdims=True)
        var = jnp.mean(jnp.square(t - mu), axis=-1, keepdims=True)
        return (t - mu) * jax.lax.rsqrt(var + LN_EPS) * g + b

    B = x.shape[0]
    tokens = patchify(x)
    emb = tokens @ params["patch_w"] + params["patch_b"]
    cls = jnp.broadcast_to(params["cls"], (B, 1, HIDDEN))
    h = jnp.concatenate([cls, emb], axis=1) + params["pos"]
    for blk in params["blocks"]:
        r = h
        xn = ln(h, blk["ln1_g"], blk["ln1_b"])
        q = xn @ blk["wq"] + blk["bq"]
        k = xn @ blk["wk"] + blk["bk"]
        v = xn @ blk["wv"] + blk["bv"]
        S = xn.shape[1]

        def split(t):
            return t.reshape(B, S, NUM_HEADS, HEAD_DIM).transpose(0, 2, 1, 3)

        qh, kh, vh = split(q), split(k), split(v)
        scores = jnp.einsum("bnqd,bnkd->bnqk", qh, kh) / math.sqrt(HEAD_DIM)
        probs = jax.nn.softmax(scores, axis=-1)
        ctx = jnp.einsum("bnqk,bnkd->bnqd", probs, vh)
        ctx = ctx.transpose(0, 2, 1, 3).reshape(B, S, HIDDEN)
        h = (ctx @ blk["wo"] + blk["bo"]) + r
        r = h
        xn = ln(h, blk["ln2_g"], blk["ln2_b"])
        y = jax.nn.gelu(xn @ blk["w1"] + blk["b1"], approximate=False)
        y = y @ blk["w2"] + blk["b2"]
        h = y + r
    return ln(h, params["enc_ln_g"], params["enc_ln_b"])


if __name__ == "__main__":
    key = jax.random.PRNGKey(0)
    pkey, xkey = jax.random.split(key)
    params = init_params(pkey)
    # Input to the tubelet embedding: Conv3d NCDHW with
    # (D, H, W) = (img_h, img_w, num_frames)
    x = jax.random.normal(xkey, (BATCH, IN_CH, IMG, IMG, FRAMES), dtype=jnp.float32)

    out = jax.block_until_ready(transformer_forward(x, params))

    ref = reference_forward(x, params)
    max_err = float(jnp.max(jnp.abs(out - ref)))
    assert out.shape == (BATCH, SEQ, HIDDEN), out.shape
    # bf16 matmul operands (f32 accumulation) + approx-reciprocal softmax/erf vs
    # the f32 reference: comfortably within 3e-2 absolute at these magnitudes.
    assert max_err < 3e-2, f"max abs error {max_err}"
    print("KERNEL_OK")
</pallas_src>

<mosaic_0001>
module attributes {stable_mosaic.version = 11 : i64} {
  func.func @_fused_encoder_kernel(%arg0: memref<66x97xbf16, #tpu.memory_space<vmem>>, %arg1: memref<97x32xbf16, #tpu.memory_space<vmem>>, %arg2: memref<1x32xf32, #tpu.memory_space<vmem>>, %arg3: memref<66x32xf32, #tpu.memory_space<vmem>>, %arg4: memref<4x32xf32, #tpu.memory_space<vmem>>, %arg5: memref<2x1x32xf32, #tpu.memory_space<vmem>>, %arg6: memref<2x1x32xf32, #tpu.memory_space<vmem>>, %arg7: memref<2x32x96xbf16, #tpu.memory_space<vmem>>, %arg8: memref<2x1x96xf32, #tpu.memory_space<vmem>>, %arg9: memref<2x32x32xbf16, #tpu.memory_space<vmem>>, %arg10: memref<2x1x32xf32, #tpu.memory_space<vmem>>, %arg11: memref<2x1x32xf32, #tpu.memory_space<vmem>>, %arg12: memref<2x1x32xf32, #tpu.memory_space<vmem>>, %arg13: memref<2x32x64xbf16, #tpu.memory_space<vmem>>, %arg14: memref<2x1x64xf32, #tpu.memory_space<vmem>>, %arg15: memref<2x64x32xbf16, #tpu.memory_space<vmem>>, %arg16: memref<2x1x32xf32, #tpu.memory_space<vmem>>, %arg17: memref<1x32xf32, #tpu.memory_space<vmem>>, %arg18: memref<1x32xf32, #tpu.memory_space<vmem>>, %arg19: memref<66x32xf32, #tpu.memory_space<vmem>>) attributes {dimension_semantics = [], scalar_prefetch = 0 : i64, scratch_operands = 0 : i64, tpu.core_type = #tpu.core_type<tc>} {
    %c0 = arith.constant 0 : index
    %c0_0 = arith.constant 0 : index
    %0 = vector.load %arg0[%c0, %c0_0] : memref<66x97xbf16, #tpu.memory_space<vmem>>, vector<66x97xbf16>
    %c0_1 = arith.constant 0 : index
    %c0_2 = arith.constant 0 : index
    %1 = vector.load %arg1[%c0_1, %c0_2] : memref<97x32xbf16, #tpu.memory_space<vmem>>, vector<97x32xbf16>
    %cst = arith.constant dense<0.000000e+00> : vector<66x32xf32>
    %2 = tpu.matmul %0, %1, %cst {dimension_numbers = #tpu.dot_dimension_numbers<[1], [0], [0], [1], [0, 0, 1, 1], [], []>} : vector<66x97xbf16>, vector<97x32xbf16>, vector<66x32xf32> -> vector<66x32xf32>
    %c0_3 = arith.constant 0 : index
    %c0_4 = arith.constant 0 : index
    %3 = vector.load %arg2[%c0_3, %c0_4] : memref<1x32xf32, #tpu.memory_space<vmem>>, vector<1x32xf32>
    %4 = vector.broadcast %3 : vector<1x32xf32> to vector<66x32xf32>
    %5 = arith.addf %2, %4 : vector<66x32xf32>
    %c0_5 = arith.constant 0 : index
    %c0_6 = arith.constant 0 : index
    %6 = vector.load %arg3[%c0_5, %c0_6] : memref<66x32xf32, #tpu.memory_space<vmem>>, vector<66x32xf32>
    %7 = arith.addf %5, %6 : vector<66x32xf32>
    %c0_7 = arith.constant 0 : index
    %c0_8 = arith.constant 0 : index
    %8 = vector.load %arg4[%c0_7, %c0_8] : memref<4x32xf32, #tpu.memory_space<vmem>>, vector<4x32xf32>
    %c0_9 = arith.constant 0 : index
    %c0_10 = arith.constant 0 : index
    %c0_11 = arith.constant 0 : index
    %9 = vector.load %arg5[%c0_9, %c0_10, %c0_11] : memref<2x1x32xf32, #tpu.memory_space<vmem>>, vector<1x1x32xf32>
    %10 = vector.shape_cast %9 : vector<1x1x32xf32> to vector<1x32xf32>
    %c0_12 = arith.constant 0 : index
    %c0_13 = arith.constant 0 : index
    %c0_14 = arith.constant 0 : index
    %11 = vector.load %arg6[%c0_12, %c0_13, %c0_14] : memref<2x1x32xf32, #tpu.memory_space<vmem>>, vector<1x1x32xf32>
    %12 = vector.shape_cast %11 : vector<1x1x32xf32> to vector<1x32xf32>
    %cst_15 = arith.constant dense<0.000000e+00> : vector<66xf32>
    %13 = vector.multi_reduction <add>, %7, %cst_15 [1] : vector<66x32xf32> to vector<66xf32>
    %14 = vector.shape_cast %13 : vector<66xf32> to vector<66x1xf32>
    %cst_16 = arith.constant 3.200000e+01 : f32
    %15 = vector.broadcast %cst_16 : f32 to vector<66x1xf32>
    %16 = arith.divf %14, %15 : vector<66x1xf32>
    %17 = arith.mulf %7, %7 : vector<66x32xf32>
    %cst_17 = arith.constant dense<0.000000e+00> : vector<66xf32>
    %18 = vector.multi_reduction <add>, %17, %cst_17 [1] : vector<66x32xf32> to vector<66xf32>
    %19 = vector.shape_cast %18 : vector<66xf32> to vector<66x1xf32>
    %cst_18 = arith.constant 3.200000e+01 : f32
    %20 = vector.broadcast %cst_18 : f32 to vector<66x1xf32>
    %21 = arith.divf %19, %20 : vector<66x1xf32>
    %22 = arith.mulf %16, %16 : vector<66x1xf32>
    %23 = arith.subf %21, %22 : vector<66x1xf32>
    %24 = vector.broadcast %16 : vector<66x1xf32> to vector<66x32xf32>
    %25 = arith.subf %7, %24 : vector<66x32xf32>
    %cst_19 = arith.constant 9.99999997E-7 : f32
    %26 = vector.broadcast %cst_19 : f32 to vector<66x1xf32>
    %27 = arith.addf %23, %26 : vector<66x1xf32>
    %28 = math.rsqrt %27 : vector<66x1xf32>
    %29 = vector.broadcast %28 : vector<66x1xf32> to vector<66x32xf32>
    %30 = arith.mulf %25, %29 : vector<66x32xf32>
    %31 = vector.broadcast %10 : vector<1x32xf32> to vector<66x32xf32>
    %32 = arith.mulf %30, %31 : vector<66x32xf32>
    %33 = vector.broadcast %12 : vector<1x32xf32> to vector<66x32xf32>
    %34 = arith.addf %32, %33 : vector<66x32xf32>
    %35 = arith.truncf %34 : vector<66x32xf32> to vector<66x32xbf16>
    %c0_20 = arith.constant 0 : index
    %c0_21 = arith.constant 0 : index
    %c0_22 = arith.constant 0 : index
    %36 = vector.load %arg7[%c0_20, %c0_21, %c0_22] : memref<2x32x96xbf16, #tpu.memory_space<vmem>>, vector<1x32x96xbf16>
    %37 = vector.shape_cast %36 : vector<1x32x96xbf16> to vector<32x96xbf16>
    %cst_23 = arith.constant dense<0.000000e+00> : vector<66x96xf32>
    %38 = tpu.matmul %35, %37, %cst_23 {dimension_numbers = #tpu.dot_dimension_numbers<[1], [0], [0], [1], [0, 0, 1, 1], [], []>} : vector<66x32xbf16>, vector<32x96xbf16>, vector<66x96xf32> -> vector<66x96xf32>
    %c0_24 = arith.constant 0 : index
    %c0_25 = arith.constant 0 : index
    %c0_26 = arith.constant 0 : index
    %39 = vector.load %arg8[%c0_24, %c0_25, %c0_26] : memref<2x1x96xf32, #tpu.memory_space<vmem>>, vector<1x1x96xf32>
    %40 = vector.shape_cast %39 : vector<1x1x96xf32> to vector<1x96xf32>
    %41 = vector.broadcast %40 : vector<1x96xf32> to vector<66x96xf32>
    %42 = arith.addf %38, %41 : vector<66x96xf32>
    %43 = vector.extract_strided_slice %42 {offsets = [0, 0], sizes = [66, 32], strides = [1, 1]} : vector<66x96xf32> to vector<66x32xf32>
    %44 = vector.extract_strided_slice %42 {offsets = [0, 32], sizes = [66, 32], strides = [1, 1]} : vector<66x96xf32> to vector<66x32xf32>
    %45 = arith.truncf %44 : vector<66x32xf32> to vector<66x32xbf16>
    %46 = vector.extract_strided_slice %42 {offsets = [0, 64], sizes = [66, 32], strides = [1, 1]} : vector<66x96xf32> to vector<66x32xf32>
    %47 = arith.truncf %46 : vector<66x32xf32> to vector<66x32xbf16>
    %48 = vector.extract_strided_slice %43 {offsets = [0, 0], sizes = [33, 32], strides = [1, 1]} : vector<66x32xf32> to vector<33x32xf32>
    %49 = vector.extract_strided_slice %43 {offsets = [33, 0], sizes = [33, 32], strides = [1, 1]} : vector<66x32xf32> to vector<33x32xf32>
    %50 = vector.extract_strided_slice %45 {offsets = [0, 0], sizes = [33, 32], strides = [1, 1]} : vector<66x32xbf16> to vector<33x32xbf16>
    %51 = vector.extract_strided_slice %45 {offsets = [33, 0], sizes = [33, 32], strides = [1, 1]} : vector<66x32xbf16> to vector<33x32xbf16>
    %52 = vector.extract_strided_slice %47 {offsets = [0, 0], sizes = [33, 32], strides = [1, 1]} : vector<66x32xbf16> to vector<33x32xbf16>
    %53 = vector.extract_strided_slice %47 {offsets = [33, 0], sizes = [33, 32], strides = [1, 1]} : vector<66x32xbf16> to vector<33x32xbf16>
    %54 = vector.extract_strided_slice %8 {offsets = [0, 0], sizes = [1, 32], strides = [1, 1]} : vector<4x32xf32> to vector<1x32xf32>
    %55 = vector.broadcast %54 : vector<1x32xf32> to vector<33x32xf32>
    %56 = arith.mulf %48, %55 : vector<33x32xf32>
    %57 = vector.extract_strided_slice %8 {offsets = [0, 0], sizes = [1, 32], strides = [1, 1]} : vector<4x32xf32> to vector<1x32xf32>
    %58 = vector.broadcast %57 : vector<1x32xf32> to vector<33x32xf32>
    %59 = arith.mulf %49, %58 : vector<33x32xf32>
    %60 = vector.extract_strided_slice %8 {offsets = [1, 0], sizes = [1, 32], strides = [1, 1]} : vector<4x32xf32> to vector<1x32xf32>
    %61 = vector.broadcast %60 : vector<1x32xf32> to vector<33x32xf32>
    %62 = arith.mulf %48, %61 : vector<33x32xf32>
    %63 = vector.extract_strided_slice %8 {offsets = [1, 0], sizes = [1, 32], strides = [1, 1]} : vector<4x32xf32> to vector<1x32xf32>
    %64 = vector.broadcast %63 : vector<1x32xf32> to vector<33x32xf32>
    %65 = arith.mulf %49, %64 : vector<33x32xf32>
    %66 = vector.extract_strided_slice %8 {offsets = [2, 0], sizes = [1, 32], strides = [1, 1]} : vector<4x32xf32> to vector<1x32xf32>
    %67 = vector.broadcast %66 : vector<1x32xf32> to vector<33x32xf32>
    %68 = arith.mulf %48, %67 : vector<33x32xf32>
    %69 = vector.extract_strided_slice %8 {offsets = [2, 0], sizes = [1, 32], strides = [1, 1]} : vector<4x32xf32> to vector<1x32xf32>
    %70 = vector.broadcast %69 : vector<1x32xf32> to vector<33x32xf32>
    %71 = arith.mulf %49, %70 : vector<33x32xf32>
    %72 = vector.extract_strided_slice %8 {offsets = [3, 0], sizes = [1, 32], strides = [1, 1]} : vector<4x32xf32> to vector<1x32xf32>
    %73 = vector.broadcast %72 : vector<1x32xf32> to vector<33x32xf32>
    %74 = arith.mulf %48, %73 : vector<33x32xf32>
    %75 = vector.extract_strided_slice %8 {offsets = [3, 0], sizes = [1, 32], strides = [1, 1]} : vector<4x32xf32> to vector<1x32xf32>
    %76 = vector.broadcast %75 : vector<1x32xf32> to vector<33x32xf32>
    %77 = arith.mulf %49, %76 : vector<33x32xf32>
    %78 = vector.shape_cast %56 : vector<33x32xf32> to vector<1x33x32xf32>
    %79 = vector.shape_cast %59 : vector<33x32xf32> to vector<1x33x32xf32>
    %80 = vector.shape_cast %62 : vector<33x32xf32> to vector<1x33x32xf32>
    %81 = vector.shape_cast %65 : vector<33x32xf32> to vector<1x33x32xf32>
    %82 = vector.shape_cast %68 : vector<33x32xf32> to vector<1x33x32xf32>
    %83 = vector.shape_cast %71 : vector<33x32xf32> to vector<1x33x32xf32>
    %84 = vector.shape_cast %74 : vector<33x32xf32> to vector<1x33x32xf32>
    %85 = vector.shape_cast %77 : vector<33x32xf32> to vector<1x33x32xf32>
    %86 = tpu.concatenate %78, %79, %80, %81, %82, %83, %84, %85 in 0 : vector<1x33x32xf32>, vector<1x33x32xf32>, vector<1x33x32xf32>, vector<1x33x32xf32>, vector<1x33x32xf32>, vector<1x33x32xf32>, vector<1x33x32xf32>, vector<1x33x32xf32> -> vector<8x33x32xf32>
    %87 = arith.truncf %86 : vector<8x33x32xf32> to vector<8x33x32xbf16>
    %88 = vector.shape_cast %50 : vector<33x32xbf16> to vector<1x33x32xbf16>
    %89 = vector.shape_cast %51 : vector<33x32xbf16> to vector<1x33x32xbf16>
    %90 = vector.shape_cast %50 : vector<33x32xbf16> to vector<1x33x32xbf16>
    %91 = vector.shape_cast %51 : vector<33x32xbf16> to vector<1x33x32xbf16>
    %92 = vector.shape_cast %50 : vector<33x32xbf16> to vector<1x33x32xbf16>
    %93 = vector.shape_cast %51 : vector<33x32xbf16> to vector<1x33x32xbf16>
    %94 = vector.shape_cast %50 : vector<33x32xbf16> to vector<1x33x32xbf16>
    %95 = vector.shape_cast %51 : vector<33x32xbf16> to vector<1x33x32xbf16>
    %96 = tpu.concatenate %88, %89, %90, %91, %92, %93, %94, %95 in 0 : vector<1x33x32xbf16>, vector<1x33x32xbf16>, vector<1x33x32xbf16>, vector<1x33x32xbf16>, vector<1x33x32xbf16>, vector<1x33x32xbf16>, vector<1x33x32xbf16>, vector<1x33x32xbf16> -> vector<8x33x32xbf16>
    %97 = vector.shape_cast %52 : vector<33x32xbf16> to vector<1x33x32xbf16>
    %98 = vector.shape_cast %53 : vector<33x32xbf16> to vector<1x33x32xbf16>
    %99 = vector.shape_cast %52 : vector<33x32xbf16> to vector<1x33x32xbf16>
    %100 = vector.shape_cast %53 : vector<33x32xbf16> to vector<1x33x32xbf16>
    %101 = vector.shape_cast %52 : vector<33x32xbf16> to vector<1x33x32xbf16>
    %102 = vector.shape_cast %53 : vector<33x32xbf16> to vector<1x33x32xbf16>
    %103 = vector.shape_cast %52 : vector<33x32xbf16> to vector<1x33x32xbf16>
    %104 = vector.shape_cast %53 : vector<33x32xbf16> to vector<1x33x32xbf16>
    %105 = tpu.concatenate %97, %98, %99, %100, %101, %102, %103, %104 in 0 : vector<1x33x32xbf16>, vector<1x33x32xbf16>, vector<1x33x32xbf16>, vector<1x33x32xbf16>, vector<1x33x32xbf16>, vector<1x33x32xbf16>, vector<1x33x32xbf16>, vector<1x33x32xbf16> -> vector<8x33x32xbf16>
    "tpu.trace_start"() <{level = 10 : i32, message = "nqh,nkh->nqk"}> : () -> ()
    %cst_27 = arith.constant dense<0.000000e+00> : vector<8x33x33xf32>
    %106 = tpu.matmul %87, %96, %cst_27 {dimension_numbers = #tpu.dot_dimension_numbers<[2], [2], [1], [1], [0, 0, 0, 1, 1, 1], [0], [0]>} : vector<8x33x32xbf16>, vector<8x33x32xbf16>, vector<8x33x33xf32> -> vector<8x33x33xf32>
    "tpu.trace_stop"() : () -> ()
    %cst_28 = arith.constant dense<0xFF800000> : vector<8x33xf32>
    %107 = vector.multi_reduction <maximumf>, %106, %cst_28 [2] : vector<8x33x33xf32> to vector<8x33xf32>
    %108 = vector.shape_cast %107 : vector<8x33xf32> to vector<8x33x1xf32>
    %109 = vector.broadcast %108 : vector<8x33x1xf32> to vector<8x33x33xf32>
    %110 = arith.subf %106, %109 : vector<8x33x33xf32>
    %111 = math.exp %110 : vector<8x33x33xf32>
    %cst_29 = arith.constant dense<0.000000e+00> : vector<8x33xf32>
    %112 = vector.multi_reduction <add>, %111, %cst_29 [2] : vector<8x33x33xf32> to vector<8x33xf32>
    %113 = vector.shape_cast %112 : vector<8x33xf32> to vector<8x33x1xf32>
    %114 = tpu.reciprocal %113 {approx = true} : vector<8x33x1xf32> -> vector<8x33x1xf32>
    %115 = vector.broadcast %114 : vector<8x33x1xf32> to vector<8x33x33xf32>
    %116 = arith.mulf %111, %115 : vector<8x33x33xf32>
    %117 = arith.truncf %116 : vector<8x33x33xf32> to vector<8x33x33xbf16>
    "tpu.trace_start"() <{level = 10 : i32, message = "nqk,nkh->nqh"}> : () -> ()
    %cst_30 = arith.constant dense<0.000000e+00> : vector<8x33x32xf32>
    %118 = tpu.matmul %117, %105, %cst_30 {dimension_numbers = #tpu.dot_dimension_numbers<[2], [1], [1], [2], [0, 0, 0, 1, 1, 2], [0], [0]>} : vector<8x33x33xbf16>, vector<8x33x32xbf16>, vector<8x33x32xf32> -> vector<8x33x32xf32>
    "tpu.trace_stop"() : () -> ()
    %119 = vector.extract_strided_slice %118 {offsets = [0, 0, 0], sizes = [1, 33, 32], strides = [1, 1, 1]} : vector<8x33x32xf32> to vector<1x33x32xf32>
    %120 = vector.shape_cast %119 : vector<1x33x32xf32> to vector<33x32xf32>
    %121 = vector.extract_strided_slice %8 {offsets = [0, 0], sizes = [1, 32], strides = [1, 1]} : vector<4x32xf32> to vector<1x32xf32>
    %122 = vector.broadcast %121 : vector<1x32xf32> to vector<33x32xf32>
    %123 = arith.mulf %120, %122 : vector<33x32xf32>
    %124 = vector.extract_strided_slice %118 {offsets = [2, 0, 0], sizes = [1, 33, 32], strides = [1, 1, 1]} : vector<8x33x32xf32> to vector<1x33x32xf32>
    %125 = vector.shape_cast %124 : vector<1x33x32xf32> to vector<33x32xf32>
    %126 = vector.extract_strided_slice %8 {offsets = [1, 0], sizes = [1, 32], strides = [1, 1]} : vector<4x32xf32> to vector<1x32xf32>
    %127 = vector.broadcast %126 : vector<1x32xf32> to vector<33x32xf32>
    %128 = arith.mulf %125, %127 : vector<33x32xf32>
    %129 = arith.addf %123, %128 : vector<33x32xf32>
    %130 = vector.extract_strided_slice %118 {offsets = [4, 0, 0], sizes = [1, 33, 32], strides = [1, 1, 1]} : vector<8x33x32xf32> to vector<1x33x32xf32>
    %131 = vector.shape_cast %130 : vector<1x33x32xf32> to vector<33x32xf32>
    %132 = vector.extract_strided_slice %8 {offsets = [2, 0], sizes = [1, 32], strides = [1, 1]} : vector<4x32xf32> to vector<1x32xf32>
    %133 = vector.broadcast %132 : vector<1x32xf32> to vector<33x32xf32>
    %134 = arith.mulf %131, %133 : vector<33x32xf32>
    %135 = arith.addf %129, %134 : vector<33x32xf32>
    %136 = vector.extract_strided_slice %118 {offsets = [6, 0, 0], sizes = [1, 33, 32], strides = [1, 1, 1]} : vector<8x33x32xf32> to vector<1x33x32xf32>
    %137 = vector.shape_cast %136 : vector<1x33x32xf32> to vector<33x32xf32>
    %138 = vector.extract_strided_slice %8 {offsets = [3, 0], sizes = [1, 32], strides = [1, 1]} : vector<4x32xf32> to vector<1x32xf32>
    %139 = vector.broadcast %138 : vector<1x32xf32> to vector<33x32xf32>
    %140 = arith.mulf %137, %139 : vector<33x32xf32>
    %141 = arith.addf %135, %140 : vector<33x32xf32>
    %142 = vector.extract_strided_slice %118 {offsets = [1, 0, 0], sizes = [1, 33, 32], strides = [1, 1, 1]} : vector<8x33x32xf32> to vector<1x33x32xf32>
    %143 = vector.shape_cast %142 : vector<1x33x32xf32> to vector<33x32xf32>
    %144 = vector.extract_strided_slice %8 {offsets = [0, 0], sizes = [1, 32], strides = [1, 1]} : vector<4x32xf32> to vector<1x32xf32>
    %145 = vector.broadcast %144 : vector<1x32xf32> to vector<33x32xf32>
    %146 = arith.mulf %143, %145 : vector<33x32xf32>
    %147 = vector.extract_strided_slice %118 {offsets = [3, 0, 0], sizes = [1, 33, 32], strides = [1, 1, 1]} : vector<8x33x32xf32> to vector<1x33x32xf32>
    %148 = vector.shape_cast %147 : vector<1x33x32xf32> to vector<33x32xf32>
    %149 = vector.extract_strided_slice %8 {offsets = [1, 0], sizes = [1, 32], strides = [1, 1]} : vector<4x32xf32> to vector<1x32xf32>
    %150 = vector.broadcast %149 : vector<1x32xf32> to vector<33x32xf32>
    %151 = arith.mulf %148, %150 : vector<33x32xf32>
    %152 = arith.addf %146, %151 : vector<33x32xf32>
    %153 = vector.extract_strided_slice %118 {offsets = [5, 0, 0], sizes = [1, 33, 32], strides = [1, 1, 1]} : vector<8x33x32xf32> to vector<1x33x32xf32>
    %154 = vector.shape_cast %153 : vector<1x33x32xf32> to vector<33x32xf32>
    %155 = vector.extract_strided_slice %8 {offsets = [2, 0], sizes = [1, 32], strides = [1, 1]} : vector<4x32xf32> to vector<1x32xf32>
    %156 = vector.broadcast %155 : vector<1x32xf32> to vector<33x32xf32>
    %157 = arith.mulf %154, %156 : vector<33x32xf32>
    %158 = arith.addf %152, %157 : vector<33x32xf32>
    %159 = vector.extract_strided_slice %118 {offsets = [7, 0, 0], sizes = [1, 33, 32], strides = [1, 1, 1]} : vector<8x33x32xf32> to vector<1x33x32xf32>
    %160 = vector.shape_cast %159 : vector<1x33x32xf32> to vector<33x32xf32>
    %161 = vector.extract_strided_slice %8 {offsets = [3, 0], sizes = [1, 32], strides = [1, 1]} : vector<4x32xf32> to vector<1x32xf32>
    %162 = vector.broadcast %161 : vector<1x32xf32> to vector<33x32xf32>
    %163 = arith.mulf %160, %162 : vector<33x32xf32>
    %164 = arith.addf %158, %163 : vector<33x32xf32>
    %165 = tpu.concatenate %141, %164 in 0 : vector<33x32xf32>, vector<33x32xf32> -> vector<66x32xf32>
    %166 = arith.truncf %165 : vector<66x32xf32> to vector<66x32xbf16>
    %c0_31 = arith.constant 0 : index
    %c0_32 = arith.constant 0 : index
    %c0_33 = arith.constant 0 : index
    %167 = vector.load %arg9[%c0_31, %c0_32, %c0_33] : memref<2x32x32xbf16, #tpu.memory_space<vmem>>, vector<1x32x32xbf16>
    %168 = vector.shape_cast %167 : vector<1x32x32xbf16> to vector<32x32xbf16>
    %cst_34 = arith.constant dense<0.000000e+00> : vector<66x32xf32>
    %169 = tpu.matmul %166, %168, %cst_34 {dimension_numbers = #tpu.dot_dimension_numbers<[1], [0], [0], [1], [0, 0, 1, 1], [], []>} : vector<66x32xbf16>, vector<32x32xbf16>, vector<66x32xf32> -> vector<66x32xf32>
    %c0_35 = arith.constant 0 : index
    %c0_36 = arith.constant 0 : index
    %c0_37 = arith.constant 0 : index
    %170 = vector.load %arg10[%c0_35, %c0_36, %c0_37] : memref<2x1x32xf32, #tpu.memory_space<vmem>>, vector<1x1x32xf32>
    %171 = vector.shape_cast %170 : vector<1x1x32xf32> to vector<1x32xf32>
    %172 = vector.broadcast %171 : vector<1x32xf32> to vector<66x32xf32>
    %173 = arith.addf %169, %172 : vector<66x32xf32>
    %174 = arith.addf %7, %173 : vector<66x32xf32>
    %c0_38 = arith.constant 0 : index
    %c0_39 = arith.constant 0 : index
    %c0_40 = arith.constant 0 : index
    %175 = vector.load %arg11[%c0_38, %c0_39, %c0_40] : memref<2x1x32xf32, #tpu.memory_space<vmem>>, vector<1x1x32xf32>
    %176 = vector.shape_cast %175 : vector<1x1x32xf32> to vector<1x32xf32>
    %c0_41 = arith.constant 0 : index
    %c0_42 = arith.constant 0 : index
    %c0_43 = arith.constant 0 : index
    %177 = vector.load %arg12[%c0_41, %c0_42, %c0_43] : memref<2x1x32xf32, #tpu.memory_space<vmem>>, vector<1x1x32xf32>
    %178 = vector.shape_cast %177 : vector<1x1x32xf32> to vector<1x32xf32>
    %cst_44 = arith.constant dense<0.000000e+00> : vector<66xf32>
    %179 = vector.multi_reduction <add>, %174, %cst_44 [1] : vector<66x32xf32> to vector<66xf32>
    %180 = vector.shape_cast %179 : vector<66xf32> to vector<66x1xf32>
    %cst_45 = arith.constant 3.200000e+01 : f32
    %181 = vector.broadcast %cst_45 : f32 to vector<66x1xf32>
    %182 = arith.divf %180, %181 : vector<66x1xf32>
    %183 = arith.mulf %174, %174 : vector<66x32xf32>
    %cst_46 = arith.constant dense<0.000000e+00> : vector<66xf32>
    %184 = vector.multi_reduction <add>, %183, %cst_46 [1] : vector<66x32xf32> to vector<66xf32>
    %185 = vector.shape_cast %184 : vector<66xf32> to vector<66x1xf32>
    %cst_47 = arith.constant 3.200000e+01 : f32
    %186 = vector.broadcast %cst_47 : f32 to vector<66x1xf32>
    %187 = arith.divf %185, %186 : vector<66x1xf32>
    %188 = arith.mulf %182, %182 : vector<66x1xf32>
    %189 = arith.subf %187, %188 : vector<66x1xf32>
    %190 = vector.broadcast %182 : vector<66x1xf32> to vector<66x32xf32>
    %191 = arith.subf %174, %190 : vector<66x32xf32>
    %cst_48 = arith.constant 9.99999997E-7 : f32
    %192 = vector.broadcast %cst_48 : f32 to vector<66x1xf32>
    %193 = arith.addf %189, %192 : vector<66x1xf32>
    %194 = math.rsqrt %193 : vector<66x1xf32>
    %195 = vector.broadcast %194 : vector<66x1xf32> to vector<66x32xf32>
    %196 = arith.mulf %191, %195 : vector<66x32xf32>
    %197 = vector.broadcast %176 : vector<1x32xf32> to vector<66x32xf32>
    %198 = arith.mulf %196, %197 : vector<66x32xf32>
    %199 = vector.broadcast %178 : vector<1x32xf32> to vector<66x32xf32>
    %200 = arith.addf %198, %199 : vector<66x32xf32>
    %201 = arith.truncf %200 : vector<66x32xf32> to vector<66x32xbf16>
    %c0_49 = arith.constant 0 : index
    %c0_50 = arith.constant 0 : index
    %c0_51 = arith.constant 0 : index
    %202 = vector.load %arg13[%c0_49, %c0_50, %c0_51] : memref<2x32x64xbf16, #tpu.memory_space<vmem>>, vector<1x32x64xbf16>
    %203 = vector.shape_cast %202 : vector<1x32x64xbf16> to vector<32x64xbf16>
    %cst_52 = arith.constant dense<0.000000e+00> : vector<66x64xf32>
    %204 = tpu.matmul %201, %203, %cst_52 {dimension_numbers = #tpu.dot_dimension_numbers<[1], [0], [0], [1], [0, 0, 1, 1], [], []>} : vector<66x32xbf16>, vector<32x64xbf16>, vector<66x64xf32> -> vector<66x64xf32>
    %c0_53 = arith.constant 0 : index
    %c0_54 = arith.constant 0 : index
    %c0_55 = arith.constant 0 : index
    %205 = vector.load %arg14[%c0_53, %c0_54, %c0_55] : memref<2x1x64xf32, #tpu.memory_space<vmem>>, vector<1x1x64xf32>
    %206 = vector.shape_cast %205 : vector<1x1x64xf32> to vector<1x64xf32>
    %207 = vector.broadcast %206 : vector<1x64xf32> to vector<66x64xf32>
    %208 = arith.addf %204, %207 : vector<66x64xf32>
    %cst_56 = arith.constant 5.000000e-01 : f32
    %209 = vector.broadcast %cst_56 : f32 to vector<66x64xf32>
    %210 = arith.mulf %209, %208 : vector<66x64xf32>
    %cst_57 = arith.constant 1.41421354 : f32
    %211 = vector.broadcast %cst_57 : f32 to vector<66x64xf32>
    %212 = arith.divf %208, %211 : vector<66x64xf32>
    %cst_58 = arith.constant 0.000000e+00 : f32
    %213 = vector.broadcast %cst_58 : f32 to vector<66x64xf32>
    %214 = arith.cmpf olt, %212, %213 : vector<66x64xf32>
    %cst_59 = arith.constant -1.000000e+00 : f32
    %cst_60 = arith.constant 1.000000e+00 : f32
    %215 = vector.broadcast %cst_59 : f32 to vector<66x64xf32>
    %216 = vector.broadcast %cst_60 : f32 to vector<66x64xf32>
    %217 = arith.select %214, %215, %216 : vector<66x64xi1>, vector<66x64xf32>
    %218 = math.absf %212 : vector<66x64xf32>
    %cst_61 = arith.constant 0.327591091 : f32
    %219 = vector.broadcast %cst_61 : f32 to vector<66x64xf32>
    %220 = arith.mulf %219, %218 : vector<66x64xf32>
    %cst_62 = arith.constant 1.000000e+00 : f32
    %221 = vector.broadcast %cst_62 : f32 to vector<66x64xf32>
    %222 = arith.addf %221, %220 : vector<66x64xf32>
    %223 = tpu.reciprocal %222 {approx = true} : vector<66x64xf32> -> vector<66x64xf32>
    %cst_63 = arith.constant 1.06140542 : f32
    %224 = vector.broadcast %cst_63 : f32 to vector<66x64xf32>
    %225 = arith.mulf %224, %223 : vector<66x64xf32>
    %cst_64 = arith.constant -1.45315206 : f32
    %226 = vector.broadcast %cst_64 : f32 to vector<66x64xf32>
    %227 = arith.addf %225, %226 : vector<66x64xf32>
    %228 = arith.mulf %227, %223 : vector<66x64xf32>
    %cst_65 = arith.constant 1.42141378 : f32
    %229 = vector.broadcast %cst_65 : f32 to vector<66x64xf32>
    %230 = arith.addf %228, %229 : vector<66x64xf32>
    %231 = arith.mulf %230, %223 : vector<66x64xf32>
    %cst_66 = arith.constant -0.284496725 : f32
    %232 = vector.broadcast %cst_66 : f32 to vector<66x64xf32>
    %233 = arith.addf %231, %232 : vector<66x64xf32>
    %234 = arith.mulf %233, %223 : vector<66x64xf32>
    %cst_67 = arith.constant 0.254829586 : f32
    %235 = vector.broadcast %cst_67 : f32 to vector<66x64xf32>
    %236 = arith.addf %234, %235 : vector<66x64xf32>
    %237 = arith.mulf %236, %223 : vector<66x64xf32>
    %cst_68 = arith.constant 0.000000e+00 : f32
    %238 = vector.broadcast %cst_68 : f32 to vector<66x64xf32>
    %239 = arith.subf %238, %218 : vector<66x64xf32>
    %240 = arith.mulf %239, %218 : vector<66x64xf32>
    %241 = math.exp %240 : vector<66x64xf32>
    %242 = arith.mulf %237, %241 : vector<66x64xf32>
    %cst_69 = arith.constant 1.000000e+00 : f32
    %243 = vector.broadcast %cst_69 : f32 to vector<66x64xf32>
    %244 = arith.subf %243, %242 : vector<66x64xf32>
    %245 = arith.mulf %217, %244 : vector<66x64xf32>
    %cst_70 = arith.constant 1.000000e+00 : f32
    %246 = vector.broadcast %cst_70 : f32 to vector<66x64xf32>
    %247 = arith.addf %246, %245 : vector<66x64xf32>
    %248 = arith.mulf %210, %247 : vector<66x64xf32>
    %249 = arith.truncf %248 : vector<66x64xf32> to vector<66x64xbf16>
    %c0_71 = arith.constant 0 : index
    %c0_72 = arith.constant 0 : index
    %c0_73 = arith.constant 0 : index
    %250 = vector.load %arg15[%c0_71, %c0_72, %c0_73] : memref<2x64x32xbf16, #tpu.memory_space<vmem>>, vector<1x64x32xbf16>
    %251 = vector.shape_cast %250 : vector<1x64x32xbf16> to vector<64x32xbf16>
    %cst_74 = arith.constant dense<0.000000e+00> : vector<66x32xf32>
    %252 = tpu.matmul %249, %251, %cst_74 {dimension_numbers = #tpu.dot_dimension_numbers<[1], [0], [0], [1], [0, 0, 1, 1], [], []>} : vector<66x64xbf16>, vector<64x32xbf16>, vector<66x32xf32> -> vector<66x32xf32>
    %c0_75 = arith.constant 0 : index
    %c0_76 = arith.constant 0 : index
    %c0_77 = arith.constant 0 : index
    %253 = vector.load %arg16[%c0_75, %c0_76, %c0_77] : memref<2x1x32xf32, #tpu.memory_space<vmem>>, vector<1x1x32xf32>
    %254 = vector.shape_cast %253 : vector<1x1x32xf32> to vector<1x32xf32>
    %255 = vector.broadcast %254 : vector<1x32xf32> to vector<66x32xf32>
    %256 = arith.addf %252, %255 : vector<66x32xf32>
    %257 = arith.addf %174, %256 : vector<66x32xf32>
    %c1 = arith.constant 1 : index
    %c0_78 = arith.constant 0 : index
    %c0_79 = arith.constant 0 : index
    %258 = vector.load %arg5[%c1, %c0_78, %c0_79] : memref<2x1x32xf32, #tpu.memory_space<vmem>>, vector<1x1x32xf32>
    %259 = vector.shape_cast %258 : vector<1x1x32xf32> to vector<1x32xf32>
    %c1_80 = arith.constant 1 : index
    %c0_81 = arith.constant 0 : index
    %c0_82 = arith.constant 0 : index
    %260 = vector.load %arg6[%c1_80, %c0_81, %c0_82] : memref<2x1x32xf32, #tpu.memory_space<vmem>>, vector<1x1x32xf32>
    %261 = vector.shape_cast %260 : vector<1x1x32xf32> to vector<1x32xf32>
    %cst_83 = arith.constant dense<0.000000e+00> : vector<66xf32>
    %262 = vector.multi_reduction <add>, %257, %cst_83 [1] : vector<66x32xf32> to vector<66xf32>
    %263 = vector.shape_cast %262 : vector<66xf32> to vector<66x1xf32>
    %cst_84 = arith.constant 3.200000e+01 : f32
    %264 = vector.broadcast %cst_84 : f32 to vector<66x1xf32>
    %265 = arith.divf %263, %264 : vector<66x1xf32>
    %266 = arith.mulf %257, %257 : vector<66x32xf32>
    %cst_85 = arith.constant dense<0.000000e+00> : vector<66xf32>
    %267 = vector.multi_reduction <add>, %266, %cst_85 [1] : vector<66x32xf32> to vector<66xf32>
    %268 = vector.shape_cast %267 : vector<66xf32> to vector<66x1xf32>
    %cst_86 = arith.constant 3.200000e+01 : f32
    %269 = vector.broadcast %cst_86 : f32 to vector<66x1xf32>
    %270 = arith.divf %268, %269 : vector<66x1xf32>
    %271 = arith.mulf %265, %265 : vector<66x1xf32>
    %272 = arith.subf %270, %271 : vector<66x1xf32>
    %273 = vector.broadcast %265 : vector<66x1xf32> to vector<66x32xf32>
    %274 = arith.subf %257, %273 : vector<66x32xf32>
    %cst_87 = arith.constant 9.99999997E-7 : f32
    %275 = vector.broadcast %cst_87 : f32 to vector<66x1xf32>
    %276 = arith.addf %272, %275 : vector<66x1xf32>
    %277 = math.rsqrt %276 : vector<66x1xf32>
    %278 = vector.broadcast %277 : vector<66x1xf32> to vector<66x32xf32>
    %279 = arith.mulf %274, %278 : vector<66x32xf32>
    %280 = vector.broadcast %259 : vector<1x32xf32> to vector<66x32xf32>
    %281 = arith.mulf %279, %280 : vector<66x32xf32>
    %282 = vector.broadcast %261 : vector<1x32xf32> to vector<66x32xf32>
    %283 = arith.addf %281, %282 : vector<66x32xf32>
    %284 = arith.truncf %283 : vector<66x32xf32> to vector<66x32xbf16>
    %c1_88 = arith.constant 1 : index
    %c0_89 = arith.constant 0 : index
    %c0_90 = arith.constant 0 : index
    %285 = vector.load %arg7[%c1_88, %c0_89, %c0_90] : memref<2x32x96xbf16, #tpu.memory_space<vmem>>, vector<1x32x96xbf16>
    %286 = vector.shape_cast %285 : vector<1x32x96xbf16> to vector<32x96xbf16>
    %cst_91 = arith.constant dense<0.000000e+00> : vector<66x96xf32>
    %287 = tpu.matmul %284, %286, %cst_91 {dimension_numbers = #tpu.dot_dimension_numbers<[1], [0], [0], [1], [0, 0, 1, 1], [], []>} : vector<66x32xbf16>, vector<32x96xbf16>, vector<66x96xf32> -> vector<66x96xf32>
    %c1_92 = arith.constant 1 : index
    %c0_93 = arith.constant 0 : index
    %c0_94 = arith.constant 0 : index
    %288 = vector.load %arg8[%c1_92, %c0_93, %c0_94] : memref<2x1x96xf32, #tpu.memory_space<vmem>>, vector<1x1x96xf32>
    %289 = vector.shape_cast %288 : vector<1x1x96xf32> to vector<1x96xf32>
    %290 = vector.broadcast %289 : vector<1x96xf32> to vector<66x96xf32>
    %291 = arith.addf %287, %290 : vector<66x96xf32>
    %292 = vector.extract_strided_slice %291 {offsets = [0, 0], sizes = [66, 32], strides = [1, 1]} : vector<66x96xf32> to vector<66x32xf32>
    %293 = vector.extract_strided_slice %291 {offsets = [0, 32], sizes = [66, 32], strides = [1, 1]} : vector<66x96xf32> to vector<66x32xf32>
    %294 = arith.truncf %293 : vector<66x32xf32> to vector<66x32xbf16>
    %295 = vector.extract_strided_slice %291 {offsets = [0, 64], sizes = [66, 32], strides = [1, 1]} : vector<66x96xf32> to vector<66x32xf32>
    %296 = arith.truncf %295 : vector<66x32xf32> to vector<66x32xbf16>
    %297 = vector.extract_strided_slice %292 {offsets = [0, 0], sizes = [33, 32], strides = [1, 1]} : vector<66x32xf32> to vector<33x32xf32>
    %298 = vector.extract_strided_slice %292 {offsets = [33, 0], sizes = [33, 32], strides = [1, 1]} : vector<66x32xf32> to vector<33x32xf32>
    %299 = vector.extract_strided_slice %294 {offsets = [0, 0], sizes = [33, 32], strides = [1, 1]} : vector<66x32xbf16> to vector<33x32xbf16>
    %300 = vector.extract_strided_slice %294 {offsets = [33, 0], sizes = [33, 32], strides = [1, 1]} : vector<66x32xbf16> to vector<33x32xbf16>
    %301 = vector.extract_strided_slice %296 {offsets = [0, 0], sizes = [33, 32], strides = [1, 1]} : vector<66x32xbf16> to vector<33x32xbf16>
    %302 = vector.extract_strided_slice %296 {offsets = [33, 0], sizes = [33, 32], strides = [1, 1]} : vector<66x32xbf16> to vector<33x32xbf16>
    %303 = vector.extract_strided_slice %8 {offsets = [0, 0], sizes = [1, 32], strides = [1, 1]} : vector<4x32xf32> to vector<1x32xf32>
    %304 = vector.broadcast %303 : vector<1x32xf32> to vector<33x32xf32>
    %305 = arith.mulf %297, %304 : vector<33x32xf32>
    %306 = vector.extract_strided_slice %8 {offsets = [0, 0], sizes = [1, 32], strides = [1, 1]} : vector<4x32xf32> to vector<1x32xf32>
    %307 = vector.broadcast %306 : vector<1x32xf32> to vector<33x32xf32>
    %308 = arith.mulf %298, %307 : vector<33x32xf32>
    %309 = vector.extract_strided_slice %8 {offsets = [1, 0], sizes = [1, 32], strides = [1, 1]} : vector<4x32xf32> to vector<1x32xf32>
    %310 = vector.broadcast %309 : vector<1x32xf32> to vector<33x32xf32>
    %311 = arith.mulf %297, %310 : vector<33x32xf32>
    %312 = vector.extract_strided_slice %8 {offsets = [1, 0], sizes = [1, 32], strides = [1, 1]} : vector<4x32xf32> to vector<1x32xf32>
    %313 = vector.broadcast %312 : vector<1x32xf32> to vector<33x32xf32>
    %314 = arith.mulf %298, %313 : vector<33x32xf32>
    %315 = vector.extract_strided_slice %8 {offsets = [2, 0], sizes = [1, 32], strides = [1, 1]} : vector<4x32xf32> to vector<1x32xf32>
    %316 = vector.broadcast %315 : vector<1x32xf32> to vector<33x32xf32>
    %317 = arith.mulf %297, %316 : vector<33x32xf32>
    %318 = vector.extract_strided_slice %8 {offsets = [2, 0], sizes = [1, 32], strides = [1, 1]} : vector<4x32xf32> to vector<1x32xf32>
    %319 = vector.broadcast %318 : vector<1x32xf32> to vector<33x32xf32>
    %320 = arith.mulf %298, %319 : vector<33x32xf32>
    %321 = vector.extract_strided_slice %8 {offsets = [3, 0], sizes = [1, 32], strides = [1, 1]} : vector<4x32xf32> to vector<1x32xf32>
    %322 = vector.broadcast %321 : vector<1x32xf32> to vector<33x32xf32>
    %323 = arith.mulf %297, %322 : vector<33x32xf32>
    %324 = vector.extract_strided_slice %8 {offsets = [3, 0], sizes = [1, 32], strides = [1, 1]} : vector<4x32xf32> to vector<1x32xf32>
    %325 = vector.broadcast %324 : vector<1x32xf32> to vector<33x32xf32>
    %326 = arith.mulf %298, %325 : vector<33x32xf32>
    %327 = vector.shape_cast %305 : vector<33x32xf32> to vector<1x33x32xf32>
    %328 = vector.shape_cast %308 : vector<33x32xf32> to vector<1x33x32xf32>
    %329 = vector.shape_cast %311 : vector<33x32xf32> to vector<1x33x32xf32>
    %330 = vector.shape_cast %314 : vector<33x32xf32> to vector<1x33x32xf32>
    %331 = vector.shape_cast %317 : vector<33x32xf32> to vector<1x33x32xf32>
    %332 = vector.shape_cast %320 : vector<33x32xf32> to vector<1x33x32xf32>
    %333 = vector.shape_cast %323 : vector<33x32xf32> to vector<1x33x32xf32>
    %334 = vector.shape_cast %326 : vector<33x32xf32> to vector<1x33x32xf32>
    %335 = tpu.concatenate %327, %328, %329, %330, %331, %332, %333, %334 in 0 : vector<1x33x32xf32>, vector<1x33x32xf32>, vector<1x33x32xf32>, vector<1x33x32xf32>, vector<1x33x32xf32>, vector<1x33x32xf32>, vector<1x33x32xf32>, vector<1x33x32xf32> -> vector<8x33x32xf32>
    %336 = arith.truncf %335 : vector<8x33x32xf32> to vector<8x33x32xbf16>
    %337 = vector.shape_cast %299 : vector<33x32xbf16> to vector<1x33x32xbf16>
    %338 = vector.shape_cast %300 : vector<33x32xbf16> to vector<1x33x32xbf16>
    %339 = vector.shape_cast %299 : vector<33x32xbf16> to vector<1x33x32xbf16>
    %340 = vector.shape_cast %300 : vector<33x32xbf16> to vector<1x33x32xbf16>
    %341 = vector.shape_cast %299 : vector<33x32xbf16> to vector<1x33x32xbf16>
    %342 = vector.shape_cast %300 : vector<33x32xbf16> to vector<1x33x32xbf16>
    %343 = vector.shape_cast %299 : vector<33x32xbf16> to vector<1x33x32xbf16>
    %344 = vector.shape_cast %300 : vector<33x32xbf16> to vector<1x33x32xbf16>
    %345 = tpu.concatenate %337, %338, %339, %340, %341, %342, %343, %344 in 0 : vector<1x33x32xbf16>, vector<1x33x32xbf16>, vector<1x33x32xbf16>, vector<1x33x32xbf16>, vector<1x33x32xbf16>, vector<1x33x32xbf16>, vector<1x33x32xbf16>, vector<1x33x32xbf16> -> vector<8x33x32xbf16>
    %346 = vector.shape_cast %301 : vector<33x32xbf16> to vector<1x33x32xbf16>
    %347 = vector.shape_cast %302 : vector<33x32xbf16> to vector<1x33x32xbf16>
    %348 = vector.shape_cast %301 : vector<33x32xbf16> to vector<1x33x32xbf16>
    %349 = vector.shape_cast %302 : vector<33x32xbf16> to vector<1x33x32xbf16>
    %350 = vector.shape_cast %301 : vector<33x32xbf16> to vector<1x33x32xbf16>
    %351 = vector.shape_cast %302 : vector<33x32xbf16> to vector<1x33x32xbf16>
    %352 = vector.shape_cast %301 : vector<33x32xbf16> to vector<1x33x32xbf16>
    %353 = vector.shape_cast %302 : vector<33x32xbf16> to vector<1x33x32xbf16>
    %354 = tpu.concatenate %346, %347, %348, %349, %350, %351, %352, %353 in 0 : vector<1x33x32xbf16>, vector<1x33x32xbf16>, vector<1x33x32xbf16>, vector<1x33x32xbf16>, vector<1x33x32xbf16>, vector<1x33x32xbf16>, vector<1x33x32xbf16>, vector<1x33x32xbf16> -> vector<8x33x32xbf16>
    "tpu.trace_start"() <{level = 10 : i32, message = "nqh,nkh->nqk"}> : () -> ()
    %cst_95 = arith.constant dense<0.000000e+00> : vector<8x33x33xf32>
    %355 = tpu.matmul %336, %345, %cst_95 {dimension_numbers = #tpu.dot_dimension_numbers<[2], [2], [1], [1], [0, 0, 0, 1, 1, 1], [0], [0]>} : vector<8x33x32xbf16>, vector<8x33x32xbf16>, vector<8x33x33xf32> -> vector<8x33x33xf32>
    "tpu.trace_stop"() : () -> ()
    %cst_96 = arith.constant dense<0xFF800000> : vector<8x33xf32>
    %356 = vector.multi_reduction <maximumf>, %355, %cst_96 [2] : vector<8x33x33xf32> to vector<8x33xf32>
    %357 = vector.shape_cast %356 : vector<8x33xf32> to vector<8x33x1xf32>
    %358 = vector.broadcast %357 : vector<8x33x1xf32> to vector<8x33x33xf32>
    %359 = arith.subf %355, %358 : vector<8x33x33xf32>
    %360 = math.exp %359 : vector<8x33x33xf32>
    %cst_97 = arith.constant dense<0.000000e+00> : vector<8x33xf32>
    %361 = vector.multi_reduction <add>, %360, %cst_97 [2] : vector<8x33x33xf32> to vector<8x33xf32>
    %362 = vector.shape_cast %361 : vector<8x33xf32> to vector<8x33x1xf32>
    %363 = tpu.reciprocal %362 {approx = true} : vector<8x33x1xf32> -> vector<8x33x1xf32>
    %364 = vector.broadcast %363 : vector<8x33x1xf32> to vector<8x33x33xf32>
    %365 = arith.mulf %360, %364 : vector<8x33x33xf32>
    %366 = arith.truncf %365 : vector<8x33x33xf32> to vector<8x33x33xbf16>
    "tpu.trace_start"() <{level = 10 : i32, message = "nqk,nkh->nqh"}> : () -> ()
    %cst_98 = arith.constant dense<0.000000e+00> : vector<8x33x32xf32>
    %367 = tpu.matmul %366, %354, %cst_98 {dimension_numbers = #tpu.dot_dimension_numbers<[2], [1], [1], [2], [0, 0, 0, 1, 1, 2], [0], [0]>} : vector<8x33x33xbf16>, vector<8x33x32xbf16>, vector<8x33x32xf32> -> vector<8x33x32xf32>
    "tpu.trace_stop"() : () -> ()
    %368 = vector.extract_strided_slice %367 {offsets = [0, 0, 0], sizes = [1, 33, 32], strides = [1, 1, 1]} : vector<8x33x32xf32> to vector<1x33x32xf32>
    %369 = vector.shape_cast %368 : vector<1x33x32xf32> to vector<33x32xf32>
    %370 = vector.extract_strided_slice %8 {offsets = [0, 0], sizes = [1, 32], strides = [1, 1]} : vector<4x32xf32> to vector<1x32xf32>
    %371 = vector.broadcast %370 : vector<1x32xf32> to vector<33x32xf32>
    %372 = arith.mulf %369, %371 : vector<33x32xf32>
    %373 = vector.extract_strided_slice %367 {offsets = [2, 0, 0], sizes = [1, 33, 32], strides = [1, 1, 1]} : vector<8x33x32xf32> to vector<1x33x32xf32>
    %374 = vector.shape_cast %373 : vector<1x33x32xf32> to vector<33x32xf32>
    %375 = vector.extract_strided_slice %8 {offsets = [1, 0], sizes = [1, 32], strides = [1, 1]} : vector<4x32xf32> to vector<1x32xf32>
    %376 = vector.broadcast %375 : vector<1x32xf32> to vector<33x32xf32>
    %377 = arith.mulf %374, %376 : vector<33x32xf32>
    %378 = arith.addf %372, %377 : vector<33x32xf32>
    %379 = vector.extract_strided_slice %367 {offsets = [4, 0, 0], sizes = [1, 33, 32], strides = [1, 1, 1]} : vector<8x33x32xf32> to vector<1x33x32xf32>
    %380 = vector.shape_cast %379 : vector<1x33x32xf32> to vector<33x32xf32>
    %381 = vector.extract_strided_slice %8 {offsets = [2, 0], sizes = [1, 32], strides = [1, 1]} : vector<4x32xf32> to vector<1x32xf32>
    %382 = vector.broadcast %381 : vector<1x32xf32> to vector<33x32xf32>
    %383 = arith.mulf %380, %382 : vector<33x32xf32>
    %384 = arith.addf %378, %383 : vector<33x32xf32>
    %385 = vector.extract_strided_slice %367 {offsets = [6, 0, 0], sizes = [1, 33, 32], strides = [1, 1, 1]} : vector<8x33x32xf32> to vector<1x33x32xf32>
    %386 = vector.shape_cast %385 : vector<1x33x32xf32> to vector<33x32xf32>
    %387 = vector.extract_strided_slice %8 {offsets = [3, 0], sizes = [1, 32], strides = [1, 1]} : vector<4x32xf32> to vector<1x32xf32>
    %388 = vector.broadcast %387 : vector<1x32xf32> to vector<33x32xf32>
    %389 = arith.mulf %386, %388 : vector<33x32xf32>
    %390 = arith.addf %384, %389 : vector<33x32xf32>
    %391 = vector.extract_strided_slice %367 {offsets = [1, 0, 0], sizes = [1, 33, 32], strides = [1, 1, 1]} : vector<8x33x32xf32> to vector<1x33x32xf32>
    %392 = vector.shape_cast %391 : vector<1x33x32xf32> to vector<33x32xf32>
    %393 = vector.extract_strided_slice %8 {offsets = [0, 0], sizes = [1, 32], strides = [1, 1]} : vector<4x32xf32> to vector<1x32xf32>
    %394 = vector.broadcast %393 : vector<1x32xf32> to vector<33x32xf32>
    %395 = arith.mulf %392, %394 : vector<33x32xf32>
    %396 = vector.extract_strided_slice %367 {offsets = [3, 0, 0], sizes = [1, 33, 32], strides = [1, 1, 1]} : vector<8x33x32xf32> to vector<1x33x32xf32>
    %397 = vector.shape_cast %396 : vector<1x33x32xf32> to vector<33x32xf32>
    %398 = vector.extract_strided_slice %8 {offsets = [1, 0], sizes = [1, 32], strides = [1, 1]} : vector<4x32xf32> to vector<1x32xf32>
    %399 = vector.broadcast %398 : vector<1x32xf32> to vector<33x32xf32>
    %400 = arith.mulf %397, %399 : vector<33x32xf32>
    %401 = arith.addf %395, %400 : vector<33x32xf32>
    %402 = vector.extract_strided_slice %367 {offsets = [5, 0, 0], sizes = [1, 33, 32], strides = [1, 1, 1]} : vector<8x33x32xf32> to vector<1x33x32xf32>
    %403 = vector.shape_cast %402 : vector<1x33x32xf32> to vector<33x32xf32>
    %404 = vector.extract_strided_slice %8 {offsets = [2, 0], sizes = [1, 32], strides = [1, 1]} : vector<4x32xf32> to vector<1x32xf32>
    %405 = vector.broadcast %404 : vector<1x32xf32> to vector<33x32xf32>
    %406 = arith.mulf %403, %405 : vector<33x32xf32>
    %407 = arith.addf %401, %406 : vector<33x32xf32>
    %408 = vector.extract_strided_slice %367 {offsets = [7, 0, 0], sizes = [1, 33, 32], strides = [1, 1, 1]} : vector<8x33x32xf32> to vector<1x33x32xf32>
    %409 = vector.shape_cast %408 : vector<1x33x32xf32> to vector<33x32xf32>
    %410 = vector.extract_strided_slice %8 {offsets = [3, 0], sizes = [1, 32], strides = [1, 1]} : vector<4x32xf32> to vector<1x32xf32>
    %411 = vector.broadcast %410 : vector<1x32xf32> to vector<33x32xf32>
    %412 = arith.mulf %409, %411 : vector<33x32xf32>
    %413 = arith.addf %407, %412 : vector<33x32xf32>
    %414 = tpu.concatenate %390, %413 in 0 : vector<33x32xf32>, vector<33x32xf32> -> vector<66x32xf32>
    %415 = arith.truncf %414 : vector<66x32xf32> to vector<66x32xbf16>
    %c1_99 = arith.constant 1 : index
    %c0_100 = arith.constant 0 : index
    %c0_101 = arith.constant 0 : index
    %416 = vector.load %arg9[%c1_99, %c0_100, %c0_101] : memref<2x32x32xbf16, #tpu.memory_space<vmem>>, vector<1x32x32xbf16>
    %417 = vector.shape_cast %416 : vector<1x32x32xbf16> to vector<32x32xbf16>
    %cst_102 = arith.constant dense<0.000000e+00> : vector<66x32xf32>
    %418 = tpu.matmul %415, %417, %cst_102 {dimension_numbers = #tpu.dot_dimension_numbers<[1], [0], [0], [1], [0, 0, 1, 1], [], []>} : vector<66x32xbf16>, vector<32x32xbf16>, vector<66x32xf32> -> vector<66x32xf32>
    %c1_103 = arith.constant 1 : index
    %c0_104 = arith.constant 0 : index
    %c0_105 = arith.constant 0 : index
    %419 = vector.load %arg10[%c1_103, %c0_104, %c0_105] : memref<2x1x32xf32, #tpu.memory_space<vmem>>, vector<1x1x32xf32>
    %420 = vector.shape_cast %419 : vector<1x1x32xf32> to vector<1x32xf32>
    %421 = vector.broadcast %420 : vector<1x32xf32> to vector<66x32xf32>
    %422 = arith.addf %418, %421 : vector<66x32xf32>
    %423 = arith.addf %257, %422 : vector<66x32xf32>
    %c1_106 = arith.constant 1 : index
    %c0_107 = arith.constant 0 : index
    %c0_108 = arith.constant 0 : index
    %424 = vector.load %arg11[%c1_106, %c0_107, %c0_108] : memref<2x1x32xf32, #tpu.memory_space<vmem>>, vector<1x1x32xf32>
    %425 = vector.shape_cast %424 : vector<1x1x32xf32> to vector<1x32xf32>
    %c1_109 = arith.constant 1 : index
    %c0_110 = arith.constant 0 : index
    %c0_111 = arith.constant 0 : index
    %426 = vector.load %arg12[%c1_109, %c0_110, %c0_111] : memref<2x1x32xf32, #tpu.memory_space<vmem>>, vector<1x1x32xf32>
    %427 = vector.shape_cast %426 : vector<1x1x32xf32> to vector<1x32xf32>
    %cst_112 = arith.constant dense<0.000000e+00> : vector<66xf32>
    %428 = vector.multi_reduction <add>, %423, %cst_112 [1] : vector<66x32xf32> to vector<66xf32>
    %429 = vector.shape_cast %428 : vector<66xf32> to vector<66x1xf32>
    %cst_113 = arith.constant 3.200000e+01 : f32
    %430 = vector.broadcast %cst_113 : f32 to vector<66x1xf32>
    %431 = arith.divf %429, %430 : vector<66x1xf32>
    %432 = arith.mulf %423, %423 : vector<66x32xf32>
    %cst_114 = arith.constant dense<0.000000e+00> : vector<66xf32>
    %433 = vector.multi_reduction <add>, %432, %cst_114 [1] : vector<66x32xf32> to vector<66xf32>
    %434 = vector.shape_cast %433 : vector<66xf32> to vector<66x1xf32>
    %cst_115 = arith.constant 3.200000e+01 : f32
    %435 = vector.broadcast %cst_115 : f32 to vector<66x1xf32>
    %436 = arith.divf %434, %435 : vector<66x1xf32>
    %437 = arith.mulf %431, %431 : vector<66x1xf32>
    %438 = arith.subf %436, %437 : vector<66x1xf32>
    %439 = vector.broadcast %431 : vector<66x1xf32> to vector<66x32xf32>
    %440 = arith.subf %423, %439 : vector<66x32xf32>
    %cst_116 = arith.constant 9.99999997E-7 : f32
    %441 = vector.broadcast %cst_116 : f32 to vector<66x1xf32>
    %442 = arith.addf %438, %441 : vector<66x1xf32>
    %443 = math.rsqrt %442 : vector<66x1xf32>
    %444 = vector.broadcast %443 : vector<66x1xf32> to vector<66x32xf32>
    %445 = arith.mulf %440, %444 : vector<66x32xf32>
    %446 = vector.broadcast %425 : vector<1x32xf32> to vector<66x32xf32>
    %447 = arith.mulf %445, %446 : vector<66x32xf32>
    %448 = vector.broadcast %427 : vector<1x32xf32> to vector<66x32xf32>
    %449 = arith.addf %447, %448 : vector<66x32xf32>
    %450 = arith.truncf %449 : vector<66x32xf32> to vector<66x32xbf16>
    %c1_117 = arith.constant 1 : index
    %c0_118 = arith.constant 0 : index
    %c0_119 = arith.constant 0 : index
    %451 = vector.load %arg13[%c1_117, %c0_118, %c0_119] : memref<2x32x64xbf16, #tpu.memory_space<vmem>>, vector<1x32x64xbf16>
    %452 = vector.shape_cast %451 : vector<1x32x64xbf16> to vector<32x64xbf16>
    %cst_120 = arith.constant dense<0.000000e+00> : vector<66x64xf32>
    %453 = tpu.matmul %450, %452, %cst_120 {dimension_numbers = #tpu.dot_dimension_numbers<[1], [0], [0], [1], [0, 0, 1, 1], [], []>} : vector<66x32xbf16>, vector<32x64xbf16>, vector<66x64xf32> -> vector<66x64xf32>
    %c1_121 = arith.constant 1 : index
    %c0_122 = arith.constant 0 : index
    %c0_123 = arith.constant 0 : index
    %454 = vector.load %arg14[%c1_121, %c0_122, %c0_123] : memref<2x1x64xf32, #tpu.memory_space<vmem>>, vector<1x1x64xf32>
    %455 = vector.shape_cast %454 : vector<1x1x64xf32> to vector<1x64xf32>
    %456 = vector.broadcast %455 : vector<1x64xf32> to vector<66x64xf32>
    %457 = arith.addf %453, %456 : vector<66x64xf32>
    %cst_124 = arith.constant 5.000000e-01 : f32
    %458 = vector.broadcast %cst_124 : f32 to vector<66x64xf32>
    %459 = arith.mulf %458, %457 : vector<66x64xf32>
    %cst_125 = arith.constant 1.41421354 : f32
    %460 = vector.broadcast %cst_125 : f32 to vector<66x64xf32>
    %461 = arith.divf %457, %460 : vector<66x64xf32>
    %cst_126 = arith.constant 0.000000e+00 : f32
    %462 = vector.broadcast %cst_126 : f32 to vector<66x64xf32>
    %463 = arith.cmpf olt, %461, %462 : vector<66x64xf32>
    %cst_127 = arith.constant -1.000000e+00 : f32
    %cst_128 = arith.constant 1.000000e+00 : f32
    %464 = vector.broadcast %cst_127 : f32 to vector<66x64xf32>
    %465 = vector.broadcast %cst_128 : f32 to vector<66x64xf32>
    %466 = arith.select %463, %464, %465 : vector<66x64xi1>, vector<66x64xf32>
    %467 = math.absf %461 : vector<66x64xf32>
    %cst_129 = arith.constant 0.327591091 : f32
    %468 = vector.broadcast %cst_129 : f32 to vector<66x64xf32>
    %469 = arith.mulf %468, %467 : vector<66x64xf32>
    %cst_130 = arith.constant 1.000000e+00 : f32
    %470 = vector.broadcast %cst_130 : f32 to vector<66x64xf32>
    %471 = arith.addf %470, %469 : vector<66x64xf32>
    %472 = tpu.reciprocal %471 {approx = true} : vector<66x64xf32> -> vector<66x64xf32>
    %cst_131 = arith.constant 1.06140542 : f32
    %473 = vector.broadcast %cst_131 : f32 to vector<66x64xf32>
    %474 = arith.mulf %473, %472 : vector<66x64xf32>
    %cst_132 = arith.constant -1.45315206 : f32
    %475 = vector.broadcast %cst_132 : f32 to vector<66x64xf32>
    %476 = arith.addf %474, %475 : vector<66x64xf32>
    %477 = arith.mulf %476, %472 : vector<66x64xf32>
    %cst_133 = arith.constant 1.42141378 : f32
    %478 = vector.broadcast %cst_133 : f32 to vector<66x64xf32>
    %479 = arith.addf %477, %478 : vector<66x64xf32>
    %480 = arith.mulf %479, %472 : vector<66x64xf32>
    %cst_134 = arith.constant -0.284496725 : f32
    %481 = vector.broadcast %cst_134 : f32 to vector<66x64xf32>
    %482 = arith.addf %480, %481 : vector<66x64xf32>
    %483 = arith.mulf %482, %472 : vector<66x64xf32>
    %cst_135 = arith.constant 0.254829586 : f32
    %484 = vector.broadcast %cst_135 : f32 to vector<66x64xf32>
    %485 = arith.addf %483, %484 : vector<66x64xf32>
    %486 = arith.mulf %485, %472 : vector<66x64xf32>
    %cst_136 = arith.constant 0.000000e+00 : f32
    %487 = vector.broadcast %cst_136 : f32 to vector<66x64xf32>
    %488 = arith.subf %487, %467 : vector<66x64xf32>
    %489 = arith.mulf %488, %467 : vector<66x64xf32>
    %490 = math.exp %489 : vector<66x64xf32>
    %491 = arith.mulf %486, %490 : vector<66x64xf32>
    %cst_137 = arith.constant 1.000000e+00 : f32
    %492 = vector.broadcast %cst_137 : f32 to vector<66x64xf32>
    %493 = arith.subf %492, %491 : vector<66x64xf32>
    %494 = arith.mulf %466, %493 : vector<66x64xf32>
    %cst_138 = arith.constant 1.000000e+00 : f32
    %495 = vector.broadcast %cst_138 : f32 to vector<66x64xf32>
    %496 = arith.addf %495, %494 : vector<66x64xf32>
    %497 = arith.mulf %459, %496 : vector<66x64xf32>
    %498 = arith.truncf %497 : vector<66x64xf32> to vector<66x64xbf16>
    %c1_139 = arith.constant 1 : index
    %c0_140 = arith.constant 0 : index
    %c0_141 = arith.constant 0 : index
    %499 = vector.load %arg15[%c1_139, %c0_140, %c0_141] : memref<2x64x32xbf16, #tpu.memory_space<vmem>>, vector<1x64x32xbf16>
    %500 = vector.shape_cast %499 : vector<1x64x32xbf16> to vector<64x32xbf16>
    %cst_142 = arith.constant dense<0.000000e+00> : vector<66x32xf32>
    %501 = tpu.matmul %498, %500, %cst_142 {dimension_numbers = #tpu.dot_dimension_numbers<[1], [0], [0], [1], [0, 0, 1, 1], [], []>} : vector<66x64xbf16>, vector<64x32xbf16>, vector<66x32xf32> -> vector<66x32xf32>
    %c1_143 = arith.constant 1 : index
    %c0_144 = arith.constant 0 : index
    %c0_145 = arith.constant 0 : index
    %502 = vector.load %arg16[%c1_143, %c0_144, %c0_145] : memref<2x1x32xf32, #tpu.memory_space<vmem>>, vector<1x1x32xf32>
    %503 = vector.shape_cast %502 : vector<1x1x32xf32> to vector<1x32xf32>
    %504 = vector.broadcast %503 : vector<1x32xf32> to vector<66x32xf32>
    %505 = arith.addf %501, %504 : vector<66x32xf32>
    %506 = arith.addf %423, %505 : vector<66x32xf32>
    %c0_146 = arith.constant 0 : index
    %c0_147 = arith.constant 0 : index
    %507 = vector.load %arg17[%c0_146, %c0_147] : memref<1x32xf32, #tpu.memory_space<vmem>>, vector<1x32xf32>
    %c0_148 = arith.constant 0 : index
    %c0_149 = arith.constant 0 : index
    %508 = vector.load %arg18[%c0_148, %c0_149] : memref<1x32xf32, #tpu.memory_space<vmem>>, vector<1x32xf32>
    %cst_150 = arith.constant dense<0.000000e+00> : vector<66xf32>
    %509 = vector.multi_reduction <add>, %506, %cst_150 [1] : vector<66x32xf32> to vector<66xf32>
    %510 = vector.shape_cast %509 : vector<66xf32> to vector<66x1xf32>
    %cst_151 = arith.constant 3.200000e+01 : f32
    %511 = vector.broadcast %cst_151 : f32 to vector<66x1xf32>
    %512 = arith.divf %510, %511 : vector<66x1xf32>
    %513 = arith.mulf %506, %506 : vector<66x32xf32>
    %cst_152 = arith.constant dense<0.000000e+00> : vector<66xf32>
    %514 = vector.multi_reduction <add>, %513, %cst_152 [1] : vector<66x32xf32> to vector<66xf32>
    %515 = vector.shape_cast %514 : vector<66xf32> to vector<66x1xf32>
    %cst_153 = arith.constant 3.200000e+01 : f32
    %516 = vector.broadcast %cst_153 : f32 to vector<66x1xf32>
    %517 = arith.divf %515, %516 : vector<66x1xf32>
    %518 = arith.mulf %512, %512 : vector<66x1xf32>
    %519 = arith.subf %517, %518 : vector<66x1xf32>
    %520 = vector.broadcast %512 : vector<66x1xf32> to vector<66x32xf32>
    %521 = arith.subf %506, %520 : vector<66x32xf32>
    %cst_154 = arith.constant 9.99999997E-7 : f32
    %522 = vector.broadcast %cst_154 : f32 to vector<66x1xf32>
    %523 = arith.addf %519, %522 : vector<66x1xf32>
    %524 = math.rsqrt %523 : vector<66x1xf32>
    %525 = vector.broadcast %524 : vector<66x1xf32> to vector<66x32xf32>
    %526 = arith.mulf %521, %525 : vector<66x32xf32>
    %527 = vector.broadcast %507 : vector<1x32xf32> to vector<66x32xf32>
    %528 = arith.mulf %526, %527 : vector<66x32xf32>
    %529 = vector.broadcast %508 : vector<1x32xf32> to vector<66x32xf32>
    %530 = arith.addf %528, %529 : vector<66x32xf32>
    %c0_155 = arith.constant 0 : index
    %c0_156 = arith.constant 0 : index
    %531 = vector.load %arg19[%c0_155, %c0_156] : memref<66x32xf32, #tpu.memory_space<vmem>>, vector<66x32xf32>
    tpu.vector_store %arg19[%c0_155, %c0_156], %530 {strides = array<i32>} : memref<66x32xf32, #tpu.memory_space<vmem>>, vector<66x32xf32>,
    return
  }
}

</mosaic_0001>

<llo_original>
// kernel: tpu_custom_call.1
$region0: #{tpu_custom_call.1}
  #allocation0 [shape = 'u32[]', space=smem, size = 0x4, offset = 0x4, fixed_abs, tag = 'smem constant byte address 0x4 - core index']
  #allocation1 [shape = 'u32[144,128]{1,0:T(1,128)}', space=vmem, size = 0x12000, scoped, tag = 'internal scratch']
  %s0 = inlined_call_operand.vmem [shape: bf16[66,97], index: 0, kind: input, shape index: {}]
  %s1 = inlined_call_operand.vmem [shape: bf16[97,32], index: 1, kind: input, shape index: {}]
  %s2 = inlined_call_operand.vmem [shape: f32[1,32], index: 2, kind: input, shape index: {}]
  %s3 = inlined_call_operand.vmem [shape: f32[66,32], index: 3, kind: input, shape index: {}]
  %s4 = inlined_call_operand.vmem [shape: f32[4,32], index: 4, kind: input, shape index: {}]
  %s5 = inlined_call_operand.vmem [shape: f32[2,1,32], index: 5, kind: input, shape index: {}]
  %s6 = inlined_call_operand.vmem [shape: f32[2,1,32], index: 6, kind: input, shape index: {}]
  %s7 = inlined_call_operand.vmem [shape: bf16[2,32,96], index: 7, kind: input, shape index: {}]
  %s8 = inlined_call_operand.vmem [shape: f32[2,1,96], index: 8, kind: input, shape index: {}]
  %s9 = inlined_call_operand.vmem [shape: bf16[2,32,32], index: 9, kind: input, shape index: {}]
  %s10 = inlined_call_operand.vmem [shape: f32[2,1,32], index: 10, kind: input, shape index: {}]
  %s11 = inlined_call_operand.vmem [shape: f32[2,1,32], index: 11, kind: input, shape index: {}]
  %s12 = inlined_call_operand.vmem [shape: f32[2,1,32], index: 12, kind: input, shape index: {}]
  %s13 = inlined_call_operand.vmem [shape: bf16[2,32,64], index: 13, kind: input, shape index: {}]
  %s14 = inlined_call_operand.vmem [shape: f32[2,1,64], index: 14, kind: input, shape index: {}]
  %s15 = inlined_call_operand.vmem [shape: bf16[2,64,32], index: 15, kind: input, shape index: {}]
  %s16 = inlined_call_operand.vmem [shape: f32[2,1,32], index: 16, kind: input, shape index: {}]
  %s17 = inlined_call_operand.vmem [shape: f32[1,32], index: 17, kind: input, shape index: {}]
  %s18 = inlined_call_operand.vmem [shape: f32[1,32], index: 18, kind: input, shape index: {}]
  %s19 = inlined_call_operand.vmem [shape: f32[66,32], index: 19, kind: output, shape index: {}]
  %s20 = sld [smem:[#allocation0]]
  $region86: #{tpu_custom_call.1} parent=0
    _
  %s22 = ssub.s32 1, %s20
  %s23 = scalar_select 0, %s22, %s20
  // Predicated region
  $region2: #{tpu_custom_call.1} parent=0 // pred_check
    _
  $region3: #{tpu_custom_call.1} parent=0 // pred_check_branch
    %25 = sbr.rel (0) target = $region5
  $region4: #{tpu_custom_call.1} parent=0 // pred_region
    _
  $region5: #{tpu_custom_call.1} parent=0 // pred_fallthru
    _
  // Predicated region
  $region6: #{tpu_custom_call.1} parent=0 // pred_check
    _
  $region7: #{tpu_custom_call.1} parent=0 // pred_check_branch
    %27 = sbr.rel (0) target = $region9
  $region8: #{tpu_custom_call.1} parent=0 // pred_region
    _
  $region9: #{tpu_custom_call.1} parent=0 // pred_fallthru
    _
  // Predicated region
  $region10: #{tpu_custom_call.1} parent=0 // pred_check
    _
  $region11: #{tpu_custom_call.1} parent=0 // pred_check_branch
    %29 = sbr.rel (0) target = $region13
  $region12: #{tpu_custom_call.1} parent=0 // pred_region
    _
  $region13: #{tpu_custom_call.1} parent=0 // pred_fallthru
    _
  // Predicated region
  $region14: #{tpu_custom_call.1} parent=0 // pred_check
    _
  $region15: #{tpu_custom_call.1} parent=0 // pred_check_branch
    %31 = sbr.rel (0) target = $region17
  $region16: #{tpu_custom_call.1} parent=0 // pred_region
    _
  $region17: #{tpu_custom_call.1} parent=0 // pred_fallthru
    _
  // Predicated region
  $region18: #{tpu_custom_call.1} parent=0 // pred_check
    _
  $region19: #{tpu_custom_call.1} parent=0 // pred_check_branch
    %33 = sbr.rel (0) target = $region21
  $region20: #{tpu_custom_call.1} parent=0 // pred_region
    _
  $region21: #{tpu_custom_call.1} parent=0 // pred_fallthru
    _
  // Predicated region
  $region22: #{tpu_custom_call.1} parent=0 // pred_check
    _
  $region23: #{tpu_custom_call.1} parent=0 // pred_check_branch
    %35 = sbr.rel (0) target = $region25
  $region24: #{tpu_custom_call.1} parent=0 // pred_region
    _
  $region25: #{tpu_custom_call.1} parent=0 // pred_fallthru
    _
  // Predicated region
  $region26: #{tpu_custom_call.1} parent=0 // pred_check
    _
  $region27: #{tpu_custom_call.1} parent=0 // pred_check_branch
    %37 = sbr.rel (0) target = $region29
  $region28: #{tpu_custom_call.1} parent=0 // pred_region
    _
  $region29: #{tpu_custom_call.1} parent=0 // pred_fallthru
    _
  // Predicated region
  $region30: #{tpu_custom_call.1} parent=0 // pred_check
    _
  $region31: #{tpu_custom_call.1} parent=0 // pred_check_branch
    %39 = sbr.rel (0) target = $region33
  $region32: #{tpu_custom_call.1} parent=0 // pred_region
    _
  $region33: #{tpu_custom_call.1} parent=0 // pred_fallthru
    _
  // Predicated region
  $region34: #{tpu_custom_call.1} parent=0 // pred_check
    _
  $region35: #{tpu_custom_call.1} parent=0 // pred_check_branch
    %41 = sbr.rel (0) target = $region37
  $region36: #{tpu_custom_call.1} parent=0 // pred_region
    _
  $region37: #{tpu_custom_call.1} parent=0 // pred_fallthru
    _
  // Predicated region
  $region38: #{tpu_custom_call.1} parent=0 // pred_check
    _
  $region39: #{tpu_custom_call.1} parent=0 // pred_check_branch
    %43 = sbr.rel (0) target = $region41
  $region40: #{tpu_custom_call.1} parent=0 // pred_region
    _
  $region41: #{tpu_custom_call.1} parent=0 // pred_fallthru
    _
  // Predicated region
  $region42: #{tpu_custom_call.1} parent=0 // pred_check
    _
  $region43: #{tpu_custom_call.1} parent=0 // pred_check_branch
    %45 = sbr.rel (0) target = $region45
  $region44: #{tpu_custom_call.1} parent=0 // pred_region
    _
  $region45: #{tpu_custom_call.1} parent=0 // pred_fallthru
    _
  // Predicated region
  $region46: #{tpu_custom_call.1} parent=0 // pred_check
    _
  $region47: #{tpu_custom_call.1} parent=0 // pred_check_branch
    %47 = sbr.rel (0) target = $region49
  $region48: #{tpu_custom_call.1} parent=0 // pred_region
    _
  $region49: #{tpu_custom_call.1} parent=0 // pred_fallthru
    _
  // Predicated region
  $region50: #{tpu_custom_call.1} parent=0 // pred_check
    _
  $region51: #{tpu_custom_call.1} parent=0 // pred_check_branch
    %49 = sbr.rel (0) target = $region53
  $region52: #{tpu_custom_call.1} parent=0 // pred_region
    _
  $region53: #{tpu_custom_call.1} parent=0 // pred_fallthru
    _
  // Predicated region
  $region54: #{tpu_custom_call.1} parent=0 // pred_check
    _
  $region55: #{tpu_custom_call.1} parent=0 // pred_check_branch
    %51 = sbr.rel (0) target = $region57
  $region56: #{tpu_custom_call.1} parent=0 // pred_region
    _
  $region57: #{tpu_custom_call.1} parent=0 // pred_fallthru
    _
  // Predicated region
  $region58: #{tpu_custom_call.1} parent=0 // pred_check
    _
  $region59: #{tpu_custom_call.1} parent=0 // pred_check_branch
    %53 = sbr.rel (0) target = $region61
  $region60: #{tpu_custom_call.1} parent=0 // pred_region
    _
  $region61: #{tpu_custom_call.1} parent=0 // pred_fallthru
    _
  // Predicated region
  $region62: #{tpu_custom_call.1} parent=0 // pred_check
    _
  $region63: #{tpu_custom_call.1} parent=0 // pred_check_branch
    %55 = sbr.rel (0) target = $region65
  $region64: #{tpu_custom_call.1} parent=0 // pred_region
    _
  $region65: #{tpu_custom_call.1} parent=0 // pred_fallthru
    _
  // Predicated region
  $region66: #{tpu_custom_call.1} parent=0 // pred_check
    _
  $region67: #{tpu_custom_call.1} parent=0 // pred_check_branch
    %57 = sbr.rel (0) target = $region69
  $region68: #{tpu_custom_call.1} parent=0 // pred_region
    _
  $region69: #{tpu_custom_call.1} parent=0 // pred_fallthru
    _
  // Predicated region
  $region70: #{tpu_custom_call.1} parent=0 // pred_check
    _
  $region71: #{tpu_custom_call.1} parent=0 // pred_check_branch
    %59 = sbr.rel (0) target = $region73
  $region72: #{tpu_custom_call.1} parent=0 // pred_region
    _
  $region73: #{tpu_custom_call.1} parent=0 // pred_fallthru
    _
  // Predicated region
  $region74: #{tpu_custom_call.1} parent=0 // pred_check
    _
  $region75: #{tpu_custom_call.1} parent=0 // pred_check_branch
    %61 = sbr.rel (0) target = $region77
  $region76: #{tpu_custom_call.1} parent=0 // pred_region
    _
  $region77: #{tpu_custom_call.1} parent=0 // pred_fallthru
    _
  %v63 = vld [vmem:[%s0] sm:$0xf]
  %v64 = vld [vmem:[%s0 + $0x4] sm:$0xf]
  %v65 = vld [vmem:[%s0 + $0x8] sm:$0xf]
  %v66 = vld [vmem:[%s0 + $0xc] sm:$0xf]
  %v67 = vld [vmem:[%s0 + $0x10] sm:$0xf]
  %v68 = vld [vmem:[%s0 + $0x14] sm:$0xf]
  %v69 = vld [vmem:[%s0 + $0x18] sm:$0xf]
  %v70 = vld [vmem:[%s0 + $0x1c] sm:$0xf]
  %v71 = vld [vmem:[%s0 + $0x20] sm:$0x1]
  %v72 = vld [vmem:[%s1] sm:$0xf]
  %v73 = vld [vmem:[%s1 + $0x4] sm:$0xf]
  %v74 = vld [vmem:[%s1 + $0x8] sm:$0xf]
  %v75 = vld [vmem:[%s1 + $0xc] sm:$0xf]
  %v76 = vld [vmem:[%s1 + $0x10] sm:$0xf]
  %v77 = vld [vmem:[%s1 + $0x14] sm:$0xf]
  %v78 = vld [vmem:[%s1 + $0x18] sm:$0xf]
  %v79 = vld [vmem:[%s1 + $0x1c] sm:$0xf]
  %v80 = vld [vmem:[%s1 + $0x20] sm:$0xf]
  %v81 = vld [vmem:[%s1 + $0x24] sm:$0xf]
  %v82 = vld [vmem:[%s1 + $0x28] sm:$0xf]
  %v83 = vld [vmem:[%s1 + $0x2c] sm:$0xf]
  %v84 = vld [vmem:[%s1 + $0x30] sm:$0x1]
  %v85 = vld [vmem:[%s2] sm:$0x1]
  %v87 = vlaneseq
  %v88 = vshrl.u32 %v87, 7
  %v89 = vsub.s32 0, %v88
  %v90 = vrot.slane %v85, %v89
  %v101 = vunpack.c.l.b16 %v63
  %v102 = vunpack.c.l.b16 %v64
  %v103 = vunpack.c.l.b16 %v65
  %v104 = vunpack.c.l.b16 %v66
  %v105 = vunpack.c.l.b16 %v67
  %v106 = vunpack.c.l.b16 %v68
  %v107 = vunpack.c.l.b16 %v69
  %v108 = vunpack.c.l.b16 %v70
  %v109 = vunpack.c.l.b16 %v71
  %v110 = vpack.c.b16 %v102, %v101
  %v111 = vpack.c.b16 %v104, %v103
  %v112 = vpack.c.b16 %v106, %v105
  %v113 = vpack.c.b16 %v108, %v107
  %v114 = vpack.c.b16 %v109, %v109
  %v128 = vunpack.c.l.b16 %v72
  %v129 = vunpack.c.l.b16 %v73
  %v130 = vunpack.c.l.b16 %v74
  %v131 = vunpack.c.l.b16 %v75
  %v132 = vunpack.c.l.b16 %v76
  %v133 = vunpack.c.l.b16 %v77
  %v134 = vunpack.c.l.b16 %v78
  %v135 = vunpack.c.l.b16 %v79
  %v136 = vunpack.c.l.b16 %v80
  %v137 = vunpack.c.l.b16 %v81
  %v138 = vunpack.c.l.b16 %v82
  %v139 = vunpack.c.l.b16 %v83
  %v140 = vunpack.c.l.b16 %v84
  %v141 = vpack.c.b16 %v129, %v128
  %v142 = vpack.c.b16 %v131, %v130
  %v143 = vpack.c.b16 %v133, %v132
  %v144 = vpack.c.b16 %v135, %v134
  %v145 = vpack.c.b16 %v137, %v136
  %v146 = vpack.c.b16 %v139, %v138
  %v147 = vpack.c.b16 %v140, %v140
  %vm154 = vcmask 793600
  %v156 = vsel %vm154, %v110, 0
  %v159 = vsel %vm154, %v111, 0
  %v162 = vsel %vm154, %v112, 0
  %v165 = vsel %vm154, %v113, 0
  %v168 = vsel %vm154, %v114, 0
  %vm170 = vcmask 1040384
  %v171 = vsel 0, 4294967295, 65535
  %v172 = vsel %vm170, %v171, 0
  %v174 = vand.u32 %v147, %v172
  %176 = vmatprep.subr.bf16.mxu0 0
  %177 = vmatpush1.bf16.msra.mxu0 0
  %178 = vmatprep.subr.bf16.mxu0 0
  %179 = vmatpush1.bf16.msra.mxu0 %v174
  %180 = vmatprep.subr.bf16.mxu0 0
  %181 = vmatpush1.bf16.msra.mxu0 %v146
  %182 = vmatprep.subr.bf16.mxu0 0
  %183 = vmatpush1.bf16.msra.mxu0 %v145
  %184 = vmatprep.subr.bf16.mxu0 0
  %185 = vmatpush1.bf16.msra.mxu0 %v144
  %186 = vmatprep.subr.bf16.mxu0 0
  %187 = vmatpush1.bf16.msra.mxu0 %v143
  %188 = vmatprep.subr.bf16.mxu0 0
  %189 = vmatpush1.bf16.msra.mxu0 %v142
  %190 = vmatprep.subr.bf16.mxu0 0
  %191 = vmatpush1.bf16.msra.mxu0 %v141
  %192 = vmatprep.subr.bf16.mxu0 0
  %193 = vmatpush2.bf16.msra.mxu0 0
  %194 = vmatprep.subr.bf16.mxu0 0
  %195 = vmatpush2.bf16.msra.mxu0 0
  %196 = vmatprep.subr.bf16.mxu0 0
  %197 = vmatpush2.bf16.msra.mxu0 0
  %198 = vmatprep.subr.bf16.mxu0 0
  %199 = vmatpush2.bf16.msra.mxu0 0
  %200 = vmatprep.subr.bf16.mxu0 0
  %201 = vmatpush2.bf16.msra.mxu0 0
  %202 = vmatprep.subr.bf16.mxu0 0
  %203 = vmatpush2.bf16.msra.mxu0 0
  %204 = vmatprep.subr.bf16.mxu0 0
  %205 = vmatpush2.bf16.msra.mxu0 0
  %206 = vmatprep.subr.bf16.mxu0 0
  %207 = vmatpush2.bf16.msra.mxu0 0
  %208 = vmatprep.mubr.bf16.mxu0 0
  %209 = vmatmul.mubr.bf16.gmra.mxu0 %v156
  %v210 = vpop.f32.mrf.mxu0
  %v211 = vadd.f32 %v90, %v210
  %v212 = vpop.f32.mrf.mxu0
  %v213 = vpop.f32.mrf.mxu0
  %v214 = vadd.f32 %v90, %v213
  %v215 = vpop.f32.mrf.mxu0
  %216 = vmatprep.mubr.bf16.mxu0 0
  %217 = vmatmul.mubr.bf16.gmra.mxu0 %v159
  %v218 = vpop.f32.mrf.mxu0
  %v219 = vadd.f32 %v90, %v218
  %v220 = vpop.f32.mrf.mxu0
  %v221 = vpop.f32.mrf.mxu0
  %v222 = vadd.f32 %v90, %v221
  %v223 = vpop.f32.mrf.mxu0
  %224 = vmatprep.mubr.bf16.mxu0 0
  %225 = vmatmul.mubr.bf16.gmra.mxu0 %v162
  %v226 = vpop.f32.mrf.mxu0
  %v227 = vadd.f32 %v90, %v226
  %v228 = vpop.f32.mrf.mxu0
  %v229 = vpop.f32.mrf.mxu0
  %v230 = vadd.f32 %v90, %v229
  %v231 = vpop.f32.mrf.mxu0
  %232 = vmatprep.mubr.bf16.mxu0 0
  %233 = vmatmul.mubr.bf16.gmra.mxu0 %v165
  %v234 = vpop.f32.mrf.mxu0
  %v235 = vadd.f32 %v90, %v234
  %v236 = vpop.f32.mrf.mxu0
  %v237 = vpop.f32.mrf.mxu0
  %v238 = vadd.f32 %v90, %v237
  %v239 = vpop.f32.mrf.mxu0
  %240 = vmatprep.mubr.bf16.mxu0 0
  %241 = vmatmul.mubr.bf16.gmra.mxu0 %v168
  %v242 = vpop.f32.mrf.mxu0
  %v243 = vadd.f32 %v90, %v242
  %v244 = vpop.f32.mrf.mxu0
  %v245 = vpop.f32.mrf.mxu0
  %v246 = vpop.f32.mrf.mxu0
  %247 = vdwg.mxu0
  %v248 = vld [vmem:[%s3] sm:$0xff]
  %v249 = vld [vmem:[%s3 + $0x8] sm:$0xff]
  %v250 = vld [vmem:[%s3 + $0x10] sm:$0xff]
  %v251 = vld [vmem:[%s3 + $0x18] sm:$0xff]
  %v252 = vld [vmem:[%s3 + $0x20] sm:$0xff]
  %v253 = vld [vmem:[%s3 + $0x28] sm:$0xff]
  %v254 = vld [vmem:[%s3 + $0x30] sm:$0xff]
  %v255 = vld [vmem:[%s3 + $0x38] sm:$0xff]
  %v256 = vld [vmem:[%s3 + $0x40] sm:$0x3]
  %v257 = vadd.f32 %v211, %v248
  %v258 = vadd.f32 %v214, %v249
  %v259 = vadd.f32 %v219, %v250
  %v260 = vadd.f32 %v222, %v251
  %v261 = vadd.f32 %v227, %v252
  %v262 = vadd.f32 %v230, %v253
  %v263 = vadd.f32 %v235, %v254
  %v264 = vadd.f32 %v238, %v255
  %v265 = vadd.f32 %v243, %v256
  %v266 = vld [vmem:[%s4] sm:$0xf]
  %v267 = vld [vmem:[%s5] sm:$0x1]
  %v268 = vld [vmem:[%s6] sm:$0x1]
  %vm269 = vcmask 261120
  %v270 = vsel %vm269, %v257, 0.0
  %271 = vadd.xlane.f32.xlu0 %v270
  %v272 = vpop.xlane.xlu0 %271
  %v273 = vsel %vm269, %v258, 0.0
  %274 = vadd.xlane.f32.xlu0 %v273
  %v275 = vpop.xlane.xlu0 %274
  %v276 = vsel %vm269, %v259, 0.0
  %277 = vadd.xlane.f32.xlu0 %v276
  %v278 = vpop.xlane.xlu0 %277
  %v279 = vsel %vm269, %v260, 0.0
  %280 = vadd.xlane.f32.xlu0 %v279
  %v281 = vpop.xlane.xlu0 %280
  %v282 = vsel %vm269, %v261, 0.0
  %283 = vadd.xlane.f32.xlu0 %v282
  %v284 = vpop.xlane.xlu0 %283
  %v285 = vsel %vm269, %v262, 0.0
  %286 = vadd.xlane.f32.xlu0 %v285
  %v287 = vpop.xlane.xlu0 %286
  %v288 = vsel %vm269, %v263, 0.0
  %289 = vadd.xlane.f32.xlu0 %v288
  %v290 = vpop.xlane.xlu0 %289
  %v291 = vsel %vm269, %v264, 0.0
  %292 = vadd.xlane.f32.xlu0 %v291
  %v293 = vpop.xlane.xlu0 %292
  %vm294 = vcmask 254976
  %v295 = vsel %vm294, %v265, 0.0
  %296 = vadd.xlane.f32.xlu0 %v295
  %v297 = vpop.xlane.xlu0 %296
  %v298 = vrcp.pop 32.0
  %v299 = vmul.f32 %v272, %v298
  %v300 = vmul.f32 %v275, %v298
  %v301 = vmul.f32 %v278, %v298
  %v302 = vmul.f32 %v281, %v298
  %v303 = vmul.f32 %v284, %v298
  %v304 = vmul.f32 %v287, %v298
  %v305 = vmul.f32 %v290, %v298
  %v306 = vmul.f32 %v293, %v298
  %v307 = vmul.f32 %v297, %v298
  %v308 = vmul.f32 %v257, %v257
  %v309 = vmul.f32 %v258, %v258
  %v310 = vmul.f32 %v259, %v259
  %v311 = vmul.f32 %v260, %v260
  %v312 = vmul.f32 %v261, %v261
  %v313 = vmul.f32 %v262, %v262
  %v314 = vmul.f32 %v263, %v263
  %v315 = vmul.f32 %v264, %v264
  %v316 = vmul.f32 %v265, %v265
  %v317 = vsel %vm269, %v308, 0.0
  %318 = vadd.xlane.f32.xlu0 %v317
  %v319 = vpop.xlane.xlu0 %318
  %v320 = vsel %vm269, %v309, 0.0
  %321 = vadd.xlane.f32.xlu0 %v320
  %v322 = vpop.xlane.xlu0 %321
  %v323 = vsel %vm269, %v310, 0.0
  %324 = vadd.xlane.f32.xlu0 %v323
  %v325 = vpop.xlane.xlu0 %324
  %v326 = vsel %vm269, %v311, 0.0
  %327 = vadd.xlane.f32.xlu0 %v326
  %v328 = vpop.xlane.xlu0 %327
  %v329 = vsel %vm269, %v312, 0.0
  %330 = vadd.xlane.f32.xlu0 %v329
  %v331 = vpop.xlane.xlu0 %330
  %v332 = vsel %vm269, %v313, 0.0
  %333 = vadd.xlane.f32.xlu0 %v332
  %v334 = vpop.xlane.xlu0 %333
  %v335 = vsel %vm269, %v314, 0.0
  %336 = vadd.xlane.f32.xlu0 %v335
  %v337 = vpop.xlane.xlu0 %336
  %v338 = vsel %vm269, %v315, 0.0
  %339 = vadd.xlane.f32.xlu0 %v338
  %v340 = vpop.xlane.xlu0 %339
  %v341 = vsel %vm294, %v316, 0.0
  %342 = vadd.xlane.f32.xlu0 %v341
  %v343 = vpop.xlane.xlu0 %342
  %v344 = vmul.f32 %v319, %v298
  %v345 = vmul.f32 %v322, %v298
  %v346 = vmul.f32 %v325, %v298
  %v347 = vmul.f32 %v328, %v298
  %v348 = vmul.f32 %v331, %v298
  %v349 = vmul.f32 %v334, %v298
  %v350 = vmul.f32 %v337, %v298
  %v351 = vmul.f32 %v340, %v298
  %v352 = vmul.f32 %v343, %v298
  %v353 = vmul.f32 %v299, %v299
  %v354 = vmul.f32 %v300, %v300
  %v355 = vmul.f32 %v301, %v301
  %v356 = vmul.f32 %v302, %v302
  %v357 = vmul.f32 %v303, %v303
  %v358 = vmul.f32 %v304, %v304
  %v359 = vmul.f32 %v305, %v305
  %v360 = vmul.f32 %v306, %v306
  %v361 = vmul.f32 %v307, %v307
  %v362 = vsub.f32 %v344, %v353
  %v363 = vsub.f32 %v345, %v354
  %v364 = vsub.f32 %v346, %v355
  %v365 = vsub.f32 %v347, %v356
  %v366 = vsub.f32 %v348, %v357
  %v367 = vsub.f32 %v349, %v358
  %v368 = vsub.f32 %v350, %v359
  %v369 = vsub.f32 %v351, %v360
  %v370 = vsub.f32 %v352, %v361
  %v371 = vsub.f32 %v257, %v299
  %v372 = vsub.f32 %v258, %v300
  %v373 = vsub.f32 %v259, %v301
  %v374 = vsub.f32 %v260, %v302
  %v375 = vsub.f32 %v261, %v303
  %v376 = vsub.f32 %v262, %v304
  %v377 = vsub.f32 %v263, %v305
  %v378 = vsub.f32 %v264, %v306
  %v379 = vsub.f32 %v265, %v307
  %v380 = vadd.f32 %v362, 1e-06
  %v381 = vadd.f32 %v363, 1e-06
  %v382 = vadd.f32 %v364, 1e-06
  %v383 = vadd.f32 %v365, 1e-06
  %v384 = vadd.f32 %v366, 1e-06
  %v385 = vadd.f32 %v367, 1e-06
  %v386 = vadd.f32 %v368, 1e-06
  %v387 = vadd.f32 %v369, 1e-06
  %v388 = vadd.f32 %v370, 1e-06
  %v389 = vrsqrt.pop %v380
  %v390 = vrsqrt.pop %v381
  %v391 = vrsqrt.pop %v382
  %v392 = vrsqrt.pop %v383
  %v393 = vrsqrt.pop %v384
  %v394 = vrsqrt.pop %v385
  %v395 = vrsqrt.pop %v386
  %v396 = vrsqrt.pop %v387
  %v397 = vrsqrt.pop %v388
  %v398 = vmul.f32 %v371, %v389
  %v399 = vmul.f32 %v372, %v390
  %v400 = vmul.f32 %v373, %v391
  %v401 = vmul.f32 %v374, %v392
  %v402 = vmul.f32 %v375, %v393
  %v403 = vmul.f32 %v376, %v394
  %v404 = vmul.f32 %v377, %v395
  %v405 = vmul.f32 %v378, %v396
  %v406 = vmul.f32 %v379, %v397
  %v408 = vlaneseq
  %v409 = vshrl.u32 %v408, 7
  %v410 = vsub.s32 0, %v409
  %v411 = vrot.slane %v267, %v410
  %v413 = vmul.f32 %v398, %v411
  %v414 = vmul.f32 %v399, %v411
  %v415 = vmul.f32 %v400, %v411
  %v416 = vmul.f32 %v401, %v411
  %v417 = vmul.f32 %v402, %v411
  %v418 = vmul.f32 %v403, %v411
  %v419 = vmul.f32 %v404, %v411
  %v420 = vmul.f32 %v405, %v411
  %v421 = vmul.f32 %v406, %v411
  %v423 = vlaneseq
  %v424 = vshrl.u32 %v423, 7
  %v425 = vsub.s32 0, %v424
  %v426 = vrot.slane %v268, %v425
  %v428 = vadd.f32 %v413, %v426
  %v429 = vadd.f32 %v414, %v426
  %v430 = vadd.f32 %v415, %v426
  %v431 = vadd.f32 %v416, %v426
  %v432 = vadd.f32 %v417, %v426
  %v433 = vadd.f32 %v418, %v426
  %v434 = vadd.f32 %v419, %v426
  %v435 = vadd.f32 %v420, %v426
  %v436 = vadd.f32 %v421, %v426
  %v437 = vpack.c.bf16 %v429, %v428
  %v438 = vpack.c.bf16 %v431, %v430
  %v439 = vpack.c.bf16 %v433, %v432
  %v440 = vpack.c.bf16 %v435, %v434
  %v441 = vpack.c.bf16 %v436, %v436
  %v442 = vld [vmem:[%s7] sm:$0xf]
  %v443 = vld [vmem:[%s7 + $0x4] sm:$0xf]
  %v444 = vld [vmem:[%s7 + $0x8] sm:$0xf]
  %v445 = vld [vmem:[%s7 + $0xc] sm:$0xf]
  %v446 = vld [vmem:[%s8] sm:$0x1]
  %v448 = vlaneseq
  %v449 = vshrl.u32 %v448, 7
  %v450 = vsub.s32 0, %v449
  %v451 = vrot.slane %v446, %v450
  %v457 = vunpack.c.l.b16 %v442
  %v458 = vunpack.c.l.b16 %v443
  %v459 = vunpack.c.l.b16 %v444
  %v460 = vunpack.c.l.b16 %v445
  %v461 = vpack.c.b16 %v458, %v457
  %v462 = vpack.c.b16 %v460, %v459
  %v466 = vsel %vm269, %v437, 0
  %v469 = vsel %vm269, %v438, 0
  %v472 = vsel %vm269, %v439, 0
  %v475 = vsel %vm269, %v440, 0
  %v478 = vsel %vm269, %v441, 0
  %480 = vmatprep.subr.bf16.mxu0 0
  %481 = vmatpush1.bf16.msra.mxu0 0
  %482 = vmatprep.subr.bf16.mxu0 0
  %483 = vmatpush1.bf16.msra.mxu0 0
  %484 = vmatprep.subr.bf16.mxu0 0
  %485 = vmatpush1.bf16.msra.mxu0 0
  %486 = vmatprep.subr.bf16.mxu0 0
  %487 = vmatpush1.bf16.msra.mxu0 0
  %488 = vmatprep.subr.bf16.mxu0 0
  %489 = vmatpush1.bf16.msra.mxu0 0
  %490 = vmatprep.subr.bf16.mxu0 0
  %491 = vmatpush1.bf16.msra.mxu0 0
  %492 = vmatprep.subr.bf16.mxu0 0
  %493 = vmatpush1.bf16.msra.mxu0 %v462
  %494 = vmatprep.subr.bf16.mxu0 0
  %495 = vmatpush1.bf16.msra.mxu0 %v461
  %496 = vmatprep.subr.bf16.mxu0 0
  %497 = vmatpush2.bf16.msra.mxu0 0
  %498 = vmatprep.subr.bf16.mxu0 0
  %499 = vmatpush2.bf16.msra.mxu0 0
  %500 = vmatprep.subr.bf16.mxu0 0
  %501 = vmatpush2.bf16.msra.mxu0 0
  %502 = vmatprep.subr.bf16.mxu0 0
  %503 = vmatpush2.bf16.msra.mxu0 0
  %504 = vmatprep.subr.bf16.mxu0 0
  %505 = vmatpush2.bf16.msra.mxu0 0
  %506 = vmatprep.subr.bf16.mxu0 0
  %507 = vmatpush2.bf16.msra.mxu0 0
  %508 = vmatprep.subr.bf16.mxu0 0
  %509 = vmatpush2.bf16.msra.mxu0 0
  %510 = vmatprep.subr.bf16.mxu0 0
  %511 = vmatpush2.bf16.msra.mxu0 0
  %512 = vmatprep.mubr.bf16.mxu0 0
  %513 = vmatmul.mubr.bf16.gmra.mxu0 %v466
  %v514 = vpop.f32.mrf.mxu0
  %v515 = vadd.f32 %v451, %v514
  %v516 = vpop.f32.mrf.mxu0
  %v517 = vpop.f32.mrf.mxu0
  %v518 = vadd.f32 %v451, %v517
  %v519 = vpop.f32.mrf.mxu0
  %520 = vmatprep.mubr.bf16.mxu0 0
  %521 = vmatmul.mubr.bf16.gmra.mxu0 %v469
  %v522 = vpop.f32.mrf.mxu0
  %v523 = vadd.f32 %v451, %v522
  %v524 = vpop.f32.mrf.mxu0
  %v525 = vpop.f32.mrf.mxu0
  %v526 = vadd.f32 %v451, %v525
  %v527 = vpop.f32.mrf.mxu0
  %528 = vmatprep.mubr.bf16.mxu0 0
  %529 = vmatmul.mubr.bf16.gmra.mxu0 %v472
  %v530 = vpop.f32.mrf.mxu0
  %v531 = vadd.f32 %v451, %v530
  %v532 = vpop.f32.mrf.mxu0
  %v533 = vpop.f32.mrf.mxu0
  %v534 = vadd.f32 %v451, %v533
  %v535 = vpop.f32.mrf.mxu0
  %536 = vmatprep.mubr.bf16.mxu0 0
  %537 = vmatmul.mubr.bf16.gmra.mxu0 %v475
  %v538 = vpop.f32.mrf.mxu0
  %v539 = vadd.f32 %v451, %v538
  %v540 = vpop.f32.mrf.mxu0
  %v541 = vpop.f32.mrf.mxu0
  %v542 = vadd.f32 %v451, %v541
  %v543 = vpop.f32.mrf.mxu0
  %544 = vmatprep.mubr.bf16.mxu0 0
  %545 = vmatmul.mubr.bf16.gmra.mxu0 %v478
  %v546 = vpop.f32.mrf.mxu0
  %v547 = vadd.f32 %v451, %v546
  %v548 = vpop.f32.mrf.mxu0
  %v549 = vpop.f32.mrf.mxu0
  %v550 = vpop.f32.mrf.mxu0
  %551 = vdwg.mxu0
  %v552 = vpack.c.bf16 %v518, %v515
  %v553 = vpack.c.bf16 %v526, %v523
  %v554 = vpack.c.bf16 %v534, %v531
  %v555 = vpack.c.bf16 %v542, %v539
  %v556 = vpack.c.bf16 %v547, %v547
  %v557 = vlaneseq
  %v558 = vshrl.u32 %v557, 7
  %v559 = vsub.s32 0, %v558
  %v560 = vrot.slane %v266, %v559
  %v561 = vmul.f32 %v515, %v560
  %v562 = vmul.f32 %v518, %v560
  %v563 = vmul.f32 %v523, %v560
  %v564 = vmul.f32 %v526, %v560
  %v565 = vmul.f32 %v531, %v560
  %v566 = vmul.f32 %v534, %v560
  %v567 = vmul.f32 %v539, %v560
  %v568 = vmul.f32 %v542, %v560
  %v569 = vmul.f32 %v547, %v560
  %v570 = vlaneseq
  %v571 = vshrl.u32 %v570, 7
  %v572 = vsub.s32 1, %v571
  %v573 = vrot.slane %v266, %v572
  %v574 = vmul.f32 %v515, %v573
  %v575 = vmul.f32 %v518, %v573
  %v576 = vmul.f32 %v523, %v573
  %v577 = vmul.f32 %v526, %v573
  %v578 = vmul.f32 %v531, %v573
  %v579 = vmul.f32 %v534, %v573
  %v580 = vmul.f32 %v539, %v573
  %v581 = vmul.f32 %v542, %v573
  %v582 = vmul.f32 %v547, %v573
  %v583 = vlaneseq
  %v584 = vshrl.u32 %v583, 7
  %v585 = vsub.s32 2, %v584
  %v586 = vrot.slane %v266, %v585
  %v587 = vmul.f32 %v515, %v586
  %v588 = vmul.f32 %v518, %v586
  %v589 = vmul.f32 %v523, %v586
  %v590 = vmul.f32 %v526, %v586
  %v591 = vmul.f32 %v531, %v586
  %v592 = vmul.f32 %v534, %v586
  %v593 = vmul.f32 %v539, %v586
  %v594 = vmul.f32 %v542, %v586
  %v595 = vmul.f32 %v547, %v586
  %v596 = vlaneseq
  %v597 = vshrl.u32 %v596, 7
  %v598 = vsub.s32 3, %v597
  %v599 = vrot.slane %v266, %v598
  %v600 = vmul.f32 %v515, %v599
  %v601 = vmul.f32 %v518, %v599
  %v602 = vmul.f32 %v523, %v599
  %v603 = vmul.f32 %v526, %v599
  %v604 = vmul.f32 %v531, %v599
  %v605 = vmul.f32 %v534, %v599
  %v606 = vmul.f32 %v539, %v599
  %v607 = vmul.f32 %v542, %v599
  %v608 = vmul.f32 %v547, %v599
  %vm614 = vcmask 1046528
  %v615 = vrot.slane %v565, 1
  %v616 = vrot.slane %v566, 1
  %v617 = vsel %vm614, %v615, %v616
  %v618 = vrot.slane %v567, 1
  %v619 = vsel %vm614, %v616, %v618
  %v620 = vrot.slane %v568, 1
  %v621 = vsel %vm614, %v618, %v620
  %v622 = vrot.slane %v569, 1
  %v623 = vsel %vm614, %v620, %v622
  %v634 = vrot.slane %v578, 1
  %v635 = vrot.slane %v579, 1
  %v636 = vsel %vm614, %v634, %v635
  %v637 = vrot.slane %v580, 1
  %v638 = vsel %vm614, %v635, %v637
  %v639 = vrot.slane %v581, 1
  %v640 = vsel %vm614, %v637, %v639
  %v641 = vrot.slane %v582, 1
  %v642 = vsel %vm614, %v639, %v641
  %v653 = vrot.slane %v591, 1
  %v654 = vrot.slane %v592, 1
  %v655 = vsel %vm614, %v653, %v654
  %v656 = vrot.slane %v593, 1
  %v657 = vsel %vm614, %v654, %v656
  %v658 = vrot.slane %v594, 1
  %v659 = vsel %vm614, %v656, %v658
  %v660 = vrot.slane %v595, 1
  %v661 = vsel %vm614, %v658, %v660
  %v672 = vrot.slane %v604, 1
  %v673 = vrot.slane %v605, 1
  %v674 = vsel %vm614, %v672, %v673
  %v675 = vrot.slane %v606, 1
  %v676 = vsel %vm614, %v673, %v675
  %v677 = vrot.slane %v607, 1
  %v678 = vsel %vm614, %v675, %v677
  %v679 = vrot.slane %v608, 1
  %v680 = vsel %vm614, %v677, %v679
  %v686 = vpack.c.bf16 %v562, %v561
  %v687 = vpack.c.bf16 %v564, %v563
  %v688 = vpack.c.bf16 %v565, %v565
  %v689 = vpack.c.bf16 %v619, %v617
  %v690 = vpack.c.bf16 %v623, %v621
  %v691 = vpack.c.bf16 %v622, %v622
  %v692 = vpack.c.bf16 %v575, %v574
  %v693 = vpack.c.bf16 %v577, %v576
  %v694 = vpack.c.bf16 %v578, %v578
  %v695 = vpack.c.bf16 %v638, %v636
  %v696 = vpack.c.bf16 %v642, %v640
  %v697 = vpack.c.bf16 %v641, %v641
  %v698 = vpack.c.bf16 %v588, %v587
  %v699 = vpack.c.bf16 %v590, %v589
  %v700 = vpack.c.bf16 %v591, %v591
  %v701 = vpack.c.bf16 %v657, %v655
  %v702 = vpack.c.bf16 %v661, %v659
  %v703 = vpack.c.bf16 %v660, %v660
  %v704 = vpack.c.bf16 %v601, %v600
  %v705 = vpack.c.bf16 %v603, %v602
  %v706 = vpack.c.bf16 %v604, %v604
  %v707 = vpack.c.bf16 %v676, %v674
  %v708 = vpack.c.bf16 %v680, %v678
  %v709 = vpack.c.bf16 %v679, %v679
  %vm710 = vsmask.f32 7424
  %v712 = vshrl.u32 %v554, 16
  %v714 = vshll.u32 %v554, 16
  %v716 = vrot.slane %v714, 1
  %v717 = vor.u32 %v712, %v716
  %v719 = vshll.u32 %v555, 16
  %v721 = vrot.slane %v719, 1
  %v722 = vsel %vm710, %v717, %v721
  %v723 = vshrl.u32 %v555, 16
  %v725 = vor.u32 %v723, %v721
  %v727 = vshll.u32 %v556, 16
  %v729 = vrot.slane %v727, 1
  %v730 = vsel %vm710, %v725, %v729
  %v731 = vshrl.u32 %v556, 16
  %736 = vrot.lane.b32.xlu0 %v552, 96
  %v737 = vpop.permute.xlu0 %736
  %738 = vrot.lane.b32.xlu0 %v553, 96
  %v739 = vpop.permute.xlu0 %738
  %740 = vrot.lane.b32.xlu0 %v554, 96
  %v741 = vpop.permute.xlu0 %740
  %v743 = vsel %vm269, %v686, 0
  %v746 = vsel %vm269, %v687, 0
  %v749 = vsel %vm269, %v688, 0
  %v752 = vsel %vm269, %v737, 0
  %v755 = vsel %vm269, %v739, 0
  %v758 = vsel %vm269, %v741, 0
  %760 = vmatprep.subr.bf16.mxu0 0
  %761 = vmatpush1.bf16.xpose.msra.mxu0 0
  %762 = vmatprep.subr.bf16.mxu0 0
  %763 = vmatpush1.bf16.xpose.msra.mxu0 0
  %764 = vmatprep.subr.bf16.mxu0 0
  %765 = vmatpush1.bf16.xpose.msra.mxu0 0
  %766 = vmatprep.subr.bf16.mxu0 0
  %767 = vmatpush1.bf16.xpose.msra.mxu0 0
  %768 = vmatprep.subr.bf16.mxu0 0
  %769 = vmatpush1.bf16.xpose.msra.mxu0 0
  %770 = vmatprep.subr.bf16.mxu0 0
  %771 = vmatpush1.bf16.xpose.msra.mxu0 %v758
  %772 = vmatprep.subr.bf16.mxu0 0
  %773 = vmatpush1.bf16.xpose.msra.mxu0 %v755
  %774 = vmatprep.subr.bf16.mxu0 0
  %775 = vmatpush1.bf16.xpose.msra.mxu0 %v752
  %776 = vmatprep.subr.bf16.mxu0 0
  %777 = vmatpush2.bf16.xpose.msra.mxu0 0
  %778 = vmatprep.subr.bf16.mxu0 0
  %779 = vmatpush2.bf16.xpose.msra.mxu0 0
  %780 = vmatprep.subr.bf16.mxu0 0
  %781 = vmatpush2.bf16.xpose.msra.mxu0 0
  %782 = vmatprep.subr.bf16.mxu0 0
  %783 = vmatpush2.bf16.xpose.msra.mxu0 0
  %784 = vmatprep.subr.bf16.mxu0 0
  %785 = vmatpush2.bf16.xpose.msra.mxu0 0
  %786 = vmatprep.subr.bf16.mxu0 0
  %787 = vmatpush2.bf16.xpose.msra.mxu0 0
  %788 = vmatprep.subr.bf16.mxu0 0
  %789 = vmatpush2.bf16.xpose.msra.mxu0 0
  %790 = vmatprep.subr.bf16.mxu0 0
  %791 = vmatpush2.bf16.xpose.msra.mxu0 0
  %792 = vmatprep.mubr.bf16.mxu0 0
  %793 = vmatmul.mubr.bf16.gmra.mxu0 %v743
  %v794 = vpop.f32.mrf.mxu0
  %v795 = vadd.f32 0.0, %v794
  %v796 = vpop.f32.mrf.mxu0
  %v797 = vpop.f32.mrf.mxu0
  %v798 = vadd.f32 0.0, %v797
  %v799 = vpop.f32.mrf.mxu0
  %800 = vmatprep.mubr.bf16.mxu0 0
  %801 = vmatmul.mubr.bf16.gmra.mxu0 %v746
  %v802 = vpop.f32.mrf.mxu0
  %v803 = vadd.f32 0.0, %v802
  %v804 = vpop.f32.mrf.mxu0
  %v805 = vpop.f32.mrf.mxu0
  %v806 = vadd.f32 0.0, %v805
  %v807 = vpop.f32.mrf.mxu0
  %808 = vmatprep.mubr.bf16.mxu0 0
  %809 = vmatmul.mubr.bf16.gmra.mxu0 %v749
  %v810 = vpop.f32.mrf.mxu0
  %v811 = vadd.f32 0.0, %v810
  %v812 = vpop.f32.mrf.mxu0
  %v813 = vpop.f32.mrf.mxu0
  %v814 = vpop.f32.mrf.mxu0
  %815 = vdwg.mxu0
  %816 = vrot.lane.b32.xlu0 %v722, 96
  %v817 = vpop.permute.xlu0 %816
  %818 = vrot.lane.b32.xlu0 %v730, 96
  %v819 = vpop.permute.xlu0 %818
  %820 = vrot.lane.b32.xlu0 %v731, 96
  %v821 = vpop.permute.xlu0 %820
  %v823 = vsel %vm269, %v689, 0
  %v826 = vsel %vm269, %v690, 0
  %v829 = vsel %vm269, %v691, 0
  %v832 = vsel %vm269, %v817, 0
  %v835 = vsel %vm269, %v819, 0
  %v838 = vsel %vm269, %v821, 0
  %840 = vmatprep.subr.bf16.mxu0 0
  %841 = vmatpush1.bf16.xpose.msra.mxu0 0
  %842 = vmatprep.subr.bf16.mxu0 0
  %843 = vmatpush1.bf16.xpose.msra.mxu0 0
  %844 = vmatprep.subr.bf16.mxu0 0
  %845 = vmatpush1.bf16.xpose.msra.mxu0 0
  %846 = vmatprep.subr.bf16.mxu0 0
  %847 = vmatpush1.bf16.xpose.msra.mxu0 0
  %848 = vmatprep.subr.bf16.mxu0 0
  %849 = vmatpush1.bf16.xpose.msra.mxu0 0
  %850 = vmatprep.subr.bf16.mxu0 0
  %851 = vmatpush1.bf16.xpose.msra.mxu0 %v838
  %852 = vmatprep.subr.bf16.mxu0 0
  %853 = vmatpush1.bf16.xpose.msra.mxu0 %v835
  %854 = vmatprep.subr.bf16.mxu0 0
  %855 = vmatpush1.bf16.xpose.msra.mxu0 %v832
  %856 = vmatprep.subr.bf16.mxu0 0
  %857 = vmatpush2.bf16.xpose.msra.mxu0 0
  %858 = vmatprep.subr.bf16.mxu0 0
  %859 = vmatpush2.bf16.xpose.msra.mxu0 0
  %860 = vmatprep.subr.bf16.mxu0 0
  %861 = vmatpush2.bf16.xpose.msra.mxu0 0
  %862 = vmatprep.subr.bf16.mxu0 0
  %863 = vmatpush2.bf16.xpose.msra.mxu0 0
  %864 = vmatprep.subr.bf16.mxu0 0
  %865 = vmatpush2.bf16.xpose.msra.mxu0 0
  %866 = vmatprep.subr.bf16.mxu0 0
  %867 = vmatpush2.bf16.xpose.msra.mxu0 0
  %868 = vmatprep.subr.bf16.mxu0 0
  %869 = vmatpush2.bf16.xpose.msra.mxu0 0
  %870 = vmatprep.subr.bf16.mxu0 0
  %871 = vmatpush2.bf16.xpose.msra.mxu0 0
  %872 = vmatprep.mubr.bf16.mxu0 0
  %873 = vmatmul.mubr.bf16.gmra.mxu0 %v823
  %v874 = vpop.f32.mrf.mxu0
  %v875 = vadd.f32 0.0, %v874
  %v876 = vpop.f32.mrf.mxu0
  %v877 = vpop.f32.mrf.mxu0
  %v878 = vadd.f32 0.0, %v877
  %v879 = vpop.f32.mrf.mxu0
  %880 = vmatprep.mubr.bf16.mxu0 0
  %881 = vmatmul.mubr.bf16.gmra.mxu0 %v826
  %v882 = vpop.f32.mrf.mxu0
  %v883 = vadd.f32 0.0, %v882
  %v884 = vpop.f32.mrf.mxu0
  %v885 = vpop.f32.mrf.mxu0
  %v886 = vadd.f32 0.0, %v885
  %v887 = vpop.f32.mrf.mxu0
  %888 = vmatprep.mubr.bf16.mxu0 0
  %889 = vmatmul.mubr.bf16.gmra.mxu0 %v829
  %v890 = vpop.f32.mrf.mxu0
  %v891 = vadd.f32 0.0, %v890
  %v892 = vpop.f32.mrf.mxu0
  %v893 = vpop.f32.mrf.mxu0
  %v894 = vpop.f32.mrf.mxu0
  %895 = vdwg.mxu0
  %v897 = vsel %vm269, %v692, 0
  %v900 = vsel %vm269, %v693, 0
  %v903 = vsel %vm269, %v694, 0
  %905 = vmatprep.subr.bf16.mxu0 0
  %906 = vmatpush1.bf16.xpose.msra.mxu0 0
  %907 = vmatprep.subr.bf16.mxu0 0
  %908 = vmatpush1.bf16.xpose.msra.mxu0 0
  %909 = vmatprep.subr.bf16.mxu0 0
  %910 = vmatpush1.bf16.xpose.msra.mxu0 0
  %911 = vmatprep.subr.bf16.mxu0 0
  %912 = vmatpush1.bf16.xpose.msra.mxu0 0
  %913 = vmatprep.subr.bf16.mxu0 0
  %914 = vmatpush1.bf16.xpose.msra.mxu0 0
  %915 = vmatprep.subr.bf16.mxu0 0
  %916 = vmatpush1.bf16.xpose.msra.mxu0 %v758
  %917 = vmatprep.subr.bf16.mxu0 0
  %918 = vmatpush1.bf16.xpose.msra.mxu0 %v755
  %919 = vmatprep.subr.bf16.mxu0 0
  %920 = vmatpush1.bf16.xpose.msra.mxu0 %v752
  %921 = vmatprep.subr.bf16.mxu0 0
  %922 = vmatpush2.bf16.xpose.msra.mxu0 0
  %923 = vmatprep.subr.bf16.mxu0 0
  %924 = vmatpush2.bf16.xpose.msra.mxu0 0
  %925 = vmatprep.subr.bf16.mxu0 0
  %926 = vmatpush2.bf16.xpose.msra.mxu0 0
  %927 = vmatprep.subr.bf16.mxu0 0
  %928 = vmatpush2.bf16.xpose.msra.mxu0 0
  %929 = vmatprep.subr.bf16.mxu0 0
  %930 = vmatpush2.bf16.xpose.msra.mxu0 0
  %931 = vmatprep.subr.bf16.mxu0 0
  %932 = vmatpush2.bf16.xpose.msra.mxu0 0
  %933 = vmatprep.subr.bf16.mxu0 0
  %934 = vmatpush2.bf16.xpose.msra.mxu0 0
  %935 = vmatprep.subr.bf16.mxu0 0
  %936 = vmatpush2.bf16.xpose.msra.mxu0 0
  %937 = vmatprep.mubr.bf16.mxu0 0
  %938 = vmatmul.mubr.bf16.gmra.mxu0 %v897
  %v939 = vpop.f32.mrf.mxu0
  %v940 = vadd.f32 0.0, %v939
  %v941 = vpop.f32.mrf.mxu0
  %v942 = vpop.f32.mrf.mxu0
  %v943 = vadd.f32 0.0, %v942
  %v944 = vpop.f32.mrf.mxu0
  %945 = vmatprep.mubr.bf16.mxu0 0
  %946 = vmatmul.mubr.bf16.gmra.mxu0 %v900
  %v947 = vpop.f32.mrf.mxu0
  %v948 = vadd.f32 0.0, %v947
  %v949 = vpop.f32.mrf.mxu0
  %v950 = vpop.f32.mrf.mxu0
  %v951 = vadd.f32 0.0, %v950
  %v952 = vpop.f32.mrf.mxu0
  %953 = vmatprep.mubr.bf16.mxu0 0
  %954 = vmatmul.mubr.bf16.gmra.mxu0 %v903
  %v955 = vpop.f32.mrf.mxu0
  %v956 = vadd.f32 0.0, %v955
  %v957 = vpop.f32.mrf.mxu0
  %v958 = vpop.f32.mrf.mxu0
  %v959 = vpop.f32.mrf.mxu0
  %960 = vdwg.mxu0
  %v962 = vsel %vm269, %v695, 0
  %v965 = vsel %vm269, %v696, 0
  %v968 = vsel %vm269, %v697, 0
  %970 = vmatprep.subr.bf16.mxu0 0
  %971 = vmatpush1.bf16.xpose.msra.mxu0 0
  %972 = vmatprep.subr.bf16.mxu0 0
  %973 = vmatpush1.bf16.xpose.msra.mxu0 0
  %974 = vmatprep.subr.bf16.mxu0 0
  %975 = vmatpush1.bf16.xpose.msra.mxu0 0
  %976 = vmatprep.subr.bf16.mxu0 0
  %977 = vmatpush1.bf16.xpose.msra.mxu0 0
  %978 = vmatprep.subr.bf16.mxu0 0
  %979 = vmatpush1.bf16.xpose.msra.mxu0 0
  %980 = vmatprep.subr.bf16.mxu0 0
  %981 = vmatpush1.bf16.xpose.msra.mxu0 %v838
  %982 = vmatprep.subr.bf16.mxu0 0
  %983 = vmatpush1.bf16.xpose.msra.mxu0 %v835
  %984 = vmatprep.subr.bf16.mxu0 0
  %985 = vmatpush1.bf16.xpose.msra.mxu0 %v832
  %986 = vmatprep.subr.bf16.mxu0 0
  %987 = vmatpush2.bf16.xpose.msra.mxu0 0
  %988 = vmatprep.subr.bf16.mxu0 0
  %989 = vmatpush2.bf16.xpose.msra.mxu0 0
  %990 = vmatprep.subr.bf16.mxu0 0
  %991 = vmatpush2.bf16.xpose.msra.mxu0 0
  %992 = vmatprep.subr.bf16.mxu0 0
  %993 = vmatpush2.bf16.xpose.msra.mxu0 0
  %994 = vmatprep.subr.bf16.mxu0 0
  %995 = vmatpush2.bf16.xpose.msra.mxu0 0
  %996 = vmatprep.subr.bf16.mxu0 0
  %997 = vmatpush2.bf16.xpose.msra.mxu0 0
  %998 = vmatprep.subr.bf16.mxu0 0
  %999 = vmatpush2.bf16.xpose.msra.mxu0 0
  %1000 = vmatprep.subr.bf16.mxu0 0
  %1001 = vmatpush2.bf16.xpose.msra.mxu0 0
  %1002 = vmatprep.mubr.bf16.mxu0 0
  %1003 = vmatmul.mubr.bf16.gmra.mxu0 %v962
  %v1004 = vpop.f32.mrf.mxu0
  %v1005 = vadd.f32 0.0, %v1004
  %v1006 = vpop.f32.mrf.mxu0
  %v1007 = vpop.f32.mrf.mxu0
  %v1008 = vadd.f32 0.0, %v1007
  %v1009 = vpop.f32.mrf.mxu0
  %1010 = vmatprep.mubr.bf16.mxu0 0
  %1011 = vmatmul.mubr.bf16.gmra.mxu0 %v965
  %v1012 = vpop.f32.mrf.mxu0
  %v1013 = vadd.f32 0.0, %v1012
  %v1014 = vpop.f32.mrf.mxu0
  %v1015 = vpop.f32.mrf.mxu0
  %v1016 = vadd.f32 0.0, %v1015
  %v1017 = vpop.f32.mrf.mxu0
  %1018 = vmatprep.mubr.bf16.mxu0 0
  %1019 = vmatmul.mubr.bf16.gmra.mxu0 %v968
  %v1020 = vpop.f32.mrf.mxu0
  %v1021 = vadd.f32 0.0, %v1020
  %v1022 = vpop.f32.mrf.mxu0
  %v1023 = vpop.f32.mrf.mxu0
  %v1024 = vpop.f32.mrf.mxu0
  %1025 = vdwg.mxu0
  %v1027 = vsel %vm269, %v698, 0
  %v1030 = vsel %vm269, %v699, 0
  %v1033 = vsel %vm269, %v700, 0
  %1035 = vmatprep.subr.bf16.mxu0 0
  %1036 = vmatpush1.bf16.xpose.msra.mxu0 0
  %1037 = vmatprep.subr.bf16.mxu0 0
  %1038 = vmatpush1.bf16.xpose.msra.mxu0 0
  %1039 = vmatprep.subr.bf16.mxu0 0
  %1040 = vmatpush1.bf16.xpose.msra.mxu0 0
  %1041 = vmatprep.subr.bf16.mxu0 0
  %1042 = vmatpush1.bf16.xpose.msra.mxu0 0
  %1043 = vmatprep.subr.bf16.mxu0 0
  %1044 = vmatpush1.bf16.xpose.msra.mxu0 0
  %1045 = vmatprep.subr.bf16.mxu0 0
  %1046 = vmatpush1.bf16.xpose.msra.mxu0 %v758
  %1047 = vmatprep.subr.bf16.mxu0 0
  %1048 = vmatpush1.bf16.xpose.msra.mxu0 %v755
  %1049 = vmatprep.subr.bf16.mxu0 0
  %1050 = vmatpush1.bf16.xpose.msra.mxu0 %v752
  %1051 = vmatprep.subr.bf16.mxu0 0
  %1052 = vmatpush2.bf16.xpose.msra.mxu0 0
  %1053 = vmatprep.subr.bf16.mxu0 0
  %1054 = vmatpush2.bf16.xpose.msra.mxu0 0
  %1055 = vmatprep.subr.bf16.mxu0 0
  %1056 = vmatpush2.bf16.xpose.msra.mxu0 0
  %1057 = vmatprep.subr.bf16.mxu0 0
  %1058 = vmatpush2.bf16.xpose.msra.mxu0 0
  %1059 = vmatprep.subr.bf16.mxu0 0
  %1060 = vmatpush2.bf16.xpose.msra.mxu0 0
  %1061 = vmatprep.subr.bf16.mxu0 0
  %1062 = vmatpush2.bf16.xpose.msra.mxu0 0
  %1063 = vmatprep.subr.bf16.mxu0 0
  %1064 = vmatpush2.bf16.xpose.msra.mxu0 0
  %1065 = vmatprep.subr.bf16.mxu0 0
  %1066 = vmatpush2.bf16.xpose.msra.mxu0 0
  %1067 = vmatprep.mubr.bf16.mxu0 0
  %1068 = vmatmul.mubr.bf16.gmra.mxu0 %v1027
  %v1069 = vpop.f32.mrf.mxu0
  %v1070 = vadd.f32 0.0, %v1069
  %v1071 = vpop.f32.mrf.mxu0
  %v1072 = vpop.f32.mrf.mxu0
  %v1073 = vadd.f32 0.0, %v1072
  %v1074 = vpop.f32.mrf.mxu0
  %1075 = vmatprep.mubr.bf16.mxu0 0
  %1076 = vmatmul.mubr.bf16.gmra.mxu0 %v1030
  %v1077 = vpop.f32.mrf.mxu0
  %v1078 = vadd.f32 0.0, %v1077
  %v1079 = vpop.f32.mrf.mxu0
  %v1080 = vpop.f32.mrf.mxu0
  %v1081 = vadd.f32 0.0, %v1080
  %v1082 = vpop.f32.mrf.mxu0
  %1083 = vmatprep.mubr.bf16.mxu0 0
  %1084 = vmatmul.mubr.bf16.gmra.mxu0 %v1033
  %v1085 = vpop.f32.mrf.mxu0
  %v1086 = vadd.f32 0.0, %v1085
  %v1087 = vpop.f32.mrf.mxu0
  %v1088 = vpop.f32.mrf.mxu0
  %v1089 = vpop.f32.mrf.mxu0
  %1090 = vdwg.mxu0
  %v1092 = vsel %vm269, %v701, 0
  %v1095 = vsel %vm269, %v702, 0
  %v1098 = vsel %vm269, %v703, 0
  %1100 = vmatprep.subr.bf16.mxu0 0
  %1101 = vmatpush1.bf16.xpose.msra.mxu0 0
  %1102 = vmatprep.subr.bf16.mxu0 0
  %1103 = vmatpush1.bf16.xpose.msra.mxu0 0
  %1104 = vmatprep.subr.bf16.mxu0 0
  %1105 = vmatpush1.bf16.xpose.msra.mxu0 0
  %1106 = vmatprep.subr.bf16.mxu0 0
  %1107 = vmatpush1.bf16.xpose.msra.mxu0 0
  %1108 = vmatprep.subr.bf16.mxu0 0
  %1109 = vmatpush1.bf16.xpose.msra.mxu0 0
  %1110 = vmatprep.subr.bf16.mxu0 0
  %1111 = vmatpush1.bf16.xpose.msra.mxu0 %v838
  %1112 = vmatprep.subr.bf16.mxu0 0
  %1113 = vmatpush1.bf16.xpose.msra.mxu0 %v835
  %1114 = vmatprep.subr.bf16.mxu0 0
  %1115 = vmatpush1.bf16.xpose.msra.mxu0 %v832
  %1116 = vmatprep.subr.bf16.mxu0 0
  %1117 = vmatpush2.bf16.xpose.msra.mxu0 0
  %1118 = vmatprep.subr.bf16.mxu0 0
  %1119 = vmatpush2.bf16.xpose.msra.mxu0 0
  %1120 = vmatprep.subr.bf16.mxu0 0
  %1121 = vmatpush2.bf16.xpose.msra.mxu0 0
  %1122 = vmatprep.subr.bf16.mxu0 0
  %1123 = vmatpush2.bf16.xpose.msra.mxu0 0
  %1124 = vmatprep.subr.bf16.mxu0 0
  %1125 = vmatpush2.bf16.xpose.msra.mxu0 0
  %1126 = vmatprep.subr.bf16.mxu0 0
  %1127 = vmatpush2.bf16.xpose.msra.mxu0 0
  %1128 = vmatprep.subr.bf16.mxu0 0
  %1129 = vmatpush2.bf16.xpose.msra.mxu0 0
  %1130 = vmatprep.subr.bf16.mxu0 0
  %1131 = vmatpush2.bf16.xpose.msra.mxu0 0
  %1132 = vmatprep.mubr.bf16.mxu0 0
  %1133 = vmatmul.mubr.bf16.gmra.mxu0 %v1092
  %v1134 = vpop.f32.mrf.mxu0
  %v1135 = vadd.f32 0.0, %v1134
  %v1136 = vpop.f32.mrf.mxu0
  %v1137 = vpop.f32.mrf.mxu0
  %v1138 = vadd.f32 0.0, %v1137
  %v1139 = vpop.f32.mrf.mxu0
  %1140 = vmatprep.mubr.bf16.mxu0 0
  %1141 = vmatmul.mubr.bf16.gmra.mxu0 %v1095
  %v1142 = vpop.f32.mrf.mxu0
  %v1143 = vadd.f32 0.0, %v1142
  %v1144 = vpop.f32.mrf.mxu0
  %v1145 = vpop.f32.mrf.mxu0
  %v1146 = vadd.f32 0.0, %v1145
  %v1147 = vpop.f32.mrf.mxu0
  %1148 = vmatprep.mubr.bf16.mxu0 0
  %1149 = vmatmul.mubr.bf16.gmra.mxu0 %v1098
  %v1150 = vpop.f32.mrf.mxu0
  %v1151 = vadd.f32 0.0, %v1150
  %v1152 = vpop.f32.mrf.mxu0
  %v1153 = vpop.f32.mrf.mxu0
  %v1154 = vpop.f32.mrf.mxu0
  %1155 = vdwg.mxu0
  %v1157 = vsel %vm269, %v704, 0
  %v1160 = vsel %vm269, %v705, 0
  %v1163 = vsel %vm269, %v706, 0
  %1165 = vmatprep.subr.bf16.mxu0 0
  %1166 = vmatpush1.bf16.xpose.msra.mxu0 0
  %1167 = vmatprep.subr.bf16.mxu0 0
  %1168 = vmatpush1.bf16.xpose.msra.mxu0 0
  %1169 = vmatprep.subr.bf16.mxu0 0
  %1170 = vmatpush1.bf16.xpose.msra.mxu0 0
  %1171 = vmatprep.subr.bf16.mxu0 0
  %1172 = vmatpush1.bf16.xpose.msra.mxu0 0
  %1173 = vmatprep.subr.bf16.mxu0 0
  %1174 = vmatpush1.bf16.xpose.msra.mxu0 0
  %1175 = vmatprep.subr.bf16.mxu0 0
  %1176 = vmatpush1.bf16.xpose.msra.mxu0 %v758
  %1177 = vmatprep.subr.bf16.mxu0 0
  %1178 = vmatpush1.bf16.xpose.msra.mxu0 %v755
  %1179 = vmatprep.subr.bf16.mxu0 0
  %1180 = vmatpush1.bf16.xpose.msra.mxu0 %v752
  %1181 = vmatprep.subr.bf16.mxu0 0
  %1182 = vmatpush2.bf16.xpose.msra.mxu0 0
  %1183 = vmatprep.subr.bf16.mxu0 0
  %1184 = vmatpush2.bf16.xpose.msra.mxu0 0
  %1185 = vmatprep.subr.bf16.mxu0 0
  %1186 = vmatpush2.bf16.xpose.msra.mxu0 0
  %1187 = vmatprep.subr.bf16.mxu0 0
  %1188 = vmatpush2.bf16.xpose.msra.mxu0 0
  %1189 = vmatprep.subr.bf16.mxu0 0
  %1190 = vmatpush2.bf16.xpose.msra.mxu0 0
  %1191 = vmatprep.subr.bf16.mxu0 0
  %1192 = vmatpush2.bf16.xpose.msra.mxu0 0
  %1193 = vmatprep.subr.bf16.mxu0 0
  %1194 = vmatpush2.bf16.xpose.msra.mxu0 0
  %1195 = vmatprep.subr.bf16.mxu0 0
  %1196 = vmatpush2.bf16.xpose.msra.mxu0 0
  %1197 = vmatprep.mubr.bf16.mxu0 0
  %1198 = vmatmul.mubr.bf16.gmra.mxu0 %v1157
  %v1199 = vpop.f32.mrf.mxu0
  %v1200 = vadd.f32 0.0, %v1199
  %v1201 = vpop.f32.mrf.mxu0
  %v1202 = vpop.f32.mrf.mxu0
  %v1203 = vadd.f32 0.0, %v1202
  %v1204 = vpop.f32.mrf.mxu0
  %1205 = vmatprep.mubr.bf16.mxu0 0
  %1206 = vmatmul.mubr.bf16.gmra.mxu0 %v1160
  %v1207 = vpop.f32.mrf.mxu0
  %v1208 = vadd.f32 0.0, %v1207
  %v1209 = vpop.f32.mrf.mxu0
  %v1210 = vpop.f32.mrf.mxu0
  %v1211 = vadd.f32 0.0, %v1210
  %v1212 = vpop.f32.mrf.mxu0
  %1213 = vmatprep.mubr.bf16.mxu0 0
  %1214 = vmatmul.mubr.bf16.gmra.mxu0 %v1163
  %v1215 = vpop.f32.mrf.mxu0
  %v1216 = vadd.f32 0.0, %v1215
  %v1217 = vpop.f32.mrf.mxu0
  %v1218 = vpop.f32.mrf.mxu0
  %v1219 = vpop.f32.mrf.mxu0
  %1220 = vdwg.mxu0
  %v1222 = vsel %vm269, %v707, 0
  %v1225 = vsel %vm269, %v708, 0
  %v1228 = vsel %vm269, %v709, 0
  %1230 = vmatprep.subr.bf16.mxu0 0
  %1231 = vmatpush1.bf16.xpose.msra.mxu0 0
  %1232 = vmatprep.subr.bf16.mxu0 0
  %1233 = vmatpush1.bf16.xpose.msra.mxu0 0
  %1234 = vmatprep.subr.bf16.mxu0 0
  %1235 = vmatpush1.bf16.xpose.msra.mxu0 0
  %1236 = vmatprep.subr.bf16.mxu0 0
  %1237 = vmatpush1.bf16.xpose.msra.mxu0 0
  %1238 = vmatprep.subr.bf16.mxu0 0
  %1239 = vmatpush1.bf16.xpose.msra.mxu0 0
  %1240 = vmatprep.subr.bf16.mxu0 0
  %1241 = vmatpush1.bf16.xpose.msra.mxu0 %v838
  %1242 = vmatprep.subr.bf16.mxu0 0
  %1243 = vmatpush1.bf16.xpose.msra.mxu0 %v835
  %1244 = vmatprep.subr.bf16.mxu0 0
  %1245 = vmatpush1.bf16.xpose.msra.mxu0 %v832
  %1246 = vmatprep.subr.bf16.mxu0 0
  %1247 = vmatpush2.bf16.xpose.msra.mxu0 0
  %1248 = vmatprep.subr.bf16.mxu0 0
  %1249 = vmatpush2.bf16.xpose.msra.mxu0 0
  %1250 = vmatprep.subr.bf16.mxu0 0
  %1251 = vmatpush2.bf16.xpose.msra.mxu0 0
  %1252 = vmatprep.subr.bf16.mxu0 0
  %1253 = vmatpush2.bf16.xpose.msra.mxu0 0
  %1254 = vmatprep.subr.bf16.mxu0 0
  %1255 = vmatpush2.bf16.xpose.msra.mxu0 0
  %1256 = vmatprep.subr.bf16.mxu0 0
  %1257 = vmatpush2.bf16.xpose.msra.mxu0 0
  %1258 = vmatprep.subr.bf16.mxu0 0
  %1259 = vmatpush2.bf16.xpose.msra.mxu0 0
  %1260 = vmatprep.subr.bf16.mxu0 0
  %1261 = vmatpush2.bf16.xpose.msra.mxu0 0
  %1262 = vmatprep.mubr.bf16.mxu0 0
  %1263 = vmatmul.mubr.bf16.gmra.mxu0 %v1222
  %v1264 = vpop.f32.mrf.mxu0
  %v1265 = vadd.f32 0.0, %v1264
  %v1266 = vpop.f32.mrf.mxu0
  %v1267 = vpop.f32.mrf.mxu0
  %v1268 = vadd.f32 0.0, %v1267
  %v1269 = vpop.f32.mrf.mxu0
  %1270 = vmatprep.mubr.bf16.mxu0 0
  %1271 = vmatmul.mubr.bf16.gmra.mxu0 %v1225
  %v1272 = vpop.f32.mrf.mxu0
  %v1273 = vadd.f32 0.0, %v1272
  %v1274 = vpop.f32.mrf.mxu0
  %v1275 = vpop.f32.mrf.mxu0
  %v1276 = vadd.f32 0.0, %v1275
  %v1277 = vpop.f32.mrf.mxu0
  %1278 = vmatprep.mubr.bf16.mxu0 0
  %1279 = vmatmul.mubr.bf16.gmra.mxu0 %v1228
  %v1280 = vpop.f32.mrf.mxu0
  %v1281 = vadd.f32 0.0, %v1280
  %v1282 = vpop.f32.mrf.mxu0
  %v1283 = vpop.f32.mrf.mxu0
  %v1284 = vpop.f32.mrf.mxu0
  %1285 = vdwg.mxu0
  %vm1286 = vcmask 269312
  %v1287 = vsel %vm1286, %v795, -inf
  %1288 = vmax.xlane.f32.xlu0 %v1287
  %v1289 = vpop.xlane.xlu0 %1288
  %v1290 = vsel %vm1286, %v798, -inf
  %1291 = vmax.xlane.f32.xlu0 %v1290
  %v1292 = vpop.xlane.xlu0 %1291
  %v1293 = vsel %vm1286, %v803, -inf
  %1294 = vmax.xlane.f32.xlu0 %v1293
  %v1295 = vpop.xlane.xlu0 %1294
  %v1296 = vsel %vm1286, %v806, -inf
  %1297 = vmax.xlane.f32.xlu0 %v1296
  %v1298 = vpop.xlane.xlu0 %1297
  %vm1299 = vcmask 262144
  %v1300 = vsel %vm1299, %v811, -inf
  %1301 = vmax.xlane.f32.xlu0 %v1300
  %v1302 = vpop.xlane.xlu0 %1301
  %v1303 = vsel %vm1286, %v875, -inf
  %1304 = vmax.xlane.f32.xlu0 %v1303
  %v1305 = vpop.xlane.xlu0 %1304
  %v1306 = vsel %vm1286, %v878, -inf
  %1307 = vmax.xlane.f32.xlu0 %v1306
  %v1308 = vpop.xlane.xlu0 %1307
  %v1309 = vsel %vm1286, %v883, -inf
  %1310 = vmax.xlane.f32.xlu0 %v1309
  %v1311 = vpop.xlane.xlu0 %1310
  %v1312 = vsel %vm1286, %v886, -inf
  %1313 = vmax.xlane.f32.xlu0 %v1312
  %v1314 = vpop.xlane.xlu0 %1313
  %v1315 = vsel %vm1299, %v891, -inf
  %1316 = vmax.xlane.f32.xlu0 %v1315
  %v1317 = vpop.xlane.xlu0 %1316
  %v1318 = vsel %vm1286, %v940, -inf
  %1319 = vmax.xlane.f32.xlu0 %v1318
  %v1320 = vpop.xlane.xlu0 %1319
  %v1321 = vsel %vm1286, %v943, -inf
  %1322 = vmax.xlane.f32.xlu0 %v1321
  %v1323 = vpop.xlane.xlu0 %1322
  %v1324 = vsel %vm1286, %v948, -inf
  %1325 = vmax.xlane.f32.xlu0 %v1324
  %v1326 = vpop.xlane.xlu0 %1325
  %v1327 = vsel %vm1286, %v951, -inf
  %1328 = vmax.xlane.f32.xlu0 %v1327
  %v1329 = vpop.xlane.xlu0 %1328
  %v1330 = vsel %vm1299, %v956, -inf
  %1331 = vmax.xlane.f32.xlu0 %v1330
  %v1332 = vpop.xlane.xlu0 %1331
  %v1333 = vsel %vm1286, %v1005, -inf
  %1334 = vmax.xlane.f32.xlu0 %v1333
  %v1335 = vpop.xlane.xlu0 %1334
  %v1336 = vsel %vm1286, %v1008, -inf
  %1337 = vmax.xlane.f32.xlu0 %v1336
  %v1338 = vpop.xlane.xlu0 %1337
  %v1339 = vsel %vm1286, %v1013, -inf
  %1340 = vmax.xlane.f32.xlu0 %v1339
  %v1341 = vpop.xlane.xlu0 %1340
  %v1342 = vsel %vm1286, %v1016, -inf
  %1343 = vmax.xlane.f32.xlu0 %v1342
  %v1344 = vpop.xlane.xlu0 %1343
  %v1345 = vsel %vm1299, %v1021, -inf
  %1346 = vmax.xlane.f32.xlu0 %v1345
  %v1347 = vpop.xlane.xlu0 %1346
  %v1348 = vsel %vm1286, %v1070, -inf
  %1349 = vmax.xlane.f32.xlu0 %v1348
  %v1350 = vpop.xlane.xlu0 %1349
  %v1351 = vsel %vm1286, %v1073, -inf
  %1352 = vmax.xlane.f32.xlu0 %v1351
  %v1353 = vpop.xlane.xlu0 %1352
  %v1354 = vsel %vm1286, %v1078, -inf
  %1355 = vmax.xlane.f32.xlu0 %v1354
  %v1356 = vpop.xlane.xlu0 %1355
  %v1357 = vsel %vm1286, %v1081, -inf
  %1358 = vmax.xlane.f32.xlu0 %v1357
  %v1359 = vpop.xlane.xlu0 %1358
  %v1360 = vsel %vm1299, %v1086, -inf
  %1361 = vmax.xlane.f32.xlu0 %v1360
  %v1362 = vpop.xlane.xlu0 %1361
  %v1363 = vsel %vm1286, %v1135, -inf
  %1364 = vmax.xlane.f32.xlu0 %v1363
  %v1365 = vpop.xlane.xlu0 %1364
  %v1366 = vsel %vm1286, %v1138, -inf
  %1367 = vmax.xlane.f32.xlu0 %v1366
  %v1368 = vpop.xlane.xlu0 %1367
  %v1369 = vsel %vm1286, %v1143, -inf
  %1370 = vmax.xlane.f32.xlu0 %v1369
  %v1371 = vpop.xlane.xlu0 %1370
  %v1372 = vsel %vm1286, %v1146, -inf
  %1373 = vmax.xlane.f32.xlu0 %v1372
  %v1374 = vpop.xlane.xlu0 %1373
  %v1375 = vsel %vm1299, %v1151, -inf
  %1376 = vmax.xlane.f32.xlu0 %v1375
  %v1377 = vpop.xlane.xlu0 %1376
  %v1378 = vsel %vm1286, %v1200, -inf
  %1379 = vmax.xlane.f32.xlu0 %v1378
  %v1380 = vpop.xlane.xlu0 %1379
  %v1381 = vsel %vm1286, %v1203, -inf
  %1382 = vmax.xlane.f32.xlu0 %v1381
  %v1383 = vpop.xlane.xlu0 %1382
  %v1384 = vsel %vm1286, %v1208, -inf
  %1385 = vmax.xlane.f32.xlu0 %v1384
  %v1386 = vpop.xlane.xlu0 %1385
  %v1387 = vsel %vm1286, %v1211, -inf
  %1388 = vmax.xlane.f32.xlu0 %v1387
  %v1389 = vpop.xlane.xlu0 %1388
  %v1390 = vsel %vm1299, %v1216, -inf
  %1391 = vmax.xlane.f32.xlu0 %v1390
  %v1392 = vpop.xlane.xlu0 %1391
  %v1393 = vsel %vm1286, %v1265, -inf
  %1394 = vmax.xlane.f32.xlu0 %v1393
  %v1395 = vpop.xlane.xlu0 %1394
  %v1396 = vsel %vm1286, %v1268, -inf
  %1397 = vmax.xlane.f32.xlu0 %v1396
  %v1398 = vpop.xlane.xlu0 %1397
  %v1399 = vsel %vm1286, %v1273, -inf
  %1400 = vmax.xlane.f32.xlu0 %v1399
  %v1401 = vpop.xlane.xlu0 %1400
  %v1402 = vsel %vm1286, %v1276, -inf
  %1403 = vmax.xlane.f32.xlu0 %v1402
  %v1404 = vpop.xlane.xlu0 %1403
  %v1405 = vsel %vm1299, %v1281, -inf
  %1406 = vmax.xlane.f32.xlu0 %v1405
  %v1407 = vpop.xlane.xlu0 %1406
  %v1408 = vsub.f32 %v795, %v1289
  %v1409 = vsub.f32 %v798, %v1292
  %v1410 = vsub.f32 %v803, %v1295
  %v1411 = vsub.f32 %v806, %v1298
  %v1412 = vsub.f32 %v811, %v1302
  %v1413 = vsub.f32 %v875, %v1305
  %v1414 = vsub.f32 %v878, %v1308
  %v1415 = vsub.f32 %v883, %v1311
  %v1416 = vsub.f32 %v886, %v1314
  %v1417 = vsub.f32 %v891, %v1317
  %v1418 = vsub.f32 %v940, %v1320
  %v1419 = vsub.f32 %v943, %v1323
  %v1420 = vsub.f32 %v948, %v1326
  %v1421 = vsub.f32 %v951, %v1329
  %v1422 = vsub.f32 %v956, %v1332
  %v1423 = vsub.f32 %v1005, %v1335
  %v1424 = vsub.f32 %v1008, %v1338
  %v1425 = vsub.f32 %v1013, %v1341
  %v1426 = vsub.f32 %v1016, %v1344
  %v1427 = vsub.f32 %v1021, %v1347
  %v1428 = vsub.f32 %v1070, %v1350
  %v1429 = vsub.f32 %v1073, %v1353
  %v1430 = vsub.f32 %v1078, %v1356
  %v1431 = vsub.f32 %v1081, %v1359
  %v1432 = vsub.f32 %v1086, %v1362
  %v1433 = vsub.f32 %v1135, %v1365
  %v1434 = vsub.f32 %v1138, %v1368
  %v1435 = vsub.f32 %v1143, %v1371
  %v1436 = vsub.f32 %v1146, %v1374
  %v1437 = vsub.f32 %v1151, %v1377
  %v1438 = vsub.f32 %v1200, %v1380
  %v1439 = vsub.f32 %v1203, %v1383
  %v1440 = vsub.f32 %v1208, %v1386
  %v1441 = vsub.f32 %v1211, %v1389
  %v1442 = vsub.f32 %v1216, %v1392
  %v1443 = vsub.f32 %v1265, %v1395
  %v1444 = vsub.f32 %v1268, %v1398
  %v1445 = vsub.f32 %v1273, %v1401
  %v1446 = vsub.f32 %v1276, %v1404
  %v1447 = vsub.f32 %v1281, %v1407
  %v1448 = vmul.f32 %v1408, 1.442695
  %v1449 = vpow.pop %v1448
  %v1450 = vmul.f32 %v1409, 1.442695
  %v1451 = vpow.pop %v1450
  %v1452 = vmul.f32 %v1410, 1.442695
  %v1453 = vpow.pop %v1452
  %v1454 = vmul.f32 %v1411, 1.442695
  %v1455 = vpow.pop %v1454
  %v1456 = vmul.f32 %v1412, 1.442695
  %v1457 = vpow.pop %v1456
  %v1458 = vmul.f32 %v1413, 1.442695
  %v1459 = vpow.pop %v1458
  %v1460 = vmul.f32 %v1414, 1.442695
  %v1461 = vpow.pop %v1460
  %v1462 = vmul.f32 %v1415, 1.442695
  %v1463 = vpow.pop %v1462
  %v1464 = vmul.f32 %v1416, 1.442695
  %v1465 = vpow.pop %v1464
  %v1466 = vmul.f32 %v1417, 1.442695
  %v1467 = vpow.pop %v1466
  %v1468 = vmul.f32 %v1418, 1.442695
  %v1469 = vpow.pop %v1468
  %v1470 = vmul.f32 %v1419, 1.442695
  %v1471 = vpow.pop %v1470
  %v1472 = vmul.f32 %v1420, 1.442695
  %v1473 = vpow.pop %v1472
  %v1474 = vmul.f32 %v1421, 1.442695
  %v1475 = vpow.pop %v1474
  %v1476 = vmul.f32 %v1422, 1.442695
  %v1477 = vpow.pop %v1476
  %v1478 = vmul.f32 %v1423, 1.442695
  %v1479 = vpow.pop %v1478
  %v1480 = vmul.f32 %v1424, 1.442695
  %v1481 = vpow.pop %v1480
  %v1482 = vmul.f32 %v1425, 1.442695
  %v1483 = vpow.pop %v1482
  %v1484 = vmul.f32 %v1426, 1.442695
  %v1485 = vpow.pop %v1484
  %v1486 = vmul.f32 %v1427, 1.442695
  %v1487 = vpow.pop %v1486
  %v1488 = vmul.f32 %v1428, 1.442695
  %v1489 = vpow.pop %v1488
  %v1490 = vmul.f32 %v1429, 1.442695
  %v1491 = vpow.pop %v1490
  %v1492 = vmul.f32 %v1430, 1.442695
  %v1493 = vpow.pop %v1492
  %v1494 = vmul.f32 %v1431, 1.442695
  %v1495 = vpow.pop %v1494
  %v1496 = vmul.f32 %v1432, 1.442695
  %v1497 = vpow.pop %v1496
  %v1498 = vmul.f32 %v1433, 1.442695
  %v1499 = vpow.pop %v1498
  %v1500 = vmul.f32 %v1434, 1.442695
  %v1501 = vpow.pop %v1500
  %v1502 = vmul.f32 %v1435, 1.442695
  %v1503 = vpow.pop %v1502
  %v1504 = vmul.f32 %v1436, 1.442695
  %v1505 = vpow.pop %v1504
  %v1506 = vmul.f32 %v1437, 1.442695
  %v1507 = vpow.pop %v1506
  %v1508 = vmul.f32 %v1438, 1.442695
  %v1509 = vpow.pop %v1508
  %v1510 = vmul.f32 %v1439, 1.442695
  %v1511 = vpow.pop %v1510
  %v1512 = vmul.f32 %v1440, 1.442695
  %v1513 = vpow.pop %v1512
  %v1514 = vmul.f32 %v1441, 1.442695
  %v1515 = vpow.pop %v1514
  %v1516 = vmul.f32 %v1442, 1.442695
  %v1517 = vpow.pop %v1516
  %v1518 = vmul.f32 %v1443, 1.442695
  %v1519 = vpow.pop %v1518
  %v1520 = vmul.f32 %v1444, 1.442695
  %v1521 = vpow.pop %v1520
  %v1522 = vmul.f32 %v1445, 1.442695
  %v1523 = vpow.pop %v1522
  %v1524 = vmul.f32 %v1446, 1.442695
  %v1525 = vpow.pop %v1524
  %v1526 = vmul.f32 %v1447, 1.442695
  %v1527 = vpow.pop %v1526
  %v1528 = vsel %vm1286, %v1449, 0.0
  %1529 = vadd.xlane.f32.xlu0 %v1528
  %v1530 = vpop.xlane.xlu0 %1529
  %v1531 = vsel %vm1286, %v1451, 0.0
  %1532 = vadd.xlane.f32.xlu0 %v1531
  %v1533 = vpop.xlane.xlu0 %1532
  %v1534 = vsel %vm1286, %v1453, 0.0
  %1535 = vadd.xlane.f32.xlu0 %v1534
  %v1536 = vpop.xlane.xlu0 %1535
  %v1537 = vsel %vm1286, %v1455, 0.0
  %1538 = vadd.xlane.f32.xlu0 %v1537
  %v1539 = vpop.xlane.xlu0 %1538
  %v1540 = vsel %vm1299, %v1457, 0.0
  %1541 = vadd.xlane.f32.xlu0 %v1540
  %v1542 = vpop.xlane.xlu0 %1541
  %v1543 = vsel %vm1286, %v1459, 0.0
  %1544 = vadd.xlane.f32.xlu0 %v1543
  %v1545 = vpop.xlane.xlu0 %1544
  %v1546 = vsel %vm1286, %v1461, 0.0
  %1547 = vadd.xlane.f32.xlu0 %v1546
  %v1548 = vpop.xlane.xlu0 %1547
  %v1549 = vsel %vm1286, %v1463, 0.0
  %1550 = vadd.xlane.f32.xlu0 %v1549
  %v1551 = vpop.xlane.xlu0 %1550
  %v1552 = vsel %vm1286, %v1465, 0.0
  %1553 = vadd.xlane.f32.xlu0 %v1552
  %v1554 = vpop.xlane.xlu0 %1553
  %v1555 = vsel %vm1299, %v1467, 0.0
  %1556 = vadd.xlane.f32.xlu0 %v1555
  %v1557 = vpop.xlane.xlu0 %1556
  %v1558 = vsel %vm1286, %v1469, 0.0
  %1559 = vadd.xlane.f32.xlu0 %v1558
  %v1560 = vpop.xlane.xlu0 %1559
  %v1561 = vsel %vm1286, %v1471, 0.0
  %1562 = vadd.xlane.f32.xlu0 %v1561
  %v1563 = vpop.xlane.xlu0 %1562
  %v1564 = vsel %vm1286, %v1473, 0.0
  %1565 = vadd.xlane.f32.xlu0 %v1564
  %v1566 = vpop.xlane.xlu0 %1565
  %v1567 = vsel %vm1286, %v1475, 0.0
  %1568 = vadd.xlane.f32.xlu0 %v1567
  %v1569 = vpop.xlane.xlu0 %1568
  %v1570 = vsel %vm1299, %v1477, 0.0
  %1571 = vadd.xlane.f32.xlu0 %v1570
  %v1572 = vpop.xlane.xlu0 %1571
  %v1573 = vsel %vm1286, %v1479, 0.0
  %1574 = vadd.xlane.f32.xlu0 %v1573
  %v1575 = vpop.xlane.xlu0 %1574
  %v1576 = vsel %vm1286, %v1481, 0.0
  %1577 = vadd.xlane.f32.xlu0 %v1576
  %v1578 = vpop.xlane.xlu0 %1577
  %v1579 = vsel %vm1286, %v1483, 0.0
  %1580 = vadd.xlane.f32.xlu0 %v1579
  %v1581 = vpop.xlane.xlu0 %1580
  %v1582 = vsel %vm1286, %v1485, 0.0
  %1583 = vadd.xlane.f32.xlu0 %v1582
  %v1584 = vpop.xlane.xlu0 %1583
  %v1585 = vsel %vm1299, %v1487, 0.0
  %1586 = vadd.xlane.f32.xlu0 %v1585
  %v1587 = vpop.xlane.xlu0 %1586
  %v1588 = vsel %vm1286, %v1489, 0.0
  %1589 = vadd.xlane.f32.xlu0 %v1588
  %v1590 = vpop.xlane.xlu0 %1589
  %v1591 = vsel %vm1286, %v1491, 0.0
  %1592 = vadd.xlane.f32.xlu0 %v1591
  %v1593 = vpop.xlane.xlu0 %1592
  %v1594 = vsel %vm1286, %v1493, 0.0
  %1595 = vadd.xlane.f32.xlu0 %v1594
  %v1596 = vpop.xlane.xlu0 %1595
  %v1597 = vsel %vm1286, %v1495, 0.0
  %1598 = vadd.xlane.f32.xlu0 %v1597
  %v1599 = vpop.xlane.xlu0 %1598
  %v1600 = vsel %vm1299, %v1497, 0.0
  %1601 = vadd.xlane.f32.xlu0 %v1600
  %v1602 = vpop.xlane.xlu0 %1601
  %v1603 = vsel %vm1286, %v1499, 0.0
  %1604 = vadd.xlane.f32.xlu0 %v1603
  %v1605 = vpop.xlane.xlu0 %1604
  %v1606 = vsel %vm1286, %v1501, 0.0
  %1607 = vadd.xlane.f32.xlu0 %v1606
  %v1608 = vpop.xlane.xlu0 %1607
  %v1609 = vsel %vm1286, %v1503, 0.0
  %1610 = vadd.xlane.f32.xlu0 %v1609
  %v1611 = vpop.xlane.xlu0 %1610
  %v1612 = vsel %vm1286, %v1505, 0.0
  %1613 = vadd.xlane.f32.xlu0 %v1612
  %v1614 = vpop.xlane.xlu0 %1613
  %v1615 = vsel %vm1299, %v1507, 0.0
  %1616 = vadd.xlane.f32.xlu0 %v1615
  %v1617 = vpop.xlane.xlu0 %1616
  %v1618 = vsel %vm1286, %v1509, 0.0
  %1619 = vadd.xlane.f32.xlu0 %v1618
  %v1620 = vpop.xlane.xlu0 %1619
  %v1621 = vsel %vm1286, %v1511, 0.0
  %1622 = vadd.xlane.f32.xlu0 %v1621
  %v1623 = vpop.xlane.xlu0 %1622
  %v1624 = vsel %vm1286, %v1513, 0.0
  %1625 = vadd.xlane.f32.xlu0 %v1624
  %v1626 = vpop.xlane.xlu0 %1625
  %v1627 = vsel %vm1286, %v1515, 0.0
  %1628 = vadd.xlane.f32.xlu0 %v1627
  %v1629 = vpop.xlane.xlu0 %1628
  %v1630 = vsel %vm1299, %v1517, 0.0
  %1631 = vadd.xlane.f32.xlu0 %v1630
  %v1632 = vpop.xlane.xlu0 %1631
  %v1633 = vsel %vm1286, %v1519, 0.0
  %1634 = vadd.xlane.f32.xlu0 %v1633
  %v1635 = vpop.xlane.xlu0 %1634
  %v1636 = vsel %vm1286, %v1521, 0.0
  %1637 = vadd.xlane.f32.xlu0 %v1636
  %v1638 = vpop.xlane.xlu0 %1637
  %v1639 = vsel %vm1286, %v1523, 0.0
  %1640 = vadd.xlane.f32.xlu0 %v1639
  %v1641 = vpop.xlane.xlu0 %1640
  %v1642 = vsel %vm1286, %v1525, 0.0
  %1643 = vadd.xlane.f32.xlu0 %v1642
  %v1644 = vpop.xlane.xlu0 %1643
  %v1645 = vsel %vm1299, %v1527, 0.0
  %1646 = vadd.xlane.f32.xlu0 %v1645
  %v1647 = vpop.xlane.xlu0 %1646
  %v1648 = vrcp.pop %v1530
  %v1649 = vrcp.pop %v1533
  %v1650 = vrcp.pop %v1536
  %v1651 = vrcp.pop %v1539
  %v1652 = vrcp.pop %v1542
  %v1653 = vrcp.pop %v1545
  %v1654 = vrcp.pop %v1548
  %v1655 = vrcp.pop %v1551
  %v1656 = vrcp.pop %v1554
  %v1657 = vrcp.pop %v1557
  %v1658 = vrcp.pop %v1560
  %v1659 = vrcp.pop %v1563
  %v1660 = vrcp.pop %v1566
  %v1661 = vrcp.pop %v1569
  %v1662 = vrcp.pop %v1572
  %v1663 = vrcp.pop %v1575
  %v1664 = vrcp.pop %v1578
  %v1665 = vrcp.pop %v1581
  %v1666 = vrcp.pop %v1584
  %v1667 = vrcp.pop %v1587
  %v1668 = vrcp.pop %v1590
  %v1669 = vrcp.pop %v1593
  %v1670 = vrcp.pop %v1596
  %v1671 = vrcp.pop %v1599
  %v1672 = vrcp.pop %v1602
  %v1673 = vrcp.pop %v1605
  %v1674 = vrcp.pop %v1608
  %v1675 = vrcp.pop %v1611
  %v1676 = vrcp.pop %v1614
  %v1677 = vrcp.pop %v1617
  %v1678 = vrcp.pop %v1620
  %v1679 = vrcp.pop %v1623
  %v1680 = vrcp.pop %v1626
  %v1681 = vrcp.pop %v1629
  %v1682 = vrcp.pop %v1632
  %v1683 = vrcp.pop %v1635
  %v1684 = vrcp.pop %v1638
  %v1685 = vrcp.pop %v1641
  %v1686 = vrcp.pop %v1644
  %v1687 = vrcp.pop %v1647
  %v1688 = vmul.f32 %v1449, %v1648
  %v1689 = vmul.f32 %v1451, %v1649
  %v1690 = vmul.f32 %v1453, %v1650
  %v1691 = vmul.f32 %v1455, %v1651
  %v1692 = vmul.f32 %v1457, %v1652
  %v1693 = vmul.f32 %v1459, %v1653
  %v1694 = vmul.f32 %v1461, %v1654
  %v1695 = vmul.f32 %v1463, %v1655
  %v1696 = vmul.f32 %v1465, %v1656
  %v1697 = vmul.f32 %v1467, %v1657
  %v1698 = vmul.f32 %v1469, %v1658
  %v1699 = vmul.f32 %v1471, %v1659
  %v1700 = vmul.f32 %v1473, %v1660
  %v1701 = vmul.f32 %v1475, %v1661
  %v1702 = vmul.f32 %v1477, %v1662
  %v1703 = vmul.f32 %v1479, %v1663
  %v1704 = vmul.f32 %v1481, %v1664
  %v1705 = vmul.f32 %v1483, %v1665
  %v1706 = vmul.f32 %v1485, %v1666
  %v1707 = vmul.f32 %v1487, %v1667
  %v1708 = vmul.f32 %v1489, %v1668
  %v1709 = vmul.f32 %v1491, %v1669
  %v1710 = vmul.f32 %v1493, %v1670
  %v1711 = vmul.f32 %v1495, %v1671
  %v1712 = vmul.f32 %v1497, %v1672
  %v1713 = vmul.f32 %v1499, %v1673
  %v1714 = vmul.f32 %v1501, %v1674
  %v1715 = vmul.f32 %v1503, %v1675
  %v1716 = vmul.f32 %v1505, %v1676
  %v1717 = vmul.f32 %v1507, %v1677
  %v1718 = vmul.f32 %v1509, %v1678
  %v1719 = vmul.f32 %v1511, %v1679
  %v1720 = vmul.f32 %v1513, %v1680
  %v1721 = vmul.f32 %v1515, %v1681
  %v1722 = vmul.f32 %v1517, %v1682
  %v1723 = vmul.f32 %v1519, %v1683
  %v1724 = vmul.f32 %v1521, %v1684
  %v1725 = vmul.f32 %v1523, %v1685
  %v1726 = vmul.f32 %v1525, %v1686
  %v1727 = vmul.f32 %v1527, %v1687
  %v1728 = vpack.c.bf16 %v1689, %v1688
  %v1729 = vpack.c.bf16 %v1691, %v1690
  %v1730 = vpack.c.bf16 %v1692, %v1692
  %v1731 = vpack.c.bf16 %v1694, %v1693
  %v1732 = vpack.c.bf16 %v1696, %v1695
  %v1733 = vpack.c.bf16 %v1697, %v1697
  %v1734 = vpack.c.bf16 %v1699, %v1698
  %v1735 = vpack.c.bf16 %v1701, %v1700
  %v1736 = vpack.c.bf16 %v1702, %v1702
  %v1737 = vpack.c.bf16 %v1704, %v1703
  %v1738 = vpack.c.bf16 %v1706, %v1705
  %v1739 = vpack.c.bf16 %v1707, %v1707
  %v1740 = vpack.c.bf16 %v1709, %v1708
  %v1741 = vpack.c.bf16 %v1711, %v1710
  %v1742 = vpack.c.bf16 %v1712, %v1712
  %v1743 = vpack.c.bf16 %v1714, %v1713
  %v1744 = vpack.c.bf16 %v1716, %v1715
  %v1745 = vpack.c.bf16 %v1717, %v1717
  %v1746 = vpack.c.bf16 %v1719, %v1718
  %v1747 = vpack.c.bf16 %v1721, %v1720
  %v1748 = vpack.c.bf16 %v1722, %v1722
  %v1749 = vpack.c.bf16 %v1724, %v1723
  %v1750 = vpack.c.bf16 %v1726, %v1725
  %v1751 = vpack.c.bf16 %v1727, %v1727
  %1752 = vrot.lane.b32.xlu0 %v552, 64
  %v1753 = vpop.permute.xlu0 %1752
  %1754 = vrot.lane.b32.xlu0 %v553, 64
  %v1755 = vpop.permute.xlu0 %1754
  %1756 = vrot.lane.b32.xlu0 %v554, 64
  %v1757 = vpop.permute.xlu0 %1756
  %v1761 = vsel %vm1286, %v1728, 0
  %v1764 = vsel %vm1286, %v1729, 0
  %v1767 = vsel %vm1286, %v1730, 0
  %v1770 = vand.u32 %v1757, %v172
  %1772 = vmatprep.subr.bf16.mxu0 0
  %1773 = vmatpush1.bf16.msra.mxu0 0
  %1774 = vmatprep.subr.bf16.mxu0 0
  %1775 = vmatpush1.bf16.msra.mxu0 0
  %1776 = vmatprep.subr.bf16.mxu0 0
  %1777 = vmatpush1.bf16.msra.mxu0 0
  %1778 = vmatprep.subr.bf16.mxu0 0
  %1779 = vmatpush1.bf16.msra.mxu0 0
  %1780 = vmatprep.subr.bf16.mxu0 0
  %1781 = vmatpush1.bf16.msra.mxu0 0
  %1782 = vmatprep.subr.bf16.mxu0 0
  %1783 = vmatpush1.bf16.msra.mxu0 %v1770
  %1784 = vmatprep.subr.bf16.mxu0 0
  %1785 = vmatpush1.bf16.msra.mxu0 %v1755
  %1786 = vmatprep.subr.bf16.mxu0 0
  %1787 = vmatpush1.bf16.msra.mxu0 %v1753
  %1788 = vmatprep.subr.bf16.mxu0 0
  %1789 = vmatpush2.bf16.msra.mxu0 0
  %1790 = vmatprep.subr.bf16.mxu0 0
  %1791 = vmatpush2.bf16.msra.mxu0 0
  %1792 = vmatprep.subr.bf16.mxu0 0
  %1793 = vmatpush2.bf16.msra.mxu0 0
  %1794 = vmatprep.subr.bf16.mxu0 0
  %1795 = vmatpush2.bf16.msra.mxu0 0
  %1796 = vmatprep.subr.bf16.mxu0 0
  %1797 = vmatpush2.bf16.msra.mxu0 0
  %1798 = vmatprep.subr.bf16.mxu0 0
  %1799 = vmatpush2.bf16.msra.mxu0 0
  %1800 = vmatprep.subr.bf16.mxu0 0
  %1801 = vmatpush2.bf16.msra.mxu0 0
  %1802 = vmatprep.subr.bf16.mxu0 0
  %1803 = vmatpush2.bf16.msra.mxu0 0
  %1804 = vmatprep.mubr.bf16.mxu0 0
  %1805 = vmatmul.mubr.bf16.gmra.mxu0 %v1761
  %v1806 = vpop.f32.mrf.mxu0
  %v1807 = vadd.f32 0.0, %v1806
  %v1808 = vpop.f32.mrf.mxu0
  %v1809 = vpop.f32.mrf.mxu0
  %v1810 = vadd.f32 0.0, %v1809
  %v1811 = vpop.f32.mrf.mxu0
  %1812 = vmatprep.mubr.bf16.mxu0 0
  %1813 = vmatmul.mubr.bf16.gmra.mxu0 %v1764
  %v1814 = vpop.f32.mrf.mxu0
  %v1815 = vadd.f32 0.0, %v1814
  %v1816 = vpop.f32.mrf.mxu0
  %v1817 = vpop.f32.mrf.mxu0
  %v1818 = vadd.f32 0.0, %v1817
  %v1819 = vpop.f32.mrf.mxu0
  %1820 = vmatprep.mubr.bf16.mxu0 0
  %1821 = vmatmul.mubr.bf16.gmra.mxu0 %v1767
  %v1822 = vpop.f32.mrf.mxu0
  %v1823 = vadd.f32 0.0, %v1822
  %v1824 = vpop.f32.mrf.mxu0
  %v1825 = vpop.f32.mrf.mxu0
  %v1826 = vpop.f32.mrf.mxu0
  %1827 = vdwg.mxu0
  %1828 = vrot.lane.b32.xlu0 %v722, 64
  %v1829 = vpop.permute.xlu0 %1828
  %1830 = vrot.lane.b32.xlu0 %v730, 64
  %v1831 = vpop.permute.xlu0 %1830
  %1832 = vrot.lane.b32.xlu0 %v731, 64
  %v1833 = vpop.permute.xlu0 %1832
  %v1837 = vsel %vm1286, %v1731, 0
  %v1840 = vsel %vm1286, %v1732, 0
  %v1843 = vsel %vm1286, %v1733, 0
  %v1846 = vand.u32 %v1833, %v172
  %1848 = vmatprep.subr.bf16.mxu0 0
  %1849 = vmatpush1.bf16.msra.mxu0 0
  %1850 = vmatprep.subr.bf16.mxu0 0
  %1851 = vmatpush1.bf16.msra.mxu0 0
  %1852 = vmatprep.subr.bf16.mxu0 0
  %1853 = vmatpush1.bf16.msra.mxu0 0
  %1854 = vmatprep.subr.bf16.mxu0 0
  %1855 = vmatpush1.bf16.msra.mxu0 0
  %1856 = vmatprep.subr.bf16.mxu0 0
  %1857 = vmatpush1.bf16.msra.mxu0 0
  %1858 = vmatprep.subr.bf16.mxu0 0
  %1859 = vmatpush1.bf16.msra.mxu0 %v1846
  %1860 = vmatprep.subr.bf16.mxu0 0
  %1861 = vmatpush1.bf16.msra.mxu0 %v1831
  %1862 = vmatprep.subr.bf16.mxu0 0
  %1863 = vmatpush1.bf16.msra.mxu0 %v1829
  %1864 = vmatprep.subr.bf16.mxu0 0
  %1865 = vmatpush2.bf16.msra.mxu0 0
  %1866 = vmatprep.subr.bf16.mxu0 0
  %1867 = vmatpush2.bf16.msra.mxu0 0
  %1868 = vmatprep.subr.bf16.mxu0 0
  %1869 = vmatpush2.bf16.msra.mxu0 0
  %1870 = vmatprep.subr.bf16.mxu0 0
  %1871 = vmatpush2.bf16.msra.mxu0 0
  %1872 = vmatprep.subr.bf16.mxu0 0
  %1873 = vmatpush2.bf16.msra.mxu0 0
  %1874 = vmatprep.subr.bf16.mxu0 0
  %1875 = vmatpush2.bf16.msra.mxu0 0
  %1876 = vmatprep.subr.bf16.mxu0 0
  %1877 = vmatpush2.bf16.msra.mxu0 0
  %1878 = vmatprep.subr.bf16.mxu0 0
  %1879 = vmatpush2.bf16.msra.mxu0 0
  %1880 = vmatprep.mubr.bf16.mxu0 0
  %1881 = vmatmul.mubr.bf16.gmra.mxu0 %v1837
  %v1882 = vpop.f32.mrf.mxu0
  %v1883 = vadd.f32 0.0, %v1882
  %v1884 = vpop.f32.mrf.mxu0
  %v1885 = vpop.f32.mrf.mxu0
  %v1886 = vadd.f32 0.0, %v1885
  %v1887 = vpop.f32.mrf.mxu0
  %1888 = vmatprep.mubr.bf16.mxu0 0
  %1889 = vmatmul.mubr.bf16.gmra.mxu0 %v1840
  %v1890 = vpop.f32.mrf.mxu0
  %v1891 = vadd.f32 0.0, %v1890
  %v1892 = vpop.f32.mrf.mxu0
  %v1893 = vpop.f32.mrf.mxu0
  %v1894 = vadd.f32 0.0, %v1893
  %v1895 = vpop.f32.mrf.mxu0
  %1896 = vmatprep.mubr.bf16.mxu0 0
  %1897 = vmatmul.mubr.bf16.gmra.mxu0 %v1843
  %v1898 = vpop.f32.mrf.mxu0
  %v1899 = vadd.f32 0.0, %v1898
  %v1900 = vpop.f32.mrf.mxu0
  %v1901 = vpop.f32.mrf.mxu0
  %v1902 = vpop.f32.mrf.mxu0
  %1903 = vdwg.mxu0
  %v1905 = vsel %vm1286, %v1734, 0
  %v1908 = vsel %vm1286, %v1735, 0
  %v1911 = vsel %vm1286, %v1736, 0
  %1913 = vmatprep.subr.bf16.mxu0 0
  %1914 = vmatpush1.bf16.msra.mxu0 0
  %1915 = vmatprep.subr.bf16.mxu0 0
  %1916 = vmatpush1.bf16.msra.mxu0 0
  %1917 = vmatprep.subr.bf16.mxu0 0
  %1918 = vmatpush1.bf16.msra.mxu0 0
  %1919 = vmatprep.subr.bf16.mxu0 0
  %1920 = vmatpush1.bf16.msra.mxu0 0
  %1921 = vmatprep.subr.bf16.mxu0 0
  %1922 = vmatpush1.bf16.msra.mxu0 0
  %1923 = vmatprep.subr.bf16.mxu0 0
  %1924 = vmatpush1.bf16.msra.mxu0 %v1770
  %1925 = vmatprep.subr.bf16.mxu0 0
  %1926 = vmatpush1.bf16.msra.mxu0 %v1755
  %1927 = vmatprep.subr.bf16.mxu0 0
  %1928 = vmatpush1.bf16.msra.mxu0 %v1753
  %1929 = vmatprep.subr.bf16.mxu0 0
  %1930 = vmatpush2.bf16.msra.mxu0 0
  %1931 = vmatprep.subr.bf16.mxu0 0
  %1932 = vmatpush2.bf16.msra.mxu0 0
  %1933 = vmatprep.subr.bf16.mxu0 0
  %1934 = vmatpush2.bf16.msra.mxu0 0
  %1935 = vmatprep.subr.bf16.mxu0 0
  %1936 = vmatpush2.bf16.msra.mxu0 0
  %1937 = vmatprep.subr.bf16.mxu0 0
  %1938 = vmatpush2.bf16.msra.mxu0 0
  %1939 = vmatprep.subr.bf16.mxu0 0
  %1940 = vmatpush2.bf16.msra.mxu0 0
  %1941 = vmatprep.subr.bf16.mxu0 0
  %1942 = vmatpush2.bf16.msra.mxu0 0
  %1943 = vmatprep.subr.bf16.mxu0 0
  %1944 = vmatpush2.bf16.msra.mxu0 0
  %1945 = vmatprep.mubr.bf16.mxu0 0
  %1946 = vmatmul.mubr.bf16.gmra.mxu0 %v1905
  %v1947 = vpop.f32.mrf.mxu0
  %v1948 = vadd.f32 0.0, %v1947
  %v1949 = vpop.f32.mrf.mxu0
  %v1950 = vpop.f32.mrf.mxu0
  %v1951 = vadd.f32 0.0, %v1950
  %v1952 = vpop.f32.mrf.mxu0
  %1953 = vmatprep.mubr.bf16.mxu0 0
  %1954 = vmatmul.mubr.bf16.gmra.mxu0 %v1908
  %v1955 = vpop.f32.mrf.mxu0
  %v1956 = vadd.f32 0.0, %v1955
  %v1957 = vpop.f32.mrf.mxu0
  %v1958 = vpop.f32.mrf.mxu0
  %v1959 = vadd.f32 0.0, %v1958
  %v1960 = vpop.f32.mrf.mxu0
  %1961 = vmatprep.mubr.bf16.mxu0 0
  %1962 = vmatmul.mubr.bf16.gmra.mxu0 %v1911
  %v1963 = vpop.f32.mrf.mxu0
  %v1964 = vadd.f32 0.0, %v1963
  %v1965 = vpop.f32.mrf.mxu0
  %v1966 = vpop.f32.mrf.mxu0
  %v1967 = vpop.f32.mrf.mxu0
  %1968 = vdwg.mxu0
  %v1970 = vsel %vm1286, %v1737, 0
  %v1973 = vsel %vm1286, %v1738, 0
  %v1976 = vsel %vm1286, %v1739, 0
  %1978 = vmatprep.subr.bf16.mxu0 0
  %1979 = vmatpush1.bf16.msra.mxu0 0
  %1980 = vmatprep.subr.bf16.mxu0 0
  %1981 = vmatpush1.bf16.msra.mxu0 0
  %1982 = vmatprep.subr.bf16.mxu0 0
  %1983 = vmatpush1.bf16.msra.mxu0 0
  %1984 = vmatprep.subr.bf16.mxu0 0
  %1985 = vmatpush1.bf16.msra.mxu0 0
  %1986 = vmatprep.subr.bf16.mxu0 0
  %1987 = vmatpush1.bf16.msra.mxu0 0
  %1988 = vmatprep.subr.bf16.mxu0 0
  %1989 = vmatpush1.bf16.msra.mxu0 %v1846
  %1990 = vmatprep.subr.bf16.mxu0 0
  %1991 = vmatpush1.bf16.msra.mxu0 %v1831
  %1992 = vmatprep.subr.bf16.mxu0 0
  %1993 = vmatpush1.bf16.msra.mxu0 %v1829
  %1994 = vmatprep.subr.bf16.mxu0 0
  %1995 = vmatpush2.bf16.msra.mxu0 0
  %1996 = vmatprep.subr.bf16.mxu0 0
  %1997 = vmatpush2.bf16.msra.mxu0 0
  %1998 = vmatprep.subr.bf16.mxu0 0
  %1999 = vmatpush2.bf16.msra.mxu0 0
  %2000 = vmatprep.subr.bf16.mxu0 0
  %2001 = vmatpush2.bf16.msra.mxu0 0
  %2002 = vmatprep.subr.bf16.mxu0 0
  %2003 = vmatpush2.bf16.msra.mxu0 0
  %2004 = vmatprep.subr.bf16.mxu0 0
  %2005 = vmatpush2.bf16.msra.mxu0 0
  %2006 = vmatprep.subr.bf16.mxu0 0
  %2007 = vmatpush2.bf16.msra.mxu0 0
  %2008 = vmatprep.subr.bf16.mxu0 0
  %2009 = vmatpush2.bf16.msra.mxu0 0
  %2010 = vmatprep.mubr.bf16.mxu0 0
  %2011 = vmatmul.mubr.bf16.gmra.mxu0 %v1970
  %v2012 = vpop.f32.mrf.mxu0
  %v2013 = vadd.f32 0.0, %v2012
  %v2014 = vpop.f32.mrf.mxu0
  %v2015 = vpop.f32.mrf.mxu0
  %v2016 = vadd.f32 0.0, %v2015
  %v2017 = vpop.f32.mrf.mxu0
  %2018 = vmatprep.mubr.bf16.mxu0 0
  %2019 = vmatmul.mubr.bf16.gmra.mxu0 %v1973
  %v2020 = vpop.f32.mrf.mxu0
  %v2021 = vadd.f32 0.0, %v2020
  %v2022 = vpop.f32.mrf.mxu0
  %v2023 = vpop.f32.mrf.mxu0
  %v2024 = vadd.f32 0.0, %v2023
  %v2025 = vpop.f32.mrf.mxu0
  %2026 = vmatprep.mubr.bf16.mxu0 0
  %2027 = vmatmul.mubr.bf16.gmra.mxu0 %v1976
  %v2028 = vpop.f32.mrf.mxu0
  %v2029 = vadd.f32 0.0, %v2028
  %v2030 = vpop.f32.mrf.mxu0
  %v2031 = vpop.f32.mrf.mxu0
  %v2032 = vpop.f32.mrf.mxu0
  %2033 = vdwg.mxu0
  %v2035 = vsel %vm1286, %v1740, 0
  %v2038 = vsel %vm1286, %v1741, 0
  %v2041 = vsel %vm1286, %v1742, 0
  %2043 = vmatprep.subr.bf16.mxu0 0
  %2044 = vmatpush1.bf16.msra.mxu0 0
  %2045 = vmatprep.subr.bf16.mxu0 0
  %2046 = vmatpush1.bf16.msra.mxu0 0
  %2047 = vmatprep.subr.bf16.mxu0 0
  %2048 = vmatpush1.bf16.msra.mxu0 0
  %2049 = vmatprep.subr.bf16.mxu0 0
  %2050 = vmatpush1.bf16.msra.mxu0 0
  %2051 = vmatprep.subr.bf16.mxu0 0
  %2052 = vmatpush1.bf16.msra.mxu0 0
  %2053 = vmatprep.subr.bf16.mxu0 0
  %2054 = vmatpush1.bf16.msra.mxu0 %v1770
  %2055 = vmatprep.subr.bf16.mxu0 0
  %2056 = vmatpush1.bf16.msra.mxu0 %v1755
  %2057 = vmatprep.subr.bf16.mxu0 0
  %2058 = vmatpush1.bf16.msra.mxu0 %v1753
  %2059 = vmatprep.subr.bf16.mxu0 0
  %2060 = vmatpush2.bf16.msra.mxu0 0
  %2061 = vmatprep.subr.bf16.mxu0 0
  %2062 = vmatpush2.bf16.msra.mxu0 0
  %2063 = vmatprep.subr.bf16.mxu0 0
  %2064 = vmatpush2.bf16.msra.mxu0 0
  %2065 = vmatprep.subr.bf16.mxu0 0
  %2066 = vmatpush2.bf16.msra.mxu0 0
  %2067 = vmatprep.subr.bf16.mxu0 0
  %2068 = vmatpush2.bf16.msra.mxu0 0
  %2069 = vmatprep.subr.bf16.mxu0 0
  %2070 = vmatpush2.bf16.msra.mxu0 0
  %2071 = vmatprep.subr.bf16.mxu0 0
  %2072 = vmatpush2.bf16.msra.mxu0 0
  %2073 = vmatprep.subr.bf16.mxu0 0
  %2074 = vmatpush2.bf16.msra.mxu0 0
  %2075 = vmatprep.mubr.bf16.mxu0 0
  %2076 = vmatmul.mubr.bf16.gmra.mxu0 %v2035
  %v2077 = vpop.f32.mrf.mxu0
  %v2078 = vadd.f32 0.0, %v2077
  %v2079 = vpop.f32.mrf.mxu0
  %v2080 = vpop.f32.mrf.mxu0
  %v2081 = vadd.f32 0.0, %v2080
  %v2082 = vpop.f32.mrf.mxu0
  %2083 = vmatprep.mubr.bf16.mxu0 0
  %2084 = vmatmul.mubr.bf16.gmra.mxu0 %v2038
  %v2085 = vpop.f32.mrf.mxu0
  %v2086 = vadd.f32 0.0, %v2085
  %v2087 = vpop.f32.mrf.mxu0
  %v2088 = vpop.f32.mrf.mxu0
  %v2089 = vadd.f32 0.0, %v2088
  %v2090 = vpop.f32.mrf.mxu0
  %2091 = vmatprep.mubr.bf16.mxu0 0
  %2092 = vmatmul.mubr.bf16.gmra.mxu0 %v2041
  %v2093 = vpop.f32.mrf.mxu0
  %v2094 = vadd.f32 0.0, %v2093
  %v2095 = vpop.f32.mrf.mxu0
  %v2096 = vpop.f32.mrf.mxu0
  %v2097 = vpop.f32.mrf.mxu0
  %2098 = vdwg.mxu0
  %v2100 = vsel %vm1286, %v1743, 0
  %v2103 = vsel %vm1286, %v1744, 0
  %v2106 = vsel %vm1286, %v1745, 0
  %2108 = vmatprep.subr.bf16.mxu0 0
  %2109 = vmatpush1.bf16.msra.mxu0 0
  %2110 = vmatprep.subr.bf16.mxu0 0
  %2111 = vmatpush1.bf16.msra.mxu0 0
  %2112 = vmatprep.subr.bf16.mxu0 0
  %2113 = vmatpush1.bf16.msra.mxu0 0
  %2114 = vmatprep.subr.bf16.mxu0 0
  %2115 = vmatpush1.bf16.msra.mxu0 0
  %2116 = vmatprep.subr.bf16.mxu0 0
  %2117 = vmatpush1.bf16.msra.mxu0 0
  %2118 = vmatprep.subr.bf16.mxu0 0
  %2119 = vmatpush1.bf16.msra.mxu0 %v1846
  %2120 = vmatprep.subr.bf16.mxu0 0
  %2121 = vmatpush1.bf16.msra.mxu0 %v1831
  %2122 = vmatprep.subr.bf16.mxu0 0
  %2123 = vmatpush1.bf16.msra.mxu0 %v1829
  %2124 = vmatprep.subr.bf16.mxu0 0
  %2125 = vmatpush2.bf16.msra.mxu0 0
  %2126 = vmatprep.subr.bf16.mxu0 0
  %2127 = vmatpush2.bf16.msra.mxu0 0
  %2128 = vmatprep.subr.bf16.mxu0 0
  %2129 = vmatpush2.bf16.msra.mxu0 0
  %2130 = vmatprep.subr.bf16.mxu0 0
  %2131 = vmatpush2.bf16.msra.mxu0 0
  %2132 = vmatprep.subr.bf16.mxu0 0
  %2133 = vmatpush2.bf16.msra.mxu0 0
  %2134 = vmatprep.subr.bf16.mxu0 0
  %2135 = vmatpush2.bf16.msra.mxu0 0
  %2136 = vmatprep.subr.bf16.mxu0 0
  %2137 = vmatpush2.bf16.msra.mxu0 0
  %2138 = vmatprep.subr.bf16.mxu0 0
  %2139 = vmatpush2.bf16.msra.mxu0 0
  %2140 = vmatprep.mubr.bf16.mxu0 0
  %2141 = vmatmul.mubr.bf16.gmra.mxu0 %v2100
  %v2142 = vpop.f32.mrf.mxu0
  %v2143 = vadd.f32 0.0, %v2142
  %v2144 = vpop.f32.mrf.mxu0
  %v2145 = vpop.f32.mrf.mxu0
  %v2146 = vadd.f32 0.0, %v2145
  %v2147 = vpop.f32.mrf.mxu0
  %2148 = vmatprep.mubr.bf16.mxu0 0
  %2149 = vmatmul.mubr.bf16.gmra.mxu0 %v2103
  %v2150 = vpop.f32.mrf.mxu0
  %v2151 = vadd.f32 0.0, %v2150
  %v2152 = vpop.f32.mrf.mxu0
  %v2153 = vpop.f32.mrf.mxu0
  %v2154 = vadd.f32 0.0, %v2153
  %v2155 = vpop.f32.mrf.mxu0
  %2156 = vmatprep.mubr.bf16.mxu0 0
  %2157 = vmatmul.mubr.bf16.gmra.mxu0 %v2106
  %v2158 = vpop.f32.mrf.mxu0
  %v2159 = vadd.f32 0.0, %v2158
  %v2160 = vpop.f32.mrf.mxu0
  %v2161 = vpop.f32.mrf.mxu0
  %v2162 = vpop.f32.mrf.mxu0
  %2163 = vdwg.mxu0
  %v2165 = vsel %vm1286, %v1746, 0
  %v2168 = vsel %vm1286, %v1747, 0
  %v2171 = vsel %vm1286, %v1748, 0
  %2173 = vmatprep.subr.bf16.mxu0 0
  %2174 = vmatpush1.bf16.msra.mxu0 0
  %2175 = vmatprep.subr.bf16.mxu0 0
  %2176 = vmatpush1.bf16.msra.mxu0 0
  %2177 = vmatprep.subr.bf16.mxu0 0
  %2178 = vmatpush1.bf16.msra.mxu0 0
  %2179 = vmatprep.subr.bf16.mxu0 0
  %2180 = vmatpush1.bf16.msra.mxu0 0
  %2181 = vmatprep.subr.bf16.mxu0 0
  %2182 = vmatpush1.bf16.msra.mxu0 0
  %2183 = vmatprep.subr.bf16.mxu0 0
  %2184 = vmatpush1.bf16.msra.mxu0 %v1770
  %2185 = vmatprep.subr.bf16.mxu0 0
  %2186 = vmatpush1.bf16.msra.mxu0 %v1755
  %2187 = vmatprep.subr.bf16.mxu0 0
  %2188 = vmatpush1.bf16.msra.mxu0 %v1753
  %2189 = vmatprep.subr.bf16.mxu0 0
  %2190 = vmatpush2.bf16.msra.mxu0 0
  %2191 = vmatprep.subr.bf16.mxu0 0
  %2192 = vmatpush2.bf16.msra.mxu0 0
  %2193 = vmatprep.subr.bf16.mxu0 0
  %2194 = vmatpush2.bf16.msra.mxu0 0
  %2195 = vmatprep.subr.bf16.mxu0 0
  %2196 = vmatpush2.bf16.msra.mxu0 0
  %2197 = vmatprep.subr.bf16.mxu0 0
  %2198 = vmatpush2.bf16.msra.mxu0 0
  %2199 = vmatprep.subr.bf16.mxu0 0
  %2200 = vmatpush2.bf16.msra.mxu0 0
  %2201 = vmatprep.subr.bf16.mxu0 0
  %2202 = vmatpush2.bf16.msra.mxu0 0
  %2203 = vmatprep.subr.bf16.mxu0 0
  %2204 = vmatpush2.bf16.msra.mxu0 0
  %2205 = vmatprep.mubr.bf16.mxu0 0
  %2206 = vmatmul.mubr.bf16.gmra.mxu0 %v2165
  %v2207 = vpop.f32.mrf.mxu0
  %v2208 = vadd.f32 0.0, %v2207
  %v2209 = vpop.f32.mrf.mxu0
  %v2210 = vpop.f32.mrf.mxu0
  %v2211 = vadd.f32 0.0, %v2210
  %v2212 = vpop.f32.mrf.mxu0
  %2213 = vmatprep.mubr.bf16.mxu0 0
  %2214 = vmatmul.mubr.bf16.gmra.mxu0 %v2168
  %v2215 = vpop.f32.mrf.mxu0
  %v2216 = vadd.f32 0.0, %v2215
  %v2217 = vpop.f32.mrf.mxu0
  %v2218 = vpop.f32.mrf.mxu0
  %v2219 = vadd.f32 0.0, %v2218
  %v2220 = vpop.f32.mrf.mxu0
  %2221 = vmatprep.mubr.bf16.mxu0 0
  %2222 = vmatmul.mubr.bf16.gmra.mxu0 %v2171
  %v2223 = vpop.f32.mrf.mxu0
  %v2224 = vadd.f32 0.0, %v2223
  %v2225 = vpop.f32.mrf.mxu0
  %v2226 = vpop.f32.mrf.mxu0
  %v2227 = vpop.f32.mrf.mxu0
  %2228 = vdwg.mxu0
  %v2230 = vsel %vm1286, %v1749, 0
  %v2233 = vsel %vm1286, %v1750, 0
  %v2236 = vsel %vm1286, %v1751, 0
  %2238 = vmatprep.subr.bf16.mxu0 0
  %2239 = vmatpush1.bf16.msra.mxu0 0
  %2240 = vmatprep.subr.bf16.mxu0 0
  %2241 = vmatpush1.bf16.msra.mxu0 0
  %2242 = vmatprep.subr.bf16.mxu0 0
  %2243 = vmatpush1.bf16.msra.mxu0 0
  %2244 = vmatprep.subr.bf16.mxu0 0
  %2245 = vmatpush1.bf16.msra.mxu0 0
  %2246 = vmatprep.subr.bf16.mxu0 0
  %2247 = vmatpush1.bf16.msra.mxu0 0
  %2248 = vmatprep.subr.bf16.mxu0 0
  %2249 = vmatpush1.bf16.msra.mxu0 %v1846
  %2250 = vmatprep.subr.bf16.mxu0 0
  %2251 = vmatpush1.bf16.msra.mxu0 %v1831
  %2252 = vmatprep.subr.bf16.mxu0 0
  %2253 = vmatpush1.bf16.msra.mxu0 %v1829
  %2254 = vmatprep.subr.bf16.mxu0 0
  %2255 = vmatpush2.bf16.msra.mxu0 0
  %2256 = vmatprep.subr.bf16.mxu0 0
  %2257 = vmatpush2.bf16.msra.mxu0 0
  %2258 = vmatprep.subr.bf16.mxu0 0
  %2259 = vmatpush2.bf16.msra.mxu0 0
  %2260 = vmatprep.subr.bf16.mxu0 0
  %2261 = vmatpush2.bf16.msra.mxu0 0
  %2262 = vmatprep.subr.bf16.mxu0 0
  %2263 = vmatpush2.bf16.msra.mxu0 0
  %2264 = vmatprep.subr.bf16.mxu0 0
  %2265 = vmatpush2.bf16.msra.mxu0 0
  %2266 = vmatprep.subr.bf16.mxu0 0
  %2267 = vmatpush2.bf16.msra.mxu0 0
  %2268 = vmatprep.subr.bf16.mxu0 0
  %2269 = vmatpush2.bf16.msra.mxu0 0
  %2270 = vmatprep.mubr.bf16.mxu0 0
  %2271 = vmatmul.mubr.bf16.gmra.mxu0 %v2230
  %v2272 = vpop.f32.mrf.mxu0
  %v2273 = vadd.f32 0.0, %v2272
  %v2274 = vpop.f32.mrf.mxu0
  %v2275 = vpop.f32.mrf.mxu0
  %v2276 = vadd.f32 0.0, %v2275
  %v2277 = vpop.f32.mrf.mxu0
  %2278 = vmatprep.mubr.bf16.mxu0 0
  %2279 = vmatmul.mubr.bf16.gmra.mxu0 %v2233
  %v2280 = vpop.f32.mrf.mxu0
  %v2281 = vadd.f32 0.0, %v2280
  %v2282 = vpop.f32.mrf.mxu0
  %v2283 = vpop.f32.mrf.mxu0
  %v2284 = vadd.f32 0.0, %v2283
  %v2285 = vpop.f32.mrf.mxu0
  %2286 = vmatprep.mubr.bf16.mxu0 0
  %2287 = vmatmul.mubr.bf16.gmra.mxu0 %v2236
  %v2288 = vpop.f32.mrf.mxu0
  %v2289 = vadd.f32 0.0, %v2288
  %v2290 = vpop.f32.mrf.mxu0
  %v2291 = vpop.f32.mrf.mxu0
  %v2292 = vpop.f32.mrf.mxu0
  %2293 = vdwg.mxu0
  %v2294 = vmul.f32 %v1807, %v560
  %v2295 = vmul.f32 %v1810, %v560
  %v2296 = vmul.f32 %v1815, %v560
  %v2297 = vmul.f32 %v1818, %v560
  %v2298 = vmul.f32 %v1823, %v560
  %v2299 = vmul.f32 %v1948, %v573
  %v2300 = vmul.f32 %v1951, %v573
  %v2301 = vmul.f32 %v1956, %v573
  %v2302 = vmul.f32 %v1959, %v573
  %v2303 = vmul.f32 %v1964, %v573
  %v2304 = vadd.f32 %v2294, %v2299
  %v2305 = vadd.f32 %v2295, %v2300
  %v2306 = vadd.f32 %v2296, %v2301
  %v2307 = vadd.f32 %v2297, %v2302
  %v2308 = vadd.f32 %v2298, %v2303
  %v2309 = vmul.f32 %v2078, %v586
  %v2310 = vmul.f32 %v2081, %v586
  %v2311 = vmul.f32 %v2086, %v586
  %v2312 = vmul.f32 %v2089, %v586
  %v2313 = vmul.f32 %v2094, %v586
  %v2314 = vadd.f32 %v2304, %v2309
  %v2315 = vadd.f32 %v2305, %v2310
  %v2316 = vadd.f32 %v2306, %v2311
  %v2317 = vadd.f32 %v2307, %v2312
  %v2318 = vadd.f32 %v2308, %v2313
  %v2319 = vmul.f32 %v2208, %v599
  %v2320 = vmul.f32 %v2211, %v599
  %v2321 = vmul.f32 %v2216, %v599
  %v2322 = vmul.f32 %v2219, %v599
  %v2323 = vmul.f32 %v2224, %v599
  %v2324 = vadd.f32 %v2314, %v2319
  %v2325 = vadd.f32 %v2315, %v2320
  %v2326 = vadd.f32 %v2316, %v2321
  %v2327 = vadd.f32 %v2317, %v2322
  %v2328 = vadd.f32 %v2318, %v2323
  %v2329 = vmul.f32 %v1883, %v560
  %v2330 = vmul.f32 %v1886, %v560
  %v2331 = vmul.f32 %v1891, %v560
  %v2332 = vmul.f32 %v1894, %v560
  %v2333 = vmul.f32 %v1899, %v560
  %v2334 = vmul.f32 %v2013, %v573
  %v2335 = vmul.f32 %v2016, %v573
  %v2336 = vmul.f32 %v2021, %v573
  %v2337 = vmul.f32 %v2024, %v573
  %v2338 = vmul.f32 %v2029, %v573
  %v2339 = vadd.f32 %v2329, %v2334
  %v2340 = vadd.f32 %v2330, %v2335
  %v2341 = vadd.f32 %v2331, %v2336
  %v2342 = vadd.f32 %v2332, %v2337
  %v2343 = vadd.f32 %v2333, %v2338
  %v2344 = vmul.f32 %v2143, %v586
  %v2345 = vmul.f32 %v2146, %v586
  %v2346 = vmul.f32 %v2151, %v586
  %v2347 = vmul.f32 %v2154, %v586
  %v2348 = vmul.f32 %v2159, %v586
  %v2349 = vadd.f32 %v2339, %v2344
  %v2350 = vadd.f32 %v2340, %v2345
  %v2351 = vadd.f32 %v2341, %v2346
  %v2352 = vadd.f32 %v2342, %v2347
  %v2353 = vadd.f32 %v2343, %v2348
  %v2354 = vmul.f32 %v2273, %v599
  %v2355 = vmul.f32 %v2276, %v599
  %v2356 = vmul.f32 %v2281, %v599
  %v2357 = vmul.f32 %v2284, %v599
  %v2358 = vmul.f32 %v2289, %v599
  %v2359 = vadd.f32 %v2349, %v2354
  %v2360 = vadd.f32 %v2350, %v2355
  %v2361 = vadd.f32 %v2351, %v2356
  %v2362 = vadd.f32 %v2352, %v2357
  %v2363 = vadd.f32 %v2353, %v2358
  %v2369 = vrot.slane %v2359, 7
  %v2370 = vrot.slane %v2360, 7
  %v2371 = vsel %vm170, %v2369, %v2370
  %v2372 = vrot.slane %v2361, 7
  %v2373 = vsel %vm170, %v2370, %v2372
  %v2374 = vrot.slane %v2362, 7
  %v2375 = vsel %vm170, %v2372, %v2374
  %v2376 = vrot.slane %v2363, 7
  %v2377 = vsel %vm170, %v2374, %v2376
  %v2383 = vsel %vm170, %v2328, %v2369
  %v2384 = vpack.c.bf16 %v2325, %v2324
  %v2385 = vpack.c.bf16 %v2327, %v2326
  %v2386 = vpack.c.bf16 %v2371, %v2383
  %v2387 = vpack.c.bf16 %v2375, %v2373
  %v2388 = vpack.c.bf16 %v2377, %v2377
  %v2389 = vld [vmem:[%s9] sm:$0xf]
  %v2390 = vld [vmem:[%s9 + $0x4] sm:$0xf]
  %v2391 = vld [vmem:[%s9 + $0x8] sm:$0xf]
  %v2392 = vld [vmem:[%s9 + $0xc] sm:$0xf]
  %v2393 = vld [vmem:[%s10] sm:$0x1]
  %v2395 = vlaneseq
  %v2396 = vshrl.u32 %v2395, 7
  %v2397 = vsub.s32 0, %v2396
  %v2398 = vrot.slane %v2393, %v2397
  %v2404 = vunpack.c.l.b16 %v2389
  %v2405 = vunpack.c.l.b16 %v2390
  %v2406 = vunpack.c.l.b16 %v2391
  %v2407 = vunpack.c.l.b16 %v2392
  %v2408 = vpack.c.b16 %v2405, %v2404
  %v2409 = vpack.c.b16 %v2407, %v2406
  %v2413 = vsel %vm269, %v2384, 0
  %v2416 = vsel %vm269, %v2385, 0
  %v2419 = vsel %vm269, %v2386, 0
  %v2422 = vsel %vm269, %v2387, 0
  %v2425 = vsel %vm269, %v2388, 0
  %2427 = vmatprep.subr.bf16.mxu0 0
  %2428 = vmatpush1.bf16.msra.mxu0 0
  %2429 = vmatprep.subr.bf16.mxu0 0
  %2430 = vmatpush1.bf16.msra.mxu0 0
  %2431 = vmatprep.subr.bf16.mxu0 0
  %2432 = vmatpush1.bf16.msra.mxu0 0
  %2433 = vmatprep.subr.bf16.mxu0 0
  %2434 = vmatpush1.bf16.msra.mxu0 0
  %2435 = vmatprep.subr.bf16.mxu0 0
  %2436 = vmatpush1.bf16.msra.mxu0 0
  %2437 = vmatprep.subr.bf16.mxu0 0
  %2438 = vmatpush1.bf16.msra.mxu0 0
  %2439 = vmatprep.subr.bf16.mxu0 0
  %2440 = vmatpush1.bf16.msra.mxu0 %v2409
  %2441 = vmatprep.subr.bf16.mxu0 0
  %2442 = vmatpush1.bf16.msra.mxu0 %v2408
  %2443 = vmatprep.subr.bf16.mxu0 0
  %2444 = vmatpush2.bf16.msra.mxu0 0
  %2445 = vmatprep.subr.bf16.mxu0 0
  %2446 = vmatpush2.bf16.msra.mxu0 0
  %2447 = vmatprep.subr.bf16.mxu0 0
  %2448 = vmatpush2.bf16.msra.mxu0 0
  %2449 = vmatprep.subr.bf16.mxu0 0
  %2450 = vmatpush2.bf16.msra.mxu0 0
  %2451 = vmatprep.subr.bf16.mxu0 0
  %2452 = vmatpush2.bf16.msra.mxu0 0
  %2453 = vmatprep.subr.bf16.mxu0 0
  %2454 = vmatpush2.bf16.msra.mxu0 0
  %2455 = vmatprep.subr.bf16.mxu0 0
  %2456 = vmatpush2.bf16.msra.mxu0 0
  %2457 = vmatprep.subr.bf16.mxu0 0
  %2458 = vmatpush2.bf16.msra.mxu0 0
  %2459 = vmatprep.mubr.bf16.mxu0 0
  %2460 = vmatmul.mubr.bf16.gmra.mxu0 %v2413
  %v2461 = vpop.f32.mrf.mxu0
  %v2462 = vadd.f32 %v2398, %v2461
  %v2463 = vpop.f32.mrf.mxu0
  %v2464 = vpop.f32.mrf.mxu0
  %v2465 = vadd.f32 %v2398, %v2464
  %v2466 = vpop.f32.mrf.mxu0
  %2467 = vmatprep.mubr.bf16.mxu0 0
  %2468 = vmatmul.mubr.bf16.gmra.mxu0 %v2416
  %v2469 = vpop.f32.mrf.mxu0
  %v2470 = vadd.f32 %v2398, %v2469
  %v2471 = vpop.f32.mrf.mxu0
  %v2472 = vpop.f32.mrf.mxu0
  %v2473 = vadd.f32 %v2398, %v2472
  %v2474 = vpop.f32.mrf.mxu0
  %2475 = vmatprep.mubr.bf16.mxu0 0
  %2476 = vmatmul.mubr.bf16.gmra.mxu0 %v2419
  %v2477 = vpop.f32.mrf.mxu0
  %v2478 = vadd.f32 %v2398, %v2477
  %v2479 = vpop.f32.mrf.mxu0
  %v2480 = vpop.f32.mrf.mxu0
  %v2481 = vadd.f32 %v2398, %v2480
  %v2482 = vpop.f32.mrf.mxu0
  %2483 = vmatprep.mubr.bf16.mxu0 0
  %2484 = vmatmul.mubr.bf16.gmra.mxu0 %v2422
  %v2485 = vpop.f32.mrf.mxu0
  %v2486 = vadd.f32 %v2398, %v2485
  %v2487 = vpop.f32.mrf.mxu0
  %v2488 = vpop.f32.mrf.mxu0
  %v2489 = vadd.f32 %v2398, %v2488
  %v2490 = vpop.f32.mrf.mxu0
  %2491 = vmatprep.mubr.bf16.mxu0 0
  %2492 = vmatmul.mubr.bf16.gmra.mxu0 %v2425
  %v2493 = vpop.f32.mrf.mxu0
  %v2494 = vadd.f32 %v2398, %v2493
  %v2495 = vpop.f32.mrf.mxu0
  %v2496 = vpop.f32.mrf.mxu0
  %v2497 = vpop.f32.mrf.mxu0
  %2498 = vdwg.mxu0
  %v2499 = vadd.f32 %v257, %v2462
  %v2500 = vadd.f32 %v258, %v2465
  %v2501 = vadd.f32 %v259, %v2470
  %v2502 = vadd.f32 %v260, %v2473
  %v2503 = vadd.f32 %v261, %v2478
  %v2504 = vadd.f32 %v262, %v2481
  %v2505 = vadd.f32 %v263, %v2486
  %v2506 = vadd.f32 %v264, %v2489
  %v2507 = vadd.f32 %v265, %v2494
  %v2508 = vld [vmem:[%s11] sm:$0x1]
  %v2509 = vld [vmem:[%s12] sm:$0x1]
  %v2510 = vsel %vm269, %v2499, 0.0
  %2511 = vadd.xlane.f32.xlu0 %v2510
  %v2512 = vpop.xlane.xlu0 %2511
  %v2513 = vsel %vm269, %v2500, 0.0
  %2514 = vadd.xlane.f32.xlu0 %v2513
  %v2515 = vpop.xlane.xlu0 %2514
  %v2516 = vsel %vm269, %v2501, 0.0
  %2517 = vadd.xlane.f32.xlu0 %v2516
  %v2518 = vpop.xlane.xlu0 %2517
  %v2519 = vsel %vm269, %v2502, 0.0
  %2520 = vadd.xlane.f32.xlu0 %v2519
  %v2521 = vpop.xlane.xlu0 %2520
  %v2522 = vsel %vm269, %v2503, 0.0
  %2523 = vadd.xlane.f32.xlu0 %v2522
  %v2524 = vpop.xlane.xlu0 %2523
  %v2525 = vsel %vm269, %v2504, 0.0
  %2526 = vadd.xlane.f32.xlu0 %v2525
  %v2527 = vpop.xlane.xlu0 %2526
  %v2528 = vsel %vm269, %v2505, 0.0
  %2529 = vadd.xlane.f32.xlu0 %v2528
  %v2530 = vpop.xlane.xlu0 %2529
  %v2531 = vsel %vm269, %v2506, 0.0
  %2532 = vadd.xlane.f32.xlu0 %v2531
  %v2533 = vpop.xlane.xlu0 %2532
  %v2534 = vsel %vm294, %v2507, 0.0
  %2535 = vadd.xlane.f32.xlu0 %v2534
  %v2536 = vpop.xlane.xlu0 %2535
  %v2537 = vmul.f32 %v2512, %v298
  %v2538 = vmul.f32 %v2515, %v298
  %v2539 = vmul.f32 %v2518, %v298
  %v2540 = vmul.f32 %v2521, %v298
  %v2541 = vmul.f32 %v2524, %v298
  %v2542 = vmul.f32 %v2527, %v298
  %v2543 = vmul.f32 %v2530, %v298
  %v2544 = vmul.f32 %v2533, %v298
  %v2545 = vmul.f32 %v2536, %v298
  %v2546 = vmul.f32 %v2499, %v2499
  %v2547 = vmul.f32 %v2500, %v2500
  %v2548 = vmul.f32 %v2501, %v2501
  %v2549 = vmul.f32 %v2502, %v2502
  %v2550 = vmul.f32 %v2503, %v2503
  %v2551 = vmul.f32 %v2504, %v2504
  %v2552 = vmul.f32 %v2505, %v2505
  %v2553 = vmul.f32 %v2506, %v2506
  %v2554 = vmul.f32 %v2507, %v2507
  %v2555 = vsel %vm269, %v2546, 0.0
  %2556 = vadd.xlane.f32.xlu0 %v2555
  %v2557 = vpop.xlane.xlu0 %2556
  %v2558 = vsel %vm269, %v2547, 0.0
  %2559 = vadd.xlane.f32.xlu0 %v2558
  %v2560 = vpop.xlane.xlu0 %2559
  %v2561 = vsel %vm269, %v2548, 0.0
  %2562 = vadd.xlane.f32.xlu0 %v2561
  %v2563 = vpop.xlane.xlu0 %2562
  %v2564 = vsel %vm269, %v2549, 0.0
  %2565 = vadd.xlane.f32.xlu0 %v2564
  %v2566 = vpop.xlane.xlu0 %2565
  %v2567 = vsel %vm269, %v2550, 0.0
  %2568 = vadd.xlane.f32.xlu0 %v2567
  %v2569 = vpop.xlane.xlu0 %2568
  %v2570 = vsel %vm269, %v2551, 0.0
  %2571 = vadd.xlane.f32.xlu0 %v2570
  %v2572 = vpop.xlane.xlu0 %2571
  %v2573 = vsel %vm269, %v2552, 0.0
  %2574 = vadd.xlane.f32.xlu0 %v2573
  %v2575 = vpop.xlane.xlu0 %2574
  %v2576 = vsel %vm269, %v2553, 0.0
  %2577 = vadd.xlane.f32.xlu0 %v2576
  %v2578 = vpop.xlane.xlu0 %2577
  %v2579 = vsel %vm294, %v2554, 0.0
  %2580 = vadd.xlane.f32.xlu0 %v2579
  %v2581 = vpop.xlane.xlu0 %2580
  %v2582 = vmul.f32 %v2557, %v298
  %v2583 = vmul.f32 %v2560, %v298
  %v2584 = vmul.f32 %v2563, %v298
  %v2585 = vmul.f32 %v2566, %v298
  %v2586 = vmul.f32 %v2569, %v298
  %v2587 = vmul.f32 %v2572, %v298
  %v2588 = vmul.f32 %v2575, %v298
  %v2589 = vmul.f32 %v2578, %v298
  %v2590 = vmul.f32 %v2581, %v298
  %v2591 = vmul.f32 %v2537, %v2537
  %v2592 = vmul.f32 %v2538, %v2538
  %v2593 = vmul.f32 %v2539, %v2539
  %v2594 = vmul.f32 %v2540, %v2540
  %v2595 = vmul.f32 %v2541, %v2541
  %v2596 = vmul.f32 %v2542, %v2542
  %v2597 = vmul.f32 %v2543, %v2543
  %v2598 = vmul.f32 %v2544, %v2544
  %v2599 = vmul.f32 %v2545, %v2545
  %v2600 = vsub.f32 %v2582, %v2591
  %v2601 = vsub.f32 %v2583, %v2592
  %v2602 = vsub.f32 %v2584, %v2593
  %v2603 = vsub.f32 %v2585, %v2594
  %v2604 = vsub.f32 %v2586, %v2595
  %v2605 = vsub.f32 %v2587, %v2596
  %v2606 = vsub.f32 %v2588, %v2597
  %v2607 = vsub.f32 %v2589, %v2598
  %v2608 = vsub.f32 %v2590, %v2599
  %v2609 = vsub.f32 %v2499, %v2537
  %v2610 = vsub.f32 %v2500, %v2538
  %v2611 = vsub.f32 %v2501, %v2539
  %v2612 = vsub.f32 %v2502, %v2540
  %v2613 = vsub.f32 %v2503, %v2541
  %v2614 = vsub.f32 %v2504, %v2542
  %v2615 = vsub.f32 %v2505, %v2543
  %v2616 = vsub.f32 %v2506, %v2544
  %v2617 = vsub.f32 %v2507, %v2545
  %v2618 = vadd.f32 %v2600, 1e-06
  %v2619 = vadd.f32 %v2601, 1e-06
  %v2620 = vadd.f32 %v2602, 1e-06
  %v2621 = vadd.f32 %v2603, 1e-06
  %v2622 = vadd.f32 %v2604, 1e-06
  %v2623 = vadd.f32 %v2605, 1e-06
  %v2624 = vadd.f32 %v2606, 1e-06
  %v2625 = vadd.f32 %v2607, 1e-06
  %v2626 = vadd.f32 %v2608, 1e-06
  %v2627 = vrsqrt.pop %v2618
  %v2628 = vrsqrt.pop %v2619
  %v2629 = vrsqrt.pop %v2620
  %v2630 = vrsqrt.pop %v2621
  %v2631 = vrsqrt.pop %v2622
  %v2632 = vrsqrt.pop %v2623
  %v2633 = vrsqrt.pop %v2624
  %v2634 = vrsqrt.pop %v2625
  %v2635 = vrsqrt.pop %v2626
  %v2636 = vmul.f32 %v2609, %v2627
  %v2637 = vmul.f32 %v2610, %v2628
  %v2638 = vmul.f32 %v2611, %v2629
  %v2639 = vmul.f32 %v2612, %v2630
  %v2640 = vmul.f32 %v2613, %v2631
  %v2641 = vmul.f32 %v2614, %v2632
  %v2642 = vmul.f32 %v2615, %v2633
  %v2643 = vmul.f32 %v2616, %v2634
  %v2644 = vmul.f32 %v2617, %v2635
  %v2646 = vlaneseq
  %v2647 = vshrl.u32 %v2646, 7
  %v2648 = vsub.s32 0, %v2647
  %v2649 = vrot.slane %v2508, %v2648
  %v2651 = vmul.f32 %v2636, %v2649
  %v2652 = vmul.f32 %v2637, %v2649
  %v2653 = vmul.f32 %v2638, %v2649
  %v2654 = vmul.f32 %v2639, %v2649
  %v2655 = vmul.f32 %v2640, %v2649
  %v2656 = vmul.f32 %v2641, %v2649
  %v2657 = vmul.f32 %v2642, %v2649
  %v2658 = vmul.f32 %v2643, %v2649
  %v2659 = vmul.f32 %v2644, %v2649
  %v2661 = vlaneseq
  %v2662 = vshrl.u32 %v2661, 7
  %v2663 = vsub.s32 0, %v2662
  %v2664 = vrot.slane %v2509, %v2663
  %v2666 = vadd.f32 %v2651, %v2664
  %v2667 = vadd.f32 %v2652, %v2664
  %v2668 = vadd.f32 %v2653, %v2664
  %v2669 = vadd.f32 %v2654, %v2664
  %v2670 = vadd.f32 %v2655, %v2664
  %v2671 = vadd.f32 %v2656, %v2664
  %v2672 = vadd.f32 %v2657, %v2664
  %v2673 = vadd.f32 %v2658, %v2664
  %v2674 = vadd.f32 %v2659, %v2664
  %v2675 = vpack.c.bf16 %v2667, %v2666
  %v2676 = vpack.c.bf16 %v2669, %v2668
  %v2677 = vpack.c.bf16 %v2671, %v2670
  %v2678 = vpack.c.bf16 %v2673, %v2672
  %v2679 = vpack.c.bf16 %v2674, %v2674
  %v2680 = vld [vmem:[%s13] sm:$0xf]
  %v2681 = vld [vmem:[%s13 + $0x4] sm:$0xf]
  %v2682 = vld [vmem:[%s13 + $0x8] sm:$0xf]
  %v2683 = vld [vmem:[%s13 + $0xc] sm:$0xf]
  %v2684 = vld [vmem:[%s14] sm:$0x1]
  %v2686 = vlaneseq
  %v2687 = vshrl.u32 %v2686, 7
  %v2688 = vsub.s32 0, %v2687
  %v2689 = vrot.slane %v2684, %v2688
  %v2695 = vunpack.c.l.b16 %v2680
  %v2696 = vunpack.c.l.b16 %v2681
  %v2697 = vunpack.c.l.b16 %v2682
  %v2698 = vunpack.c.l.b16 %v2683
  %v2699 = vpack.c.b16 %v2696, %v2695
  %v2700 = vpack.c.b16 %v2698, %v2697
  %v2704 = vsel %vm269, %v2675, 0
  %v2707 = vsel %vm269, %v2676, 0
  %v2710 = vsel %vm269, %v2677, 0
  %v2713 = vsel %vm269, %v2678, 0
  %v2716 = vsel %vm269, %v2679, 0
  %2718 = vmatprep.subr.bf16.mxu0 0
  %2719 = vmatpush1.bf16.msra.mxu0 0
  %2720 = vmatprep.subr.bf16.mxu0 0
  %2721 = vmatpush1.bf16.msra.mxu0 0
  %2722 = vmatprep.subr.bf16.mxu0 0
  %2723 = vmatpush1.bf16.msra.mxu0 0
  %2724 = vmatprep.subr.bf16.mxu0 0
  %2725 = vmatpush1.bf16.msra.mxu0 0
  %2726 = vmatprep.subr.bf16.mxu0 0
  %2727 = vmatpush1.bf16.msra.mxu0 0
  %2728 = vmatprep.subr.bf16.mxu0 0
  %2729 = vmatpush1.bf16.msra.mxu0 0
  %2730 = vmatprep.subr.bf16.mxu0 0
  %2731 = vmatpush1.bf16.msra.mxu0 %v2700
  %2732 = vmatprep.subr.bf16.mxu0 0
  %2733 = vmatpush1.bf16.msra.mxu0 %v2699
  %2734 = vmatprep.subr.bf16.mxu0 0
  %2735 = vmatpush2.bf16.msra.mxu0 0
  %2736 = vmatprep.subr.bf16.mxu0 0
  %2737 = vmatpush2.bf16.msra.mxu0 0
  %2738 = vmatprep.subr.bf16.mxu0 0
  %2739 = vmatpush2.bf16.msra.mxu0 0
  %2740 = vmatprep.subr.bf16.mxu0 0
  %2741 = vmatpush2.bf16.msra.mxu0 0
  %2742 = vmatprep.subr.bf16.mxu0 0
  %2743 = vmatpush2.bf16.msra.mxu0 0
  %2744 = vmatprep.subr.bf16.mxu0 0
  %2745 = vmatpush2.bf16.msra.mxu0 0
  %2746 = vmatprep.subr.bf16.mxu0 0
  %2747 = vmatpush2.bf16.msra.mxu0 0
  %2748 = vmatprep.subr.bf16.mxu0 0
  %2749 = vmatpush2.bf16.msra.mxu0 0
  %2750 = vmatprep.mubr.bf16.mxu0 0
  %2751 = vmatmul.mubr.bf16.gmra.mxu0 %v2704
  %v2752 = vpop.f32.mrf.mxu0
  %v2753 = vadd.f32 %v2689, %v2752
  %v2754 = vpop.f32.mrf.mxu0
  %v2755 = vpop.f32.mrf.mxu0
  %v2756 = vadd.f32 %v2689, %v2755
  %v2757 = vpop.f32.mrf.mxu0
  %2758 = vmatprep.mubr.bf16.mxu0 0
  %2759 = vmatmul.mubr.bf16.gmra.mxu0 %v2707
  %v2760 = vpop.f32.mrf.mxu0
  %v2761 = vadd.f32 %v2689, %v2760
  %v2762 = vpop.f32.mrf.mxu0
  %v2763 = vpop.f32.mrf.mxu0
  %v2764 = vadd.f32 %v2689, %v2763
  %v2765 = vpop.f32.mrf.mxu0
  %2766 = vmatprep.mubr.bf16.mxu0 0
  %2767 = vmatmul.mubr.bf16.gmra.mxu0 %v2710
  %v2768 = vpop.f32.mrf.mxu0
  %v2769 = vadd.f32 %v2689, %v2768
  %v2770 = vpop.f32.mrf.mxu0
  %v2771 = vpop.f32.mrf.mxu0
  %v2772 = vadd.f32 %v2689, %v2771
  %v2773 = vpop.f32.mrf.mxu0
  %2774 = vmatprep.mubr.bf16.mxu0 0
  %2775 = vmatmul.mubr.bf16.gmra.mxu0 %v2713
  %v2776 = vpop.f32.mrf.mxu0
  %v2777 = vadd.f32 %v2689, %v2776
  %v2778 = vpop.f32.mrf.mxu0
  %v2779 = vpop.f32.mrf.mxu0
  %v2780 = vadd.f32 %v2689, %v2779
  %v2781 = vpop.f32.mrf.mxu0
  %2782 = vmatprep.mubr.bf16.mxu0 0
  %2783 = vmatmul.mubr.bf16.gmra.mxu0 %v2716
  %v2784 = vpop.f32.mrf.mxu0
  %v2785 = vadd.f32 %v2689, %v2784
  %v2786 = vpop.f32.mrf.mxu0
  %v2787 = vpop.f32.mrf.mxu0
  %v2788 = vpop.f32.mrf.mxu0
  %2789 = vdwg.mxu0
  %v2790 = vmul.f32 %v2753, 0.5
  %v2791 = vmul.f32 %v2756, 0.5
  %v2792 = vmul.f32 %v2761, 0.5
  %v2793 = vmul.f32 %v2764, 0.5
  %v2794 = vmul.f32 %v2769, 0.5
  %v2795 = vmul.f32 %v2772, 0.5
  %v2796 = vmul.f32 %v2777, 0.5
  %v2797 = vmul.f32 %v2780, 0.5
  %v2798 = vmul.f32 %v2785, 0.5
  %v2799 = vrcp.pop 1.4142135
  %v2800 = vmul.f32 %v2753, %v2799
  %v2801 = vmul.f32 %v2756, %v2799
  %v2802 = vmul.f32 %v2761, %v2799
  %v2803 = vmul.f32 %v2764, %v2799
  %v2804 = vmul.f32 %v2769, %v2799
  %v2805 = vmul.f32 %v2772, %v2799
  %v2806 = vmul.f32 %v2777, %v2799
  %v2807 = vmul.f32 %v2780, %v2799
  %v2808 = vmul.f32 %v2785, %v2799
  %vm2809 = vcmp.lt.f32.partialorder %v2800, 0.0
  %vm2810 = vcmp.lt.f32.partialorder %v2801, 0.0
  %vm2811 = vcmp.lt.f32.partialorder %v2802, 0.0
  %vm2812 = vcmp.lt.f32.partialorder %v2803, 0.0
  %vm2813 = vcmp.lt.f32.partialorder %v2804, 0.0
  %vm2814 = vcmp.lt.f32.partialorder %v2805, 0.0
  %vm2815 = vcmp.lt.f32.partialorder %v2806, 0.0
  %vm2816 = vcmp.lt.f32.partialorder %v2807, 0.0
  %vm2817 = vcmp.lt.f32.partialorder %v2808, 0.0
  %v2818 = vsel %vm2809, -1.0, 1.0
  %v2819 = vsel %vm2810, -1.0, 1.0
  %v2820 = vsel %vm2811, -1.0, 1.0
  %v2821 = vsel %vm2812, -1.0, 1.0
  %v2822 = vsel %vm2813, -1.0, 1.0
  %v2823 = vsel %vm2814, -1.0, 1.0
  %v2824 = vsel %vm2815, -1.0, 1.0
  %v2825 = vsel %vm2816, -1.0, 1.0
  %v2826 = vsel %vm2817, -1.0, 1.0
  %v2827 = vand.u32 2147483647, %v2800
  %v2828 = vand.u32 2147483647, %v2801
  %v2829 = vand.u32 2147483647, %v2802
  %v2830 = vand.u32 2147483647, %v2803
  %v2831 = vand.u32 2147483647, %v2804
  %v2832 = vand.u32 2147483647, %v2805
  %v2833 = vand.u32 2147483647, %v2806
  %v2834 = vand.u32 2147483647, %v2807
  %v2835 = vand.u32 2147483647, %v2808
  %v2836 = vmul.f32 %v2827, 0.3275911
  %v2837 = vmul.f32 %v2828, 0.3275911
  %v2838 = vmul.f32 %v2829, 0.3275911
  %v2839 = vmul.f32 %v2830, 0.3275911
  %v2840 = vmul.f32 %v2831, 0.3275911
  %v2841 = vmul.f32 %v2832, 0.3275911
  %v2842 = vmul.f32 %v2833, 0.3275911
  %v2843 = vmul.f32 %v2834, 0.3275911
  %v2844 = vmul.f32 %v2835, 0.3275911
  %v2845 = vadd.f32 %v2836, 1.0
  %v2846 = vadd.f32 %v2837, 1.0
  %v2847 = vadd.f32 %v2838, 1.0
  %v2848 = vadd.f32 %v2839, 1.0
  %v2849 = vadd.f32 %v2840, 1.0
  %v2850 = vadd.f32 %v2841, 1.0
  %v2851 = vadd.f32 %v2842, 1.0
  %v2852 = vadd.f32 %v2843, 1.0
  %v2853 = vadd.f32 %v2844, 1.0
  %v2854 = vrcp.pop %v2845
  %v2855 = vrcp.pop %v2846
  %v2856 = vrcp.pop %v2847
  %v2857 = vrcp.pop %v2848
  %v2858 = vrcp.pop %v2849
  %v2859 = vrcp.pop %v2850
  %v2860 = vrcp.pop %v2851
  %v2861 = vrcp.pop %v2852
  %v2862 = vrcp.pop %v2853
  %v2863 = vmul.f32 %v2854, 1.0614054
  %v2864 = vmul.f32 %v2855, 1.0614054
  %v2865 = vmul.f32 %v2856, 1.0614054
  %v2866 = vmul.f32 %v2857, 1.0614054
  %v2867 = vmul.f32 %v2858, 1.0614054
  %v2868 = vmul.f32 %v2859, 1.0614054
  %v2869 = vmul.f32 %v2860, 1.0614054
  %v2870 = vmul.f32 %v2861, 1.0614054
  %v2871 = vmul.f32 %v2862, 1.0614054
  %v2872 = vadd.f32 %v2863, -1.4531521
  %v2873 = vadd.f32 %v2864, -1.4531521
  %v2874 = vadd.f32 %v2865, -1.4531521
  %v2875 = vadd.f32 %v2866, -1.4531521
  %v2876 = vadd.f32 %v2867, -1.4531521
  %v2877 = vadd.f32 %v2868, -1.4531521
  %v2878 = vadd.f32 %v2869, -1.4531521
  %v2879 = vadd.f32 %v2870, -1.4531521
  %v2880 = vadd.f32 %v2871, -1.4531521
  %v2881 = vmul.f32 %v2872, %v2854
  %v2882 = vmul.f32 %v2873, %v2855
  %v2883 = vmul.f32 %v2874, %v2856
  %v2884 = vmul.f32 %v2875, %v2857
  %v2885 = vmul.f32 %v2876, %v2858
  %v2886 = vmul.f32 %v2877, %v2859
  %v2887 = vmul.f32 %v2878, %v2860
  %v2888 = vmul.f32 %v2879, %v2861
  %v2889 = vmul.f32 %v2880, %v2862
  %v2890 = vadd.f32 %v2881, 1.4214138
  %v2891 = vadd.f32 %v2882, 1.4214138
  %v2892 = vadd.f32 %v2883, 1.4214138
  %v2893 = vadd.f32 %v2884, 1.4214138
  %v2894 = vadd.f32 %v2885, 1.4214138
  %v2895 = vadd.f32 %v2886, 1.4214138
  %v2896 = vadd.f32 %v2887, 1.4214138
  %v2897 = vadd.f32 %v2888, 1.4214138
  %v2898 = vadd.f32 %v2889, 1.4214138
  %v2899 = vmul.f32 %v2890, %v2854
  %v2900 = vmul.f32 %v2891, %v2855
  %v2901 = vmul.f32 %v2892, %v2856
  %v2902 = vmul.f32 %v2893, %v2857
  %v2903 = vmul.f32 %v2894, %v2858
  %v2904 = vmul.f32 %v2895, %v2859
  %v2905 = vmul.f32 %v2896, %v2860
  %v2906 = vmul.f32 %v2897, %v2861
  %v2907 = vmul.f32 %v2898, %v2862
  %v2908 = vadd.f32 %v2899, -0.28449672
  %v2909 = vadd.f32 %v2900, -0.28449672
  %v2910 = vadd.f32 %v2901, -0.28449672
  %v2911 = vadd.f32 %v2902, -0.28449672
  %v2912 = vadd.f32 %v2903, -0.28449672
  %v2913 = vadd.f32 %v2904, -0.28449672
  %v2914 = vadd.f32 %v2905, -0.28449672
  %v2915 = vadd.f32 %v2906, -0.28449672
  %v2916 = vadd.f32 %v2907, -0.28449672
  %v2917 = vmul.f32 %v2908, %v2854
  %v2918 = vmul.f32 %v2909, %v2855
  %v2919 = vmul.f32 %v2910, %v2856
  %v2920 = vmul.f32 %v2911, %v2857
  %v2921 = vmul.f32 %v2912, %v2858
  %v2922 = vmul.f32 %v2913, %v2859
  %v2923 = vmul.f32 %v2914, %v2860
  %v2924 = vmul.f32 %v2915, %v2861
  %v2925 = vmul.f32 %v2916, %v2862
  %v2926 = vadd.f32 %v2917, 0.2548296
  %v2927 = vadd.f32 %v2918, 0.2548296
  %v2928 = vadd.f32 %v2919, 0.2548296
  %v2929 = vadd.f32 %v2920, 0.2548296
  %v2930 = vadd.f32 %v2921, 0.2548296
  %v2931 = vadd.f32 %v2922, 0.2548296
  %v2932 = vadd.f32 %v2923, 0.2548296
  %v2933 = vadd.f32 %v2924, 0.2548296
  %v2934 = vadd.f32 %v2925, 0.2548296
  %v2935 = vmul.f32 %v2926, %v2854
  %v2936 = vmul.f32 %v2927, %v2855
  %v2937 = vmul.f32 %v2928, %v2856
  %v2938 = vmul.f32 %v2929, %v2857
  %v2939 = vmul.f32 %v2930, %v2858
  %v2940 = vmul.f32 %v2931, %v2859
  %v2941 = vmul.f32 %v2932, %v2860
  %v2942 = vmul.f32 %v2933, %v2861
  %v2943 = vmul.f32 %v2934, %v2862
  %v2944 = vsub.f32 0.0, %v2827
  %v2945 = vsub.f32 0.0, %v2828
  %v2946 = vsub.f32 0.0, %v2829
  %v2947 = vsub.f32 0.0, %v2830
  %v2948 = vsub.f32 0.0, %v2831
  %v2949 = vsub.f32 0.0, %v2832
  %v2950 = vsub.f32 0.0, %v2833
  %v2951 = vsub.f32 0.0, %v2834
  %v2952 = vsub.f32 0.0, %v2835
  %v2953 = vmul.f32 %v2944, %v2827
  %v2954 = vmul.f32 %v2945, %v2828
  %v2955 = vmul.f32 %v2946, %v2829
  %v2956 = vmul.f32 %v2947, %v2830
  %v2957 = vmul.f32 %v2948, %v2831
  %v2958 = vmul.f32 %v2949, %v2832
  %v2959 = vmul.f32 %v2950, %v2833
  %v2960 = vmul.f32 %v2951, %v2834
  %v2961 = vmul.f32 %v2952, %v2835
  %v2962 = vmul.f32 %v2953, 1.442695
  %v2963 = vpow.pop %v2962
  %v2964 = vmul.f32 %v2954, 1.442695
  %v2965 = vpow.pop %v2964
  %v2966 = vmul.f32 %v2955, 1.442695
  %v2967 = vpow.pop %v2966
  %v2968 = vmul.f32 %v2956, 1.442695
  %v2969 = vpow.pop %v2968
  %v2970 = vmul.f32 %v2957, 1.442695
  %v2971 = vpow.pop %v2970
  %v2972 = vmul.f32 %v2958, 1.442695
  %v2973 = vpow.pop %v2972
  %v2974 = vmul.f32 %v2959, 1.442695
  %v2975 = vpow.pop %v2974
  %v2976 = vmul.f32 %v2960, 1.442695
  %v2977 = vpow.pop %v2976
  %v2978 = vmul.f32 %v2961, 1.442695
  %v2979 = vpow.pop %v2978
  %v2980 = vmul.f32 %v2935, %v2963
  %v2981 = vmul.f32 %v2936, %v2965
  %v2982 = vmul.f32 %v2937, %v2967
  %v2983 = vmul.f32 %v2938, %v2969
  %v2984 = vmul.f32 %v2939, %v2971
  %v2985 = vmul.f32 %v2940, %v2973
  %v2986 = vmul.f32 %v2941, %v2975
  %v2987 = vmul.f32 %v2942, %v2977
  %v2988 = vmul.f32 %v2943, %v2979
  %v2989 = vsub.f32 1.0, %v2980
  %v2990 = vsub.f32 1.0, %v2981
  %v2991 = vsub.f32 1.0, %v2982
  %v2992 = vsub.f32 1.0, %v2983
  %v2993 = vsub.f32 1.0, %v2984
  %v2994 = vsub.f32 1.0, %v2985
  %v2995 = vsub.f32 1.0, %v2986
  %v2996 = vsub.f32 1.0, %v2987
  %v2997 = vsub.f32 1.0, %v2988
  %v2998 = vmul.f32 %v2818, %v2989
  %v2999 = vmul.f32 %v2819, %v2990
  %v3000 = vmul.f32 %v2820, %v2991
  %v3001 = vmul.f32 %v2821, %v2992
  %v3002 = vmul.f32 %v2822, %v2993
  %v3003 = vmul.f32 %v2823, %v2994
  %v3004 = vmul.f32 %v2824, %v2995
  %v3005 = vmul.f32 %v2825, %v2996
  %v3006 = vmul.f32 %v2826, %v2997
  %v3007 = vadd.f32 %v2998, 1.0
  %v3008 = vadd.f32 %v2999, 1.0
  %v3009 = vadd.f32 %v3000, 1.0
  %v3010 = vadd.f32 %v3001, 1.0
  %v3011 = vadd.f32 %v3002, 1.0
  %v3012 = vadd.f32 %v3003, 1.0
  %v3013 = vadd.f32 %v3004, 1.0
  %v3014 = vadd.f32 %v3005, 1.0
  %v3015 = vadd.f32 %v3006, 1.0
  %v3016 = vmul.f32 %v2790, %v3007
  %v3017 = vmul.f32 %v2791, %v3008
  %v3018 = vmul.f32 %v2792, %v3009
  %v3019 = vmul.f32 %v2793, %v3010
  %v3020 = vmul.f32 %v2794, %v3011
  %v3021 = vmul.f32 %v2795, %v3012
  %v3022 = vmul.f32 %v2796, %v3013
  %v3023 = vmul.f32 %v2797, %v3014
  %v3024 = vmul.f32 %v2798, %v3015
  %v3025 = vpack.c.bf16 %v3017, %v3016
  %v3026 = vpack.c.bf16 %v3019, %v3018
  %v3027 = vpack.c.bf16 %v3021, %v3020
  %v3028 = vpack.c.bf16 %v3023, %v3022
  %v3029 = vpack.c.bf16 %v3024, %v3024
  %v3030 = vld [vmem:[%s15] sm:$0xf]
  %v3031 = vld [vmem:[%s15 + $0x4] sm:$0xf]
  %v3032 = vld [vmem:[%s15 + $0x8] sm:$0xf]
  %v3033 = vld [vmem:[%s15 + $0xc] sm:$0xf]
  %v3034 = vld [vmem:[%s15 + $0x10] sm:$0xf]
  %v3035 = vld [vmem:[%s15 + $0x14] sm:$0xf]
  %v3036 = vld [vmem:[%s15 + $0x18] sm:$0xf]
  %v3037 = vld [vmem:[%s15 + $0x1c] sm:$0xf]
  %v3038 = vld [vmem:[%s16] sm:$0x1]
  %v3040 = vlaneseq
  %v3041 = vshrl.u32 %v3040, 7
  %v3042 = vsub.s32 0, %v3041
  %v3043 = vrot.slane %v3038, %v3042
  %v3053 = vunpack.c.l.b16 %v3030
  %v3054 = vunpack.c.l.b16 %v3031
  %v3055 = vunpack.c.l.b16 %v3032
  %v3056 = vunpack.c.l.b16 %v3033
  %v3057 = vunpack.c.l.b16 %v3034
  %v3058 = vunpack.c.l.b16 %v3035
  %v3059 = vunpack.c.l.b16 %v3036
  %v3060 = vunpack.c.l.b16 %v3037
  %v3061 = vpack.c.b16 %v3054, %v3053
  %v3062 = vpack.c.b16 %v3056, %v3055
  %v3063 = vpack.c.b16 %v3058, %v3057
  %v3064 = vpack.c.b16 %v3060, %v3059
  %vm3069 = vcmask 523264
  %v3071 = vsel %vm3069, %v3025, 0
  %v3074 = vsel %vm3069, %v3026, 0
  %v3077 = vsel %vm3069, %v3027, 0
  %v3080 = vsel %vm3069, %v3028, 0
  %v3083 = vsel %vm3069, %v3029, 0
  %3085 = vmatprep.subr.bf16.mxu0 0
  %3086 = vmatpush1.bf16.msra.mxu0 0
  %3087 = vmatprep.subr.bf16.mxu0 0
  %3088 = vmatpush1.bf16.msra.mxu0 0
  %3089 = vmatprep.subr.bf16.mxu0 0
  %3090 = vmatpush1.bf16.msra.mxu0 0
  %3091 = vmatprep.subr.bf16.mxu0 0
  %3092 = vmatpush1.bf16.msra.mxu0 0
  %3093 = vmatprep.subr.bf16.mxu0 0
  %3094 = vmatpush1.bf16.msra.mxu0 %v3064
  %3095 = vmatprep.subr.bf16.mxu0 0
  %3096 = vmatpush1.bf16.msra.mxu0 %v3063
  %3097 = vmatprep.subr.bf16.mxu0 0
  %3098 = vmatpush1.bf16.msra.mxu0 %v3062
  %3099 = vmatprep.subr.bf16.mxu0 0
  %3100 = vmatpush1.bf16.msra.mxu0 %v3061
  %3101 = vmatprep.subr.bf16.mxu0 0
  %3102 = vmatpush2.bf16.msra.mxu0 0
  %3103 = vmatprep.subr.bf16.mxu0 0
  %3104 = vmatpush2.bf16.msra.mxu0 0
  %3105 = vmatprep.subr.bf16.mxu0 0
  %3106 = vmatpush2.bf16.msra.mxu0 0
  %3107 = vmatprep.subr.bf16.mxu0 0
  %3108 = vmatpush2.bf16.msra.mxu0 0
  %3109 = vmatprep.subr.bf16.mxu0 0
  %3110 = vmatpush2.bf16.msra.mxu0 0
  %3111 = vmatprep.subr.bf16.mxu0 0
  %3112 = vmatpush2.bf16.msra.mxu0 0
  %3113 = vmatprep.subr.bf16.mxu0 0
  %3114 = vmatpush2.bf16.msra.mxu0 0
  %3115 = vmatprep.subr.bf16.mxu0 0
  %3116 = vmatpush2.bf16.msra.mxu0 0
  %3117 = vmatprep.mubr.bf16.mxu0 0
  %3118 = vmatmul.mubr.bf16.gmra.mxu0 %v3071
  %v3119 = vpop.f32.mrf.mxu0
  %v3120 = vadd.f32 %v3043, %v3119
  %v3121 = vpop.f32.mrf.mxu0
  %v3122 = vpop.f32.mrf.mxu0
  %v3123 = vadd.f32 %v3043, %v3122
  %v3124 = vpop.f32.mrf.mxu0
  %3125 = vmatprep.mubr.bf16.mxu0 0
  %3126 = vmatmul.mubr.bf16.gmra.mxu0 %v3074
  %v3127 = vpop.f32.mrf.mxu0
  %v3128 = vadd.f32 %v3043, %v3127
  %v3129 = vpop.f32.mrf.mxu0
  %v3130 = vpop.f32.mrf.mxu0
  %v3131 = vadd.f32 %v3043, %v3130
  %v3132 = vpop.f32.mrf.mxu0
  %3133 = vmatprep.mubr.bf16.mxu0 0
  %3134 = vmatmul.mubr.bf16.gmra.mxu0 %v3077
  %v3135 = vpop.f32.mrf.mxu0
  %v3136 = vadd.f32 %v3043, %v3135
  %v3137 = vpop.f32.mrf.mxu0
  %v3138 = vpop.f32.mrf.mxu0
  %v3139 = vadd.f32 %v3043, %v3138
  %v3140 = vpop.f32.mrf.mxu0
  %3141 = vmatprep.mubr.bf16.mxu0 0
  %3142 = vmatmul.mubr.bf16.gmra.mxu0 %v3080
  %v3143 = vpop.f32.mrf.mxu0
  %v3144 = vadd.f32 %v3043, %v3143
  %v3145 = vpop.f32.mrf.mxu0
  %v3146 = vpop.f32.mrf.mxu0
  %v3147 = vadd.f32 %v3043, %v3146
  %v3148 = vpop.f32.mrf.mxu0
  %3149 = vmatprep.mubr.bf16.mxu0 0
  %3150 = vmatmul.mubr.bf16.gmra.mxu0 %v3083
  %v3151 = vpop.f32.mrf.mxu0
  %v3152 = vadd.f32 %v3043, %v3151
  %v3153 = vpop.f32.mrf.mxu0
  %v3154 = vpop.f32.mrf.mxu0
  %v3155 = vpop.f32.mrf.mxu0
  %3156 = vdwg.mxu0
  %v3157 = vadd.f32 %v2499, %v3120
  %v3158 = vadd.f32 %v2500, %v3123
  %v3159 = vadd.f32 %v2501, %v3128
  %v3160 = vadd.f32 %v2502, %v3131
  %v3161 = vadd.f32 %v2503, %v3136
  %v3162 = vadd.f32 %v2504, %v3139
  %v3163 = vadd.f32 %v2505, %v3144
  %v3164 = vadd.f32 %v2506, %v3147
  %v3165 = vadd.f32 %v2507, %v3152
  %s3166 = scalar_lea.vmem %s5, 1
  %v3167 = vld [vmem:[%s3166] sm:$0x1]
  %s3168 = scalar_lea.vmem %s6, 1
  %v3169 = vld [vmem:[%s3168] sm:$0x1]
  %v3170 = vsel %vm269, %v3157, 0.0
  %3171 = vadd.xlane.f32.xlu0 %v3170
  %v3172 = vpop.xlane.xlu0 %3171
  %v3173 = vsel %vm269, %v3158, 0.0
  %3174 = vadd.xlane.f32.xlu0 %v3173
  %v3175 = vpop.xlane.xlu0 %3174
  %v3176 = vsel %vm269, %v3159, 0.0
  %3177 = vadd.xlane.f32.xlu0 %v3176
  %v3178 = vpop.xlane.xlu0 %3177
  %v3179 = vsel %vm269, %v3160, 0.0
  %3180 = vadd.xlane.f32.xlu0 %v3179
  %v3181 = vpop.xlane.xlu0 %3180
  %v3182 = vsel %vm269, %v3161, 0.0
  %3183 = vadd.xlane.f32.xlu0 %v3182
  %v3184 = vpop.xlane.xlu0 %3183
  %v3185 = vsel %vm269, %v3162, 0.0
  %3186 = vadd.xlane.f32.xlu0 %v3185
  %v3187 = vpop.xlane.xlu0 %3186
  %v3188 = vsel %vm269, %v3163, 0.0
  %3189 = vadd.xlane.f32.xlu0 %v3188
  %v3190 = vpop.xlane.xlu0 %3189
  %v3191 = vsel %vm269, %v3164, 0.0
  %3192 = vadd.xlane.f32.xlu0 %v3191
  %v3193 = vpop.xlane.xlu0 %3192
  %v3194 = vsel %vm294, %v3165, 0.0
  %3195 = vadd.xlane.f32.xlu0 %v3194
  %v3196 = vpop.xlane.xlu0 %3195
  %v3197 = vmul.f32 %v3172, %v298
  %v3198 = vmul.f32 %v3175, %v298
  %v3199 = vmul.f32 %v3178, %v298
  %v3200 = vmul.f32 %v3181, %v298
  %v3201 = vmul.f32 %v3184, %v298
  %v3202 = vmul.f32 %v3187, %v298
  %v3203 = vmul.f32 %v3190, %v298
  %v3204 = vmul.f32 %v3193, %v298
  %v3205 = vmul.f32 %v3196, %v298
  %v3206 = vmul.f32 %v3157, %v3157
  %v3207 = vmul.f32 %v3158, %v3158
  %v3208 = vmul.f32 %v3159, %v3159
  %v3209 = vmul.f32 %v3160, %v3160
  %v3210 = vmul.f32 %v3161, %v3161
  %v3211 = vmul.f32 %v3162, %v3162
  %v3212 = vmul.f32 %v3163, %v3163
  %v3213 = vmul.f32 %v3164, %v3164
  %v3214 = vmul.f32 %v3165, %v3165
  %v3215 = vsel %vm269, %v3206, 0.0
  %3216 = vadd.xlane.f32.xlu0 %v3215
  %v3217 = vpop.xlane.xlu0 %3216
  %v3218 = vsel %vm269, %v3207, 0.0
  %3219 = vadd.xlane.f32.xlu0 %v3218
  %v3220 = vpop.xlane.xlu0 %3219
  %v3221 = vsel %vm269, %v3208, 0.0
  %3222 = vadd.xlane.f32.xlu0 %v3221
  %v3223 = vpop.xlane.xlu0 %3222
  %v3224 = vsel %vm269, %v3209, 0.0
  %3225 = vadd.xlane.f32.xlu0 %v3224
  %v3226 = vpop.xlane.xlu0 %3225
  %v3227 = vsel %vm269, %v3210, 0.0
  %3228 = vadd.xlane.f32.xlu0 %v3227
  %v3229 = vpop.xlane.xlu0 %3228
  %v3230 = vsel %vm269, %v3211, 0.0
  %3231 = vadd.xlane.f32.xlu0 %v3230
  %v3232 = vpop.xlane.xlu0 %3231
  %v3233 = vsel %vm269, %v3212, 0.0
  %3234 = vadd.xlane.f32.xlu0 %v3233
  %v3235 = vpop.xlane.xlu0 %3234
  %v3236 = vsel %vm269, %v3213, 0.0
  %3237 = vadd.xlane.f32.xlu0 %v3236
  %v3238 = vpop.xlane.xlu0 %3237
  %v3239 = vsel %vm294, %v3214, 0.0
  %3240 = vadd.xlane.f32.xlu0 %v3239
  %v3241 = vpop.xlane.xlu0 %3240
  %v3242 = vmul.f32 %v3217, %v298
  %v3243 = vmul.f32 %v3220, %v298
  %v3244 = vmul.f32 %v3223, %v298
  %v3245 = vmul.f32 %v3226, %v298
  %v3246 = vmul.f32 %v3229, %v298
  %v3247 = vmul.f32 %v3232, %v298
  %v3248 = vmul.f32 %v3235, %v298
  %v3249 = vmul.f32 %v3238, %v298
  %v3250 = vmul.f32 %v3241, %v298
  %v3251 = vmul.f32 %v3197, %v3197
  %v3252 = vmul.f32 %v3198, %v3198
  %v3253 = vmul.f32 %v3199, %v3199
  %v3254 = vmul.f32 %v3200, %v3200
  %v3255 = vmul.f32 %v3201, %v3201
  %v3256 = vmul.f32 %v3202, %v3202
  %v3257 = vmul.f32 %v3203, %v3203
  %v3258 = vmul.f32 %v3204, %v3204
  %v3259 = vmul.f32 %v3205, %v3205
  %v3260 = vsub.f32 %v3242, %v3251
  %v3261 = vsub.f32 %v3243, %v3252
  %v3262 = vsub.f32 %v3244, %v3253
  %v3263 = vsub.f32 %v3245, %v3254
  %v3264 = vsub.f32 %v3246, %v3255
  %v3265 = vsub.f32 %v3247, %v3256
  %v3266 = vsub.f32 %v3248, %v3257
  %v3267 = vsub.f32 %v3249, %v3258
  %v3268 = vsub.f32 %v3250, %v3259
  %v3269 = vsub.f32 %v3157, %v3197
  %v3270 = vsub.f32 %v3158, %v3198
  %v3271 = vsub.f32 %v3159, %v3199
  %v3272 = vsub.f32 %v3160, %v3200
  %v3273 = vsub.f32 %v3161, %v3201
  %v3274 = vsub.f32 %v3162, %v3202
  %v3275 = vsub.f32 %v3163, %v3203
  %v3276 = vsub.f32 %v3164, %v3204
  %v3277 = vsub.f32 %v3165, %v3205
  %v3278 = vadd.f32 %v3260, 1e-06
  %v3279 = vadd.f32 %v3261, 1e-06
  %v3280 = vadd.f32 %v3262, 1e-06
  %v3281 = vadd.f32 %v3263, 1e-06
  %v3282 = vadd.f32 %v3264, 1e-06
  %v3283 = vadd.f32 %v3265, 1e-06
  %v3284 = vadd.f32 %v3266, 1e-06
  %v3285 = vadd.f32 %v3267, 1e-06
  %v3286 = vadd.f32 %v3268, 1e-06
  %v3287 = vrsqrt.pop %v3278
  %v3288 = vrsqrt.pop %v3279
  %v3289 = vrsqrt.pop %v3280
  %v3290 = vrsqrt.pop %v3281
  %v3291 = vrsqrt.pop %v3282
  %v3292 = vrsqrt.pop %v3283
  %v3293 = vrsqrt.pop %v3284
  %v3294 = vrsqrt.pop %v3285
  %v3295 = vrsqrt.pop %v3286
  %v3296 = vmul.f32 %v3269, %v3287
  %v3297 = vmul.f32 %v3270, %v3288
  %v3298 = vmul.f32 %v3271, %v3289
  %v3299 = vmul.f32 %v3272, %v3290
  %v3300 = vmul.f32 %v3273, %v3291
  %v3301 = vmul.f32 %v3274, %v3292
  %v3302 = vmul.f32 %v3275, %v3293
  %v3303 = vmul.f32 %v3276, %v3294
  %v3304 = vmul.f32 %v3277, %v3295
  %v3306 = vlaneseq
  %v3307 = vshrl.u32 %v3306, 7
  %v3308 = vsub.s32 0, %v3307
  %v3309 = vrot.slane %v3167, %v3308
  %v3311 = vmul.f32 %v3296, %v3309
  %v3312 = vmul.f32 %v3297, %v3309
  %v3313 = vmul.f32 %v3298, %v3309
  %v3314 = vmul.f32 %v3299, %v3309
  %v3315 = vmul.f32 %v3300, %v3309
  %v3316 = vmul.f32 %v3301, %v3309
  %v3317 = vmul.f32 %v3302, %v3309
  %v3318 = vmul.f32 %v3303, %v3309
  %v3319 = vmul.f32 %v3304, %v3309
  %v3321 = vlaneseq
  %v3322 = vshrl.u32 %v3321, 7
  %v3323 = vsub.s32 0, %v3322
  %v3324 = vrot.slane %v3169, %v3323
  %v3326 = vadd.f32 %v3311, %v3324
  %v3327 = vadd.f32 %v3312, %v3324
  %v3328 = vadd.f32 %v3313, %v3324
  %v3329 = vadd.f32 %v3314, %v3324
  %v3330 = vadd.f32 %v3315, %v3324
  %v3331 = vadd.f32 %v3316, %v3324
  %v3332 = vadd.f32 %v3317, %v3324
  %v3333 = vadd.f32 %v3318, %v3324
  %v3334 = vadd.f32 %v3319, %v3324
  %v3335 = vpack.c.bf16 %v3327, %v3326
  %v3336 = vpack.c.bf16 %v3329, %v3328
  %v3337 = vpack.c.bf16 %v3331, %v3330
  %v3338 = vpack.c.bf16 %v3333, %v3332
  %v3339 = vpack.c.bf16 %v3334, %v3334
  %s3340 = scalar_lea.vmem %s7, 16
  %v3341 = vld [vmem:[%s3340] sm:$0xf]
  %v3342 = vld [vmem:[%s3340 + $0x4] sm:$0xf]
  %v3343 = vld [vmem:[%s3340 + $0x8] sm:$0xf]
  %v3344 = vld [vmem:[%s3340 + $0xc] sm:$0xf]
  %s3345 = scalar_lea.vmem %s8, 1
  %v3346 = vld [vmem:[%s3345] sm:$0x1]
  %v3348 = vlaneseq
  %v3349 = vshrl.u32 %v3348, 7
  %v3350 = vsub.s32 0, %v3349
  %v3351 = vrot.slane %v3346, %v3350
  %v3357 = vunpack.c.l.b16 %v3341
  %v3358 = vunpack.c.l.b16 %v3342
  %v3359 = vunpack.c.l.b16 %v3343
  %v3360 = vunpack.c.l.b16 %v3344
  %v3361 = vpack.c.b16 %v3358, %v3357
  %v3362 = vpack.c.b16 %v3360, %v3359
  %v3366 = vsel %vm269, %v3335, 0
  %v3369 = vsel %vm269, %v3336, 0
  %v3372 = vsel %vm269, %v3337, 0
  %v3375 = vsel %vm269, %v3338, 0
  %v3378 = vsel %vm269, %v3339, 0
  %3380 = vmatprep.subr.bf16.mxu0 0
  %3381 = vmatpush1.bf16.msra.mxu0 0
  %3382 = vmatprep.subr.bf16.mxu0 0
  %3383 = vmatpush1.bf16.msra.mxu0 0
  %3384 = vmatprep.subr.bf16.mxu0 0
  %3385 = vmatpush1.bf16.msra.mxu0 0
  %3386 = vmatprep.subr.bf16.mxu0 0
  %3387 = vmatpush1.bf16.msra.mxu0 0
  %3388 = vmatprep.subr.bf16.mxu0 0
  %3389 = vmatpush1.bf16.msra.mxu0 0
  %3390 = vmatprep.subr.bf16.mxu0 0
  %3391 = vmatpush1.bf16.msra.mxu0 0
  %3392 = vmatprep.subr.bf16.mxu0 0
  %3393 = vmatpush1.bf16.msra.mxu0 %v3362
  %3394 = vmatprep.subr.bf16.mxu0 0
  %3395 = vmatpush1.bf16.msra.mxu0 %v3361
  %3396 = vmatprep.subr.bf16.mxu0 0
  %3397 = vmatpush2.bf16.msra.mxu0 0
  %3398 = vmatprep.subr.bf16.mxu0 0
  %3399 = vmatpush2.bf16.msra.mxu0 0
  %3400 = vmatprep.subr.bf16.mxu0 0
  %3401 = vmatpush2.bf16.msra.mxu0 0
  %3402 = vmatprep.subr.bf16.mxu0 0
  %3403 = vmatpush2.bf16.msra.mxu0 0
  %3404 = vmatprep.subr.bf16.mxu0 0
  %3405 = vmatpush2.bf16.msra.mxu0 0
  %3406 = vmatprep.subr.bf16.mxu0 0
  %3407 = vmatpush2.bf16.msra.mxu0 0
  %3408 = vmatprep.subr.bf16.mxu0 0
  %3409 = vmatpush2.bf16.msra.mxu0 0
  %3410 = vmatprep.subr.bf16.mxu0 0
  %3411 = vmatpush2.bf16.msra.mxu0 0
  %3412 = vmatprep.mubr.bf16.mxu0 0
  %3413 = vmatmul.mubr.bf16.gmra.mxu0 %v3366
  %v3414 = vpop.f32.mrf.mxu0
  %v3415 = vadd.f32 %v3351, %v3414
  %v3416 = vpop.f32.mrf.mxu0
  %v3417 = vpop.f32.mrf.mxu0
  %v3418 = vadd.f32 %v3351, %v3417
  %v3419 = vpop.f32.mrf.mxu0
  %3420 = vmatprep.mubr.bf16.mxu0 0
  %3421 = vmatmul.mubr.bf16.gmra.mxu0 %v3369
  %v3422 = vpop.f32.mrf.mxu0
  %v3423 = vadd.f32 %v3351, %v3422
  %v3424 = vpop.f32.mrf.mxu0
  %v3425 = vpop.f32.mrf.mxu0
  %v3426 = vadd.f32 %v3351, %v3425
  %v3427 = vpop.f32.mrf.mxu0
  %3428 = vmatprep.mubr.bf16.mxu0 0
  %3429 = vmatmul.mubr.bf16.gmra.mxu0 %v3372
  %v3430 = vpop.f32.mrf.mxu0
  %v3431 = vadd.f32 %v3351, %v3430
  %v3432 = vpop.f32.mrf.mxu0
  %v3433 = vpop.f32.mrf.mxu0
  %v3434 = vadd.f32 %v3351, %v3433
  %v3435 = vpop.f32.mrf.mxu0
  %3436 = vmatprep.mubr.bf16.mxu0 0
  %3437 = vmatmul.mubr.bf16.gmra.mxu0 %v3375
  %v3438 = vpop.f32.mrf.mxu0
  %v3439 = vadd.f32 %v3351, %v3438
  %v3440 = vpop.f32.mrf.mxu0
  %v3441 = vpop.f32.mrf.mxu0
  %v3442 = vadd.f32 %v3351, %v3441
  %v3443 = vpop.f32.mrf.mxu0
  %3444 = vmatprep.mubr.bf16.mxu0 0
  %3445 = vmatmul.mubr.bf16.gmra.mxu0 %v3378
  %v3446 = vpop.f32.mrf.mxu0
  %v3447 = vadd.f32 %v3351, %v3446
  %v3448 = vpop.f32.mrf.mxu0
  %v3449 = vpop.f32.mrf.mxu0
  %v3450 = vpop.f32.mrf.mxu0
  %3451 = vdwg.mxu0
  %v3452 = vpack.c.bf16 %v3418, %v3415
  %v3453 = vpack.c.bf16 %v3426, %v3423
  %v3454 = vpack.c.bf16 %v3434, %v3431
  %v3455 = vpack.c.bf16 %v3442, %v3439
  %v3456 = vpack.c.bf16 %v3447, %v3447
  %v3457 = vmul.f32 %v3415, %v560
  %v3458 = vmul.f32 %v3418, %v560
  %v3459 = vmul.f32 %v3423, %v560
  %v3460 = vmul.f32 %v3426, %v560
  %v3461 = vmul.f32 %v3431, %v560
  %v3462 = vmul.f32 %v3434, %v560
  %v3463 = vmul.f32 %v3439, %v560
  %v3464 = vmul.f32 %v3442, %v560
  %v3465 = vmul.f32 %v3447, %v560
  %v3466 = vmul.f32 %v3415, %v573
  %v3467 = vmul.f32 %v3418, %v573
  %v3468 = vmul.f32 %v3423, %v573
  %v3469 = vmul.f32 %v3426, %v573
  %v3470 = vmul.f32 %v3431, %v573
  %v3471 = vmul.f32 %v3434, %v573
  %v3472 = vmul.f32 %v3439, %v573
  %v3473 = vmul.f32 %v3442, %v573
  %v3474 = vmul.f32 %v3447, %v573
  %v3475 = vmul.f32 %v3415, %v586
  %v3476 = vmul.f32 %v3418, %v586
  %v3477 = vmul.f32 %v3423, %v586
  %v3478 = vmul.f32 %v3426, %v586
  %v3479 = vmul.f32 %v3431, %v586
  %v3480 = vmul.f32 %v3434, %v586
  %v3481 = vmul.f32 %v3439, %v586
  %v3482 = vmul.f32 %v3442, %v586
  %v3483 = vmul.f32 %v3447, %v586
  %v3484 = vmul.f32 %v3415, %v599
  %v3485 = vmul.f32 %v3418, %v599
  %v3486 = vmul.f32 %v3423, %v599
  %v3487 = vmul.f32 %v3426, %v599
  %v3488 = vmul.f32 %v3431, %v599
  %v3489 = vmul.f32 %v3434, %v599
  %v3490 = vmul.f32 %v3439, %v599
  %v3491 = vmul.f32 %v3442, %v599
  %v3492 = vmul.f32 %v3447, %v599
  %v3498 = vrot.slane %v3461, 1
  %v3499 = vrot.slane %v3462, 1
  %v3500 = vsel %vm614, %v3498, %v3499
  %v3501 = vrot.slane %v3463, 1
  %v3502 = vsel %vm614, %v3499, %v3501
  %v3503 = vrot.slane %v3464, 1
  %v3504 = vsel %vm614, %v3501, %v3503
  %v3505 = vrot.slane %v3465, 1
  %v3506 = vsel %vm614, %v3503, %v3505
  %v3517 = vrot.slane %v3470, 1
  %v3518 = vrot.slane %v3471, 1
  %v3519 = vsel %vm614, %v3517, %v3518
  %v3520 = vrot.slane %v3472, 1
  %v3521 = vsel %vm614, %v3518, %v3520
  %v3522 = vrot.slane %v3473, 1
  %v3523 = vsel %vm614, %v3520, %v3522
  %v3524 = vrot.slane %v3474, 1
  %v3525 = vsel %vm614, %v3522, %v3524
  %v3536 = vrot.slane %v3479, 1
  %v3537 = vrot.slane %v3480, 1
  %v3538 = vsel %vm614, %v3536, %v3537
  %v3539 = vrot.slane %v3481, 1
  %v3540 = vsel %vm614, %v3537, %v3539
  %v3541 = vrot.slane %v3482, 1
  %v3542 = vsel %vm614, %v3539, %v3541
  %v3543 = vrot.slane %v3483, 1
  %v3544 = vsel %vm614, %v3541, %v3543
  %v3555 = vrot.slane %v3488, 1
  %v3556 = vrot.slane %v3489, 1
  %v3557 = vsel %vm614, %v3555, %v3556
  %v3558 = vrot.slane %v3490, 1
  %v3559 = vsel %vm614, %v3556, %v3558
  %v3560 = vrot.slane %v3491, 1
  %v3561 = vsel %vm614, %v3558, %v3560
  %v3562 = vrot.slane %v3492, 1
  %v3563 = vsel %vm614, %v3560, %v3562
  %v3569 = vpack.c.bf16 %v3458, %v3457
  %v3570 = vpack.c.bf16 %v3460, %v3459
  %v3571 = vpack.c.bf16 %v3461, %v3461
  %v3572 = vpack.c.bf16 %v3502, %v3500
  %v3573 = vpack.c.bf16 %v3506, %v3504
  %v3574 = vpack.c.bf16 %v3505, %v3505
  %v3575 = vpack.c.bf16 %v3467, %v3466
  %v3576 = vpack.c.bf16 %v3469, %v3468
  %v3577 = vpack.c.bf16 %v3470, %v3470
  %v3578 = vpack.c.bf16 %v3521, %v3519
  %v3579 = vpack.c.bf16 %v3525, %v3523
  %v3580 = vpack.c.bf16 %v3524, %v3524
  %v3581 = vpack.c.bf16 %v3476, %v3475
  %v3582 = vpack.c.bf16 %v3478, %v3477
  %v3583 = vpack.c.bf16 %v3479, %v3479
  %v3584 = vpack.c.bf16 %v3540, %v3538
  %v3585 = vpack.c.bf16 %v3544, %v3542
  %v3586 = vpack.c.bf16 %v3543, %v3543
  %v3587 = vpack.c.bf16 %v3485, %v3484
  %v3588 = vpack.c.bf16 %v3487, %v3486
  %v3589 = vpack.c.bf16 %v3488, %v3488
  %v3590 = vpack.c.bf16 %v3559, %v3557
  %v3591 = vpack.c.bf16 %v3563, %v3561
  %v3592 = vpack.c.bf16 %v3562, %v3562
  %v3594 = vshrl.u32 %v3454, 16
  %v3596 = vshll.u32 %v3454, 16
  %v3598 = vrot.slane %v3596, 1
  %v3599 = vor.u32 %v3594, %v3598
  %v3601 = vshll.u32 %v3455, 16
  %v3603 = vrot.slane %v3601, 1
  %v3604 = vsel %vm710, %v3599, %v3603
  %v3605 = vshrl.u32 %v3455, 16
  %v3607 = vor.u32 %v3605, %v3603
  %v3609 = vshll.u32 %v3456, 16
  %v3611 = vrot.slane %v3609, 1
  %v3612 = vsel %vm710, %v3607, %v3611
  %v3613 = vshrl.u32 %v3456, 16
  %3618 = vrot.lane.b32.xlu0 %v3452, 96
  %v3619 = vpop.permute.xlu0 %3618
  %3620 = vrot.lane.b32.xlu0 %v3453, 96
  %v3621 = vpop.permute.xlu0 %3620
  %3622 = vrot.lane.b32.xlu0 %v3454, 96
  %v3623 = vpop.permute.xlu0 %3622
  %v3625 = vsel %vm269, %v3569, 0
  %v3628 = vsel %vm269, %v3570, 0
  %v3631 = vsel %vm269, %v3571, 0
  %v3634 = vsel %vm269, %v3619, 0
  %v3637 = vsel %vm269, %v3621, 0
  %v3640 = vsel %vm269, %v3623, 0
  %3642 = vmatprep.subr.bf16.mxu0 0
  %3643 = vmatpush1.bf16.xpose.msra.mxu0 0
  %3644 = vmatprep.subr.bf16.mxu0 0
  %3645 = vmatpush1.bf16.xpose.msra.mxu0 0
  %3646 = vmatprep.subr.bf16.mxu0 0
  %3647 = vmatpush1.bf16.xpose.msra.mxu0 0
  %3648 = vmatprep.subr.bf16.mxu0 0
  %3649 = vmatpush1.bf16.xpose.msra.mxu0 0
  %3650 = vmatprep.subr.bf16.mxu0 0
  %3651 = vmatpush1.bf16.xpose.msra.mxu0 0
  %3652 = vmatprep.subr.bf16.mxu0 0
  %3653 = vmatpush1.bf16.xpose.msra.mxu0 %v3640
  %3654 = vmatprep.subr.bf16.mxu0 0
  %3655 = vmatpush1.bf16.xpose.msra.mxu0 %v3637
  %3656 = vmatprep.subr.bf16.mxu0 0
  %3657 = vmatpush1.bf16.xpose.msra.mxu0 %v3634
  %3658 = vmatprep.subr.bf16.mxu0 0
  %3659 = vmatpush2.bf16.xpose.msra.mxu0 0
  %3660 = vmatprep.subr.bf16.mxu0 0
  %3661 = vmatpush2.bf16.xpose.msra.mxu0 0
  %3662 = vmatprep.subr.bf16.mxu0 0
  %3663 = vmatpush2.bf16.xpose.msra.mxu0 0
  %3664 = vmatprep.subr.bf16.mxu0 0
  %3665 = vmatpush2.bf16.xpose.msra.mxu0 0
  %3666 = vmatprep.subr.bf16.mxu0 0
  %3667 = vmatpush2.bf16.xpose.msra.mxu0 0
  %3668 = vmatprep.subr.bf16.mxu0 0
  %3669 = vmatpush2.bf16.xpose.msra.mxu0 0
  %3670 = vmatprep.subr.bf16.mxu0 0
  %3671 = vmatpush2.bf16.xpose.msra.mxu0 0
  %3672 = vmatprep.subr.bf16.mxu0 0
  %3673 = vmatpush2.bf16.xpose.msra.mxu0 0
  %3674 = vmatprep.mubr.bf16.mxu0 0
  %3675 = vmatmul.mubr.bf16.gmra.mxu0 %v3625
  %v3676 = vpop.f32.mrf.mxu0
  %v3677 = vadd.f32 0.0, %v3676
  %v3678 = vpop.f32.mrf.mxu0
  %v3679 = vpop.f32.mrf.mxu0
  %v3680 = vadd.f32 0.0, %v3679
  %v3681 = vpop.f32.mrf.mxu0
  %3682 = vmatprep.mubr.bf16.mxu0 0
  %3683 = vmatmul.mubr.bf16.gmra.mxu0 %v3628
  %v3684 = vpop.f32.mrf.mxu0
  %v3685 = vadd.f32 0.0, %v3684
  %v3686 = vpop.f32.mrf.mxu0
  %v3687 = vpop.f32.mrf.mxu0
  %v3688 = vadd.f32 0.0, %v3687
  %v3689 = vpop.f32.mrf.mxu0
  %3690 = vmatprep.mubr.bf16.mxu0 0
  %3691 = vmatmul.mubr.bf16.gmra.mxu0 %v3631
  %v3692 = vpop.f32.mrf.mxu0
  %v3693 = vadd.f32 0.0, %v3692
  %v3694 = vpop.f32.mrf.mxu0
  %v3695 = vpop.f32.mrf.mxu0
  %v3696 = vpop.f32.mrf.mxu0
  %3697 = vdwg.mxu0
  %3698 = vrot.lane.b32.xlu0 %v3604, 96
  %v3699 = vpop.permute.xlu0 %3698
  %3700 = vrot.lane.b32.xlu0 %v3612, 96
  %v3701 = vpop.permute.xlu0 %3700
  %3702 = vrot.lane.b32.xlu0 %v3613, 96
  %v3703 = vpop.permute.xlu0 %3702
  %v3705 = vsel %vm269, %v3572, 0
  %v3708 = vsel %vm269, %v3573, 0
  %v3711 = vsel %vm269, %v3574, 0
  %v3714 = vsel %vm269, %v3699, 0
  %v3717 = vsel %vm269, %v3701, 0
  %v3720 = vsel %vm269, %v3703, 0
  %3722 = vmatprep.subr.bf16.mxu0 0
  %3723 = vmatpush1.bf16.xpose.msra.mxu0 0
  %3724 = vmatprep.subr.bf16.mxu0 0
  %3725 = vmatpush1.bf16.xpose.msra.mxu0 0
  %3726 = vmatprep.subr.bf16.mxu0 0
  %3727 = vmatpush1.bf16.xpose.msra.mxu0 0
  %3728 = vmatprep.subr.bf16.mxu0 0
  %3729 = vmatpush1.bf16.xpose.msra.mxu0 0
  %3730 = vmatprep.subr.bf16.mxu0 0
  %3731 = vmatpush1.bf16.xpose.msra.mxu0 0
  %3732 = vmatprep.subr.bf16.mxu0 0
  %3733 = vmatpush1.bf16.xpose.msra.mxu0 %v3720
  %3734 = vmatprep.subr.bf16.mxu0 0
  %3735 = vmatpush1.bf16.xpose.msra.mxu0 %v3717
  %3736 = vmatprep.subr.bf16.mxu0 0
  %3737 = vmatpush1.bf16.xpose.msra.mxu0 %v3714
  %3738 = vmatprep.subr.bf16.mxu0 0
  %3739 = vmatpush2.bf16.xpose.msra.mxu0 0
  %3740 = vmatprep.subr.bf16.mxu0 0
  %3741 = vmatpush2.bf16.xpose.msra.mxu0 0
  %3742 = vmatprep.subr.bf16.mxu0 0
  %3743 = vmatpush2.bf16.xpose.msra.mxu0 0
  %3744 = vmatprep.subr.bf16.mxu0 0
  %3745 = vmatpush2.bf16.xpose.msra.mxu0 0
  %3746 = vmatprep.subr.bf16.mxu0 0
  %3747 = vmatpush2.bf16.xpose.msra.mxu0 0
  %3748 = vmatprep.subr.bf16.mxu0 0
  %3749 = vmatpush2.bf16.xpose.msra.mxu0 0
  %3750 = vmatprep.subr.bf16.mxu0 0
  %3751 = vmatpush2.bf16.xpose.msra.mxu0 0
  %3752 = vmatprep.subr.bf16.mxu0 0
  %3753 = vmatpush2.bf16.xpose.msra.mxu0 0
  %3754 = vmatprep.mubr.bf16.mxu0 0
  %3755 = vmatmul.mubr.bf16.gmra.mxu0 %v3705
  %v3756 = vpop.f32.mrf.mxu0
  %v3757 = vadd.f32 0.0, %v3756
  %v3758 = vpop.f32.mrf.mxu0
  %v3759 = vpop.f32.mrf.mxu0
  %v3760 = vadd.f32 0.0, %v3759
  %v3761 = vpop.f32.mrf.mxu0
  %3762 = vmatprep.mubr.bf16.mxu0 0
  %3763 = vmatmul.mubr.bf16.gmra.mxu0 %v3708
  %v3764 = vpop.f32.mrf.mxu0
  %v3765 = vadd.f32 0.0, %v3764
  %v3766 = vpop.f32.mrf.mxu0
  %v3767 = vpop.f32.mrf.mxu0
  %v3768 = vadd.f32 0.0, %v3767
  %v3769 = vpop.f32.mrf.mxu0
  %3770 = vmatprep.mubr.bf16.mxu0 0
  %3771 = vmatmul.mubr.bf16.gmra.mxu0 %v3711
  %v3772 = vpop.f32.mrf.mxu0
  %v3773 = vadd.f32 0.0, %v3772
  %v3774 = vpop.f32.mrf.mxu0
  %v3775 = vpop.f32.mrf.mxu0
  %v3776 = vpop.f32.mrf.mxu0
  %3777 = vdwg.mxu0
  %v3779 = vsel %vm269, %v3575, 0
  %v3782 = vsel %vm269, %v3576, 0
  %v3785 = vsel %vm269, %v3577, 0
  %3787 = vmatprep.subr.bf16.mxu0 0
  %3788 = vmatpush1.bf16.xpose.msra.mxu0 0
  %3789 = vmatprep.subr.bf16.mxu0 0
  %3790 = vmatpush1.bf16.xpose.msra.mxu0 0
  %3791 = vmatprep.subr.bf16.mxu0 0
  %3792 = vmatpush1.bf16.xpose.msra.mxu0 0
  %3793 = vmatprep.subr.bf16.mxu0 0
  %3794 = vmatpush1.bf16.xpose.msra.mxu0 0
  %3795 = vmatprep.subr.bf16.mxu0 0
  %3796 = vmatpush1.bf16.xpose.msra.mxu0 0
  %3797 = vmatprep.subr.bf16.mxu0 0
  %3798 = vmatpush1.bf16.xpose.msra.mxu0 %v3640
  %3799 = vmatprep.subr.bf16.mxu0 0
  %3800 = vmatpush1.bf16.xpose.msra.mxu0 %v3637
  %3801 = vmatprep.subr.bf16.mxu0 0
  %3802 = vmatpush1.bf16.xpose.msra.mxu0 %v3634
  %3803 = vmatprep.subr.bf16.mxu0 0
  %3804 = vmatpush2.bf16.xpose.msra.mxu0 0
  %3805 = vmatprep.subr.bf16.mxu0 0
  %3806 = vmatpush2.bf16.xpose.msra.mxu0 0
  %3807 = vmatprep.subr.bf16.mxu0 0
  %3808 = vmatpush2.bf16.xpose.msra.mxu0 0
  %3809 = vmatprep.subr.bf16.mxu0 0
  %3810 = vmatpush2.bf16.xpose.msra.mxu0 0
  %3811 = vmatprep.subr.bf16.mxu0 0
  %3812 = vmatpush2.bf16.xpose.msra.mxu0 0
  %3813 = vmatprep.subr.bf16.mxu0 0
  %3814 = vmatpush2.bf16.xpose.msra.mxu0 0
  %3815 = vmatprep.subr.bf16.mxu0 0
  %3816 = vmatpush2.bf16.xpose.msra.mxu0 0
  %3817 = vmatprep.subr.bf16.mxu0 0
  %3818 = vmatpush2.bf16.xpose.msra.mxu0 0
  %3819 = vmatprep.mubr.bf16.mxu0 0
  %3820 = vmatmul.mubr.bf16.gmra.mxu0 %v3779
  %v3821 = vpop.f32.mrf.mxu0
  %v3822 = vadd.f32 0.0, %v3821
  %v3823 = vpop.f32.mrf.mxu0
  %v3824 = vpop.f32.mrf.mxu0
  %v3825 = vadd.f32 0.0, %v3824
  %v3826 = vpop.f32.mrf.mxu0
  %3827 = vmatprep.mubr.bf16.mxu0 0
  %3828 = vmatmul.mubr.bf16.gmra.mxu0 %v3782
  %v3829 = vpop.f32.mrf.mxu0
  %v3830 = vadd.f32 0.0, %v3829
  %v3831 = vpop.f32.mrf.mxu0
  %v3832 = vpop.f32.mrf.mxu0
  %v3833 = vadd.f32 0.0, %v3832
  %v3834 = vpop.f32.mrf.mxu0
  %3835 = vmatprep.mubr.bf16.mxu0 0
  %3836 = vmatmul.mubr.bf16.gmra.mxu0 %v3785
  %v3837 = vpop.f32.mrf.mxu0
  %v3838 = vadd.f32 0.0, %v3837
  %v3839 = vpop.f32.mrf.mxu0
  %v3840 = vpop.f32.mrf.mxu0
  %v3841 = vpop.f32.mrf.mxu0
  %3842 = vdwg.mxu0
  %v3844 = vsel %vm269, %v3578, 0
  %v3847 = vsel %vm269, %v3579, 0
  %v3850 = vsel %vm269, %v3580, 0
  %3852 = vmatprep.subr.bf16.mxu0 0
  %3853 = vmatpush1.bf16.xpose.msra.mxu0 0
  %3854 = vmatprep.subr.bf16.mxu0 0
  %3855 = vmatpush1.bf16.xpose.msra.mxu0 0
  %3856 = vmatprep.subr.bf16.mxu0 0
  %3857 = vmatpush1.bf16.xpose.msra.mxu0 0
  %3858 = vmatprep.subr.bf16.mxu0 0
  %3859 = vmatpush1.bf16.xpose.msra.mxu0 0
  %3860 = vmatprep.subr.bf16.mxu0 0
  %3861 = vmatpush1.bf16.xpose.msra.mxu0 0
  %3862 = vmatprep.subr.bf16.mxu0 0
  %3863 = vmatpush1.bf16.xpose.msra.mxu0 %v3720
  %3864 = vmatprep.subr.bf16.mxu0 0
  %3865 = vmatpush1.bf16.xpose.msra.mxu0 %v3717
  %3866 = vmatprep.subr.bf16.mxu0 0
  %3867 = vmatpush1.bf16.xpose.msra.mxu0 %v3714
  %3868 = vmatprep.subr.bf16.mxu0 0
  %3869 = vmatpush2.bf16.xpose.msra.mxu0 0
  %3870 = vmatprep.subr.bf16.mxu0 0
  %3871 = vmatpush2.bf16.xpose.msra.mxu0 0
  %3872 = vmatprep.subr.bf16.mxu0 0
  %3873 = vmatpush2.bf16.xpose.msra.mxu0 0
  %3874 = vmatprep.subr.bf16.mxu0 0
  %3875 = vmatpush2.bf16.xpose.msra.mxu0 0
  %3876 = vmatprep.subr.bf16.mxu0 0
  %3877 = vmatpush2.bf16.xpose.msra.mxu0 0
  %3878 = vmatprep.subr.bf16.mxu0 0
  %3879 = vmatpush2.bf16.xpose.msra.mxu0 0
  %3880 = vmatprep.subr.bf16.mxu0 0
  %3881 = vmatpush2.bf16.xpose.msra.mxu0 0
  %3882 = vmatprep.subr.bf16.mxu0 0
  %3883 = vmatpush2.bf16.xpose.msra.mxu0 0
  %3884 = vmatprep.mubr.bf16.mxu0 0
  %3885 = vmatmul.mubr.bf16.gmra.mxu0 %v3844
  %v3886 = vpop.f32.mrf.mxu0
  %v3887 = vadd.f32 0.0, %v3886
  %v3888 = vpop.f32.mrf.mxu0
  %v3889 = vpop.f32.mrf.mxu0
  %v3890 = vadd.f32 0.0, %v3889
  %v3891 = vpop.f32.mrf.mxu0
  %3892 = vmatprep.mubr.bf16.mxu0 0
  %3893 = vmatmul.mubr.bf16.gmra.mxu0 %v3847
  %v3894 = vpop.f32.mrf.mxu0
  %v3895 = vadd.f32 0.0, %v3894
  %v3896 = vpop.f32.mrf.mxu0
  %v3897 = vpop.f32.mrf.mxu0
  %v3898 = vadd.f32 0.0, %v3897
  %v3899 = vpop.f32.mrf.mxu0
  %3900 = vmatprep.mubr.bf16.mxu0 0
  %3901 = vmatmul.mubr.bf16.gmra.mxu0 %v3850
  %v3902 = vpop.f32.mrf.mxu0
  %v3903 = vadd.f32 0.0, %v3902
  %v3904 = vpop.f32.mrf.mxu0
  %v3905 = vpop.f32.mrf.mxu0
  %v3906 = vpop.f32.mrf.mxu0
  %3907 = vdwg.mxu0
  %v3909 = vsel %vm269, %v3581, 0
  %v3912 = vsel %vm269, %v3582, 0
  %v3915 = vsel %vm269, %v3583, 0
  %3917 = vmatprep.subr.bf16.mxu0 0
  %3918 = vmatpush1.bf16.xpose.msra.mxu0 0
  %3919 = vmatprep.subr.bf16.mxu0 0
  %3920 = vmatpush1.bf16.xpose.msra.mxu0 0
  %3921 = vmatprep.subr.bf16.mxu0 0
  %3922 = vmatpush1.bf16.xpose.msra.mxu0 0
  %3923 = vmatprep.subr.bf16.mxu0 0
  %3924 = vmatpush1.bf16.xpose.msra.mxu0 0
  %3925 = vmatprep.subr.bf16.mxu0 0
  %3926 = vmatpush1.bf16.xpose.msra.mxu0 0
  %3927 = vmatprep.subr.bf16.mxu0 0
  %3928 = vmatpush1.bf16.xpose.msra.mxu0 %v3640
  %3929 = vmatprep.subr.bf16.mxu0 0
  %3930 = vmatpush1.bf16.xpose.msra.mxu0 %v3637
  %3931 = vmatprep.subr.bf16.mxu0 0
  %3932 = vmatpush1.bf16.xpose.msra.mxu0 %v3634
  %3933 = vmatprep.subr.bf16.mxu0 0
  %3934 = vmatpush2.bf16.xpose.msra.mxu0 0
  %3935 = vmatprep.subr.bf16.mxu0 0
  %3936 = vmatpush2.bf16.xpose.msra.mxu0 0
  %3937 = vmatprep.subr.bf16.mxu0 0
  %3938 = vmatpush2.bf16.xpose.msra.mxu0 0
  %3939 = vmatprep.subr.bf16.mxu0 0
  %3940 = vmatpush2.bf16.xpose.msra.mxu0 0
  %3941 = vmatprep.subr.bf16.mxu0 0
  %3942 = vmatpush2.bf16.xpose.msra.mxu0 0
  %3943 = vmatprep.subr.bf16.mxu0 0
  %3944 = vmatpush2.bf16.xpose.msra.mxu0 0
  %3945 = vmatprep.subr.bf16.mxu0 0
  %3946 = vmatpush2.bf16.xpose.msra.mxu0 0
  %3947 = vmatprep.subr.bf16.mxu0 0
  %3948 = vmatpush2.bf16.xpose.msra.mxu0 0
  %3949 = vmatprep.mubr.bf16.mxu0 0
  %3950 = vmatmul.mubr.bf16.gmra.mxu0 %v3909
  %v3951 = vpop.f32.mrf.mxu0
  %v3952 = vadd.f32 0.0, %v3951
  %v3953 = vpop.f32.mrf.mxu0
  %v3954 = vpop.f32.mrf.mxu0
  %v3955 = vadd.f32 0.0, %v3954
  %v3956 = vpop.f32.mrf.mxu0
  %3957 = vmatprep.mubr.bf16.mxu0 0
  %3958 = vmatmul.mubr.bf16.gmra.mxu0 %v3912
  %v3959 = vpop.f32.mrf.mxu0
  %v3960 = vadd.f32 0.0, %v3959
  %v3961 = vpop.f32.mrf.mxu0
  %v3962 = vpop.f32.mrf.mxu0
  %v3963 = vadd.f32 0.0, %v3962
  %v3964 = vpop.f32.mrf.mxu0
  %3965 = vmatprep.mubr.bf16.mxu0 0
  %3966 = vmatmul.mubr.bf16.gmra.mxu0 %v3915
  %v3967 = vpop.f32.mrf.mxu0
  %v3968 = vadd.f32 0.0, %v3967
  %v3969 = vpop.f32.mrf.mxu0
  %v3970 = vpop.f32.mrf.mxu0
  %v3971 = vpop.f32.mrf.mxu0
  %3972 = vdwg.mxu0
  %v3974 = vsel %vm269, %v3584, 0
  %v3977 = vsel %vm269, %v3585, 0
  %v3980 = vsel %vm269, %v3586, 0
  %3982 = vmatprep.subr.bf16.mxu0 0
  %3983 = vmatpush1.bf16.xpose.msra.mxu0 0
  %3984 = vmatprep.subr.bf16.mxu0 0
  %3985 = vmatpush1.bf16.xpose.msra.mxu0 0
  %3986 = vmatprep.subr.bf16.mxu0 0
  %3987 = vmatpush1.bf16.xpose.msra.mxu0 0
  %3988 = vmatprep.subr.bf16.mxu0 0
  %3989 = vmatpush1.bf16.xpose.msra.mxu0 0
  %3990 = vmatprep.subr.bf16.mxu0 0
  %3991 = vmatpush1.bf16.xpose.msra.mxu0 0
  %3992 = vmatprep.subr.bf16.mxu0 0
  %3993 = vmatpush1.bf16.xpose.msra.mxu0 %v3720
  %3994 = vmatprep.subr.bf16.mxu0 0
  %3995 = vmatpush1.bf16.xpose.msra.mxu0 %v3717
  %3996 = vmatprep.subr.bf16.mxu0 0
  %3997 = vmatpush1.bf16.xpose.msra.mxu0 %v3714
  %3998 = vmatprep.subr.bf16.mxu0 0
  %3999 = vmatpush2.bf16.xpose.msra.mxu0 0
  %4000 = vmatprep.subr.bf16.mxu0 0
  %4001 = vmatpush2.bf16.xpose.msra.mxu0 0
  %4002 = vmatprep.subr.bf16.mxu0 0
  %4003 = vmatpush2.bf16.xpose.msra.mxu0 0
  %4004 = vmatprep.subr.bf16.mxu0 0
  %4005 = vmatpush2.bf16.xpose.msra.mxu0 0
  %4006 = vmatprep.subr.bf16.mxu0 0
  %4007 = vmatpush2.bf16.xpose.msra.mxu0 0
  %4008 = vmatprep.subr.bf16.mxu0 0
  %4009 = vmatpush2.bf16.xpose.msra.mxu0 0
  %4010 = vmatprep.subr.bf16.mxu0 0
  %4011 = vmatpush2.bf16.xpose.msra.mxu0 0
  %4012 = vmatprep.subr.bf16.mxu0 0
  %4013 = vmatpush2.bf16.xpose.msra.mxu0 0
  %4014 = vmatprep.mubr.bf16.mxu0 0
  %4015 = vmatmul.mubr.bf16.gmra.mxu0 %v3974
  %v4016 = vpop.f32.mrf.mxu0
  %v4017 = vadd.f32 0.0, %v4016
  %v4018 = vpop.f32.mrf.mxu0
  %v4019 = vpop.f32.mrf.mxu0
  %v4020 = vadd.f32 0.0, %v4019
  %v4021 = vpop.f32.mrf.mxu0
  %4022 = vmatprep.mubr.bf16.mxu0 0
  %4023 = vmatmul.mubr.bf16.gmra.mxu0 %v3977
  %v4024 = vpop.f32.mrf.mxu0
  %v4025 = vadd.f32 0.0, %v4024
  %v4026 = vpop.f32.mrf.mxu0
  %v4027 = vpop.f32.mrf.mxu0
  %v4028 = vadd.f32 0.0, %v4027
  %v4029 = vpop.f32.mrf.mxu0
  %4030 = vmatprep.mubr.bf16.mxu0 0
  %4031 = vmatmul.mubr.bf16.gmra.mxu0 %v3980
  %v4032 = vpop.f32.mrf.mxu0
  %v4033 = vadd.f32 0.0, %v4032
  %v4034 = vpop.f32.mrf.mxu0
  %v4035 = vpop.f32.mrf.mxu0
  %v4036 = vpop.f32.mrf.mxu0
  %4037 = vdwg.mxu0
  %v4039 = vsel %vm269, %v3587, 0
  %v4042 = vsel %vm269, %v3588, 0
  %v4045 = vsel %vm269, %v3589, 0
  %4047 = vmatprep.subr.bf16.mxu0 0
  %4048 = vmatpush1.bf16.xpose.msra.mxu0 0
  %4049 = vmatprep.subr.bf16.mxu0 0
  %4050 = vmatpush1.bf16.xpose.msra.mxu0 0
  %4051 = vmatprep.subr.bf16.mxu0 0
  %4052 = vmatpush1.bf16.xpose.msra.mxu0 0
  %4053 = vmatprep.subr.bf16.mxu0 0
  %4054 = vmatpush1.bf16.xpose.msra.mxu0 0
  %4055 = vmatprep.subr.bf16.mxu0 0
  %4056 = vmatpush1.bf16.xpose.msra.mxu0 0
  %4057 = vmatprep.subr.bf16.mxu0 0
  %4058 = vmatpush1.bf16.xpose.msra.mxu0 %v3640
  %4059 = vmatprep.subr.bf16.mxu0 0
  %4060 = vmatpush1.bf16.xpose.msra.mxu0 %v3637
  %4061 = vmatprep.subr.bf16.mxu0 0
  %4062 = vmatpush1.bf16.xpose.msra.mxu0 %v3634
  %4063 = vmatprep.subr.bf16.mxu0 0
  %4064 = vmatpush2.bf16.xpose.msra.mxu0 0
  %4065 = vmatprep.subr.bf16.mxu0 0
  %4066 = vmatpush2.bf16.xpose.msra.mxu0 0
  %4067 = vmatprep.subr.bf16.mxu0 0
  %4068 = vmatpush2.bf16.xpose.msra.mxu0 0
  %4069 = vmatprep.subr.bf16.mxu0 0
  %4070 = vmatpush2.bf16.xpose.msra.mxu0 0
  %4071 = vmatprep.subr.bf16.mxu0 0
  %4072 = vmatpush2.bf16.xpose.msra.mxu0 0
  %4073 = vmatprep.subr.bf16.mxu0 0
  %4074 = vmatpush2.bf16.xpose.msra.mxu0 0
  %4075 = vmatprep.subr.bf16.mxu0 0
  %4076 = vmatpush2.bf16.xpose.msra.mxu0 0
  %4077 = vmatprep.subr.bf16.mxu0 0
  %4078 = vmatpush2.bf16.xpose.msra.mxu0 0
  %4079 = vmatprep.mubr.bf16.mxu0 0
  %4080 = vmatmul.mubr.bf16.gmra.mxu0 %v4039
  %v4081 = vpop.f32.mrf.mxu0
  %v4082 = vadd.f32 0.0, %v4081
  %v4083 = vpop.f32.mrf.mxu0
  %v4084 = vpop.f32.mrf.mxu0
  %v4085 = vadd.f32 0.0, %v4084
  %v4086 = vpop.f32.mrf.mxu0
  %4087 = vmatprep.mubr.bf16.mxu0 0
  %4088 = vmatmul.mubr.bf16.gmra.mxu0 %v4042
  %v4089 = vpop.f32.mrf.mxu0
  %v4090 = vadd.f32 0.0, %v4089
  %v4091 = vpop.f32.mrf.mxu0
  %v4092 = vpop.f32.mrf.mxu0
  %v4093 = vadd.f32 0.0, %v4092
  %v4094 = vpop.f32.mrf.mxu0
  %4095 = vmatprep.mubr.bf16.mxu0 0
  %4096 = vmatmul.mubr.bf16.gmra.mxu0 %v4045
  %v4097 = vpop.f32.mrf.mxu0
  %v4098 = vadd.f32 0.0, %v4097
  %v4099 = vpop.f32.mrf.mxu0
  %v4100 = vpop.f32.mrf.mxu0
  %v4101 = vpop.f32.mrf.mxu0
  %4102 = vdwg.mxu0
  %v4104 = vsel %vm269, %v3590, 0
  %v4107 = vsel %vm269, %v3591, 0
  %v4110 = vsel %vm269, %v3592, 0
  %4112 = vmatprep.subr.bf16.mxu0 0
  %4113 = vmatpush1.bf16.xpose.msra.mxu0 0
  %4114 = vmatprep.subr.bf16.mxu0 0
  %4115 = vmatpush1.bf16.xpose.msra.mxu0 0
  %4116 = vmatprep.subr.bf16.mxu0 0
  %4117 = vmatpush1.bf16.xpose.msra.mxu0 0
  %4118 = vmatprep.subr.bf16.mxu0 0
  %4119 = vmatpush1.bf16.xpose.msra.mxu0 0
  %4120 = vmatprep.subr.bf16.mxu0 0
  %4121 = vmatpush1.bf16.xpose.msra.mxu0 0
  %4122 = vmatprep.subr.bf16.mxu0 0
  %4123 = vmatpush1.bf16.xpose.msra.mxu0 %v3720
  %4124 = vmatprep.subr.bf16.mxu0 0
  %4125 = vmatpush1.bf16.xpose.msra.mxu0 %v3717
  %4126 = vmatprep.subr.bf16.mxu0 0
  %4127 = vmatpush1.bf16.xpose.msra.mxu0 %v3714
  %4128 = vmatprep.subr.bf16.mxu0 0
  %4129 = vmatpush2.bf16.xpose.msra.mxu0 0
  %4130 = vmatprep.subr.bf16.mxu0 0
  %4131 = vmatpush2.bf16.xpose.msra.mxu0 0
  %4132 = vmatprep.subr.bf16.mxu0 0
  %4133 = vmatpush2.bf16.xpose.msra.mxu0 0
  %4134 = vmatprep.subr.bf16.mxu0 0
  %4135 = vmatpush2.bf16.xpose.msra.mxu0 0
  %4136 = vmatprep.subr.bf16.mxu0 0
  %4137 = vmatpush2.bf16.xpose.msra.mxu0 0
  %4138 = vmatprep.subr.bf16.mxu0 0
  %4139 = vmatpush2.bf16.xpose.msra.mxu0 0
  %4140 = vmatprep.subr.bf16.mxu0 0
  %4141 = vmatpush2.bf16.xpose.msra.mxu0 0
  %4142 = vmatprep.subr.bf16.mxu0 0
  %4143 = vmatpush2.bf16.xpose.msra.mxu0 0
  %4144 = vmatprep.mubr.bf16.mxu0 0
  %4145 = vmatmul.mubr.bf16.gmra.mxu0 %v4104
  %v4146 = vpop.f32.mrf.mxu0
  %v4147 = vadd.f32 0.0, %v4146
  %v4148 = vpop.f32.mrf.mxu0
  %v4149 = vpop.f32.mrf.mxu0
  %v4150 = vadd.f32 0.0, %v4149
  %v4151 = vpop.f32.mrf.mxu0
  %4152 = vmatprep.mubr.bf16.mxu0 0
  %4153 = vmatmul.mubr.bf16.gmra.mxu0 %v4107
  %v4154 = vpop.f32.mrf.mxu0
  %v4155 = vadd.f32 0.0, %v4154
  %v4156 = vpop.f32.mrf.mxu0
  %v4157 = vpop.f32.mrf.mxu0
  %v4158 = vadd.f32 0.0, %v4157
  %v4159 = vpop.f32.mrf.mxu0
  %4160 = vmatprep.mubr.bf16.mxu0 0
  %4161 = vmatmul.mubr.bf16.gmra.mxu0 %v4110
  %v4162 = vpop.f32.mrf.mxu0
  %v4163 = vadd.f32 0.0, %v4162
  %v4164 = vpop.f32.mrf.mxu0
  %v4165 = vpop.f32.mrf.mxu0
  %v4166 = vpop.f32.mrf.mxu0
  %4167 = vdwg.mxu0
  %v4168 = vsel %vm1286, %v3677, -inf
  %4169 = vmax.xlane.f32.xlu0 %v4168
  %v4170 = vpop.xlane.xlu0 %4169
  %v4171 = vsel %vm1286, %v3680, -inf
  %4172 = vmax.xlane.f32.xlu0 %v4171
  %v4173 = vpop.xlane.xlu0 %4172
  %v4174 = vsel %vm1286, %v3685, -inf
  %4175 = vmax.xlane.f32.xlu0 %v4174
  %v4176 = vpop.xlane.xlu0 %4175
  %v4177 = vsel %vm1286, %v3688, -inf
  %4178 = vmax.xlane.f32.xlu0 %v4177
  %v4179 = vpop.xlane.xlu0 %4178
  %v4180 = vsel %vm1299, %v3693, -inf
  %4181 = vmax.xlane.f32.xlu0 %v4180
  %v4182 = vpop.xlane.xlu0 %4181
  %v4183 = vsel %vm1286, %v3757, -inf
  %4184 = vmax.xlane.f32.xlu0 %v4183
  %v4185 = vpop.xlane.xlu0 %4184
  %v4186 = vsel %vm1286, %v3760, -inf
  %4187 = vmax.xlane.f32.xlu0 %v4186
  %v4188 = vpop.xlane.xlu0 %4187
  %v4189 = vsel %vm1286, %v3765, -inf
  %4190 = vmax.xlane.f32.xlu0 %v4189
  %v4191 = vpop.xlane.xlu0 %4190
  %v4192 = vsel %vm1286, %v3768, -inf
  %4193 = vmax.xlane.f32.xlu0 %v4192
  %v4194 = vpop.xlane.xlu0 %4193
  %v4195 = vsel %vm1299, %v3773, -inf
  %4196 = vmax.xlane.f32.xlu0 %v4195
  %v4197 = vpop.xlane.xlu0 %4196
  %v4198 = vsel %vm1286, %v3822, -inf
  %4199 = vmax.xlane.f32.xlu0 %v4198
  %v4200 = vpop.xlane.xlu0 %4199
  %v4201 = vsel %vm1286, %v3825, -inf
  %4202 = vmax.xlane.f32.xlu0 %v4201
  %v4203 = vpop.xlane.xlu0 %4202
  %v4204 = vsel %vm1286, %v3830, -inf
  %4205 = vmax.xlane.f32.xlu0 %v4204
  %v4206 = vpop.xlane.xlu0 %4205
  %v4207 = vsel %vm1286, %v3833, -inf
  %4208 = vmax.xlane.f32.xlu0 %v4207
  %v4209 = vpop.xlane.xlu0 %4208
  %v4210 = vsel %vm1299, %v3838, -inf
  %4211 = vmax.xlane.f32.xlu0 %v4210
  %v4212 = vpop.xlane.xlu0 %4211
  %v4213 = vsel %vm1286, %v3887, -inf
  %4214 = vmax.xlane.f32.xlu0 %v4213
  %v4215 = vpop.xlane.xlu0 %4214
  %v4216 = vsel %vm1286, %v3890, -inf
  %4217 = vmax.xlane.f32.xlu0 %v4216
  %v4218 = vpop.xlane.xlu0 %4217
  %v4219 = vsel %vm1286, %v3895, -inf
  %4220 = vmax.xlane.f32.xlu0 %v4219
  %v4221 = vpop.xlane.xlu0 %4220
  %v4222 = vsel %vm1286, %v3898, -inf
  %4223 = vmax.xlane.f32.xlu0 %v4222
  %v4224 = vpop.xlane.xlu0 %4223
  %v4225 = vsel %vm1299, %v3903, -inf
  %4226 = vmax.xlane.f32.xlu0 %v4225
  %v4227 = vpop.xlane.xlu0 %4226
  %v4228 = vsel %vm1286, %v3952, -inf
  %4229 = vmax.xlane.f32.xlu0 %v4228
  %v4230 = vpop.xlane.xlu0 %4229
  %v4231 = vsel %vm1286, %v3955, -inf
  %4232 = vmax.xlane.f32.xlu0 %v4231
  %v4233 = vpop.xlane.xlu0 %4232
  %v4234 = vsel %vm1286, %v3960, -inf
  %4235 = vmax.xlane.f32.xlu0 %v4234
  %v4236 = vpop.xlane.xlu0 %4235
  %v4237 = vsel %vm1286, %v3963, -inf
  %4238 = vmax.xlane.f32.xlu0 %v4237
  %v4239 = vpop.xlane.xlu0 %4238
  %v4240 = vsel %vm1299, %v3968, -inf
  %4241 = vmax.xlane.f32.xlu0 %v4240
  %v4242 = vpop.xlane.xlu0 %4241
  %v4243 = vsel %vm1286, %v4017, -inf
  %4244 = vmax.xlane.f32.xlu0 %v4243
  %v4245 = vpop.xlane.xlu0 %4244
  %v4246 = vsel %vm1286, %v4020, -inf
  %4247 = vmax.xlane.f32.xlu0 %v4246
  %v4248 = vpop.xlane.xlu0 %4247
  %v4249 = vsel %vm1286, %v4025, -inf
  %4250 = vmax.xlane.f32.xlu0 %v4249
  %v4251 = vpop.xlane.xlu0 %4250
  %v4252 = vsel %vm1286, %v4028, -inf
  %4253 = vmax.xlane.f32.xlu0 %v4252
  %v4254 = vpop.xlane.xlu0 %4253
  %v4255 = vsel %vm1299, %v4033, -inf
  %4256 = vmax.xlane.f32.xlu0 %v4255
  %v4257 = vpop.xlane.xlu0 %4256
  %v4258 = vsel %vm1286, %v4082, -inf
  %4259 = vmax.xlane.f32.xlu0 %v4258
  %v4260 = vpop.xlane.xlu0 %4259
  %v4261 = vsel %vm1286, %v4085, -inf
  %4262 = vmax.xlane.f32.xlu0 %v4261
  %v4263 = vpop.xlane.xlu0 %4262
  %v4264 = vsel %vm1286, %v4090, -inf
  %4265 = vmax.xlane.f32.xlu0 %v4264
  %v4266 = vpop.xlane.xlu0 %4265
  %v4267 = vsel %vm1286, %v4093, -inf
  %4268 = vmax.xlane.f32.xlu0 %v4267
  %v4269 = vpop.xlane.xlu0 %4268
  %v4270 = vsel %vm1299, %v4098, -inf
  %4271 = vmax.xlane.f32.xlu0 %v4270
  %v4272 = vpop.xlane.xlu0 %4271
  %v4273 = vsel %vm1286, %v4147, -inf
  %4274 = vmax.xlane.f32.xlu0 %v4273
  %v4275 = vpop.xlane.xlu0 %4274
  %v4276 = vsel %vm1286, %v4150, -inf
  %4277 = vmax.xlane.f32.xlu0 %v4276
  %v4278 = vpop.xlane.xlu0 %4277
  %v4279 = vsel %vm1286, %v4155, -inf
  %4280 = vmax.xlane.f32.xlu0 %v4279
  %v4281 = vpop.xlane.xlu0 %4280
  %v4282 = vsel %vm1286, %v4158, -inf
  %4283 = vmax.xlane.f32.xlu0 %v4282
  %v4284 = vpop.xlane.xlu0 %4283
  %v4285 = vsel %vm1299, %v4163, -inf
  %4286 = vmax.xlane.f32.xlu0 %v4285
  %v4287 = vpop.xlane.xlu0 %4286
  %v4288 = vsub.f32 %v3677, %v4170
  %v4289 = vsub.f32 %v3680, %v4173
  %v4290 = vsub.f32 %v3685, %v4176
  %v4291 = vsub.f32 %v3688, %v4179
  %v4292 = vsub.f32 %v3693, %v4182
  %v4293 = vsub.f32 %v3757, %v4185
  %v4294 = vsub.f32 %v3760, %v4188
  %v4295 = vsub.f32 %v3765, %v4191
  %v4296 = vsub.f32 %v3768, %v4194
  %v4297 = vsub.f32 %v3773, %v4197
  %v4298 = vsub.f32 %v3822, %v4200
  %v4299 = vsub.f32 %v3825, %v4203
  %v4300 = vsub.f32 %v3830, %v4206
  %v4301 = vsub.f32 %v3833, %v4209
  %v4302 = vsub.f32 %v3838, %v4212
  %v4303 = vsub.f32 %v3887, %v4215
  %v4304 = vsub.f32 %v3890, %v4218
  %v4305 = vsub.f32 %v3895, %v4221
  %v4306 = vsub.f32 %v3898, %v4224
  %v4307 = vsub.f32 %v3903, %v4227
  %v4308 = vsub.f32 %v3952, %v4230
  %v4309 = vsub.f32 %v3955, %v4233
  %v4310 = vsub.f32 %v3960, %v4236
  %v4311 = vsub.f32 %v3963, %v4239
  %v4312 = vsub.f32 %v3968, %v4242
  %v4313 = vsub.f32 %v4017, %v4245
  %v4314 = vsub.f32 %v4020, %v4248
  %v4315 = vsub.f32 %v4025, %v4251
  %v4316 = vsub.f32 %v4028, %v4254
  %v4317 = vsub.f32 %v4033, %v4257
  %v4318 = vsub.f32 %v4082, %v4260
  %v4319 = vsub.f32 %v4085, %v4263
  %v4320 = vsub.f32 %v4090, %v4266
  %v4321 = vsub.f32 %v4093, %v4269
  %v4322 = vsub.f32 %v4098, %v4272
  %v4323 = vsub.f32 %v4147, %v4275
  %v4324 = vsub.f32 %v4150, %v4278
  %v4325 = vsub.f32 %v4155, %v4281
  %v4326 = vsub.f32 %v4158, %v4284
  %v4327 = vsub.f32 %v4163, %v4287
  %v4328 = vmul.f32 %v4288, 1.442695
  %v4329 = vpow.pop %v4328
  %v4330 = vmul.f32 %v4289, 1.442695
  %v4331 = vpow.pop %v4330
  %v4332 = vmul.f32 %v4290, 1.442695
  %v4333 = vpow.pop %v4332
  %v4334 = vmul.f32 %v4291, 1.442695
  %v4335 = vpow.pop %v4334
  %v4336 = vmul.f32 %v4292, 1.442695
  %v4337 = vpow.pop %v4336
  %v4338 = vmul.f32 %v4293, 1.442695
  %v4339 = vpow.pop %v4338
  %v4340 = vmul.f32 %v4294, 1.442695
  %v4341 = vpow.pop %v4340
  %v4342 = vmul.f32 %v4295, 1.442695
  %v4343 = vpow.pop %v4342
  %v4344 = vmul.f32 %v4296, 1.442695
  %v4345 = vpow.pop %v4344
  %v4346 = vmul.f32 %v4297, 1.442695
  %v4347 = vpow.pop %v4346
  %v4348 = vmul.f32 %v4298, 1.442695
  %v4349 = vpow.pop %v4348
  %v4350 = vmul.f32 %v4299, 1.442695
  %v4351 = vpow.pop %v4350
  %v4352 = vmul.f32 %v4300, 1.442695
  %v4353 = vpow.pop %v4352
  %v4354 = vmul.f32 %v4301, 1.442695
  %v4355 = vpow.pop %v4354
  %v4356 = vmul.f32 %v4302, 1.442695
  %v4357 = vpow.pop %v4356
  %v4358 = vmul.f32 %v4303, 1.442695
  %v4359 = vpow.pop %v4358
  %v4360 = vmul.f32 %v4304, 1.442695
  %v4361 = vpow.pop %v4360
  %v4362 = vmul.f32 %v4305, 1.442695
  %v4363 = vpow.pop %v4362
  %v4364 = vmul.f32 %v4306, 1.442695
  %v4365 = vpow.pop %v4364
  %v4366 = vmul.f32 %v4307, 1.442695
  %v4367 = vpow.pop %v4366
  %v4368 = vmul.f32 %v4308, 1.442695
  %v4369 = vpow.pop %v4368
  %v4370 = vmul.f32 %v4309, 1.442695
  %v4371 = vpow.pop %v4370
  %v4372 = vmul.f32 %v4310, 1.442695
  %v4373 = vpow.pop %v4372
  %v4374 = vmul.f32 %v4311, 1.442695
  %v4375 = vpow.pop %v4374
  %v4376 = vmul.f32 %v4312, 1.442695
  %v4377 = vpow.pop %v4376
  %v4378 = vmul.f32 %v4313, 1.442695
  %v4379 = vpow.pop %v4378
  %v4380 = vmul.f32 %v4314, 1.442695
  %v4381 = vpow.pop %v4380
  %v4382 = vmul.f32 %v4315, 1.442695
  %v4383 = vpow.pop %v4382
  %v4384 = vmul.f32 %v4316, 1.442695
  %v4385 = vpow.pop %v4384
  %v4386 = vmul.f32 %v4317, 1.442695
  %v4387 = vpow.pop %v4386
  %v4388 = vmul.f32 %v4318, 1.442695
  %v4389 = vpow.pop %v4388
  %v4390 = vmul.f32 %v4319, 1.442695
  %v4391 = vpow.pop %v4390
  %v4392 = vmul.f32 %v4320, 1.442695
  %v4393 = vpow.pop %v4392
  %v4394 = vmul.f32 %v4321, 1.442695
  %v4395 = vpow.pop %v4394
  %v4396 = vmul.f32 %v4322, 1.442695
  %v4397 = vpow.pop %v4396
  %v4398 = vmul.f32 %v4323, 1.442695
  %v4399 = vpow.pop %v4398
  %v4400 = vmul.f32 %v4324, 1.442695
  %v4401 = vpow.pop %v4400
  %v4402 = vmul.f32 %v4325, 1.442695
  %v4403 = vpow.pop %v4402
  %v4404 = vmul.f32 %v4326, 1.442695
  %v4405 = vpow.pop %v4404
  %v4406 = vmul.f32 %v4327, 1.442695
  %v4407 = vpow.pop %v4406
  %v4408 = vsel %vm1286, %v4329, 0.0
  %4409 = vadd.xlane.f32.xlu0 %v4408
  %v4410 = vpop.xlane.xlu0 %4409
  %v4411 = vsel %vm1286, %v4331, 0.0
  %4412 = vadd.xlane.f32.xlu0 %v4411
  %v4413 = vpop.xlane.xlu0 %4412
  %v4414 = vsel %vm1286, %v4333, 0.0
  %4415 = vadd.xlane.f32.xlu0 %v4414
  %v4416 = vpop.xlane.xlu0 %4415
  %v4417 = vsel %vm1286, %v4335, 0.0
  %4418 = vadd.xlane.f32.xlu0 %v4417
  %v4419 = vpop.xlane.xlu0 %4418
  %v4420 = vsel %vm1299, %v4337, 0.0
  %4421 = vadd.xlane.f32.xlu0 %v4420
  %v4422 = vpop.xlane.xlu0 %4421
  %v4423 = vsel %vm1286, %v4339, 0.0
  %4424 = vadd.xlane.f32.xlu0 %v4423
  %v4425 = vpop.xlane.xlu0 %4424
  %v4426 = vsel %vm1286, %v4341, 0.0
  %4427 = vadd.xlane.f32.xlu0 %v4426
  %v4428 = vpop.xlane.xlu0 %4427
  %v4429 = vsel %vm1286, %v4343, 0.0
  %4430 = vadd.xlane.f32.xlu0 %v4429
  %v4431 = vpop.xlane.xlu0 %4430
  %v4432 = vsel %vm1286, %v4345, 0.0
  %4433 = vadd.xlane.f32.xlu0 %v4432
  %v4434 = vpop.xlane.xlu0 %4433
  %v4435 = vsel %vm1299, %v4347, 0.0
  %4436 = vadd.xlane.f32.xlu0 %v4435
  %v4437 = vpop.xlane.xlu0 %4436
  %v4438 = vsel %vm1286, %v4349, 0.0
  %4439 = vadd.xlane.f32.xlu0 %v4438
  %v4440 = vpop.xlane.xlu0 %4439
  %v4441 = vsel %vm1286, %v4351, 0.0
  %4442 = vadd.xlane.f32.xlu0 %v4441
  %v4443 = vpop.xlane.xlu0 %4442
  %v4444 = vsel %vm1286, %v4353, 0.0
  %4445 = vadd.xlane.f32.xlu0 %v4444
  %v4446 = vpop.xlane.xlu0 %4445
  %v4447 = vsel %vm1286, %v4355, 0.0
  %4448 = vadd.xlane.f32.xlu0 %v4447
  %v4449 = vpop.xlane.xlu0 %4448
  %v4450 = vsel %vm1299, %v4357, 0.0
  %4451 = vadd.xlane.f32.xlu0 %v4450
  %v4452 = vpop.xlane.xlu0 %4451
  %v4453 = vsel %vm1286, %v4359, 0.0
  %4454 = vadd.xlane.f32.xlu0 %v4453
  %v4455 = vpop.xlane.xlu0 %4454
  %v4456 = vsel %vm1286, %v4361, 0.0
  %4457 = vadd.xlane.f32.xlu0 %v4456
  %v4458 = vpop.xlane.xlu0 %4457
  %v4459 = vsel %vm1286, %v4363, 0.0
  %4460 = vadd.xlane.f32.xlu0 %v4459
  %v4461 = vpop.xlane.xlu0 %4460
  %v4462 = vsel %vm1286, %v4365, 0.0
  %4463 = vadd.xlane.f32.xlu0 %v4462
  %v4464 = vpop.xlane.xlu0 %4463
  %v4465 = vsel %vm1299, %v4367, 0.0
  %4466 = vadd.xlane.f32.xlu0 %v4465
  %v4467 = vpop.xlane.xlu0 %4466
  %v4468 = vsel %vm1286, %v4369, 0.0
  %4469 = vadd.xlane.f32.xlu0 %v4468
  %v4470 = vpop.xlane.xlu0 %4469
  %v4471 = vsel %vm1286, %v4371, 0.0
  %4472 = vadd.xlane.f32.xlu0 %v4471
  %v4473 = vpop.xlane.xlu0 %4472
  %v4474 = vsel %vm1286, %v4373, 0.0
  %4475 = vadd.xlane.f32.xlu0 %v4474
  %v4476 = vpop.xlane.xlu0 %4475
  %v4477 = vsel %vm1286, %v4375, 0.0
  %4478 = vadd.xlane.f32.xlu0 %v4477
  %v4479 = vpop.xlane.xlu0 %4478
  %v4480 = vsel %vm1299, %v4377, 0.0
  %4481 = vadd.xlane.f32.xlu0 %v4480
  %v4482 = vpop.xlane.xlu0 %4481
  %v4483 = vsel %vm1286, %v4379, 0.0
  %4484 = vadd.xlane.f32.xlu0 %v4483
  %v4485 = vpop.xlane.xlu0 %4484
  %v4486 = vsel %vm1286, %v4381, 0.0
  %4487 = vadd.xlane.f32.xlu0 %v4486
  %v4488 = vpop.xlane.xlu0 %4487
  %v4489 = vsel %vm1286, %v4383, 0.0
  %4490 = vadd.xlane.f32.xlu0 %v4489
  %v4491 = vpop.xlane.xlu0 %4490
  %v4492 = vsel %vm1286, %v4385, 0.0
  %4493 = vadd.xlane.f32.xlu0 %v4492
  %v4494 = vpop.xlane.xlu0 %4493
  %v4495 = vsel %vm1299, %v4387, 0.0
  %4496 = vadd.xlane.f32.xlu0 %v4495
  %v4497 = vpop.xlane.xlu0 %4496
  %v4498 = vsel %vm1286, %v4389, 0.0
  %4499 = vadd.xlane.f32.xlu0 %v4498
  %v4500 = vpop.xlane.xlu0 %4499
  %v4501 = vsel %vm1286, %v4391, 0.0
  %4502 = vadd.xlane.f32.xlu0 %v4501
  %v4503 = vpop.xlane.xlu0 %4502
  %v4504 = vsel %vm1286, %v4393, 0.0
  %4505 = vadd.xlane.f32.xlu0 %v4504
  %v4506 = vpop.xlane.xlu0 %4505
  %v4507 = vsel %vm1286, %v4395, 0.0
  %4508 = vadd.xlane.f32.xlu0 %v4507
  %v4509 = vpop.xlane.xlu0 %4508
  %v4510 = vsel %vm1299, %v4397, 0.0
  %4511 = vadd.xlane.f32.xlu0 %v4510
  %v4512 = vpop.xlane.xlu0 %4511
  %v4513 = vsel %vm1286, %v4399, 0.0
  %4514 = vadd.xlane.f32.xlu0 %v4513
  %v4515 = vpop.xlane.xlu0 %4514
  %v4516 = vsel %vm1286, %v4401, 0.0
  %4517 = vadd.xlane.f32.xlu0 %v4516
  %v4518 = vpop.xlane.xlu0 %4517
  %v4519 = vsel %vm1286, %v4403, 0.0
  %4520 = vadd.xlane.f32.xlu0 %v4519
  %v4521 = vpop.xlane.xlu0 %4520
  %v4522 = vsel %vm1286, %v4405, 0.0
  %4523 = vadd.xlane.f32.xlu0 %v4522
  %v4524 = vpop.xlane.xlu0 %4523
  %v4525 = vsel %vm1299, %v4407, 0.0
  %4526 = vadd.xlane.f32.xlu0 %v4525
  %v4527 = vpop.xlane.xlu0 %4526
  %v4528 = vrcp.pop %v4410
  %v4529 = vrcp.pop %v4413
  %v4530 = vrcp.pop %v4416
  %v4531 = vrcp.pop %v4419
  %v4532 = vrcp.pop %v4422
  %v4533 = vrcp.pop %v4425
  %v4534 = vrcp.pop %v4428
  %v4535 = vrcp.pop %v4431
  %v4536 = vrcp.pop %v4434
  %v4537 = vrcp.pop %v4437
  %v4538 = vrcp.pop %v4440
  %v4539 = vrcp.pop %v4443
  %v4540 = vrcp.pop %v4446
  %v4541 = vrcp.pop %v4449
  %v4542 = vrcp.pop %v4452
  %v4543 = vrcp.pop %v4455
  %v4544 = vrcp.pop %v4458
  %v4545 = vrcp.pop %v4461
  %v4546 = vrcp.pop %v4464
  %v4547 = vrcp.pop %v4467
  %v4548 = vrcp.pop %v4470
  %v4549 = vrcp.pop %v4473
  %v4550 = vrcp.pop %v4476
  %v4551 = vrcp.pop %v4479
  %v4552 = vrcp.pop %v4482
  %v4553 = vrcp.pop %v4485
  %v4554 = vrcp.pop %v4488
  %v4555 = vrcp.pop %v4491
  %v4556 = vrcp.pop %v4494
  %v4557 = vrcp.pop %v4497
  %v4558 = vrcp.pop %v4500
  %v4559 = vrcp.pop %v4503
  %v4560 = vrcp.pop %v4506
  %v4561 = vrcp.pop %v4509
  %v4562 = vrcp.pop %v4512
  %v4563 = vrcp.pop %v4515
  %v4564 = vrcp.pop %v4518
  %v4565 = vrcp.pop %v4521
  %v4566 = vrcp.pop %v4524
  %v4567 = vrcp.pop %v4527
  %v4568 = vmul.f32 %v4329, %v4528
  %v4569 = vmul.f32 %v4331, %v4529
  %v4570 = vmul.f32 %v4333, %v4530
  %v4571 = vmul.f32 %v4335, %v4531
  %v4572 = vmul.f32 %v4337, %v4532
  %v4573 = vmul.f32 %v4339, %v4533
  %v4574 = vmul.f32 %v4341, %v4534
  %v4575 = vmul.f32 %v4343, %v4535
  %v4576 = vmul.f32 %v4345, %v4536
  %v4577 = vmul.f32 %v4347, %v4537
  %v4578 = vmul.f32 %v4349, %v4538
  %v4579 = vmul.f32 %v4351, %v4539
  %v4580 = vmul.f32 %v4353, %v4540
  %v4581 = vmul.f32 %v4355, %v4541
  %v4582 = vmul.f32 %v4357, %v4542
  %v4583 = vmul.f32 %v4359, %v4543
  %v4584 = vmul.f32 %v4361, %v4544
  %v4585 = vmul.f32 %v4363, %v4545
  %v4586 = vmul.f32 %v4365, %v4546
  %v4587 = vmul.f32 %v4367, %v4547
  %v4588 = vmul.f32 %v4369, %v4548
  %v4589 = vmul.f32 %v4371, %v4549
  %v4590 = vmul.f32 %v4373, %v4550
  %v4591 = vmul.f32 %v4375, %v4551
  %v4592 = vmul.f32 %v4377, %v4552
  %v4593 = vmul.f32 %v4379, %v4553
  %v4594 = vmul.f32 %v4381, %v4554
  %v4595 = vmul.f32 %v4383, %v4555
  %v4596 = vmul.f32 %v4385, %v4556
  %v4597 = vmul.f32 %v4387, %v4557
  %v4598 = vmul.f32 %v4389, %v4558
  %v4599 = vmul.f32 %v4391, %v4559
  %v4600 = vmul.f32 %v4393, %v4560
  %v4601 = vmul.f32 %v4395, %v4561
  %v4602 = vmul.f32 %v4397, %v4562
  %v4603 = vmul.f32 %v4399, %v4563
  %v4604 = vmul.f32 %v4401, %v4564
  %v4605 = vmul.f32 %v4403, %v4565
  %v4606 = vmul.f32 %v4405, %v4566
  %v4607 = vmul.f32 %v4407, %v4567
  %v4608 = vpack.c.bf16 %v4569, %v4568
  %v4609 = vpack.c.bf16 %v4571, %v4570
  %v4610 = vpack.c.bf16 %v4572, %v4572
  %v4611 = vpack.c.bf16 %v4574, %v4573
  %v4612 = vpack.c.bf16 %v4576, %v4575
  %v4613 = vpack.c.bf16 %v4577, %v4577
  %v4614 = vpack.c.bf16 %v4579, %v4578
  %v4615 = vpack.c.bf16 %v4581, %v4580
  %v4616 = vpack.c.bf16 %v4582, %v4582
  %v4617 = vpack.c.bf16 %v4584, %v4583
  %v4618 = vpack.c.bf16 %v4586, %v4585
  %v4619 = vpack.c.bf16 %v4587, %v4587
  %v4620 = vpack.c.bf16 %v4589, %v4588
  %v4621 = vpack.c.bf16 %v4591, %v4590
  %v4622 = vpack.c.bf16 %v4592, %v4592
  %v4623 = vpack.c.bf16 %v4594, %v4593
  %v4624 = vpack.c.bf16 %v4596, %v4595
  %v4625 = vpack.c.bf16 %v4597, %v4597
  %v4626 = vpack.c.bf16 %v4599, %v4598
  %v4627 = vpack.c.bf16 %v4601, %v4600
  %v4628 = vpack.c.bf16 %v4602, %v4602
  %v4629 = vpack.c.bf16 %v4604, %v4603
  %v4630 = vpack.c.bf16 %v4606, %v4605
  %v4631 = vpack.c.bf16 %v4607, %v4607
  %4632 = vrot.lane.b32.xlu0 %v3452, 64
  %v4633 = vpop.permute.xlu0 %4632
  %4634 = vrot.lane.b32.xlu0 %v3453, 64
  %v4635 = vpop.permute.xlu0 %4634
  %4636 = vrot.lane.b32.xlu0 %v3454, 64
  %v4637 = vpop.permute.xlu0 %4636
  %v4641 = vsel %vm1286, %v4608, 0
  %v4644 = vsel %vm1286, %v4609, 0
  %v4647 = vsel %vm1286, %v4610, 0
  %v4650 = vand.u32 %v4637, %v172
  %4652 = vmatprep.subr.bf16.mxu0 0
  %4653 = vmatpush1.bf16.msra.mxu0 0
  %4654 = vmatprep.subr.bf16.mxu0 0
  %4655 = vmatpush1.bf16.msra.mxu0 0
  %4656 = vmatprep.subr.bf16.mxu0 0
  %4657 = vmatpush1.bf16.msra.mxu0 0
  %4658 = vmatprep.subr.bf16.mxu0 0
  %4659 = vmatpush1.bf16.msra.mxu0 0
  %4660 = vmatprep.subr.bf16.mxu0 0
  %4661 = vmatpush1.bf16.msra.mxu0 0
  %4662 = vmatprep.subr.bf16.mxu0 0
  %4663 = vmatpush1.bf16.msra.mxu0 %v4650
  %4664 = vmatprep.subr.bf16.mxu0 0
  %4665 = vmatpush1.bf16.msra.mxu0 %v4635
  %4666 = vmatprep.subr.bf16.mxu0 0
  %4667 = vmatpush1.bf16.msra.mxu0 %v4633
  %4668 = vmatprep.subr.bf16.mxu0 0
  %4669 = vmatpush2.bf16.msra.mxu0 0
  %4670 = vmatprep.subr.bf16.mxu0 0
  %4671 = vmatpush2.bf16.msra.mxu0 0
  %4672 = vmatprep.subr.bf16.mxu0 0
  %4673 = vmatpush2.bf16.msra.mxu0 0
  %4674 = vmatprep.subr.bf16.mxu0 0
  %4675 = vmatpush2.bf16.msra.mxu0 0
  %4676 = vmatprep.subr.bf16.mxu0 0
  %4677 = vmatpush2.bf16.msra.mxu0 0
  %4678 = vmatprep.subr.bf16.mxu0 0
  %4679 = vmatpush2.bf16.msra.mxu0 0
  %4680 = vmatprep.subr.bf16.mxu0 0
  %4681 = vmatpush2.bf16.msra.mxu0 0
  %4682 = vmatprep.subr.bf16.mxu0 0
  %4683 = vmatpush2.bf16.msra.mxu0 0
  %4684 = vmatprep.mubr.bf16.mxu0 0
  %4685 = vmatmul.mubr.bf16.gmra.mxu0 %v4641
  %v4686 = vpop.f32.mrf.mxu0
  %v4687 = vadd.f32 0.0, %v4686
  %v4688 = vpop.f32.mrf.mxu0
  %v4689 = vpop.f32.mrf.mxu0
  %v4690 = vadd.f32 0.0, %v4689
  %v4691 = vpop.f32.mrf.mxu0
  %4692 = vmatprep.mubr.bf16.mxu0 0
  %4693 = vmatmul.mubr.bf16.gmra.mxu0 %v4644
  %v4694 = vpop.f32.mrf.mxu0
  %v4695 = vadd.f32 0.0, %v4694
  %v4696 = vpop.f32.mrf.mxu0
  %v4697 = vpop.f32.mrf.mxu0
  %v4698 = vadd.f32 0.0, %v4697
  %v4699 = vpop.f32.mrf.mxu0
  %4700 = vmatprep.mubr.bf16.mxu0 0
  %4701 = vmatmul.mubr.bf16.gmra.mxu0 %v4647
  %v4702 = vpop.f32.mrf.mxu0
  %v4703 = vadd.f32 0.0, %v4702
  %v4704 = vpop.f32.mrf.mxu0
  %v4705 = vpop.f32.mrf.mxu0
  %v4706 = vpop.f32.mrf.mxu0
  %4707 = vdwg.mxu0
  %4708 = vrot.lane.b32.xlu0 %v3604, 64
  %v4709 = vpop.permute.xlu0 %4708
  %4710 = vrot.lane.b32.xlu0 %v3612, 64
  %v4711 = vpop.permute.xlu0 %4710
  %4712 = vrot.lane.b32.xlu0 %v3613, 64
  %v4713 = vpop.permute.xlu0 %4712
  %v4717 = vsel %vm1286, %v4611, 0
  %v4720 = vsel %vm1286, %v4612, 0
  %v4723 = vsel %vm1286, %v4613, 0
  %v4726 = vand.u32 %v4713, %v172
  %4728 = vmatprep.subr.bf16.mxu0 0
  %4729 = vmatpush1.bf16.msra.mxu0 0
  %4730 = vmatprep.subr.bf16.mxu0 0
  %4731 = vmatpush1.bf16.msra.mxu0 0
  %4732 = vmatprep.subr.bf16.mxu0 0
  %4733 = vmatpush1.bf16.msra.mxu0 0
  %4734 = vmatprep.subr.bf16.mxu0 0
  %4735 = vmatpush1.bf16.msra.mxu0 0
  %4736 = vmatprep.subr.bf16.mxu0 0
  %4737 = vmatpush1.bf16.msra.mxu0 0
  %4738 = vmatprep.subr.bf16.mxu0 0
  %4739 = vmatpush1.bf16.msra.mxu0 %v4726
  %4740 = vmatprep.subr.bf16.mxu0 0
  %4741 = vmatpush1.bf16.msra.mxu0 %v4711
  %4742 = vmatprep.subr.bf16.mxu0 0
  %4743 = vmatpush1.bf16.msra.mxu0 %v4709
  %4744 = vmatprep.subr.bf16.mxu0 0
  %4745 = vmatpush2.bf16.msra.mxu0 0
  %4746 = vmatprep.subr.bf16.mxu0 0
  %4747 = vmatpush2.bf16.msra.mxu0 0
  %4748 = vmatprep.subr.bf16.mxu0 0
  %4749 = vmatpush2.bf16.msra.mxu0 0
  %4750 = vmatprep.subr.bf16.mxu0 0
  %4751 = vmatpush2.bf16.msra.mxu0 0
  %4752 = vmatprep.subr.bf16.mxu0 0
  %4753 = vmatpush2.bf16.msra.mxu0 0
  %4754 = vmatprep.subr.bf16.mxu0 0
  %4755 = vmatpush2.bf16.msra.mxu0 0
  %4756 = vmatprep.subr.bf16.mxu0 0
  %4757 = vmatpush2.bf16.msra.mxu0 0
  %4758 = vmatprep.subr.bf16.mxu0 0
  %4759 = vmatpush2.bf16.msra.mxu0 0
  %4760 = vmatprep.mubr.bf16.mxu0 0
  %4761 = vmatmul.mubr.bf16.gmra.mxu0 %v4717
  %v4762 = vpop.f32.mrf.mxu0
  %v4763 = vadd.f32 0.0, %v4762
  %v4764 = vpop.f32.mrf.mxu0
  %v4765 = vpop.f32.mrf.mxu0
  %v4766 = vadd.f32 0.0, %v4765
  %v4767 = vpop.f32.mrf.mxu0
  %4768 = vmatprep.mubr.bf16.mxu0 0
  %4769 = vmatmul.mubr.bf16.gmra.mxu0 %v4720
  %v4770 = vpop.f32.mrf.mxu0
  %v4771 = vadd.f32 0.0, %v4770
  %v4772 = vpop.f32.mrf.mxu0
  %v4773 = vpop.f32.mrf.mxu0
  %v4774 = vadd.f32 0.0, %v4773
  %v4775 = vpop.f32.mrf.mxu0
  %4776 = vmatprep.mubr.bf16.mxu0 0
  %4777 = vmatmul.mubr.bf16.gmra.mxu0 %v4723
  %v4778 = vpop.f32.mrf.mxu0
  %v4779 = vadd.f32 0.0, %v4778
  %v4780 = vpop.f32.mrf.mxu0
  %v4781 = vpop.f32.mrf.mxu0
  %v4782 = vpop.f32.mrf.mxu0
  %4783 = vdwg.mxu0
  %v4785 = vsel %vm1286, %v4614, 0
  %v4788 = vsel %vm1286, %v4615, 0
  %v4791 = vsel %vm1286, %v4616, 0
  %4793 = vmatprep.subr.bf16.mxu0 0
  %4794 = vmatpush1.bf16.msra.mxu0 0
  %4795 = vmatprep.subr.bf16.mxu0 0
  %4796 = vmatpush1.bf16.msra.mxu0 0
  %4797 = vmatprep.subr.bf16.mxu0 0
  %4798 = vmatpush1.bf16.msra.mxu0 0
  %4799 = vmatprep.subr.bf16.mxu0 0
  %4800 = vmatpush1.bf16.msra.mxu0 0
  %4801 = vmatprep.subr.bf16.mxu0 0
  %4802 = vmatpush1.bf16.msra.mxu0 0
  %4803 = vmatprep.subr.bf16.mxu0 0
  %4804 = vmatpush1.bf16.msra.mxu0 %v4650
  %4805 = vmatprep.subr.bf16.mxu0 0
  %4806 = vmatpush1.bf16.msra.mxu0 %v4635
  %4807 = vmatprep.subr.bf16.mxu0 0
  %4808 = vmatpush1.bf16.msra.mxu0 %v4633
  %4809 = vmatprep.subr.bf16.mxu0 0
  %4810 = vmatpush2.bf16.msra.mxu0 0
  %4811 = vmatprep.subr.bf16.mxu0 0
  %4812 = vmatpush2.bf16.msra.mxu0 0
  %4813 = vmatprep.subr.bf16.mxu0 0
  %4814 = vmatpush2.bf16.msra.mxu0 0
  %4815 = vmatprep.subr.bf16.mxu0 0
  %4816 = vmatpush2.bf16.msra.mxu0 0
  %4817 = vmatprep.subr.bf16.mxu0 0
  %4818 = vmatpush2.bf16.msra.mxu0 0
  %4819 = vmatprep.subr.bf16.mxu0 0
  %4820 = vmatpush2.bf16.msra.mxu0 0
  %4821 = vmatprep.subr.bf16.mxu0 0
  %4822 = vmatpush2.bf16.msra.mxu0 0
  %4823 = vmatprep.subr.bf16.mxu0 0
  %4824 = vmatpush2.bf16.msra.mxu0 0
  %4825 = vmatprep.mubr.bf16.mxu0 0
  %4826 = vmatmul.mubr.bf16.gmra.mxu0 %v4785
  %v4827 = vpop.f32.mrf.mxu0
  %v4828 = vadd.f32 0.0, %v4827
  %v4829 = vpop.f32.mrf.mxu0
  %v4830 = vpop.f32.mrf.mxu0
  %v4831 = vadd.f32 0.0, %v4830
  %v4832 = vpop.f32.mrf.mxu0
  %4833 = vmatprep.mubr.bf16.mxu0 0
  %4834 = vmatmul.mubr.bf16.gmra.mxu0 %v4788
  %v4835 = vpop.f32.mrf.mxu0
  %v4836 = vadd.f32 0.0, %v4835
  %v4837 = vpop.f32.mrf.mxu0
  %v4838 = vpop.f32.mrf.mxu0
  %v4839 = vadd.f32 0.0, %v4838
  %v4840 = vpop.f32.mrf.mxu0
  %4841 = vmatprep.mubr.bf16.mxu0 0
  %4842 = vmatmul.mubr.bf16.gmra.mxu0 %v4791
  %v4843 = vpop.f32.mrf.mxu0
  %v4844 = vadd.f32 0.0, %v4843
  %v4845 = vpop.f32.mrf.mxu0
  %v4846 = vpop.f32.mrf.mxu0
  %v4847 = vpop.f32.mrf.mxu0
  %4848 = vdwg.mxu0
  %v4850 = vsel %vm1286, %v4617, 0
  %v4853 = vsel %vm1286, %v4618, 0
  %v4856 = vsel %vm1286, %v4619, 0
  %4858 = vmatprep.subr.bf16.mxu0 0
  %4859 = vmatpush1.bf16.msra.mxu0 0
  %4860 = vmatprep.subr.bf16.mxu0 0
  %4861 = vmatpush1.bf16.msra.mxu0 0
  %4862 = vmatprep.subr.bf16.mxu0 0
  %4863 = vmatpush1.bf16.msra.mxu0 0
  %4864 = vmatprep.subr.bf16.mxu0 0
  %4865 = vmatpush1.bf16.msra.mxu0 0
  %4866 = vmatprep.subr.bf16.mxu0 0
  %4867 = vmatpush1.bf16.msra.mxu0 0
  %4868 = vmatprep.subr.bf16.mxu0 0
  %4869 = vmatpush1.bf16.msra.mxu0 %v4726
  %4870 = vmatprep.subr.bf16.mxu0 0
  %4871 = vmatpush1.bf16.msra.mxu0 %v4711
  %4872 = vmatprep.subr.bf16.mxu0 0
  %4873 = vmatpush1.bf16.msra.mxu0 %v4709
  %4874 = vmatprep.subr.bf16.mxu0 0
  %4875 = vmatpush2.bf16.msra.mxu0 0
  %4876 = vmatprep.subr.bf16.mxu0 0
  %4877 = vmatpush2.bf16.msra.mxu0 0
  %4878 = vmatprep.subr.bf16.mxu0 0
  %4879 = vmatpush2.bf16.msra.mxu0 0
  %4880 = vmatprep.subr.bf16.mxu0 0
  %4881 = vmatpush2.bf16.msra.mxu0 0
  %4882 = vmatprep.subr.bf16.mxu0 0
  %4883 = vmatpush2.bf16.msra.mxu0 0
  %4884 = vmatprep.subr.bf16.mxu0 0
  %4885 = vmatpush2.bf16.msra.mxu0 0
  %4886 = vmatprep.subr.bf16.mxu0 0
  %4887 = vmatpush2.bf16.msra.mxu0 0
  %4888 = vmatprep.subr.bf16.mxu0 0
  %4889 = vmatpush2.bf16.msra.mxu0 0
  %4890 = vmatprep.mubr.bf16.mxu0 0
  %4891 = vmatmul.mubr.bf16.gmra.mxu0 %v4850
  %v4892 = vpop.f32.mrf.mxu0
  %v4893 = vadd.f32 0.0, %v4892
  %v4894 = vpop.f32.mrf.mxu0
  %v4895 = vpop.f32.mrf.mxu0
  %v4896 = vadd.f32 0.0, %v4895
  %v4897 = vpop.f32.mrf.mxu0
  %4898 = vmatprep.mubr.bf16.mxu0 0
  %4899 = vmatmul.mubr.bf16.gmra.mxu0 %v4853
  %v4900 = vpop.f32.mrf.mxu0
  %v4901 = vadd.f32 0.0, %v4900
  %v4902 = vpop.f32.mrf.mxu0
  %v4903 = vpop.f32.mrf.mxu0
  %v4904 = vadd.f32 0.0, %v4903
  %v4905 = vpop.f32.mrf.mxu0
  %4906 = vmatprep.mubr.bf16.mxu0 0
  %4907 = vmatmul.mubr.bf16.gmra.mxu0 %v4856
  %v4908 = vpop.f32.mrf.mxu0
  %v4909 = vadd.f32 0.0, %v4908
  %v4910 = vpop.f32.mrf.mxu0
  %v4911 = vpop.f32.mrf.mxu0
  %v4912 = vpop.f32.mrf.mxu0
  %4913 = vdwg.mxu0
  %v4915 = vsel %vm1286, %v4620, 0
  %v4918 = vsel %vm1286, %v4621, 0
  %v4921 = vsel %vm1286, %v4622, 0
  %4923 = vmatprep.subr.bf16.mxu0 0
  %4924 = vmatpush1.bf16.msra.mxu0 0
  %4925 = vmatprep.subr.bf16.mxu0 0
  %4926 = vmatpush1.bf16.msra.mxu0 0
  %4927 = vmatprep.subr.bf16.mxu0 0
  %4928 = vmatpush1.bf16.msra.mxu0 0
  %4929 = vmatprep.subr.bf16.mxu0 0
  %4930 = vmatpush1.bf16.msra.mxu0 0
  %4931 = vmatprep.subr.bf16.mxu0 0
  %4932 = vmatpush1.bf16.msra.mxu0 0
  %4933 = vmatprep.subr.bf16.mxu0 0
  %4934 = vmatpush1.bf16.msra.mxu0 %v4650
  %4935 = vmatprep.subr.bf16.mxu0 0
  %4936 = vmatpush1.bf16.msra.mxu0 %v4635
  %4937 = vmatprep.subr.bf16.mxu0 0
  %4938 = vmatpush1.bf16.msra.mxu0 %v4633
  %4939 = vmatprep.subr.bf16.mxu0 0
  %4940 = vmatpush2.bf16.msra.mxu0 0
  %4941 = vmatprep.subr.bf16.mxu0 0
  %4942 = vmatpush2.bf16.msra.mxu0 0
  %4943 = vmatprep.subr.bf16.mxu0 0
  %4944 = vmatpush2.bf16.msra.mxu0 0
  %4945 = vmatprep.subr.bf16.mxu0 0
  %4946 = vmatpush2.bf16.msra.mxu0 0
  %4947 = vmatprep.subr.bf16.mxu0 0
  %4948 = vmatpush2.bf16.msra.mxu0 0
  %4949 = vmatprep.subr.bf16.mxu0 0
  %4950 = vmatpush2.bf16.msra.mxu0 0
  %4951 = vmatprep.subr.bf16.mxu0 0
  %4952 = vmatpush2.bf16.msra.mxu0 0
  %4953 = vmatprep.subr.bf16.mxu0 0
  %4954 = vmatpush2.bf16.msra.mxu0 0
  %4955 = vmatprep.mubr.bf16.mxu0 0
  %4956 = vmatmul.mubr.bf16.gmra.mxu0 %v4915
  %v4957 = vpop.f32.mrf.mxu0
  %v4958 = vadd.f32 0.0, %v4957
  %v4959 = vpop.f32.mrf.mxu0
  %v4960 = vpop.f32.mrf.mxu0
  %v4961 = vadd.f32 0.0, %v4960
  %v4962 = vpop.f32.mrf.mxu0
  %4963 = vmatprep.mubr.bf16.mxu0 0
  %4964 = vmatmul.mubr.bf16.gmra.mxu0 %v4918
  %v4965 = vpop.f32.mrf.mxu0
  %v4966 = vadd.f32 0.0, %v4965
  %v4967 = vpop.f32.mrf.mxu0
  %v4968 = vpop.f32.mrf.mxu0
  %v4969 = vadd.f32 0.0, %v4968
  %v4970 = vpop.f32.mrf.mxu0
  %4971 = vmatprep.mubr.bf16.mxu0 0
  %4972 = vmatmul.mubr.bf16.gmra.mxu0 %v4921
  %v4973 = vpop.f32.mrf.mxu0
  %v4974 = vadd.f32 0.0, %v4973
  %v4975 = vpop.f32.mrf.mxu0
  %v4976 = vpop.f32.mrf.mxu0
  %v4977 = vpop.f32.mrf.mxu0
  %4978 = vdwg.mxu0
  %v4980 = vsel %vm1286, %v4623, 0
  %v4983 = vsel %vm1286, %v4624, 0
  %v4986 = vsel %vm1286, %v4625, 0
  %4988 = vmatprep.subr.bf16.mxu0 0
  %4989 = vmatpush1.bf16.msra.mxu0 0
  %4990 = vmatprep.subr.bf16.mxu0 0
  %4991 = vmatpush1.bf16.msra.mxu0 0
  %4992 = vmatprep.subr.bf16.mxu0 0
  %4993 = vmatpush1.bf16.msra.mxu0 0
  %4994 = vmatprep.subr.bf16.mxu0 0
  %4995 = vmatpush1.bf16.msra.mxu0 0
  %4996 = vmatprep.subr.bf16.mxu0 0
  %4997 = vmatpush1.bf16.msra.mxu0 0
  %4998 = vmatprep.subr.bf16.mxu0 0
  %4999 = vmatpush1.bf16.msra.mxu0 %v4726
  %5000 = vmatprep.subr.bf16.mxu0 0
  %5001 = vmatpush1.bf16.msra.mxu0 %v4711
  %5002 = vmatprep.subr.bf16.mxu0 0
  %5003 = vmatpush1.bf16.msra.mxu0 %v4709
  %5004 = vmatprep.subr.bf16.mxu0 0
  %5005 = vmatpush2.bf16.msra.mxu0 0
  %5006 = vmatprep.subr.bf16.mxu0 0
  %5007 = vmatpush2.bf16.msra.mxu0 0
  %5008 = vmatprep.subr.bf16.mxu0 0
  %5009 = vmatpush2.bf16.msra.mxu0 0
  %5010 = vmatprep.subr.bf16.mxu0 0
  %5011 = vmatpush2.bf16.msra.mxu0 0
  %5012 = vmatprep.subr.bf16.mxu0 0
  %5013 = vmatpush2.bf16.msra.mxu0 0
  %5014 = vmatprep.subr.bf16.mxu0 0
  %5015 = vmatpush2.bf16.msra.mxu0 0
  %5016 = vmatprep.subr.bf16.mxu0 0
  %5017 = vmatpush2.bf16.msra.mxu0 0
  %5018 = vmatprep.subr.bf16.mxu0 0
  %5019 = vmatpush2.bf16.msra.mxu0 0
  %5020 = vmatprep.mubr.bf16.mxu0 0
  %5021 = vmatmul.mubr.bf16.gmra.mxu0 %v4980
  %v5022 = vpop.f32.mrf.mxu0
  %v5023 = vadd.f32 0.0, %v5022
  %v5024 = vpop.f32.mrf.mxu0
  %v5025 = vpop.f32.mrf.mxu0
  %v5026 = vadd.f32 0.0, %v5025
  %v5027 = vpop.f32.mrf.mxu0
  %5028 = vmatprep.mubr.bf16.mxu0 0
  %5029 = vmatmul.mubr.bf16.gmra.mxu0 %v4983
  %v5030 = vpop.f32.mrf.mxu0
  %v5031 = vadd.f32 0.0, %v5030
  %v5032 = vpop.f32.mrf.mxu0
  %v5033 = vpop.f32.mrf.mxu0
  %v5034 = vadd.f32 0.0, %v5033
  %v5035 = vpop.f32.mrf.mxu0
  %5036 = vmatprep.mubr.bf16.mxu0 0
  %5037 = vmatmul.mubr.bf16.gmra.mxu0 %v4986
  %v5038 = vpop.f32.mrf.mxu0
  %v5039 = vadd.f32 0.0, %v5038
  %v5040 = vpop.f32.mrf.mxu0
  %v5041 = vpop.f32.mrf.mxu0
  %v5042 = vpop.f32.mrf.mxu0
  %5043 = vdwg.mxu0
  %v5045 = vsel %vm1286, %v4626, 0
  %v5048 = vsel %vm1286, %v4627, 0
  %v5051 = vsel %vm1286, %v4628, 0
  %5053 = vmatprep.subr.bf16.mxu0 0
  %5054 = vmatpush1.bf16.msra.mxu0 0
  %5055 = vmatprep.subr.bf16.mxu0 0
  %5056 = vmatpush1.bf16.msra.mxu0 0
  %5057 = vmatprep.subr.bf16.mxu0 0
  %5058 = vmatpush1.bf16.msra.mxu0 0
  %5059 = vmatprep.subr.bf16.mxu0 0
  %5060 = vmatpush1.bf16.msra.mxu0 0
  %5061 = vmatprep.subr.bf16.mxu0 0
  %5062 = vmatpush1.bf16.msra.mxu0 0
  %5063 = vmatprep.subr.bf16.mxu0 0
  %5064 = vmatpush1.bf16.msra.mxu0 %v4650
  %5065 = vmatprep.subr.bf16.mxu0 0
  %5066 = vmatpush1.bf16.msra.mxu0 %v4635
  %5067 = vmatprep.subr.bf16.mxu0 0
  %5068 = vmatpush1.bf16.msra.mxu0 %v4633
  %5069 = vmatprep.subr.bf16.mxu0 0
  %5070 = vmatpush2.bf16.msra.mxu0 0
  %5071 = vmatprep.subr.bf16.mxu0 0
  %5072 = vmatpush2.bf16.msra.mxu0 0
  %5073 = vmatprep.subr.bf16.mxu0 0
  %5074 = vmatpush2.bf16.msra.mxu0 0
  %5075 = vmatprep.subr.bf16.mxu0 0
  %5076 = vmatpush2.bf16.msra.mxu0 0
  %5077 = vmatprep.subr.bf16.mxu0 0
  %5078 = vmatpush2.bf16.msra.mxu0 0
  %5079 = vmatprep.subr.bf16.mxu0 0
  %5080 = vmatpush2.bf16.msra.mxu0 0
  %5081 = vmatprep.subr.bf16.mxu0 0
  %5082 = vmatpush2.bf16.msra.mxu0 0
  %5083 = vmatprep.subr.bf16.mxu0 0
  %5084 = vmatpush2.bf16.msra.mxu0 0
  %5085 = vmatprep.mubr.bf16.mxu0 0
  %5086 = vmatmul.mubr.bf16.gmra.mxu0 %v5045
  %v5087 = vpop.f32.mrf.mxu0
  %v5088 = vadd.f32 0.0, %v5087
  %v5089 = vpop.f32.mrf.mxu0
  %v5090 = vpop.f32.mrf.mxu0
  %v5091 = vadd.f32 0.0, %v5090
  %v5092 = vpop.f32.mrf.mxu0
  %5093 = vmatprep.mubr.bf16.mxu0 0
  %5094 = vmatmul.mubr.bf16.gmra.mxu0 %v5048
  %v5095 = vpop.f32.mrf.mxu0
  %v5096 = vadd.f32 0.0, %v5095
  %v5097 = vpop.f32.mrf.mxu0
  %v5098 = vpop.f32.mrf.mxu0
  %v5099 = vadd.f32 0.0, %v5098
  %v5100 = vpop.f32.mrf.mxu0
  %5101 = vmatprep.mubr.bf16.mxu0 0
  %5102 = vmatmul.mubr.bf16.gmra.mxu0 %v5051
  %v5103 = vpop.f32.mrf.mxu0
  %v5104 = vadd.f32 0.0, %v5103
  %v5105 = vpop.f32.mrf.mxu0
  %v5106 = vpop.f32.mrf.mxu0
  %v5107 = vpop.f32.mrf.mxu0
  %5108 = vdwg.mxu0
  %v5110 = vsel %vm1286, %v4629, 0
  %v5113 = vsel %vm1286, %v4630, 0
  %v5116 = vsel %vm1286, %v4631, 0
  %5118 = vmatprep.subr.bf16.mxu0 0
  %5119 = vmatpush1.bf16.msra.mxu0 0
  %5120 = vmatprep.subr.bf16.mxu0 0
  %5121 = vmatpush1.bf16.msra.mxu0 0
  %5122 = vmatprep.subr.bf16.mxu0 0
  %5123 = vmatpush1.bf16.msra.mxu0 0
  %5124 = vmatprep.subr.bf16.mxu0 0
  %5125 = vmatpush1.bf16.msra.mxu0 0
  %5126 = vmatprep.subr.bf16.mxu0 0
  %5127 = vmatpush1.bf16.msra.mxu0 0
  %5128 = vmatprep.subr.bf16.mxu0 0
  %5129 = vmatpush1.bf16.msra.mxu0 %v4726
  %5130 = vmatprep.subr.bf16.mxu0 0
  %5131 = vmatpush1.bf16.msra.mxu0 %v4711
  %5132 = vmatprep.subr.bf16.mxu0 0
  %5133 = vmatpush1.bf16.msra.mxu0 %v4709
  %5134 = vmatprep.subr.bf16.mxu0 0
  %5135 = vmatpush2.bf16.msra.mxu0 0
  %5136 = vmatprep.subr.bf16.mxu0 0
  %5137 = vmatpush2.bf16.msra.mxu0 0
  %5138 = vmatprep.subr.bf16.mxu0 0
  %5139 = vmatpush2.bf16.msra.mxu0 0
  %5140 = vmatprep.subr.bf16.mxu0 0
  %5141 = vmatpush2.bf16.msra.mxu0 0
  %5142 = vmatprep.subr.bf16.mxu0 0
  %5143 = vmatpush2.bf16.msra.mxu0 0
  %5144 = vmatprep.subr.bf16.mxu0 0
  %5145 = vmatpush2.bf16.msra.mxu0 0
  %5146 = vmatprep.subr.bf16.mxu0 0
  %5147 = vmatpush2.bf16.msra.mxu0 0
  %5148 = vmatprep.subr.bf16.mxu0 0
  %5149 = vmatpush2.bf16.msra.mxu0 0
  %5150 = vmatprep.mubr.bf16.mxu0 0
  %5151 = vmatmul.mubr.bf16.gmra.mxu0 %v5110
  %v5152 = vpop.f32.mrf.mxu0
  %v5153 = vadd.f32 0.0, %v5152
  %v5154 = vpop.f32.mrf.mxu0
  %v5155 = vpop.f32.mrf.mxu0
  %v5156 = vadd.f32 0.0, %v5155
  %v5157 = vpop.f32.mrf.mxu0
  %5158 = vmatprep.mubr.bf16.mxu0 0
  %5159 = vmatmul.mubr.bf16.gmra.mxu0 %v5113
  %v5160 = vpop.f32.mrf.mxu0
  %v5161 = vadd.f32 0.0, %v5160
  %v5162 = vpop.f32.mrf.mxu0
  %v5163 = vpop.f32.mrf.mxu0
  %v5164 = vadd.f32 0.0, %v5163
  %v5165 = vpop.f32.mrf.mxu0
  %5166 = vmatprep.mubr.bf16.mxu0 0
  %5167 = vmatmul.mubr.bf16.gmra.mxu0 %v5116
  %v5168 = vpop.f32.mrf.mxu0
  %v5169 = vadd.f32 0.0, %v5168
  %v5170 = vpop.f32.mrf.mxu0
  %v5171 = vpop.f32.mrf.mxu0
  %v5172 = vpop.f32.mrf.mxu0
  %5173 = vdwg.mxu0
  %v5174 = vmul.f32 %v4687, %v560
  %v5175 = vmul.f32 %v4690, %v560
  %v5176 = vmul.f32 %v4695, %v560
  %v5177 = vmul.f32 %v4698, %v560
  %v5178 = vmul.f32 %v4703, %v560
  %v5179 = vmul.f32 %v4828, %v573
  %v5180 = vmul.f32 %v4831, %v573
  %v5181 = vmul.f32 %v4836, %v573
  %v5182 = vmul.f32 %v4839, %v573
  %v5183 = vmul.f32 %v4844, %v573
  %v5184 = vadd.f32 %v5174, %v5179
  %v5185 = vadd.f32 %v5175, %v5180
  %v5186 = vadd.f32 %v5176, %v5181
  %v5187 = vadd.f32 %v5177, %v5182
  %v5188 = vadd.f32 %v5178, %v5183
  %v5189 = vmul.f32 %v4958, %v586
  %v5190 = vmul.f32 %v4961, %v586
  %v5191 = vmul.f32 %v4966, %v586
  %v5192 = vmul.f32 %v4969, %v586
  %v5193 = vmul.f32 %v4974, %v586
  %v5194 = vadd.f32 %v5184, %v5189
  %v5195 = vadd.f32 %v5185, %v5190
  %v5196 = vadd.f32 %v5186, %v5191
  %v5197 = vadd.f32 %v5187, %v5192
  %v5198 = vadd.f32 %v5188, %v5193
  %v5199 = vmul.f32 %v5088, %v599
  %v5200 = vmul.f32 %v5091, %v599
  %v5201 = vmul.f32 %v5096, %v599
  %v5202 = vmul.f32 %v5099, %v599
  %v5203 = vmul.f32 %v5104, %v599
  %v5204 = vadd.f32 %v5194, %v5199
  %v5205 = vadd.f32 %v5195, %v5200
  %v5206 = vadd.f32 %v5196, %v5201
  %v5207 = vadd.f32 %v5197, %v5202
  %v5208 = vadd.f32 %v5198, %v5203
  %v5209 = vmul.f32 %v4763, %v560
  %v5210 = vmul.f32 %v4766, %v560
  %v5211 = vmul.f32 %v4771, %v560
  %v5212 = vmul.f32 %v4774, %v560
  %v5213 = vmul.f32 %v4779, %v560
  %v5214 = vmul.f32 %v4893, %v573
  %v5215 = vmul.f32 %v4896, %v573
  %v5216 = vmul.f32 %v4901, %v573
  %v5217 = vmul.f32 %v4904, %v573
  %v5218 = vmul.f32 %v4909, %v573
  %v5219 = vadd.f32 %v5209, %v5214
  %v5220 = vadd.f32 %v5210, %v5215
  %v5221 = vadd.f32 %v5211, %v5216
  %v5222 = vadd.f32 %v5212, %v5217
  %v5223 = vadd.f32 %v5213, %v5218
  %v5224 = vmul.f32 %v5023, %v586
  %v5225 = vmul.f32 %v5026, %v586
  %v5226 = vmul.f32 %v5031, %v586
  %v5227 = vmul.f32 %v5034, %v586
  %v5228 = vmul.f32 %v5039, %v586
  %v5229 = vadd.f32 %v5219, %v5224
  %v5230 = vadd.f32 %v5220, %v5225
  %v5231 = vadd.f32 %v5221, %v5226
  %v5232 = vadd.f32 %v5222, %v5227
  %v5233 = vadd.f32 %v5223, %v5228
  %v5234 = vmul.f32 %v5153, %v599
  %v5235 = vmul.f32 %v5156, %v599
  %v5236 = vmul.f32 %v5161, %v599
  %v5237 = vmul.f32 %v5164, %v599
  %v5238 = vmul.f32 %v5169, %v599
  %v5239 = vadd.f32 %v5229, %v5234
  %v5240 = vadd.f32 %v5230, %v5235
  %v5241 = vadd.f32 %v5231, %v5236
  %v5242 = vadd.f32 %v5232, %v5237
  %v5243 = vadd.f32 %v5233, %v5238
  %v5249 = vrot.slane %v5239, 7
  %v5250 = vrot.slane %v5240, 7
  %v5251 = vsel %vm170, %v5249, %v5250
  %v5252 = vrot.slane %v5241, 7
  %v5253 = vsel %vm170, %v5250, %v5252
  %v5254 = vrot.slane %v5242, 7
  %v5255 = vsel %vm170, %v5252, %v5254
  %v5256 = vrot.slane %v5243, 7
  %v5257 = vsel %vm170, %v5254, %v5256
  %v5263 = vsel %vm170, %v5208, %v5249
  %v5264 = vpack.c.bf16 %v5205, %v5204
  %v5265 = vpack.c.bf16 %v5207, %v5206
  %v5266 = vpack.c.bf16 %v5251, %v5263
  %v5267 = vpack.c.bf16 %v5255, %v5253
  %v5268 = vpack.c.bf16 %v5257, %v5257
  %s5269 = scalar_lea.vmem %s9, 16
  %v5270 = vld [vmem:[%s5269] sm:$0xf]
  %v5271 = vld [vmem:[%s5269 + $0x4] sm:$0xf]
  %v5272 = vld [vmem:[%s5269 + $0x8] sm:$0xf]
  %v5273 = vld [vmem:[%s5269 + $0xc] sm:$0xf]
  %s5274 = scalar_lea.vmem %s10, 1
  %v5275 = vld [vmem:[%s5274] sm:$0x1]
  %v5277 = vlaneseq
  %v5278 = vshrl.u32 %v5277, 7
  %v5279 = vsub.s32 0, %v5278
  %v5280 = vrot.slane %v5275, %v5279
  %v5286 = vunpack.c.l.b16 %v5270
  %v5287 = vunpack.c.l.b16 %v5271
  %v5288 = vunpack.c.l.b16 %v5272
  %v5289 = vunpack.c.l.b16 %v5273
  %v5290 = vpack.c.b16 %v5287, %v5286
  %v5291 = vpack.c.b16 %v5289, %v5288
  %v5295 = vsel %vm269, %v5264, 0
  %v5298 = vsel %vm269, %v5265, 0
  %v5301 = vsel %vm269, %v5266, 0
  %v5304 = vsel %vm269, %v5267, 0
  %v5307 = vsel %vm269, %v5268, 0
  %5309 = vmatprep.subr.bf16.mxu0 0
  %5310 = vmatpush1.bf16.msra.mxu0 0
  %5311 = vmatprep.subr.bf16.mxu0 0
  %5312 = vmatpush1.bf16.msra.mxu0 0
  %5313 = vmatprep.subr.bf16.mxu0 0
  %5314 = vmatpush1.bf16.msra.mxu0 0
  %5315 = vmatprep.subr.bf16.mxu0 0
  %5316 = vmatpush1.bf16.msra.mxu0 0
  %5317 = vmatprep.subr.bf16.mxu0 0
  %5318 = vmatpush1.bf16.msra.mxu0 0
  %5319 = vmatprep.subr.bf16.mxu0 0
  %5320 = vmatpush1.bf16.msra.mxu0 0
  %5321 = vmatprep.subr.bf16.mxu0 0
  %5322 = vmatpush1.bf16.msra.mxu0 %v5291
  %5323 = vmatprep.subr.bf16.mxu0 0
  %5324 = vmatpush1.bf16.msra.mxu0 %v5290
  %5325 = vmatprep.subr.bf16.mxu0 0
  %5326 = vmatpush2.bf16.msra.mxu0 0
  %5327 = vmatprep.subr.bf16.mxu0 0
  %5328 = vmatpush2.bf16.msra.mxu0 0
  %5329 = vmatprep.subr.bf16.mxu0 0
  %5330 = vmatpush2.bf16.msra.mxu0 0
  %5331 = vmatprep.subr.bf16.mxu0 0
  %5332 = vmatpush2.bf16.msra.mxu0 0
  %5333 = vmatprep.subr.bf16.mxu0 0
  %5334 = vmatpush2.bf16.msra.mxu0 0
  %5335 = vmatprep.subr.bf16.mxu0 0
  %5336 = vmatpush2.bf16.msra.mxu0 0
  %5337 = vmatprep.subr.bf16.mxu0 0
  %5338 = vmatpush2.bf16.msra.mxu0 0
  %5339 = vmatprep.subr.bf16.mxu0 0
  %5340 = vmatpush2.bf16.msra.mxu0 0
  %5341 = vmatprep.mubr.bf16.mxu0 0
  %5342 = vmatmul.mubr.bf16.gmra.mxu0 %v5295
  %v5343 = vpop.f32.mrf.mxu0
  %v5344 = vadd.f32 %v5280, %v5343
  %v5345 = vpop.f32.mrf.mxu0
  %v5346 = vpop.f32.mrf.mxu0
  %v5347 = vadd.f32 %v5280, %v5346
  %v5348 = vpop.f32.mrf.mxu0
  %5349 = vmatprep.mubr.bf16.mxu0 0
  %5350 = vmatmul.mubr.bf16.gmra.mxu0 %v5298
  %v5351 = vpop.f32.mrf.mxu0
  %v5352 = vadd.f32 %v5280, %v5351
  %v5353 = vpop.f32.mrf.mxu0
  %v5354 = vpop.f32.mrf.mxu0
  %v5355 = vadd.f32 %v5280, %v5354
  %v5356 = vpop.f32.mrf.mxu0
  %5357 = vmatprep.mubr.bf16.mxu0 0
  %5358 = vmatmul.mubr.bf16.gmra.mxu0 %v5301
  %v5359 = vpop.f32.mrf.mxu0
  %v5360 = vadd.f32 %v5280, %v5359
  %v5361 = vpop.f32.mrf.mxu0
  %v5362 = vpop.f32.mrf.mxu0
  %v5363 = vadd.f32 %v5280, %v5362
  %v5364 = vpop.f32.mrf.mxu0
  %5365 = vmatprep.mubr.bf16.mxu0 0
  %5366 = vmatmul.mubr.bf16.gmra.mxu0 %v5304
  %v5367 = vpop.f32.mrf.mxu0
  %v5368 = vadd.f32 %v5280, %v5367
  %v5369 = vpop.f32.mrf.mxu0
  %v5370 = vpop.f32.mrf.mxu0
  %v5371 = vadd.f32 %v5280, %v5370
  %v5372 = vpop.f32.mrf.mxu0
  %5373 = vmatprep.mubr.bf16.mxu0 0
  %5374 = vmatmul.mubr.bf16.gmra.mxu0 %v5307
  %v5375 = vpop.f32.mrf.mxu0
  %v5376 = vadd.f32 %v5280, %v5375
  %v5377 = vpop.f32.mrf.mxu0
  %v5378 = vpop.f32.mrf.mxu0
  %v5379 = vpop.f32.mrf.mxu0
  %5380 = vdwg.mxu0
  %v5381 = vadd.f32 %v3157, %v5344
  %v5382 = vadd.f32 %v3158, %v5347
  %v5383 = vadd.f32 %v3159, %v5352
  %v5384 = vadd.f32 %v3160, %v5355
  %v5385 = vadd.f32 %v3161, %v5360
  %v5386 = vadd.f32 %v3162, %v5363
  %v5387 = vadd.f32 %v3163, %v5368
  %v5388 = vadd.f32 %v3164, %v5371
  %v5389 = vadd.f32 %v3165, %v5376
  %s5390 = scalar_lea.vmem %s11, 1
  %v5391 = vld [vmem:[%s5390] sm:$0x1]
  %s5392 = scalar_lea.vmem %s12, 1
  %v5393 = vld [vmem:[%s5392] sm:$0x1]
  %v5394 = vsel %vm269, %v5381, 0.0
  %5395 = vadd.xlane.f32.xlu0 %v5394
  %v5396 = vpop.xlane.xlu0 %5395
  %v5397 = vsel %vm269, %v5382, 0.0
  %5398 = vadd.xlane.f32.xlu0 %v5397
  %v5399 = vpop.xlane.xlu0 %5398
  %v5400 = vsel %vm269, %v5383, 0.0
  %5401 = vadd.xlane.f32.xlu0 %v5400
  %v5402 = vpop.xlane.xlu0 %5401
  %v5403 = vsel %vm269, %v5384, 0.0
  %5404 = vadd.xlane.f32.xlu0 %v5403
  %v5405 = vpop.xlane.xlu0 %5404
  %v5406 = vsel %vm269, %v5385, 0.0
  %5407 = vadd.xlane.f32.xlu0 %v5406
  %v5408 = vpop.xlane.xlu0 %5407
  %v5409 = vsel %vm269, %v5386, 0.0
  %5410 = vadd.xlane.f32.xlu0 %v5409
  %v5411 = vpop.xlane.xlu0 %5410
  %v5412 = vsel %vm269, %v5387, 0.0
  %5413 = vadd.xlane.f32.xlu0 %v5412
  %v5414 = vpop.xlane.xlu0 %5413
  %v5415 = vsel %vm269, %v5388, 0.0
  %5416 = vadd.xlane.f32.xlu0 %v5415
  %v5417 = vpop.xlane.xlu0 %5416
  %v5418 = vsel %vm294, %v5389, 0.0
  %5419 = vadd.xlane.f32.xlu0 %v5418
  %v5420 = vpop.xlane.xlu0 %5419
  %v5421 = vmul.f32 %v5396, %v298
  %v5422 = vmul.f32 %v5399, %v298
  %v5423 = vmul.f32 %v5402, %v298
  %v5424 = vmul.f32 %v5405, %v298
  %v5425 = vmul.f32 %v5408, %v298
  %v5426 = vmul.f32 %v5411, %v298
  %v5427 = vmul.f32 %v5414, %v298
  %v5428 = vmul.f32 %v5417, %v298
  %v5429 = vmul.f32 %v5420, %v298
  %v5430 = vmul.f32 %v5381, %v5381
  %v5431 = vmul.f32 %v5382, %v5382
  %v5432 = vmul.f32 %v5383, %v5383
  %v5433 = vmul.f32 %v5384, %v5384
  %v5434 = vmul.f32 %v5385, %v5385
  %v5435 = vmul.f32 %v5386, %v5386
  %v5436 = vmul.f32 %v5387, %v5387
  %v5437 = vmul.f32 %v5388, %v5388
  %v5438 = vmul.f32 %v5389, %v5389
  %v5439 = vsel %vm269, %v5430, 0.0
  %5440 = vadd.xlane.f32.xlu0 %v5439
  %v5441 = vpop.xlane.xlu0 %5440
  %v5442 = vsel %vm269, %v5431, 0.0
  %5443 = vadd.xlane.f32.xlu0 %v5442
  %v5444 = vpop.xlane.xlu0 %5443
  %v5445 = vsel %vm269, %v5432, 0.0
  %5446 = vadd.xlane.f32.xlu0 %v5445
  %v5447 = vpop.xlane.xlu0 %5446
  %v5448 = vsel %vm269, %v5433, 0.0
  %5449 = vadd.xlane.f32.xlu0 %v5448
  %v5450 = vpop.xlane.xlu0 %5449
  %v5451 = vsel %vm269, %v5434, 0.0
  %5452 = vadd.xlane.f32.xlu0 %v5451
  %v5453 = vpop.xlane.xlu0 %5452
  %v5454 = vsel %vm269, %v5435, 0.0
  %5455 = vadd.xlane.f32.xlu0 %v5454
  %v5456 = vpop.xlane.xlu0 %5455
  %v5457 = vsel %vm269, %v5436, 0.0
  %5458 = vadd.xlane.f32.xlu0 %v5457
  %v5459 = vpop.xlane.xlu0 %5458
  %v5460 = vsel %vm269, %v5437, 0.0
  %5461 = vadd.xlane.f32.xlu0 %v5460
  %v5462 = vpop.xlane.xlu0 %5461
  %v5463 = vsel %vm294, %v5438, 0.0
  %5464 = vadd.xlane.f32.xlu0 %v5463
  %v5465 = vpop.xlane.xlu0 %5464
  %v5466 = vmul.f32 %v5441, %v298
  %v5467 = vmul.f32 %v5444, %v298
  %v5468 = vmul.f32 %v5447, %v298
  %v5469 = vmul.f32 %v5450, %v298
  %v5470 = vmul.f32 %v5453, %v298
  %v5471 = vmul.f32 %v5456, %v298
  %v5472 = vmul.f32 %v5459, %v298
  %v5473 = vmul.f32 %v5462, %v298
  %v5474 = vmul.f32 %v5465, %v298
  %v5475 = vmul.f32 %v5421, %v5421
  %v5476 = vmul.f32 %v5422, %v5422
  %v5477 = vmul.f32 %v5423, %v5423
  %v5478 = vmul.f32 %v5424, %v5424
  %v5479 = vmul.f32 %v5425, %v5425
  %v5480 = vmul.f32 %v5426, %v5426
  %v5481 = vmul.f32 %v5427, %v5427
  %v5482 = vmul.f32 %v5428, %v5428
  %v5483 = vmul.f32 %v5429, %v5429
  %v5484 = vsub.f32 %v5466, %v5475
  %v5485 = vsub.f32 %v5467, %v5476
  %v5486 = vsub.f32 %v5468, %v5477
  %v5487 = vsub.f32 %v5469, %v5478
  %v5488 = vsub.f32 %v5470, %v5479
  %v5489 = vsub.f32 %v5471, %v5480
  %v5490 = vsub.f32 %v5472, %v5481
  %v5491 = vsub.f32 %v5473, %v5482
  %v5492 = vsub.f32 %v5474, %v5483
  %v5493 = vsub.f32 %v5381, %v5421
  %v5494 = vsub.f32 %v5382, %v5422
  %v5495 = vsub.f32 %v5383, %v5423
  %v5496 = vsub.f32 %v5384, %v5424
  %v5497 = vsub.f32 %v5385, %v5425
  %v5498 = vsub.f32 %v5386, %v5426
  %v5499 = vsub.f32 %v5387, %v5427
  %v5500 = vsub.f32 %v5388, %v5428
  %v5501 = vsub.f32 %v5389, %v5429
  %v5502 = vadd.f32 %v5484, 1e-06
  %v5503 = vadd.f32 %v5485, 1e-06
  %v5504 = vadd.f32 %v5486, 1e-06
  %v5505 = vadd.f32 %v5487, 1e-06
  %v5506 = vadd.f32 %v5488, 1e-06
  %v5507 = vadd.f32 %v5489, 1e-06
  %v5508 = vadd.f32 %v5490, 1e-06
  %v5509 = vadd.f32 %v5491, 1e-06
  %v5510 = vadd.f32 %v5492, 1e-06
  %v5511 = vrsqrt.pop %v5502
  %v5512 = vrsqrt.pop %v5503
  %v5513 = vrsqrt.pop %v5504
  %v5514 = vrsqrt.pop %v5505
  %v5515 = vrsqrt.pop %v5506
  %v5516 = vrsqrt.pop %v5507
  %v5517 = vrsqrt.pop %v5508
  %v5518 = vrsqrt.pop %v5509
  %v5519 = vrsqrt.pop %v5510
  %v5520 = vmul.f32 %v5493, %v5511
  %v5521 = vmul.f32 %v5494, %v5512
  %v5522 = vmul.f32 %v5495, %v5513
  %v5523 = vmul.f32 %v5496, %v5514
  %v5524 = vmul.f32 %v5497, %v5515
  %v5525 = vmul.f32 %v5498, %v5516
  %v5526 = vmul.f32 %v5499, %v5517
  %v5527 = vmul.f32 %v5500, %v5518
  %v5528 = vmul.f32 %v5501, %v5519
  %v5530 = vlaneseq
  %v5531 = vshrl.u32 %v5530, 7
  %v5532 = vsub.s32 0, %v5531
  %v5533 = vrot.slane %v5391, %v5532
  %v5535 = vmul.f32 %v5520, %v5533
  %v5536 = vmul.f32 %v5521, %v5533
  %v5537 = vmul.f32 %v5522, %v5533
  %v5538 = vmul.f32 %v5523, %v5533
  %v5539 = vmul.f32 %v5524, %v5533
  %v5540 = vmul.f32 %v5525, %v5533
  %v5541 = vmul.f32 %v5526, %v5533
  %v5542 = vmul.f32 %v5527, %v5533
  %v5543 = vmul.f32 %v5528, %v5533
  %v5545 = vlaneseq
  %v5546 = vshrl.u32 %v5545, 7
  %v5547 = vsub.s32 0, %v5546
  %v5548 = vrot.slane %v5393, %v5547
  %v5550 = vadd.f32 %v5535, %v5548
  %v5551 = vadd.f32 %v5536, %v5548
  %v5552 = vadd.f32 %v5537, %v5548
  %v5553 = vadd.f32 %v5538, %v5548
  %v5554 = vadd.f32 %v5539, %v5548
  %v5555 = vadd.f32 %v5540, %v5548
  %v5556 = vadd.f32 %v5541, %v5548
  %v5557 = vadd.f32 %v5542, %v5548
  %v5558 = vadd.f32 %v5543, %v5548
  %v5559 = vpack.c.bf16 %v5551, %v5550
  %v5560 = vpack.c.bf16 %v5553, %v5552
  %v5561 = vpack.c.bf16 %v5555, %v5554
  %v5562 = vpack.c.bf16 %v5557, %v5556
  %v5563 = vpack.c.bf16 %v5558, %v5558
  %s5564 = scalar_lea.vmem %s13, 16
  %v5565 = vld [vmem:[%s5564] sm:$0xf]
  %v5566 = vld [vmem:[%s5564 + $0x4] sm:$0xf]
  %v5567 = vld [vmem:[%s5564 + $0x8] sm:$0xf]
  %v5568 = vld [vmem:[%s5564 + $0xc] sm:$0xf]
  %s5569 = scalar_lea.vmem %s14, 1
  %v5570 = vld [vmem:[%s5569] sm:$0x1]
  %v5572 = vlaneseq
  %v5573 = vshrl.u32 %v5572, 7
  %v5574 = vsub.s32 0, %v5573
  %v5575 = vrot.slane %v5570, %v5574
  %v5581 = vunpack.c.l.b16 %v5565
  %v5582 = vunpack.c.l.b16 %v5566
  %v5583 = vunpack.c.l.b16 %v5567
  %v5584 = vunpack.c.l.b16 %v5568
  %v5585 = vpack.c.b16 %v5582, %v5581
  %v5586 = vpack.c.b16 %v5584, %v5583
  %v5590 = vsel %vm269, %v5559, 0
  %v5593 = vsel %vm269, %v5560, 0
  %v5596 = vsel %vm269, %v5561, 0
  %v5599 = vsel %vm269, %v5562, 0
  %v5602 = vsel %vm269, %v5563, 0
  %5604 = vmatprep.subr.bf16.mxu0 0
  %5605 = vmatpush1.bf16.msra.mxu0 0
  %5606 = vmatprep.subr.bf16.mxu0 0
  %5607 = vmatpush1.bf16.msra.mxu0 0
  %5608 = vmatprep.subr.bf16.mxu0 0
  %5609 = vmatpush1.bf16.msra.mxu0 0
  %5610 = vmatprep.subr.bf16.mxu0 0
  %5611 = vmatpush1.bf16.msra.mxu0 0
  %5612 = vmatprep.subr.bf16.mxu0 0
  %5613 = vmatpush1.bf16.msra.mxu0 0
  %5614 = vmatprep.subr.bf16.mxu0 0
  %5615 = vmatpush1.bf16.msra.mxu0 0
  %5616 = vmatprep.subr.bf16.mxu0 0
  %5617 = vmatpush1.bf16.msra.mxu0 %v5586
  %5618 = vmatprep.subr.bf16.mxu0 0
  %5619 = vmatpush1.bf16.msra.mxu0 %v5585
  %5620 = vmatprep.subr.bf16.mxu0 0
  %5621 = vmatpush2.bf16.msra.mxu0 0
  %5622 = vmatprep.subr.bf16.mxu0 0
  %5623 = vmatpush2.bf16.msra.mxu0 0
  %5624 = vmatprep.subr.bf16.mxu0 0
  %5625 = vmatpush2.bf16.msra.mxu0 0
  %5626 = vmatprep.subr.bf16.mxu0 0
  %5627 = vmatpush2.bf16.msra.mxu0 0
  %5628 = vmatprep.subr.bf16.mxu0 0
  %5629 = vmatpush2.bf16.msra.mxu0 0
  %5630 = vmatprep.subr.bf16.mxu0 0
  %5631 = vmatpush2.bf16.msra.mxu0 0
  %5632 = vmatprep.subr.bf16.mxu0 0
  %5633 = vmatpush2.bf16.msra.mxu0 0
  %5634 = vmatprep.subr.bf16.mxu0 0
  %5635 = vmatpush2.bf16.msra.mxu0 0
  %5636 = vmatprep.mubr.bf16.mxu0 0
  %5637 = vmatmul.mubr.bf16.gmra.mxu0 %v5590
  %v5638 = vpop.f32.mrf.mxu0
  %v5639 = vadd.f32 %v5575, %v5638
  %v5640 = vpop.f32.mrf.mxu0
  %v5641 = vpop.f32.mrf.mxu0
  %v5642 = vadd.f32 %v5575, %v5641
  %v5643 = vpop.f32.mrf.mxu0
  %5644 = vmatprep.mubr.bf16.mxu0 0
  %5645 = vmatmul.mubr.bf16.gmra.mxu0 %v5593
  %v5646 = vpop.f32.mrf.mxu0
  %v5647 = vadd.f32 %v5575, %v5646
  %v5648 = vpop.f32.mrf.mxu0
  %v5649 = vpop.f32.mrf.mxu0
  %v5650 = vadd.f32 %v5575, %v5649
  %v5651 = vpop.f32.mrf.mxu0
  %5652 = vmatprep.mubr.bf16.mxu0 0
  %5653 = vmatmul.mubr.bf16.gmra.mxu0 %v5596
  %v5654 = vpop.f32.mrf.mxu0
  %v5655 = vadd.f32 %v5575, %v5654
  %v5656 = vpop.f32.mrf.mxu0
  %v5657 = vpop.f32.mrf.mxu0
  %v5658 = vadd.f32 %v5575, %v5657
  %v5659 = vpop.f32.mrf.mxu0
  %5660 = vmatprep.mubr.bf16.mxu0 0
  %5661 = vmatmul.mubr.bf16.gmra.mxu0 %v5599
  %v5662 = vpop.f32.mrf.mxu0
  %v5663 = vadd.f32 %v5575, %v5662
  %v5664 = vpop.f32.mrf.mxu0
  %v5665 = vpop.f32.mrf.mxu0
  %v5666 = vadd.f32 %v5575, %v5665
  %v5667 = vpop.f32.mrf.mxu0
  %5668 = vmatprep.mubr.bf16.mxu0 0
  %5669 = vmatmul.mubr.bf16.gmra.mxu0 %v5602
  %v5670 = vpop.f32.mrf.mxu0
  %v5671 = vadd.f32 %v5575, %v5670
  %v5672 = vpop.f32.mrf.mxu0
  %v5673 = vpop.f32.mrf.mxu0
  %v5674 = vpop.f32.mrf.mxu0
  %5675 = vdwg.mxu0
  %v5676 = vmul.f32 %v5639, 0.5
  %v5677 = vmul.f32 %v5642, 0.5
  %v5678 = vmul.f32 %v5647, 0.5
  %v5679 = vmul.f32 %v5650, 0.5
  %v5680 = vmul.f32 %v5655, 0.5
  %v5681 = vmul.f32 %v5658, 0.5
  %v5682 = vmul.f32 %v5663, 0.5
  %v5683 = vmul.f32 %v5666, 0.5
  %v5684 = vmul.f32 %v5671, 0.5
  %v5685 = vmul.f32 %v5639, %v2799
  %v5686 = vmul.f32 %v5642, %v2799
  %v5687 = vmul.f32 %v5647, %v2799
  %v5688 = vmul.f32 %v5650, %v2799
  %v5689 = vmul.f32 %v5655, %v2799
  %v5690 = vmul.f32 %v5658, %v2799
  %v5691 = vmul.f32 %v5663, %v2799
  %v5692 = vmul.f32 %v5666, %v2799
  %v5693 = vmul.f32 %v5671, %v2799
  %vm5694 = vcmp.lt.f32.partialorder %v5685, 0.0
  %vm5695 = vcmp.lt.f32.partialorder %v5686, 0.0
  %vm5696 = vcmp.lt.f32.partialorder %v5687, 0.0
  %vm5697 = vcmp.lt.f32.partialorder %v5688, 0.0
  %vm5698 = vcmp.lt.f32.partialorder %v5689, 0.0
  %vm5699 = vcmp.lt.f32.partialorder %v5690, 0.0
  %vm5700 = vcmp.lt.f32.partialorder %v5691, 0.0
  %vm5701 = vcmp.lt.f32.partialorder %v5692, 0.0
  %vm5702 = vcmp.lt.f32.partialorder %v5693, 0.0
  %v5703 = vsel %vm5694, -1.0, 1.0
  %v5704 = vsel %vm5695, -1.0, 1.0
  %v5705 = vsel %vm5696, -1.0, 1.0
  %v5706 = vsel %vm5697, -1.0, 1.0
  %v5707 = vsel %vm5698, -1.0, 1.0
  %v5708 = vsel %vm5699, -1.0, 1.0
  %v5709 = vsel %vm5700, -1.0, 1.0
  %v5710 = vsel %vm5701, -1.0, 1.0
  %v5711 = vsel %vm5702, -1.0, 1.0
  %v5712 = vand.u32 2147483647, %v5685
  %v5713 = vand.u32 2147483647, %v5686
  %v5714 = vand.u32 2147483647, %v5687
  %v5715 = vand.u32 2147483647, %v5688
  %v5716 = vand.u32 2147483647, %v5689
  %v5717 = vand.u32 2147483647, %v5690
  %v5718 = vand.u32 2147483647, %v5691
  %v5719 = vand.u32 2147483647, %v5692
  %v5720 = vand.u32 2147483647, %v5693
  %v5721 = vmul.f32 %v5712, 0.3275911
  %v5722 = vmul.f32 %v5713, 0.3275911
  %v5723 = vmul.f32 %v5714, 0.3275911
  %v5724 = vmul.f32 %v5715, 0.3275911
  %v5725 = vmul.f32 %v5716, 0.3275911
  %v5726 = vmul.f32 %v5717, 0.3275911
  %v5727 = vmul.f32 %v5718, 0.3275911
  %v5728 = vmul.f32 %v5719, 0.3275911
  %v5729 = vmul.f32 %v5720, 0.3275911
  %v5730 = vadd.f32 %v5721, 1.0
  %v5731 = vadd.f32 %v5722, 1.0
  %v5732 = vadd.f32 %v5723, 1.0
  %v5733 = vadd.f32 %v5724, 1.0
  %v5734 = vadd.f32 %v5725, 1.0
  %v5735 = vadd.f32 %v5726, 1.0
  %v5736 = vadd.f32 %v5727, 1.0
  %v5737 = vadd.f32 %v5728, 1.0
  %v5738 = vadd.f32 %v5729, 1.0
  %v5739 = vrcp.pop %v5730
  %v5740 = vrcp.pop %v5731
  %v5741 = vrcp.pop %v5732
  %v5742 = vrcp.pop %v5733
  %v5743 = vrcp.pop %v5734
  %v5744 = vrcp.pop %v5735
  %v5745 = vrcp.pop %v5736
  %v5746 = vrcp.pop %v5737
  %v5747 = vrcp.pop %v5738
  %v5748 = vmul.f32 %v5739, 1.0614054
  %v5749 = vmul.f32 %v5740, 1.0614054
  %v5750 = vmul.f32 %v5741, 1.0614054
  %v5751 = vmul.f32 %v5742, 1.0614054
  %v5752 = vmul.f32 %v5743, 1.0614054
  %v5753 = vmul.f32 %v5744, 1.0614054
  %v5754 = vmul.f32 %v5745, 1.0614054
  %v5755 = vmul.f32 %v5746, 1.0614054
  %v5756 = vmul.f32 %v5747, 1.0614054
  %v5757 = vadd.f32 %v5748, -1.4531521
  %v5758 = vadd.f32 %v5749, -1.4531521
  %v5759 = vadd.f32 %v5750, -1.4531521
  %v5760 = vadd.f32 %v5751, -1.4531521
  %v5761 = vadd.f32 %v5752, -1.4531521
  %v5762 = vadd.f32 %v5753, -1.4531521
  %v5763 = vadd.f32 %v5754, -1.4531521
  %v5764 = vadd.f32 %v5755, -1.4531521
  %v5765 = vadd.f32 %v5756, -1.4531521
  %v5766 = vmul.f32 %v5757, %v5739
  %v5767 = vmul.f32 %v5758, %v5740
  %v5768 = vmul.f32 %v5759, %v5741
  %v5769 = vmul.f32 %v5760, %v5742
  %v5770 = vmul.f32 %v5761, %v5743
  %v5771 = vmul.f32 %v5762, %v5744
  %v5772 = vmul.f32 %v5763, %v5745
  %v5773 = vmul.f32 %v5764, %v5746
  %v5774 = vmul.f32 %v5765, %v5747
  %v5775 = vadd.f32 %v5766, 1.4214138
  %v5776 = vadd.f32 %v5767, 1.4214138
  %v5777 = vadd.f32 %v5768, 1.4214138
  %v5778 = vadd.f32 %v5769, 1.4214138
  %v5779 = vadd.f32 %v5770, 1.4214138
  %v5780 = vadd.f32 %v5771, 1.4214138
  %v5781 = vadd.f32 %v5772, 1.4214138
  %v5782 = vadd.f32 %v5773, 1.4214138
  %v5783 = vadd.f32 %v5774, 1.4214138
  %v5784 = vmul.f32 %v5775, %v5739
  %v5785 = vmul.f32 %v5776, %v5740
  %v5786 = vmul.f32 %v5777, %v5741
  %v5787 = vmul.f32 %v5778, %v5742
  %v5788 = vmul.f32 %v5779, %v5743
  %v5789 = vmul.f32 %v5780, %v5744
  %v5790 = vmul.f32 %v5781, %v5745
  %v5791 = vmul.f32 %v5782, %v5746
  %v5792 = vmul.f32 %v5783, %v5747
  %v5793 = vadd.f32 %v5784, -0.28449672
  %v5794 = vadd.f32 %v5785, -0.28449672
  %v5795 = vadd.f32 %v5786, -0.28449672
  %v5796 = vadd.f32 %v5787, -0.28449672
  %v5797 = vadd.f32 %v5788, -0.28449672
  %v5798 = vadd.f32 %v5789, -0.28449672
  %v5799 = vadd.f32 %v5790, -0.28449672
  %v5800 = vadd.f32 %v5791, -0.28449672
  %v5801 = vadd.f32 %v5792, -0.28449672
  %v5802 = vmul.f32 %v5793, %v5739
  %v5803 = vmul.f32 %v5794, %v5740
  %v5804 = vmul.f32 %v5795, %v5741
  %v5805 = vmul.f32 %v5796, %v5742
  %v5806 = vmul.f32 %v5797, %v5743
  %v5807 = vmul.f32 %v5798, %v5744
  %v5808 = vmul.f32 %v5799, %v5745
  %v5809 = vmul.f32 %v5800, %v5746
  %v5810 = vmul.f32 %v5801, %v5747
  %v5811 = vadd.f32 %v5802, 0.2548296
  %v5812 = vadd.f32 %v5803, 0.2548296
  %v5813 = vadd.f32 %v5804, 0.2548296
  %v5814 = vadd.f32 %v5805, 0.2548296
  %v5815 = vadd.f32 %v5806, 0.2548296
  %v5816 = vadd.f32 %v5807, 0.2548296
  %v5817 = vadd.f32 %v5808, 0.2548296
  %v5818 = vadd.f32 %v5809, 0.2548296
  %v5819 = vadd.f32 %v5810, 0.2548296
  %v5820 = vmul.f32 %v5811, %v5739
  %v5821 = vmul.f32 %v5812, %v5740
  %v5822 = vmul.f32 %v5813, %v5741
  %v5823 = vmul.f32 %v5814, %v5742
  %v5824 = vmul.f32 %v5815, %v5743
  %v5825 = vmul.f32 %v5816, %v5744
  %v5826 = vmul.f32 %v5817, %v5745
  %v5827 = vmul.f32 %v5818, %v5746
  %v5828 = vmul.f32 %v5819, %v5747
  %v5829 = vsub.f32 0.0, %v5712
  %v5830 = vsub.f32 0.0, %v5713
  %v5831 = vsub.f32 0.0, %v5714
  %v5832 = vsub.f32 0.0, %v5715
  %v5833 = vsub.f32 0.0, %v5716
  %v5834 = vsub.f32 0.0, %v5717
  %v5835 = vsub.f32 0.0, %v5718
  %v5836 = vsub.f32 0.0, %v5719
  %v5837 = vsub.f32 0.0, %v5720
  %v5838 = vmul.f32 %v5829, %v5712
  %v5839 = vmul.f32 %v5830, %v5713
  %v5840 = vmul.f32 %v5831, %v5714
  %v5841 = vmul.f32 %v5832, %v5715
  %v5842 = vmul.f32 %v5833, %v5716
  %v5843 = vmul.f32 %v5834, %v5717
  %v5844 = vmul.f32 %v5835, %v5718
  %v5845 = vmul.f32 %v5836, %v5719
  %v5846 = vmul.f32 %v5837, %v5720
  %v5847 = vmul.f32 %v5838, 1.442695
  %v5848 = vpow.pop %v5847
  %v5849 = vmul.f32 %v5839, 1.442695
  %v5850 = vpow.pop %v5849
  %v5851 = vmul.f32 %v5840, 1.442695
  %v5852 = vpow.pop %v5851
  %v5853 = vmul.f32 %v5841, 1.442695
  %v5854 = vpow.pop %v5853
  %v5855 = vmul.f32 %v5842, 1.442695
  %v5856 = vpow.pop %v5855
  %v5857 = vmul.f32 %v5843, 1.442695
  %v5858 = vpow.pop %v5857
  %v5859 = vmul.f32 %v5844, 1.442695
  %v5860 = vpow.pop %v5859
  %v5861 = vmul.f32 %v5845, 1.442695
  %v5862 = vpow.pop %v5861
  %v5863 = vmul.f32 %v5846, 1.442695
  %v5864 = vpow.pop %v5863
  %v5865 = vmul.f32 %v5820, %v5848
  %v5866 = vmul.f32 %v5821, %v5850
  %v5867 = vmul.f32 %v5822, %v5852
  %v5868 = vmul.f32 %v5823, %v5854
  %v5869 = vmul.f32 %v5824, %v5856
  %v5870 = vmul.f32 %v5825, %v5858
  %v5871 = vmul.f32 %v5826, %v5860
  %v5872 = vmul.f32 %v5827, %v5862
  %v5873 = vmul.f32 %v5828, %v5864
  %v5874 = vsub.f32 1.0, %v5865
  %v5875 = vsub.f32 1.0, %v5866
  %v5876 = vsub.f32 1.0, %v5867
  %v5877 = vsub.f32 1.0, %v5868
  %v5878 = vsub.f32 1.0, %v5869
  %v5879 = vsub.f32 1.0, %v5870
  %v5880 = vsub.f32 1.0, %v5871
  %v5881 = vsub.f32 1.0, %v5872
  %v5882 = vsub.f32 1.0, %v5873
  %v5883 = vmul.f32 %v5703, %v5874
  %v5884 = vmul.f32 %v5704, %v5875
  %v5885 = vmul.f32 %v5705, %v5876
  %v5886 = vmul.f32 %v5706, %v5877
  %v5887 = vmul.f32 %v5707, %v5878
  %v5888 = vmul.f32 %v5708, %v5879
  %v5889 = vmul.f32 %v5709, %v5880
  %v5890 = vmul.f32 %v5710, %v5881
  %v5891 = vmul.f32 %v5711, %v5882
  %v5892 = vadd.f32 %v5883, 1.0
  %v5893 = vadd.f32 %v5884, 1.0
  %v5894 = vadd.f32 %v5885, 1.0
  %v5895 = vadd.f32 %v5886, 1.0
  %v5896 = vadd.f32 %v5887, 1.0
  %v5897 = vadd.f32 %v5888, 1.0
  %v5898 = vadd.f32 %v5889, 1.0
  %v5899 = vadd.f32 %v5890, 1.0
  %v5900 = vadd.f32 %v5891, 1.0
  %v5901 = vmul.f32 %v5676, %v5892
  %v5902 = vmul.f32 %v5677, %v5893
  %v5903 = vmul.f32 %v5678, %v5894
  %v5904 = vmul.f32 %v5679, %v5895
  %v5905 = vmul.f32 %v5680, %v5896
  %v5906 = vmul.f32 %v5681, %v5897
  %v5907 = vmul.f32 %v5682, %v5898
  %v5908 = vmul.f32 %v5683, %v5899
  %v5909 = vmul.f32 %v5684, %v5900
  %v5910 = vpack.c.bf16 %v5902, %v5901
  %v5911 = vpack.c.bf16 %v5904, %v5903
  %v5912 = vpack.c.bf16 %v5906, %v5905
  %v5913 = vpack.c.bf16 %v5908, %v5907
  %v5914 = vpack.c.bf16 %v5909, %v5909
  %s5915 = scalar_lea.vmem %s15, 32
  %v5916 = vld [vmem:[%s5915] sm:$0xf]
  %v5917 = vld [vmem:[%s5915 + $0x4] sm:$0xf]
  %v5918 = vld [vmem:[%s5915 + $0x8] sm:$0xf]
  %v5919 = vld [vmem:[%s5915 + $0xc] sm:$0xf]
  %v5920 = vld [vmem:[%s5915 + $0x10] sm:$0xf]
  %v5921 = vld [vmem:[%s5915 + $0x14] sm:$0xf]
  %v5922 = vld [vmem:[%s5915 + $0x18] sm:$0xf]
  %v5923 = vld [vmem:[%s5915 + $0x1c] sm:$0xf]
  %s5924 = scalar_lea.vmem %s16, 1
  %v5925 = vld [vmem:[%s5924] sm:$0x1]
  %v5927 = vlaneseq
  %v5928 = vshrl.u32 %v5927, 7
  %v5929 = vsub.s32 0, %v5928
  %v5930 = vrot.slane %v5925, %v5929
  %v5940 = vunpack.c.l.b16 %v5916
  %v5941 = vunpack.c.l.b16 %v5917
  %v5942 = vunpack.c.l.b16 %v5918
  %v5943 = vunpack.c.l.b16 %v5919
  %v5944 = vunpack.c.l.b16 %v5920
  %v5945 = vunpack.c.l.b16 %v5921
  %v5946 = vunpack.c.l.b16 %v5922
  %v5947 = vunpack.c.l.b16 %v5923
  %v5948 = vpack.c.b16 %v5941, %v5940
  %v5949 = vpack.c.b16 %v5943, %v5942
  %v5950 = vpack.c.b16 %v5945, %v5944
  %v5951 = vpack.c.b16 %v5947, %v5946
  %v5957 = vsel %vm3069, %v5910, 0
  %v5960 = vsel %vm3069, %v5911, 0
  %v5963 = vsel %vm3069, %v5912, 0
  %v5966 = vsel %vm3069, %v5913, 0
  %v5969 = vsel %vm3069, %v5914, 0
  %5971 = vmatprep.subr.bf16.mxu0 0
  %5972 = vmatpush1.bf16.msra.mxu0 0
  %5973 = vmatprep.subr.bf16.mxu0 0
  %5974 = vmatpush1.bf16.msra.mxu0 0
  %5975 = vmatprep.subr.bf16.mxu0 0
  %5976 = vmatpush1.bf16.msra.mxu0 0
  %5977 = vmatprep.subr.bf16.mxu0 0
  %5978 = vmatpush1.bf16.msra.mxu0 0
  %5979 = vmatprep.subr.bf16.mxu0 0
  %5980 = vmatpush1.bf16.msra.mxu0 %v5951
  %5981 = vmatprep.subr.bf16.mxu0 0
  %5982 = vmatpush1.bf16.msra.mxu0 %v5950
  %5983 = vmatprep.subr.bf16.mxu0 0
  %5984 = vmatpush1.bf16.msra.mxu0 %v5949
  %5985 = vmatprep.subr.bf16.mxu0 0
  %5986 = vmatpush1.bf16.msra.mxu0 %v5948
  %5987 = vmatprep.subr.bf16.mxu0 0
  %5988 = vmatpush2.bf16.msra.mxu0 0
  %5989 = vmatprep.subr.bf16.mxu0 0
  %5990 = vmatpush2.bf16.msra.mxu0 0
  %5991 = vmatprep.subr.bf16.mxu0 0
  %5992 = vmatpush2.bf16.msra.mxu0 0
  %5993 = vmatprep.subr.bf16.mxu0 0
  %5994 = vmatpush2.bf16.msra.mxu0 0
  %5995 = vmatprep.subr.bf16.mxu0 0
  %5996 = vmatpush2.bf16.msra.mxu0 0
  %5997 = vmatprep.subr.bf16.mxu0 0
  %5998 = vmatpush2.bf16.msra.mxu0 0
  %5999 = vmatprep.subr.bf16.mxu0 0
  %6000 = vmatpush2.bf16.msra.mxu0 0
  %6001 = vmatprep.subr.bf16.mxu0 0
  %6002 = vmatpush2.bf16.msra.mxu0 0
  %6003 = vmatprep.mubr.bf16.mxu0 0
  %6004 = vmatmul.mubr.bf16.gmra.mxu0 %v5957
  %v6005 = vpop.f32.mrf.mxu0
  %v6006 = vadd.f32 %v5930, %v6005
  %v6007 = vpop.f32.mrf.mxu0
  %v6008 = vpop.f32.mrf.mxu0
  %v6009 = vadd.f32 %v5930, %v6008
  %v6010 = vpop.f32.mrf.mxu0
  %6011 = vmatprep.mubr.bf16.mxu0 0
  %6012 = vmatmul.mubr.bf16.gmra.mxu0 %v5960
  %v6013 = vpop.f32.mrf.mxu0
  %v6014 = vadd.f32 %v5930, %v6013
  %v6015 = vpop.f32.mrf.mxu0
  %v6016 = vpop.f32.mrf.mxu0
  %v6017 = vadd.f32 %v5930, %v6016
  %v6018 = vpop.f32.mrf.mxu0
  %6019 = vmatprep.mubr.bf16.mxu0 0
  %6020 = vmatmul.mubr.bf16.gmra.mxu0 %v5963
  %v6021 = vpop.f32.mrf.mxu0
  %v6022 = vadd.f32 %v5930, %v6021
  %v6023 = vpop.f32.mrf.mxu0
  %v6024 = vpop.f32.mrf.mxu0
  %v6025 = vadd.f32 %v5930, %v6024
  %v6026 = vpop.f32.mrf.mxu0
  %6027 = vmatprep.mubr.bf16.mxu0 0
  %6028 = vmatmul.mubr.bf16.gmra.mxu0 %v5966
  %v6029 = vpop.f32.mrf.mxu0
  %v6030 = vadd.f32 %v5930, %v6029
  %v6031 = vpop.f32.mrf.mxu0
  %v6032 = vpop.f32.mrf.mxu0
  %v6033 = vadd.f32 %v5930, %v6032
  %v6034 = vpop.f32.mrf.mxu0
  %6035 = vmatprep.mubr.bf16.mxu0 0
  %6036 = vmatmul.mubr.bf16.gmra.mxu0 %v5969
  %v6037 = vpop.f32.mrf.mxu0
  %v6038 = vadd.f32 %v5930, %v6037
  %v6039 = vpop.f32.mrf.mxu0
  %v6040 = vpop.f32.mrf.mxu0
  %v6041 = vpop.f32.mrf.mxu0
  %6042 = vdwg.mxu0
  %v6043 = vadd.f32 %v5381, %v6006
  %v6044 = vadd.f32 %v5382, %v6009
  %v6045 = vadd.f32 %v5383, %v6014
  %v6046 = vadd.f32 %v5384, %v6017
  %v6047 = vadd.f32 %v5385, %v6022
  %v6048 = vadd.f32 %v5386, %v6025
  %v6049 = vadd.f32 %v5387, %v6030
  %v6050 = vadd.f32 %v5388, %v6033
  %v6051 = vadd.f32 %v5389, %v6038
  %v6052 = vld [vmem:[%s17] sm:$0x1]
  %v6053 = vld [vmem:[%s18] sm:$0x1]
  %v6054 = vsel %vm269, %v6043, 0.0
  %6055 = vadd.xlane.f32.xlu0 %v6054
  %v6056 = vpop.xlane.xlu0 %6055
  %v6057 = vsel %vm269, %v6044, 0.0
  %6058 = vadd.xlane.f32.xlu0 %v6057
  %v6059 = vpop.xlane.xlu0 %6058
  %v6060 = vsel %vm269, %v6045, 0.0
  %6061 = vadd.xlane.f32.xlu0 %v6060
  %v6062 = vpop.xlane.xlu0 %6061
  %v6063 = vsel %vm269, %v6046, 0.0
  %6064 = vadd.xlane.f32.xlu0 %v6063
  %v6065 = vpop.xlane.xlu0 %6064
  %v6066 = vsel %vm269, %v6047, 0.0
  %6067 = vadd.xlane.f32.xlu0 %v6066
  %v6068 = vpop.xlane.xlu0 %6067
  %v6069 = vsel %vm269, %v6048, 0.0
  %6070 = vadd.xlane.f32.xlu0 %v6069
  %v6071 = vpop.xlane.xlu0 %6070
  %v6072 = vsel %vm269, %v6049, 0.0
  %6073 = vadd.xlane.f32.xlu0 %v6072
  %v6074 = vpop.xlane.xlu0 %6073
  %v6075 = vsel %vm269, %v6050, 0.0
  %6076 = vadd.xlane.f32.xlu0 %v6075
  %v6077 = vpop.xlane.xlu0 %6076
  %v6078 = vsel %vm294, %v6051, 0.0
  %6079 = vadd.xlane.f32.xlu0 %v6078
  %v6080 = vpop.xlane.xlu0 %6079
  %v6081 = vmul.f32 %v6056, %v298
  %v6082 = vmul.f32 %v6059, %v298
  %v6083 = vmul.f32 %v6062, %v298
  %v6084 = vmul.f32 %v6065, %v298
  %v6085 = vmul.f32 %v6068, %v298
  %v6086 = vmul.f32 %v6071, %v298
  %v6087 = vmul.f32 %v6074, %v298
  %v6088 = vmul.f32 %v6077, %v298
  %v6089 = vmul.f32 %v6080, %v298
  %v6090 = vmul.f32 %v6043, %v6043
  %v6091 = vmul.f32 %v6044, %v6044
  %v6092 = vmul.f32 %v6045, %v6045
  %v6093 = vmul.f32 %v6046, %v6046
  %v6094 = vmul.f32 %v6047, %v6047
  %v6095 = vmul.f32 %v6048, %v6048
  %v6096 = vmul.f32 %v6049, %v6049
  %v6097 = vmul.f32 %v6050, %v6050
  %v6098 = vmul.f32 %v6051, %v6051
  %v6099 = vsel %vm269, %v6090, 0.0
  %6100 = vadd.xlane.f32.xlu0 %v6099
  %v6101 = vpop.xlane.xlu0 %6100
  %v6102 = vsel %vm269, %v6091, 0.0
  %6103 = vadd.xlane.f32.xlu0 %v6102
  %v6104 = vpop.xlane.xlu0 %6103
  %v6105 = vsel %vm269, %v6092, 0.0
  %6106 = vadd.xlane.f32.xlu0 %v6105
  %v6107 = vpop.xlane.xlu0 %6106
  %v6108 = vsel %vm269, %v6093, 0.0
  %6109 = vadd.xlane.f32.xlu0 %v6108
  %v6110 = vpop.xlane.xlu0 %6109
  %v6111 = vsel %vm269, %v6094, 0.0
  %6112 = vadd.xlane.f32.xlu0 %v6111
  %v6113 = vpop.xlane.xlu0 %6112
  %v6114 = vsel %vm269, %v6095, 0.0
  %6115 = vadd.xlane.f32.xlu0 %v6114
  %v6116 = vpop.xlane.xlu0 %6115
  %v6117 = vsel %vm269, %v6096, 0.0
  %6118 = vadd.xlane.f32.xlu0 %v6117
  %v6119 = vpop.xlane.xlu0 %6118
  %v6120 = vsel %vm269, %v6097, 0.0
  %6121 = vadd.xlane.f32.xlu0 %v6120
  %v6122 = vpop.xlane.xlu0 %6121
  %v6123 = vsel %vm294, %v6098, 0.0
  %6124 = vadd.xlane.f32.xlu0 %v6123
  %v6125 = vpop.xlane.xlu0 %6124
  %v6126 = vmul.f32 %v6101, %v298
  %v6127 = vmul.f32 %v6104, %v298
  %v6128 = vmul.f32 %v6107, %v298
  %v6129 = vmul.f32 %v6110, %v298
  %v6130 = vmul.f32 %v6113, %v298
  %v6131 = vmul.f32 %v6116, %v298
  %v6132 = vmul.f32 %v6119, %v298
  %v6133 = vmul.f32 %v6122, %v298
  %v6134 = vmul.f32 %v6125, %v298
  %v6135 = vmul.f32 %v6081, %v6081
  %v6136 = vmul.f32 %v6082, %v6082
  %v6137 = vmul.f32 %v6083, %v6083
  %v6138 = vmul.f32 %v6084, %v6084
  %v6139 = vmul.f32 %v6085, %v6085
  %v6140 = vmul.f32 %v6086, %v6086
  %v6141 = vmul.f32 %v6087, %v6087
  %v6142 = vmul.f32 %v6088, %v6088
  %v6143 = vmul.f32 %v6089, %v6089
  %v6144 = vsub.f32 %v6126, %v6135
  %v6145 = vsub.f32 %v6127, %v6136
  %v6146 = vsub.f32 %v6128, %v6137
  %v6147 = vsub.f32 %v6129, %v6138
  %v6148 = vsub.f32 %v6130, %v6139
  %v6149 = vsub.f32 %v6131, %v6140
  %v6150 = vsub.f32 %v6132, %v6141
  %v6151 = vsub.f32 %v6133, %v6142
  %v6152 = vsub.f32 %v6134, %v6143
  %v6153 = vsub.f32 %v6043, %v6081
  %v6154 = vsub.f32 %v6044, %v6082
  %v6155 = vsub.f32 %v6045, %v6083
  %v6156 = vsub.f32 %v6046, %v6084
  %v6157 = vsub.f32 %v6047, %v6085
  %v6158 = vsub.f32 %v6048, %v6086
  %v6159 = vsub.f32 %v6049, %v6087
  %v6160 = vsub.f32 %v6050, %v6088
  %v6161 = vsub.f32 %v6051, %v6089
  %v6162 = vadd.f32 %v6144, 1e-06
  %v6163 = vadd.f32 %v6145, 1e-06
  %v6164 = vadd.f32 %v6146, 1e-06
  %v6165 = vadd.f32 %v6147, 1e-06
  %v6166 = vadd.f32 %v6148, 1e-06
  %v6167 = vadd.f32 %v6149, 1e-06
  %v6168 = vadd.f32 %v6150, 1e-06
  %v6169 = vadd.f32 %v6151, 1e-06
  %v6170 = vadd.f32 %v6152, 1e-06
  %v6171 = vrsqrt.pop %v6162
  %v6172 = vrsqrt.pop %v6163
  %v6173 = vrsqrt.pop %v6164
  %v6174 = vrsqrt.pop %v6165
  %v6175 = vrsqrt.pop %v6166
  %v6176 = vrsqrt.pop %v6167
  %v6177 = vrsqrt.pop %v6168
  %v6178 = vrsqrt.pop %v6169
  %v6179 = vrsqrt.pop %v6170
  %v6180 = vmul.f32 %v6153, %v6171
  %v6181 = vmul.f32 %v6154, %v6172
  %v6182 = vmul.f32 %v6155, %v6173
  %v6183 = vmul.f32 %v6156, %v6174
  %v6184 = vmul.f32 %v6157, %v6175
  %v6185 = vmul.f32 %v6158, %v6176
  %v6186 = vmul.f32 %v6159, %v6177
  %v6187 = vmul.f32 %v6160, %v6178
  %v6188 = vmul.f32 %v6161, %v6179
  %v6190 = vlaneseq
  %v6191 = vshrl.u32 %v6190, 7
  %v6192 = vsub.s32 0, %v6191
  %v6193 = vrot.slane %v6052, %v6192
  %v6195 = vmul.f32 %v6180, %v6193
  %v6196 = vmul.f32 %v6181, %v6193
  %v6197 = vmul.f32 %v6182, %v6193
  %v6198 = vmul.f32 %v6183, %v6193
  %v6199 = vmul.f32 %v6184, %v6193
  %v6200 = vmul.f32 %v6185, %v6193
  %v6201 = vmul.f32 %v6186, %v6193
  %v6202 = vmul.f32 %v6187, %v6193
  %v6203 = vmul.f32 %v6188, %v6193
  %v6205 = vlaneseq
  %v6206 = vshrl.u32 %v6205, 7
  %v6207 = vsub.s32 0, %v6206
  %v6208 = vrot.slane %v6053, %v6207
  %v6210 = vadd.f32 %v6195, %v6208
  %v6211 = vadd.f32 %v6196, %v6208
  %v6212 = vadd.f32 %v6197, %v6208
  %v6213 = vadd.f32 %v6198, %v6208
  %v6214 = vadd.f32 %v6199, %v6208
  %v6215 = vadd.f32 %v6200, %v6208
  %v6216 = vadd.f32 %v6201, %v6208
  %v6217 = vadd.f32 %v6202, %v6208
  %v6218 = vadd.f32 %v6203, %v6208
  %6219 = vst.msk [vmem:[%s19] sm:$0xff] %vm269, %v6210
  %6220 = vst.msk [vmem:[%s19 + $0x8] sm:$0xff] %vm269, %v6211
  %6221 = vst.msk [vmem:[%s19 + $0x10] sm:$0xff] %vm269, %v6212
  %6222 = vst.msk [vmem:[%s19 + $0x18] sm:$0xff] %vm269, %v6213
  %6223 = vst.msk [vmem:[%s19 + $0x20] sm:$0xff] %vm269, %v6214
  %6224 = vst.msk [vmem:[%s19 + $0x28] sm:$0xff] %vm269, %v6215
  %6225 = vst.msk [vmem:[%s19 + $0x30] sm:$0xff] %vm269, %v6216
  %6226 = vst.msk [vmem:[%s19 + $0x38] sm:$0xff] %vm269, %v6217
  %6227 = vst.msk [vmem:[%s19 + $0x40] sm:$0x3] %vm294, %v6218
  // Predicated region
  $region78: #{tpu_custom_call.1} parent=0 // pred_check
    _
  $region79: #{tpu_custom_call.1} parent=0 // pred_check_branch
    %6229 = sbr.rel (0) target = $region81
  $region80: #{tpu_custom_call.1} parent=0 // pred_region
    _
  $region81: #{tpu_custom_call.1} parent=0 // pred_fallthru
    _
  // Predicated region
  $region82: #{tpu_custom_call.1} parent=0 // pred_check
    _
  $region83: #{tpu_custom_call.1} parent=0 // pred_check_branch
    %6231 = sbr.rel (0) target = $region85
  $region84: #{tpu_custom_call.1} parent=0 // pred_region
    _
  $region85: #{tpu_custom_call.1} parent=0 // pred_fallthru
    _

</llo_original>
